<compile_context>
chip_gen: v7x
topology: tpu7x:2x2x1
jax: 0.10.0
libtpu: 0.0.40
codegen_flags: <defaults>
</compile_context>

<pallas_src>
import math
from functools import partial

import jax
import jax.numpy as jnp
from jax import lax
from jax.experimental import pallas as pl
from jax.experimental.pallas import tpu as pltpu

# ---- model hyper-params (small, consistent with the module) ----
EMBED_SIZE = 32
HEADS = 4
HEAD_DIM = EMBED_SIZE // HEADS
NUM_LAYERS = 2
EXPANSION = 4
FF_DIM = EXPANSION * EMBED_SIZE
SRC_VOCAB = 50
TRG_VOCAB = 60
VOCAB_PAD = 128            # lane-dense padded output width (multiple of 128)
MAX_LEN = 100
EPS = 1e-5                 # torch.nn.LayerNorm default
MASK_FILL = -1000000000.0
ATTN_SCALE = 1.0 / math.sqrt(HEAD_DIM)


# ----------------------- in-kernel building blocks -----------------------

def _layernorm(h, g, b):
    """LayerNorm over last axis; biased variance (matches torch)."""
    mean = jnp.mean(h, axis=-1, keepdims=True)
    var = jnp.mean((h - mean) * (h - mean), axis=-1, keepdims=True)
    return (h - mean) * lax.rsqrt(var + EPS) * g + b


def _attention(x_q, x_kv, wqkv, bqkv, wo, bo, keep):
    """Multi-head attention for ONE batch element.

    x_q: [Lq, E] (queries), x_kv: [Lk, E] (keys/values, may be x_q itself).
    wqkv: [E, 3E], bqkv: [1, 3E], wo: [E, E], bo: [1, E].
    keep: [H*Lq, Lk] bool, stacked head-major (False => masked_fill -1e9).
    """
    E, Dh, H = EMBED_SIZE, HEAD_DIM, HEADS
    Lq = x_q.shape[0]

    if x_q is x_kv:
        # self-attention: single fused QKV matmul
        qkv = jnp.dot(x_q, wqkv, preferred_element_type=jnp.float32) + bqkv
        q, k, v = qkv[:, :E], qkv[:, E:2 * E], qkv[:, 2 * E:]
    else:
        # cross-attention: Q from x_q, fused K/V from x_kv
        q = jnp.dot(x_q, wqkv[:, :E], preferred_element_type=jnp.float32) + bqkv[:, :E]
        kv = jnp.dot(x_kv, wqkv[:, E:], preferred_element_type=jnp.float32) + bqkv[:, E:]
        k, v = kv[:, :E], kv[:, E:]

    kT = k.T                                              # [E, Lk] (one transpose)

    # scores for all heads stacked along sublanes: [H*Lq, Lk]
    scores = jnp.concatenate(
        [jnp.dot(q[:, h * Dh:(h + 1) * Dh], kT[h * Dh:(h + 1) * Dh, :],
                 preferred_element_type=jnp.float32)
         for h in range(H)], axis=0) * ATTN_SCALE

    scores = jnp.where(keep, scores, MASK_FILL)           # masked_fill semantics
    scores = scores - jnp.max(scores, axis=-1, keepdims=True)
    p = jnp.exp(scores)
    p = p * pl.reciprocal(jnp.sum(p, axis=-1, keepdims=True), approx=True)

    # head-merge folded into the output projection:
    #   concat_h(p_h @ v_h) @ Wo == sum_h (p_h @ v_h) @ Wo[h*Dh:(h+1)*Dh, :]
    out = None
    for h in range(H):
        oh = jnp.dot(p[h * Lq:(h + 1) * Lq, :], v[:, h * Dh:(h + 1) * Dh],
                     preferred_element_type=jnp.float32)
        term = jnp.dot(oh, wo[h * Dh:(h + 1) * Dh, :],
                       preferred_element_type=jnp.float32)
        out = term if out is None else out + term
    return out + bo


def _block(x_q, x_kv, keep, p):
    """TransformerBlock: attention(Q=x_q, K=V=x_kv) + LN + FFN + LN."""
    attn = _attention(x_q, x_kv, p["wqkv"], p["bqkv"], p["wo"], p["bo"], keep)
    x = _layernorm(attn + x_q, p["ln1_g"], p["ln1_b"])            # dropout == identity
    h = jnp.maximum(jnp.dot(x, p["w1"], preferred_element_type=jnp.float32) + p["b1"], 0.0)
    ff = jnp.dot(h, p["w2"], preferred_element_type=jnp.float32) + p["b2"]
    return _layernorm(ff + x, p["ln2_g"], p["ln2_b"])             # dropout == identity


# ----------------------------- fused kernel -----------------------------

def _fused_transformer_kernel(
        src_x_ref, trg_x_ref, src_valid_ref,
        enc_wqkv_ref, enc_bqkv_ref, enc_wo_ref, enc_bo_ref,
        enc_ln1g_ref, enc_ln1b_ref, enc_ln2g_ref, enc_ln2b_ref,
        enc_w1_ref, enc_b1_ref, enc_w2_ref, enc_b2_ref,
        dec_sa_wqkv_ref, dec_sa_bqkv_ref, dec_sa_wo_ref, dec_sa_bo_ref,
        dec_lng_ref, dec_lnb_ref,
        dec_ca_wqkv_ref, dec_ca_bqkv_ref, dec_ca_wo_ref, dec_ca_bo_ref,
        dec_ln1g_ref, dec_ln1b_ref, dec_ln2g_ref, dec_ln2b_ref,
        dec_w1_ref, dec_b1_ref, dec_w2_ref, dec_b2_ref,
        wout_ref, bout_ref,
        out_ref):
    Ls = src_x_ref.shape[0]
    Lt = trg_x_ref.shape[0]
    H = HEADS

    # ---- masks: built in-kernel once as booleans, shared by all layers ----
    valid = src_valid_ref[...] != 0.0                            # [1, Ls] bool
    enc_keep = jnp.broadcast_to(valid, (H * Ls, Ls))             # encoder self-attn
    cross_keep = jnp.broadcast_to(valid, (H * Lt, Ls))           # decoder cross-attn
    q_idx = lax.broadcasted_iota(jnp.int32, (Lt, Lt), 0)
    k_idx = lax.broadcasted_iota(jnp.int32, (Lt, Lt), 1)
    causal = q_idx >= k_idx                                      # [Lt, Lt] tril
    causal_keep = jnp.concatenate([causal] * H, axis=0)          # [H*Lt, Lt]

    # ---- encoder ----
    enc = src_x_ref[...]                                         # [Ls, E]
    for l in range(NUM_LAYERS):
        p = dict(wqkv=enc_wqkv_ref[l], bqkv=enc_bqkv_ref[l],
                 wo=enc_wo_ref[l], bo=enc_bo_ref[l],
                 ln1_g=enc_ln1g_ref[l], ln1_b=enc_ln1b_ref[l],
                 ln2_g=enc_ln2g_ref[l], ln2_b=enc_ln2b_ref[l],
                 w1=enc_w1_ref[l], b1=enc_b1_ref[l],
                 w2=enc_w2_ref[l], b2=enc_b2_ref[l])
        enc = _block(enc, enc, enc_keep, p)

    # ---- decoder ----
    x = trg_x_ref[...]                                           # [Lt, E]
    for l in range(NUM_LAYERS):
        attn = _attention(x, x, dec_sa_wqkv_ref[l], dec_sa_bqkv_ref[l],
                          dec_sa_wo_ref[l], dec_sa_bo_ref[l], causal_keep)
        query = _layernorm(attn + x, dec_lng_ref[l], dec_lnb_ref[l])   # dropout == identity
        p = dict(wqkv=dec_ca_wqkv_ref[l], bqkv=dec_ca_bqkv_ref[l],
                 wo=dec_ca_wo_ref[l], bo=dec_ca_bo_ref[l],
                 ln1_g=dec_ln1g_ref[l], ln1_b=dec_ln1b_ref[l],
                 ln2_g=dec_ln2g_ref[l], ln2_b=dec_ln2b_ref[l],
                 w1=dec_w1_ref[l], b1=dec_b1_ref[l],
                 w2=dec_w2_ref[l], b2=dec_b2_ref[l])
        x = _block(query, enc, cross_keep, p)

    # ---- final vocab projection, padded to 128 lanes (lane-dense store) ----
    out_ref[...] = (jnp.dot(x, wout_ref[...], preferred_element_type=jnp.float32)
                    + bout_ref[...])


# ----------------------------- wrapper -----------------------------

@partial(jax.jit, static_argnames=("src_pad_idx", "trg_pad_idx"))
def transformer_forward(params, src, trg, *, src_pad_idx, trg_pad_idx):
    N, Ls = src.shape
    _, Lt = trg.shape

    # token embedding + positional encoding (cheap gathers, kept in XLA).
    # NOTE: reproduces the reference PositionalEncoding broadcast quirk — it
    # slices the positional table by the BATCH size and broadcasts over the
    # sequence axis: x + pe[:N][:, None, :].
    pe = params["pe"]
    enc_p, dec_p = params["enc"], params["dec"]
    src_x = enc_p["word_emb"][src] + pe[:N][:, None, :]          # [N, Ls, E]
    trg_x = dec_p["word_emb"][trg] + pe[:N][:, None, :]          # [N, Lt, E]
    src_valid = (src != src_pad_idx).astype(jnp.float32).reshape(N, 1, Ls)
    # trg_pad_idx unused for masks (reference uses a pure causal trg mask).

    inputs = [
        src_x, trg_x, src_valid,
        enc_p["wqkv"], enc_p["bqkv"], enc_p["wo"], enc_p["bo"],
        enc_p["ln1_g"], enc_p["ln1_b"], enc_p["ln2_g"], enc_p["ln2_b"],
        enc_p["w1"], enc_p["b1"], enc_p["w2"], enc_p["b2"],
        dec_p["sa_wqkv"], dec_p["sa_bqkv"], dec_p["sa_wo"], dec_p["sa_bo"],
        dec_p["ln_g"], dec_p["ln_b"],
        dec_p["ca_wqkv"], dec_p["ca_bqkv"], dec_p["ca_wo"], dec_p["ca_bo"],
        dec_p["ln1_g"], dec_p["ln1_b"], dec_p["ln2_g"], dec_p["ln2_b"],
        dec_p["w1"], dec_p["b1"], dec_p["w2"], dec_p["b2"],
        dec_p["w_out_pad"], dec_p["b_out_pad"],
    ]

    def batch_spec(shape):
        # one batch element per grid step, batch dim squeezed away in-kernel
        return pl.BlockSpec((None,) + tuple(shape[1:]),
                            lambda b: (b,) + (0,) * (len(shape) - 1))

    def shared_spec(shape):
        # weights: full-array block, same block for every grid step (resident)
        return pl.BlockSpec(tuple(shape), lambda b: (0,) * len(shape))

    in_specs = [batch_spec(src_x.shape), batch_spec(trg_x.shape),
                batch_spec(src_valid.shape)]
    in_specs += [shared_spec(a.shape) for a in inputs[3:]]

    out = pl.pallas_call(
        _fused_transformer_kernel,
        out_shape=jax.ShapeDtypeStruct((N, Lt, VOCAB_PAD), jnp.float32),
        grid=(N,),
        in_specs=in_specs,
        out_specs=pl.BlockSpec((None, Lt, VOCAB_PAD), lambda b: (b, 0, 0)),
        compiler_params=pltpu.CompilerParams(
            dimension_semantics=("parallel",)),
    )(*inputs)

    return out[:, :, :TRG_VOCAB]                                  # strip lane padding


# ----------------------------- pure-JAX reference -----------------------------

def transformer_reference(params, src, trg, *, src_pad_idx, trg_pad_idx):
    """fp32 reference mirroring the torch module math (for correctness check)."""
    hp = lax.Precision.HIGHEST
    dot = lambda a, b: jnp.dot(a, b, precision=hp)
    E, H, Dh = EMBED_SIZE, HEADS, HEAD_DIM

    pe = params["pe"]
    enc_p, dec_p = params["enc"], params["dec"]
    N, Ls = src.shape
    _, Lt = trg.shape
    src_x = enc_p["word_emb"][src] + pe[:N][:, None, :]
    trg_x = dec_p["word_emb"][trg] + pe[:N][:, None, :]
    src_keep = (src != src_pad_idx)                              # [N, Ls]
    causal = jnp.tril(jnp.ones((Lt, Lt), bool))

    def layernorm(h, g, b):
        m = h.mean(-1, keepdims=True)
        v = ((h - m) ** 2).mean(-1, keepdims=True)
        return (h - m) / jnp.sqrt(v + EPS) * g + b

    def mha(xq, xkv, wqkv, bqkv, wo, bo, keep):                  # keep: [., Lq|1, Lk]
        Lq, Lk = xq.shape[0], xkv.shape[0]
        q = dot(xq, wqkv[:, :E]) + bqkv[0, :E]
        k = dot(xkv, wqkv[:, E:2 * E]) + bqkv[0, E:2 * E]
        v = dot(xkv, wqkv[:, 2 * E:]) + bqkv[0, 2 * E:]
        q = q.reshape(Lq, H, Dh).transpose(1, 0, 2)
        k = k.reshape(Lk, H, Dh).transpose(1, 0, 2)
        v = v.reshape(Lk, H, Dh).transpose(1, 0, 2)
        s = jnp.einsum("hqd,hkd->hqk", q, k, precision=hp) * ATTN_SCALE
        s = jnp.where(keep, s, MASK_FILL)
        p = jax.nn.softmax(s, axis=-1)
        o = jnp.einsum("hqk,hkd->hqd", p, v, precision=hp)
        o = o.transpose(1, 0, 2).reshape(Lq, E)
        return dot(o, wo) + bo[0]

    def tblock(xq, xkv, keep, p):
        a = mha(xq, xkv, p["wqkv"], p["bqkv"], p["wo"], p["bo"], keep)
        x = layernorm(a + xq, p["ln1_g"][0], p["ln1_b"][0])
        h = jax.nn.relu(dot(x, p["w1"]) + p["b1"][0])
        ff = dot(h, p["w2"]) + p["b2"][0]
        return layernorm(ff + x, p["ln2_g"][0], p["ln2_b"][0])

    outs = []
    for b in range(N):
        key_keep = src_keep[b][None, None, :]                    # [1,1,Ls]
        enc = src_x[b]
        for l in range(NUM_LAYERS):
            p = {k: v[l] for k, v in enc_p.items() if k != "word_emb"}
            enc = tblock(enc, enc, key_keep, p)
        x = trg_x[b]
        for l in range(NUM_LAYERS):
            d = {k: v[l] for k, v in dec_p.items()
                 if k not in ("word_emb", "w_out_pad", "b_out_pad")}
            a = mha(x, x, d["sa_wqkv"], d["sa_bqkv"], d["sa_wo"], d["sa_bo"],
                    causal[None])
            q = layernorm(a + x, d["ln_g"][0], d["ln_b"][0])
            p = dict(wqkv=d["ca_wqkv"], bqkv=d["ca_bqkv"], wo=d["ca_wo"], bo=d["ca_bo"],
                     ln1_g=d["ln1_g"], ln1_b=d["ln1_b"], ln2_g=d["ln2_g"], ln2_b=d["ln2_b"],
                     w1=d["w1"], b1=d["b1"], w2=d["w2"], b2=d["b2"])
            x = tblock(q, enc, key_keep, p)
        logits = dot(x, dec_p["w_out_pad"][:, :TRG_VOCAB]) + dec_p["b_out_pad"][0, :TRG_VOCAB]
        outs.append(logits)
    return jnp.stack(outs)


# ----------------------------- parameter init -----------------------------

def make_pos_encoding(max_len, embed_size):
    position = jnp.arange(max_len, dtype=jnp.float32)[:, None]
    div_term = jnp.exp(jnp.arange(0, embed_size, 2, dtype=jnp.float32)
                       * (-math.log(10000.0) / embed_size))
    pe = jnp.zeros((max_len, embed_size), jnp.float32)
    pe = pe.at[:, 0::2].set(jnp.sin(position * div_term))
    pe = pe.at[:, 1::2].set(jnp.cos(position * div_term))
    return pe


def _init_linear(key, in_dim, out_dim):
    k1, k2 = jax.random.split(key)
    w = jax.random.normal(k1, (in_dim, out_dim), jnp.float32) * 0.02  # stored [in, out]
    b = jax.random.normal(k2, (out_dim,), jnp.float32) * 0.02
    return w, b


def _init_mha(key):
    kq, kk, kv, ko = jax.random.split(key, 4)
    wq, bq = _init_linear(kq, EMBED_SIZE, EMBED_SIZE)
    wk, bk = _init_linear(kk, EMBED_SIZE, EMBED_SIZE)
    wv, bv = _init_linear(kv, EMBED_SIZE, EMBED_SIZE)
    wo, bo = _init_linear(ko, EMBED_SIZE, EMBED_SIZE)
    wqkv = jnp.concatenate([wq, wk, wv], axis=1)          # [E, 3E] fused QKV
    bqkv = jnp.concatenate([bq, bk, bv], axis=0)[None]    # [1, 3E]
    return wqkv, bqkv, wo, bo[None]                       # bo -> [1, E]


def _init_tblock(key):
    k1, k2, k3 = jax.random.split(key, 3)
    wqkv, bqkv, wo, bo = _init_mha(k1)
    w1, b1 = _init_linear(k2, EMBED_SIZE, FF_DIM)
    w2, b2 = _init_linear(k3, FF_DIM, EMBED_SIZE)
    ones = jnp.ones((1, EMBED_SIZE), jnp.float32)
    zeros = jnp.zeros((1, EMBED_SIZE), jnp.float32)
    return dict(wqkv=wqkv, bqkv=bqkv, wo=wo, bo=bo,
                ln1_g=ones, ln1_b=zeros, ln2_g=ones, ln2_b=zeros,
                w1=w1, b1=b1[None], w2=w2, b2=b2[None])


def _init_dblock(key):
    k1, k2 = jax.random.split(key)
    wqkv, bqkv, wo, bo = _init_mha(k1)
    t = _init_tblock(k2)
    return dict(sa_wqkv=wqkv, sa_bqkv=bqkv, sa_wo=wo, sa_bo=bo,
                ln_g=jnp.ones((1, EMBED_SIZE), jnp.float32),
                ln_b=jnp.zeros((1, EMBED_SIZE), jnp.float32),
                ca_wqkv=t["wqkv"], ca_bqkv=t["bqkv"], ca_wo=t["wo"], ca_bo=t["bo"],
                ln1_g=t["ln1_g"], ln1_b=t["ln1_b"], ln2_g=t["ln2_g"], ln2_b=t["ln2_b"],
                w1=t["w1"], b1=t["b1"], w2=t["w2"], b2=t["b2"])


def init_params(key):
    k_enc_emb, k_dec_emb, k_enc, k_dec, k_out = jax.random.split(key, 5)

    enc_layers = [_init_tblock(k) for k in jax.random.split(k_enc, NUM_LAYERS)]
    dec_layers = [_init_dblock(k) for k in jax.random.split(k_dec, NUM_LAYERS)]

    enc = {name: jnp.stack([lp[name] for lp in enc_layers], axis=0)
           for name in enc_layers[0]}
    dec = {name: jnp.stack([lp[name] for lp in dec_layers], axis=0)
           for name in dec_layers[0]}

    enc["word_emb"] = jax.random.normal(k_enc_emb, (SRC_VOCAB, EMBED_SIZE), jnp.float32)
    dec["word_emb"] = jax.random.normal(k_dec_emb, (TRG_VOCAB, EMBED_SIZE), jnp.float32)

    # final vocab projection, zero-padded to 128 output lanes
    w_out, b_out = _init_linear(k_out, EMBED_SIZE, TRG_VOCAB)
    dec["w_out_pad"] = jnp.zeros((EMBED_SIZE, VOCAB_PAD), jnp.float32).at[:, :TRG_VOCAB].set(w_out)
    dec["b_out_pad"] = jnp.zeros((1, VOCAB_PAD), jnp.float32).at[:, :TRG_VOCAB].set(b_out)

    return {"enc": enc, "dec": dec, "pe": make_pos_encoding(MAX_LEN, EMBED_SIZE)}


# ----------------------------- main -----------------------------

if __name__ == "__main__":
    SRC_PAD_IDX = 0
    TRG_PAD_IDX = 0
    N, LS, LT = 2, 8, 8

    root = jax.random.PRNGKey(0)
    k_params, k_src, k_trg = jax.random.split(root, 3)
    params = init_params(k_params)

    src = jax.random.randint(k_src, (N, LS), 1, SRC_VOCAB, dtype=jnp.int32)
    trg = jax.random.randint(k_trg, (N, LT), 1, TRG_VOCAB, dtype=jnp.int32)

    out = transformer_forward(params, src, trg,
                              src_pad_idx=SRC_PAD_IDX, trg_pad_idx=TRG_PAD_IDX)
    out = jax.block_until_ready(out)

    assert out.shape == (N, LT, TRG_VOCAB), out.shape
    assert out.dtype == jnp.float32
    assert bool(jnp.all(jnp.isfinite(out)))

    # correctness check vs pure-JAX fp32 reference (generous tol: EUP approx
    # reciprocal in the kernel softmax vs exact division in the reference)
    ref = jax.block_until_ready(
        transformer_reference(params, src, trg,
                              src_pad_idx=SRC_PAD_IDX, trg_pad_idx=TRG_PAD_IDX))
    err = float(jnp.max(jnp.abs(out - ref)))
    assert err < 5e-2, f"max abs error vs reference: {err}"

    print("KERNEL_OK")
</pallas_src>

<mosaic_0001>
module attributes {stable_mosaic.version = 11 : i64} {
  func.func @_fused_transformer_kernel(%arg0: i32, %arg1: memref<1x8x32xf32, #tpu.memory_space<vmem>>, %arg2: memref<1x8x32xf32, #tpu.memory_space<vmem>>, %arg3: memref<1x1x8xf32, #tpu.memory_space<vmem>>, %arg4: memref<2x32x96xf32, #tpu.memory_space<vmem>>, %arg5: memref<2x1x96xf32, #tpu.memory_space<vmem>>, %arg6: memref<2x32x32xf32, #tpu.memory_space<vmem>>, %arg7: memref<2x1x32xf32, #tpu.memory_space<vmem>>, %arg8: memref<2x1x32xf32, #tpu.memory_space<vmem>>, %arg9: memref<2x1x32xf32, #tpu.memory_space<vmem>>, %arg10: memref<2x1x32xf32, #tpu.memory_space<vmem>>, %arg11: memref<2x1x32xf32, #tpu.memory_space<vmem>>, %arg12: memref<2x32x128xf32, #tpu.memory_space<vmem>>, %arg13: memref<2x1x128xf32, #tpu.memory_space<vmem>>, %arg14: memref<2x128x32xf32, #tpu.memory_space<vmem>>, %arg15: memref<2x1x32xf32, #tpu.memory_space<vmem>>, %arg16: memref<2x32x96xf32, #tpu.memory_space<vmem>>, %arg17: memref<2x1x96xf32, #tpu.memory_space<vmem>>, %arg18: memref<2x32x32xf32, #tpu.memory_space<vmem>>, %arg19: memref<2x1x32xf32, #tpu.memory_space<vmem>>, %arg20: memref<2x1x32xf32, #tpu.memory_space<vmem>>, %arg21: memref<2x1x32xf32, #tpu.memory_space<vmem>>, %arg22: memref<2x32x96xf32, #tpu.memory_space<vmem>>, %arg23: memref<2x1x96xf32, #tpu.memory_space<vmem>>, %arg24: memref<2x32x32xf32, #tpu.memory_space<vmem>>, %arg25: memref<2x1x32xf32, #tpu.memory_space<vmem>>, %arg26: memref<2x1x32xf32, #tpu.memory_space<vmem>>, %arg27: memref<2x1x32xf32, #tpu.memory_space<vmem>>, %arg28: memref<2x1x32xf32, #tpu.memory_space<vmem>>, %arg29: memref<2x1x32xf32, #tpu.memory_space<vmem>>, %arg30: memref<2x32x128xf32, #tpu.memory_space<vmem>>, %arg31: memref<2x1x128xf32, #tpu.memory_space<vmem>>, %arg32: memref<2x128x32xf32, #tpu.memory_space<vmem>>, %arg33: memref<2x1x32xf32, #tpu.memory_space<vmem>>, %arg34: memref<32x128xf32, #tpu.memory_space<vmem>>, %arg35: memref<1x128xf32, #tpu.memory_space<vmem>>, %arg36: memref<1x8x128xf32, #tpu.memory_space<vmem>>) attributes {dimension_semantics = [#tpu.dimension_semantics<parallel>], iteration_bounds = array<i64: 2>, scalar_prefetch = 0 : i64, scratch_operands = 0 : i64, tpu.core_type = #tpu.core_type<tc>, window_params = [{transform_indices = @transform_0, window_bounds = array<i64: 1, 8, 32>}, {transform_indices = @transform_1, window_bounds = array<i64: 1, 8, 32>}, {transform_indices = @transform_2, window_bounds = array<i64: 1, 1, 8>}, {pipeline_mode = #tpu.pipeline_mode<synchronous>, transform_indices = @transform_3, window_bounds = array<i64: 2, 32, 96>}, {pipeline_mode = #tpu.pipeline_mode<synchronous>, transform_indices = @transform_4, window_bounds = array<i64: 2, 1, 96>}, {pipeline_mode = #tpu.pipeline_mode<synchronous>, transform_indices = @transform_5, window_bounds = array<i64: 2, 32, 32>}, {pipeline_mode = #tpu.pipeline_mode<synchronous>, transform_indices = @transform_6, window_bounds = array<i64: 2, 1, 32>}, {pipeline_mode = #tpu.pipeline_mode<synchronous>, transform_indices = @transform_7, window_bounds = array<i64: 2, 1, 32>}, {pipeline_mode = #tpu.pipeline_mode<synchronous>, transform_indices = @transform_8, window_bounds = array<i64: 2, 1, 32>}, {pipeline_mode = #tpu.pipeline_mode<synchronous>, transform_indices = @transform_9, window_bounds = array<i64: 2, 1, 32>}, {pipeline_mode = #tpu.pipeline_mode<synchronous>, transform_indices = @transform_10, window_bounds = array<i64: 2, 1, 32>}, {pipeline_mode = #tpu.pipeline_mode<synchronous>, transform_indices = @transform_11, window_bounds = array<i64: 2, 32, 128>}, {pipeline_mode = #tpu.pipeline_mode<synchronous>, transform_indices = @transform_12, window_bounds = array<i64: 2, 1, 128>}, {pipeline_mode = #tpu.pipeline_mode<synchronous>, transform_indices = @transform_13, window_bounds = array<i64: 2, 128, 32>}, {pipeline_mode = #tpu.pipeline_mode<synchronous>, transform_indices = @transform_14, window_bounds = array<i64: 2, 1, 32>}, {pipeline_mode = #tpu.pipeline_mode<synchronous>, transform_indices = @transform_15, window_bounds = array<i64: 2, 32, 96>}, {pipeline_mode = #tpu.pipeline_mode<synchronous>, transform_indices = @transform_16, window_bounds = array<i64: 2, 1, 96>}, {pipeline_mode = #tpu.pipeline_mode<synchronous>, transform_indices = @transform_17, window_bounds = array<i64: 2, 32, 32>}, {pipeline_mode = #tpu.pipeline_mode<synchronous>, transform_indices = @transform_18, window_bounds = array<i64: 2, 1, 32>}, {pipeline_mode = #tpu.pipeline_mode<synchronous>, transform_indices = @transform_19, window_bounds = array<i64: 2, 1, 32>}, {pipeline_mode = #tpu.pipeline_mode<synchronous>, transform_indices = @transform_20, window_bounds = array<i64: 2, 1, 32>}, {pipeline_mode = #tpu.pipeline_mode<synchronous>, transform_indices = @transform_21, window_bounds = array<i64: 2, 32, 96>}, {pipeline_mode = #tpu.pipeline_mode<synchronous>, transform_indices = @transform_22, window_bounds = array<i64: 2, 1, 96>}, {pipeline_mode = #tpu.pipeline_mode<synchronous>, transform_indices = @transform_23, window_bounds = array<i64: 2, 32, 32>}, {pipeline_mode = #tpu.pipeline_mode<synchronous>, transform_indices = @transform_24, window_bounds = array<i64: 2, 1, 32>}, {pipeline_mode = #tpu.pipeline_mode<synchronous>, transform_indices = @transform_25, window_bounds = array<i64: 2, 1, 32>}, {pipeline_mode = #tpu.pipeline_mode<synchronous>, transform_indices = @transform_26, window_bounds = array<i64: 2, 1, 32>}, {pipeline_mode = #tpu.pipeline_mode<synchronous>, transform_indices = @transform_27, window_bounds = array<i64: 2, 1, 32>}, {pipeline_mode = #tpu.pipeline_mode<synchronous>, transform_indices = @transform_28, window_bounds = array<i64: 2, 1, 32>}, {pipeline_mode = #tpu.pipeline_mode<synchronous>, transform_indices = @transform_29, window_bounds = array<i64: 2, 32, 128>}, {pipeline_mode = #tpu.pipeline_mode<synchronous>, transform_indices = @transform_30, window_bounds = array<i64: 2, 1, 128>}, {pipeline_mode = #tpu.pipeline_mode<synchronous>, transform_indices = @transform_31, window_bounds = array<i64: 2, 128, 32>}, {pipeline_mode = #tpu.pipeline_mode<synchronous>, transform_indices = @transform_32, window_bounds = array<i64: 2, 1, 32>}, {pipeline_mode = #tpu.pipeline_mode<synchronous>, transform_indices = @transform_33, window_bounds = array<i64: 32, 128>}, {pipeline_mode = #tpu.pipeline_mode<synchronous>, transform_indices = @transform_34, window_bounds = array<i64: 1, 128>}, {transform_indices = @transform_35, window_bounds = array<i64: 1, 8, 128>}]} {
    %c0 = arith.constant 0 : index
    %c0_0 = arith.constant 0 : index
    %c0_1 = arith.constant 0 : index
    %0 = vector.load %arg3[%c0, %c0_0, %c0_1] : memref<1x1x8xf32, #tpu.memory_space<vmem>>, vector<1x1x8xf32>
    %1 = vector.shape_cast %0 : vector<1x1x8xf32> to vector<1x8xf32>
    %cst = arith.constant 0.000000e+00 : f32
    %2 = vector.broadcast %cst : f32 to vector<1x8xf32>
    %3 = arith.cmpf one, %1, %2 : vector<1x8xf32>
    %4 = vector.shape_cast %3 : vector<1x8xi1> to vector<1x8xi1>
    %5 = vector.broadcast %4 : vector<1x8xi1> to vector<32x8xi1>
    %6 = vector.shape_cast %3 : vector<1x8xi1> to vector<1x8xi1>
    %7 = vector.broadcast %6 : vector<1x8xi1> to vector<32x8xi1>
    %8 = tpu.iota {dimensions = array<i32: 0>} : vector<8x8xi32>
    %9 = tpu.iota {dimensions = array<i32: 1>} : vector<8x8xi32>
    %10 = arith.cmpi sge, %8, %9 : vector<8x8xi32>
    %11 = tpu.concatenate %10, %10, %10, %10 in 0 : vector<8x8xi1>, vector<8x8xi1>, vector<8x8xi1>, vector<8x8xi1> -> vector<32x8xi1>
    %c0_2 = arith.constant 0 : index
    %c0_3 = arith.constant 0 : index
    %c0_4 = arith.constant 0 : index
    %12 = vector.load %arg1[%c0_2, %c0_3, %c0_4] : memref<1x8x32xf32, #tpu.memory_space<vmem>>, vector<1x8x32xf32>
    %13 = vector.shape_cast %12 : vector<1x8x32xf32> to vector<8x32xf32>
    %c0_5 = arith.constant 0 : index
    %c0_6 = arith.constant 0 : index
    %c0_7 = arith.constant 0 : index
    %14 = vector.load %arg4[%c0_5, %c0_6, %c0_7] : memref<2x32x96xf32, #tpu.memory_space<vmem>>, vector<1x32x96xf32>
    %15 = vector.shape_cast %14 : vector<1x32x96xf32> to vector<32x96xf32>
    %c0_8 = arith.constant 0 : index
    %c0_9 = arith.constant 0 : index
    %c0_10 = arith.constant 0 : index
    %16 = vector.load %arg5[%c0_8, %c0_9, %c0_10] : memref<2x1x96xf32, #tpu.memory_space<vmem>>, vector<1x1x96xf32>
    %17 = vector.shape_cast %16 : vector<1x1x96xf32> to vector<1x96xf32>
    %c0_11 = arith.constant 0 : index
    %c0_12 = arith.constant 0 : index
    %c0_13 = arith.constant 0 : index
    %18 = vector.load %arg6[%c0_11, %c0_12, %c0_13] : memref<2x32x32xf32, #tpu.memory_space<vmem>>, vector<1x32x32xf32>
    %19 = vector.shape_cast %18 : vector<1x32x32xf32> to vector<32x32xf32>
    %c0_14 = arith.constant 0 : index
    %c0_15 = arith.constant 0 : index
    %c0_16 = arith.constant 0 : index
    %20 = vector.load %arg7[%c0_14, %c0_15, %c0_16] : memref<2x1x32xf32, #tpu.memory_space<vmem>>, vector<1x1x32xf32>
    %21 = vector.shape_cast %20 : vector<1x1x32xf32> to vector<1x32xf32>
    %c0_17 = arith.constant 0 : index
    %c0_18 = arith.constant 0 : index
    %c0_19 = arith.constant 0 : index
    %22 = vector.load %arg8[%c0_17, %c0_18, %c0_19] : memref<2x1x32xf32, #tpu.memory_space<vmem>>, vector<1x1x32xf32>
    %23 = vector.shape_cast %22 : vector<1x1x32xf32> to vector<1x32xf32>
    %c0_20 = arith.constant 0 : index
    %c0_21 = arith.constant 0 : index
    %c0_22 = arith.constant 0 : index
    %24 = vector.load %arg9[%c0_20, %c0_21, %c0_22] : memref<2x1x32xf32, #tpu.memory_space<vmem>>, vector<1x1x32xf32>
    %25 = vector.shape_cast %24 : vector<1x1x32xf32> to vector<1x32xf32>
    %c0_23 = arith.constant 0 : index
    %c0_24 = arith.constant 0 : index
    %c0_25 = arith.constant 0 : index
    %26 = vector.load %arg10[%c0_23, %c0_24, %c0_25] : memref<2x1x32xf32, #tpu.memory_space<vmem>>, vector<1x1x32xf32>
    %27 = vector.shape_cast %26 : vector<1x1x32xf32> to vector<1x32xf32>
    %c0_26 = arith.constant 0 : index
    %c0_27 = arith.constant 0 : index
    %c0_28 = arith.constant 0 : index
    %28 = vector.load %arg11[%c0_26, %c0_27, %c0_28] : memref<2x1x32xf32, #tpu.memory_space<vmem>>, vector<1x1x32xf32>
    %29 = vector.shape_cast %28 : vector<1x1x32xf32> to vector<1x32xf32>
    %c0_29 = arith.constant 0 : index
    %c0_30 = arith.constant 0 : index
    %c0_31 = arith.constant 0 : index
    %30 = vector.load %arg12[%c0_29, %c0_30, %c0_31] : memref<2x32x128xf32, #tpu.memory_space<vmem>>, vector<1x32x128xf32>
    %31 = vector.shape_cast %30 : vector<1x32x128xf32> to vector<32x128xf32>
    %c0_32 = arith.constant 0 : index
    %c0_33 = arith.constant 0 : index
    %c0_34 = arith.constant 0 : index
    %32 = vector.load %arg13[%c0_32, %c0_33, %c0_34] : memref<2x1x128xf32, #tpu.memory_space<vmem>>, vector<1x1x128xf32>
    %33 = vector.shape_cast %32 : vector<1x1x128xf32> to vector<1x128xf32>
    %c0_35 = arith.constant 0 : index
    %c0_36 = arith.constant 0 : index
    %c0_37 = arith.constant 0 : index
    %34 = vector.load %arg14[%c0_35, %c0_36, %c0_37] : memref<2x128x32xf32, #tpu.memory_space<vmem>>, vector<1x128x32xf32>
    %35 = vector.shape_cast %34 : vector<1x128x32xf32> to vector<128x32xf32>
    %c0_38 = arith.constant 0 : index
    %c0_39 = arith.constant 0 : index
    %c0_40 = arith.constant 0 : index
    %36 = vector.load %arg15[%c0_38, %c0_39, %c0_40] : memref<2x1x32xf32, #tpu.memory_space<vmem>>, vector<1x1x32xf32>
    %37 = vector.shape_cast %36 : vector<1x1x32xf32> to vector<1x32xf32>
    %cst_41 = arith.constant dense<0.000000e+00> : vector<8x96xf32>
    %38 = tpu.matmul %13, %15, %cst_41 {dimension_numbers = #tpu.dot_dimension_numbers<[1], [0], [0], [1], [0, 0, 1, 1], [], []>} : vector<8x32xf32>, vector<32x96xf32>, vector<8x96xf32> -> vector<8x96xf32>
    %39 = vector.broadcast %17 : vector<1x96xf32> to vector<8x96xf32>
    %40 = arith.addf %38, %39 : vector<8x96xf32>
    %41 = vector.extract_strided_slice %40 {offsets = [0, 0], sizes = [8, 32], strides = [1, 1]} : vector<8x96xf32> to vector<8x32xf32>
    %42 = vector.extract_strided_slice %40 {offsets = [0, 32], sizes = [8, 32], strides = [1, 1]} : vector<8x96xf32> to vector<8x32xf32>
    %43 = vector.extract_strided_slice %40 {offsets = [0, 64], sizes = [8, 32], strides = [1, 1]} : vector<8x96xf32> to vector<8x32xf32>
    %44 = tpu.transpose %42, [1, 0] : vector<8x32xf32> -> vector<32x8xf32>
    %45 = vector.extract_strided_slice %41 {offsets = [0, 0], sizes = [8, 8], strides = [1, 1]} : vector<8x32xf32> to vector<8x8xf32>
    %46 = vector.extract_strided_slice %44 {offsets = [0, 0], sizes = [8, 8], strides = [1, 1]} : vector<32x8xf32> to vector<8x8xf32>
    %cst_42 = arith.constant dense<0.000000e+00> : vector<8x8xf32>
    %47 = tpu.matmul %45, %46, %cst_42 {dimension_numbers = #tpu.dot_dimension_numbers<[1], [0], [0], [1], [0, 0, 1, 1], [], []>} : vector<8x8xf32>, vector<8x8xf32>, vector<8x8xf32> -> vector<8x8xf32>
    %48 = vector.extract_strided_slice %41 {offsets = [0, 8], sizes = [8, 8], strides = [1, 1]} : vector<8x32xf32> to vector<8x8xf32>
    %49 = vector.extract_strided_slice %44 {offsets = [8, 0], sizes = [8, 8], strides = [1, 1]} : vector<32x8xf32> to vector<8x8xf32>
    %cst_43 = arith.constant dense<0.000000e+00> : vector<8x8xf32>
    %50 = tpu.matmul %48, %49, %cst_43 {dimension_numbers = #tpu.dot_dimension_numbers<[1], [0], [0], [1], [0, 0, 1, 1], [], []>} : vector<8x8xf32>, vector<8x8xf32>, vector<8x8xf32> -> vector<8x8xf32>
    %51 = vector.extract_strided_slice %41 {offsets = [0, 16], sizes = [8, 8], strides = [1, 1]} : vector<8x32xf32> to vector<8x8xf32>
    %52 = vector.extract_strided_slice %44 {offsets = [16, 0], sizes = [8, 8], strides = [1, 1]} : vector<32x8xf32> to vector<8x8xf32>
    %cst_44 = arith.constant dense<0.000000e+00> : vector<8x8xf32>
    %53 = tpu.matmul %51, %52, %cst_44 {dimension_numbers = #tpu.dot_dimension_numbers<[1], [0], [0], [1], [0, 0, 1, 1], [], []>} : vector<8x8xf32>, vector<8x8xf32>, vector<8x8xf32> -> vector<8x8xf32>
    %54 = vector.extract_strided_slice %41 {offsets = [0, 24], sizes = [8, 8], strides = [1, 1]} : vector<8x32xf32> to vector<8x8xf32>
    %55 = vector.extract_strided_slice %44 {offsets = [24, 0], sizes = [8, 8], strides = [1, 1]} : vector<32x8xf32> to vector<8x8xf32>
    %cst_45 = arith.constant dense<0.000000e+00> : vector<8x8xf32>
    %56 = tpu.matmul %54, %55, %cst_45 {dimension_numbers = #tpu.dot_dimension_numbers<[1], [0], [0], [1], [0, 0, 1, 1], [], []>} : vector<8x8xf32>, vector<8x8xf32>, vector<8x8xf32> -> vector<8x8xf32>
    %57 = tpu.concatenate %47, %50, %53, %56 in 0 : vector<8x8xf32>, vector<8x8xf32>, vector<8x8xf32>, vector<8x8xf32> -> vector<32x8xf32>
    %cst_46 = arith.constant 0.353553385 : f32
    %58 = vector.broadcast %cst_46 : f32 to vector<32x8xf32>
    %59 = arith.mulf %57, %58 : vector<32x8xf32>
    %cst_47 = arith.constant -1.000000e+09 : f32
    %60 = vector.broadcast %cst_47 : f32 to vector<32x8xf32>
    %61 = arith.select %5, %59, %60 : vector<32x8xi1>, vector<32x8xf32>
    %cst_48 = arith.constant dense<0xFF800000> : vector<32xf32>
    %62 = vector.multi_reduction <maximumf>, %61, %cst_48 [1] : vector<32x8xf32> to vector<32xf32>
    %63 = vector.shape_cast %62 : vector<32xf32> to vector<32x1xf32>
    %64 = vector.broadcast %63 : vector<32x1xf32> to vector<32x8xf32>
    %65 = arith.subf %61, %64 : vector<32x8xf32>
    %66 = math.exp %65 : vector<32x8xf32>
    %cst_49 = arith.constant dense<0.000000e+00> : vector<32xf32>
    %67 = vector.multi_reduction <add>, %66, %cst_49 [1] : vector<32x8xf32> to vector<32xf32>
    %68 = vector.shape_cast %67 : vector<32xf32> to vector<32x1xf32>
    %69 = tpu.reciprocal %68 {approx = true} : vector<32x1xf32> -> vector<32x1xf32>
    %70 = vector.broadcast %69 : vector<32x1xf32> to vector<32x8xf32>
    %71 = arith.mulf %66, %70 : vector<32x8xf32>
    %72 = vector.extract_strided_slice %71 {offsets = [0, 0], sizes = [8, 8], strides = [1, 1]} : vector<32x8xf32> to vector<8x8xf32>
    %73 = vector.extract_strided_slice %43 {offsets = [0, 0], sizes = [8, 8], strides = [1, 1]} : vector<8x32xf32> to vector<8x8xf32>
    %cst_50 = arith.constant dense<0.000000e+00> : vector<8x8xf32>
    %74 = tpu.matmul %72, %73, %cst_50 {dimension_numbers = #tpu.dot_dimension_numbers<[1], [0], [0], [1], [0, 0, 1, 1], [], []>} : vector<8x8xf32>, vector<8x8xf32>, vector<8x8xf32> -> vector<8x8xf32>
    %75 = vector.extract_strided_slice %19 {offsets = [0, 0], sizes = [8, 32], strides = [1, 1]} : vector<32x32xf32> to vector<8x32xf32>
    %cst_51 = arith.constant dense<0.000000e+00> : vector<8x32xf32>
    %76 = tpu.matmul %74, %75, %cst_51 {dimension_numbers = #tpu.dot_dimension_numbers<[1], [0], [0], [1], [0, 0, 1, 1], [], []>} : vector<8x8xf32>, vector<8x32xf32>, vector<8x32xf32> -> vector<8x32xf32>
    %77 = vector.extract_strided_slice %71 {offsets = [8, 0], sizes = [8, 8], strides = [1, 1]} : vector<32x8xf32> to vector<8x8xf32>
    %78 = vector.extract_strided_slice %43 {offsets = [0, 8], sizes = [8, 8], strides = [1, 1]} : vector<8x32xf32> to vector<8x8xf32>
    %cst_52 = arith.constant dense<0.000000e+00> : vector<8x8xf32>
    %79 = tpu.matmul %77, %78, %cst_52 {dimension_numbers = #tpu.dot_dimension_numbers<[1], [0], [0], [1], [0, 0, 1, 1], [], []>} : vector<8x8xf32>, vector<8x8xf32>, vector<8x8xf32> -> vector<8x8xf32>
    %80 = vector.extract_strided_slice %19 {offsets = [8, 0], sizes = [8, 32], strides = [1, 1]} : vector<32x32xf32> to vector<8x32xf32>
    %cst_53 = arith.constant dense<0.000000e+00> : vector<8x32xf32>
    %81 = tpu.matmul %79, %80, %cst_53 {dimension_numbers = #tpu.dot_dimension_numbers<[1], [0], [0], [1], [0, 0, 1, 1], [], []>} : vector<8x8xf32>, vector<8x32xf32>, vector<8x32xf32> -> vector<8x32xf32>
    %82 = arith.addf %76, %81 : vector<8x32xf32>
    %83 = vector.extract_strided_slice %71 {offsets = [16, 0], sizes = [8, 8], strides = [1, 1]} : vector<32x8xf32> to vector<8x8xf32>
    %84 = vector.extract_strided_slice %43 {offsets = [0, 16], sizes = [8, 8], strides = [1, 1]} : vector<8x32xf32> to vector<8x8xf32>
    %cst_54 = arith.constant dense<0.000000e+00> : vector<8x8xf32>
    %85 = tpu.matmul %83, %84, %cst_54 {dimension_numbers = #tpu.dot_dimension_numbers<[1], [0], [0], [1], [0, 0, 1, 1], [], []>} : vector<8x8xf32>, vector<8x8xf32>, vector<8x8xf32> -> vector<8x8xf32>
    %86 = vector.extract_strided_slice %19 {offsets = [16, 0], sizes = [8, 32], strides = [1, 1]} : vector<32x32xf32> to vector<8x32xf32>
    %cst_55 = arith.constant dense<0.000000e+00> : vector<8x32xf32>
    %87 = tpu.matmul %85, %86, %cst_55 {dimension_numbers = #tpu.dot_dimension_numbers<[1], [0], [0], [1], [0, 0, 1, 1], [], []>} : vector<8x8xf32>, vector<8x32xf32>, vector<8x32xf32> -> vector<8x32xf32>
    %88 = arith.addf %82, %87 : vector<8x32xf32>
    %89 = vector.extract_strided_slice %71 {offsets = [24, 0], sizes = [8, 8], strides = [1, 1]} : vector<32x8xf32> to vector<8x8xf32>
    %90 = vector.extract_strided_slice %43 {offsets = [0, 24], sizes = [8, 8], strides = [1, 1]} : vector<8x32xf32> to vector<8x8xf32>
    %cst_56 = arith.constant dense<0.000000e+00> : vector<8x8xf32>
    %91 = tpu.matmul %89, %90, %cst_56 {dimension_numbers = #tpu.dot_dimension_numbers<[1], [0], [0], [1], [0, 0, 1, 1], [], []>} : vector<8x8xf32>, vector<8x8xf32>, vector<8x8xf32> -> vector<8x8xf32>
    %92 = vector.extract_strided_slice %19 {offsets = [24, 0], sizes = [8, 32], strides = [1, 1]} : vector<32x32xf32> to vector<8x32xf32>
    %cst_57 = arith.constant dense<0.000000e+00> : vector<8x32xf32>
    %93 = tpu.matmul %91, %92, %cst_57 {dimension_numbers = #tpu.dot_dimension_numbers<[1], [0], [0], [1], [0, 0, 1, 1], [], []>} : vector<8x8xf32>, vector<8x32xf32>, vector<8x32xf32> -> vector<8x32xf32>
    %94 = arith.addf %88, %93 : vector<8x32xf32>
    %95 = vector.broadcast %21 : vector<1x32xf32> to vector<8x32xf32>
    %96 = arith.addf %94, %95 : vector<8x32xf32>
    %97 = arith.addf %96, %13 : vector<8x32xf32>
    %cst_58 = arith.constant dense<0.000000e+00> : vector<8xf32>
    %98 = vector.multi_reduction <add>, %97, %cst_58 [1] : vector<8x32xf32> to vector<8xf32>
    %99 = vector.shape_cast %98 : vector<8xf32> to vector<8x1xf32>
    %cst_59 = arith.constant 3.200000e+01 : f32
    %100 = vector.broadcast %cst_59 : f32 to vector<8x1xf32>
    %101 = arith.divf %99, %100 : vector<8x1xf32>
    %102 = vector.broadcast %101 : vector<8x1xf32> to vector<8x32xf32>
    %103 = arith.subf %97, %102 : vector<8x32xf32>
    %104 = vector.broadcast %101 : vector<8x1xf32> to vector<8x32xf32>
    %105 = arith.subf %97, %104 : vector<8x32xf32>
    %106 = arith.mulf %103, %105 : vector<8x32xf32>
    %cst_60 = arith.constant dense<0.000000e+00> : vector<8xf32>
    %107 = vector.multi_reduction <add>, %106, %cst_60 [1] : vector<8x32xf32> to vector<8xf32>
    %108 = vector.shape_cast %107 : vector<8xf32> to vector<8x1xf32>
    %cst_61 = arith.constant 3.200000e+01 : f32
    %109 = vector.broadcast %cst_61 : f32 to vector<8x1xf32>
    %110 = arith.divf %108, %109 : vector<8x1xf32>
    %111 = vector.broadcast %101 : vector<8x1xf32> to vector<8x32xf32>
    %112 = arith.subf %97, %111 : vector<8x32xf32>
    %cst_62 = arith.constant 9.99999974E-6 : f32
    %113 = vector.broadcast %cst_62 : f32 to vector<8x1xf32>
    %114 = arith.addf %110, %113 : vector<8x1xf32>
    %115 = math.rsqrt %114 : vector<8x1xf32>
    %116 = vector.broadcast %115 : vector<8x1xf32> to vector<8x32xf32>
    %117 = arith.mulf %112, %116 : vector<8x32xf32>
    %118 = vector.broadcast %23 : vector<1x32xf32> to vector<8x32xf32>
    %119 = arith.mulf %117, %118 : vector<8x32xf32>
    %120 = vector.broadcast %25 : vector<1x32xf32> to vector<8x32xf32>
    %121 = arith.addf %119, %120 : vector<8x32xf32>
    %cst_63 = arith.constant dense<0.000000e+00> : vector<8x128xf32>
    %122 = tpu.matmul %121, %31, %cst_63 {dimension_numbers = #tpu.dot_dimension_numbers<[1], [0], [0], [1], [0, 0, 1, 1], [], []>} : vector<8x32xf32>, vector<32x128xf32>, vector<8x128xf32> -> vector<8x128xf32>
    %123 = vector.broadcast %33 : vector<1x128xf32> to vector<8x128xf32>
    %124 = arith.addf %122, %123 : vector<8x128xf32>
    %cst_64 = arith.constant 0.000000e+00 : f32
    %125 = vector.broadcast %cst_64 : f32 to vector<8x128xf32>
    %126 = arith.maximumf %124, %125 : vector<8x128xf32>
    %cst_65 = arith.constant dense<0.000000e+00> : vector<8x32xf32>
    %127 = tpu.matmul %126, %35, %cst_65 {dimension_numbers = #tpu.dot_dimension_numbers<[1], [0], [0], [1], [0, 0, 1, 1], [], []>} : vector<8x128xf32>, vector<128x32xf32>, vector<8x32xf32> -> vector<8x32xf32>
    %128 = vector.broadcast %37 : vector<1x32xf32> to vector<8x32xf32>
    %129 = arith.addf %127, %128 : vector<8x32xf32>
    %130 = arith.addf %129, %121 : vector<8x32xf32>
    %cst_66 = arith.constant dense<0.000000e+00> : vector<8xf32>
    %131 = vector.multi_reduction <add>, %130, %cst_66 [1] : vector<8x32xf32> to vector<8xf32>
    %132 = vector.shape_cast %131 : vector<8xf32> to vector<8x1xf32>
    %cst_67 = arith.constant 3.200000e+01 : f32
    %133 = vector.broadcast %cst_67 : f32 to vector<8x1xf32>
    %134 = arith.divf %132, %133 : vector<8x1xf32>
    %135 = vector.broadcast %134 : vector<8x1xf32> to vector<8x32xf32>
    %136 = arith.subf %130, %135 : vector<8x32xf32>
    %137 = vector.broadcast %134 : vector<8x1xf32> to vector<8x32xf32>
    %138 = arith.subf %130, %137 : vector<8x32xf32>
    %139 = arith.mulf %136, %138 : vector<8x32xf32>
    %cst_68 = arith.constant dense<0.000000e+00> : vector<8xf32>
    %140 = vector.multi_reduction <add>, %139, %cst_68 [1] : vector<8x32xf32> to vector<8xf32>
    %141 = vector.shape_cast %140 : vector<8xf32> to vector<8x1xf32>
    %cst_69 = arith.constant 3.200000e+01 : f32
    %142 = vector.broadcast %cst_69 : f32 to vector<8x1xf32>
    %143 = arith.divf %141, %142 : vector<8x1xf32>
    %144 = vector.broadcast %134 : vector<8x1xf32> to vector<8x32xf32>
    %145 = arith.subf %130, %144 : vector<8x32xf32>
    %cst_70 = arith.constant 9.99999974E-6 : f32
    %146 = vector.broadcast %cst_70 : f32 to vector<8x1xf32>
    %147 = arith.addf %143, %146 : vector<8x1xf32>
    %148 = math.rsqrt %147 : vector<8x1xf32>
    %149 = vector.broadcast %148 : vector<8x1xf32> to vector<8x32xf32>
    %150 = arith.mulf %145, %149 : vector<8x32xf32>
    %151 = vector.broadcast %27 : vector<1x32xf32> to vector<8x32xf32>
    %152 = arith.mulf %150, %151 : vector<8x32xf32>
    %153 = vector.broadcast %29 : vector<1x32xf32> to vector<8x32xf32>
    %154 = arith.addf %152, %153 : vector<8x32xf32>
    %c1 = arith.constant 1 : index
    %c0_71 = arith.constant 0 : index
    %c0_72 = arith.constant 0 : index
    %155 = vector.load %arg4[%c1, %c0_71, %c0_72] : memref<2x32x96xf32, #tpu.memory_space<vmem>>, vector<1x32x96xf32>
    %156 = vector.shape_cast %155 : vector<1x32x96xf32> to vector<32x96xf32>
    %c1_73 = arith.constant 1 : index
    %c0_74 = arith.constant 0 : index
    %c0_75 = arith.constant 0 : index
    %157 = vector.load %arg5[%c1_73, %c0_74, %c0_75] : memref<2x1x96xf32, #tpu.memory_space<vmem>>, vector<1x1x96xf32>
    %158 = vector.shape_cast %157 : vector<1x1x96xf32> to vector<1x96xf32>
    %c1_76 = arith.constant 1 : index
    %c0_77 = arith.constant 0 : index
    %c0_78 = arith.constant 0 : index
    %159 = vector.load %arg6[%c1_76, %c0_77, %c0_78] : memref<2x32x32xf32, #tpu.memory_space<vmem>>, vector<1x32x32xf32>
    %160 = vector.shape_cast %159 : vector<1x32x32xf32> to vector<32x32xf32>
    %c1_79 = arith.constant 1 : index
    %c0_80 = arith.constant 0 : index
    %c0_81 = arith.constant 0 : index
    %161 = vector.load %arg7[%c1_79, %c0_80, %c0_81] : memref<2x1x32xf32, #tpu.memory_space<vmem>>, vector<1x1x32xf32>
    %162 = vector.shape_cast %161 : vector<1x1x32xf32> to vector<1x32xf32>
    %c1_82 = arith.constant 1 : index
    %c0_83 = arith.constant 0 : index
    %c0_84 = arith.constant 0 : index
    %163 = vector.load %arg8[%c1_82, %c0_83, %c0_84] : memref<2x1x32xf32, #tpu.memory_space<vmem>>, vector<1x1x32xf32>
    %164 = vector.shape_cast %163 : vector<1x1x32xf32> to vector<1x32xf32>
    %c1_85 = arith.constant 1 : index
    %c0_86 = arith.constant 0 : index
    %c0_87 = arith.constant 0 : index
    %165 = vector.load %arg9[%c1_85, %c0_86, %c0_87] : memref<2x1x32xf32, #tpu.memory_space<vmem>>, vector<1x1x32xf32>
    %166 = vector.shape_cast %165 : vector<1x1x32xf32> to vector<1x32xf32>
    %c1_88 = arith.constant 1 : index
    %c0_89 = arith.constant 0 : index
    %c0_90 = arith.constant 0 : index
    %167 = vector.load %arg10[%c1_88, %c0_89, %c0_90] : memref<2x1x32xf32, #tpu.memory_space<vmem>>, vector<1x1x32xf32>
    %168 = vector.shape_cast %167 : vector<1x1x32xf32> to vector<1x32xf32>
    %c1_91 = arith.constant 1 : index
    %c0_92 = arith.constant 0 : index
    %c0_93 = arith.constant 0 : index
    %169 = vector.load %arg11[%c1_91, %c0_92, %c0_93] : memref<2x1x32xf32, #tpu.memory_space<vmem>>, vector<1x1x32xf32>
    %170 = vector.shape_cast %169 : vector<1x1x32xf32> to vector<1x32xf32>
    %c1_94 = arith.constant 1 : index
    %c0_95 = arith.constant 0 : index
    %c0_96 = arith.constant 0 : index
    %171 = vector.load %arg12[%c1_94, %c0_95, %c0_96] : memref<2x32x128xf32, #tpu.memory_space<vmem>>, vector<1x32x128xf32>
    %172 = vector.shape_cast %171 : vector<1x32x128xf32> to vector<32x128xf32>
    %c1_97 = arith.constant 1 : index
    %c0_98 = arith.constant 0 : index
    %c0_99 = arith.constant 0 : index
    %173 = vector.load %arg13[%c1_97, %c0_98, %c0_99] : memref<2x1x128xf32, #tpu.memory_space<vmem>>, vector<1x1x128xf32>
    %174 = vector.shape_cast %173 : vector<1x1x128xf32> to vector<1x128xf32>
    %c1_100 = arith.constant 1 : index
    %c0_101 = arith.constant 0 : index
    %c0_102 = arith.constant 0 : index
    %175 = vector.load %arg14[%c1_100, %c0_101, %c0_102] : memref<2x128x32xf32, #tpu.memory_space<vmem>>, vector<1x128x32xf32>
    %176 = vector.shape_cast %175 : vector<1x128x32xf32> to vector<128x32xf32>
    %c1_103 = arith.constant 1 : index
    %c0_104 = arith.constant 0 : index
    %c0_105 = arith.constant 0 : index
    %177 = vector.load %arg15[%c1_103, %c0_104, %c0_105] : memref<2x1x32xf32, #tpu.memory_space<vmem>>, vector<1x1x32xf32>
    %178 = vector.shape_cast %177 : vector<1x1x32xf32> to vector<1x32xf32>
    %cst_106 = arith.constant dense<0.000000e+00> : vector<8x96xf32>
    %179 = tpu.matmul %154, %156, %cst_106 {dimension_numbers = #tpu.dot_dimension_numbers<[1], [0], [0], [1], [0, 0, 1, 1], [], []>} : vector<8x32xf32>, vector<32x96xf32>, vector<8x96xf32> -> vector<8x96xf32>
    %180 = vector.broadcast %158 : vector<1x96xf32> to vector<8x96xf32>
    %181 = arith.addf %179, %180 : vector<8x96xf32>
    %182 = vector.extract_strided_slice %181 {offsets = [0, 0], sizes = [8, 32], strides = [1, 1]} : vector<8x96xf32> to vector<8x32xf32>
    %183 = vector.extract_strided_slice %181 {offsets = [0, 32], sizes = [8, 32], strides = [1, 1]} : vector<8x96xf32> to vector<8x32xf32>
    %184 = vector.extract_strided_slice %181 {offsets = [0, 64], sizes = [8, 32], strides = [1, 1]} : vector<8x96xf32> to vector<8x32xf32>
    %185 = tpu.transpose %183, [1, 0] : vector<8x32xf32> -> vector<32x8xf32>
    %186 = vector.extract_strided_slice %182 {offsets = [0, 0], sizes = [8, 8], strides = [1, 1]} : vector<8x32xf32> to vector<8x8xf32>
    %187 = vector.extract_strided_slice %185 {offsets = [0, 0], sizes = [8, 8], strides = [1, 1]} : vector<32x8xf32> to vector<8x8xf32>
    %cst_107 = arith.constant dense<0.000000e+00> : vector<8x8xf32>
    %188 = tpu.matmul %186, %187, %cst_107 {dimension_numbers = #tpu.dot_dimension_numbers<[1], [0], [0], [1], [0, 0, 1, 1], [], []>} : vector<8x8xf32>, vector<8x8xf32>, vector<8x8xf32> -> vector<8x8xf32>
    %189 = vector.extract_strided_slice %182 {offsets = [0, 8], sizes = [8, 8], strides = [1, 1]} : vector<8x32xf32> to vector<8x8xf32>
    %190 = vector.extract_strided_slice %185 {offsets = [8, 0], sizes = [8, 8], strides = [1, 1]} : vector<32x8xf32> to vector<8x8xf32>
    %cst_108 = arith.constant dense<0.000000e+00> : vector<8x8xf32>
    %191 = tpu.matmul %189, %190, %cst_108 {dimension_numbers = #tpu.dot_dimension_numbers<[1], [0], [0], [1], [0, 0, 1, 1], [], []>} : vector<8x8xf32>, vector<8x8xf32>, vector<8x8xf32> -> vector<8x8xf32>
    %192 = vector.extract_strided_slice %182 {offsets = [0, 16], sizes = [8, 8], strides = [1, 1]} : vector<8x32xf32> to vector<8x8xf32>
    %193 = vector.extract_strided_slice %185 {offsets = [16, 0], sizes = [8, 8], strides = [1, 1]} : vector<32x8xf32> to vector<8x8xf32>
    %cst_109 = arith.constant dense<0.000000e+00> : vector<8x8xf32>
    %194 = tpu.matmul %192, %193, %cst_109 {dimension_numbers = #tpu.dot_dimension_numbers<[1], [0], [0], [1], [0, 0, 1, 1], [], []>} : vector<8x8xf32>, vector<8x8xf32>, vector<8x8xf32> -> vector<8x8xf32>
    %195 = vector.extract_strided_slice %182 {offsets = [0, 24], sizes = [8, 8], strides = [1, 1]} : vector<8x32xf32> to vector<8x8xf32>
    %196 = vector.extract_strided_slice %185 {offsets = [24, 0], sizes = [8, 8], strides = [1, 1]} : vector<32x8xf32> to vector<8x8xf32>
    %cst_110 = arith.constant dense<0.000000e+00> : vector<8x8xf32>
    %197 = tpu.matmul %195, %196, %cst_110 {dimension_numbers = #tpu.dot_dimension_numbers<[1], [0], [0], [1], [0, 0, 1, 1], [], []>} : vector<8x8xf32>, vector<8x8xf32>, vector<8x8xf32> -> vector<8x8xf32>
    %198 = tpu.concatenate %188, %191, %194, %197 in 0 : vector<8x8xf32>, vector<8x8xf32>, vector<8x8xf32>, vector<8x8xf32> -> vector<32x8xf32>
    %cst_111 = arith.constant 0.353553385 : f32
    %199 = vector.broadcast %cst_111 : f32 to vector<32x8xf32>
    %200 = arith.mulf %198, %199 : vector<32x8xf32>
    %cst_112 = arith.constant -1.000000e+09 : f32
    %201 = vector.broadcast %cst_112 : f32 to vector<32x8xf32>
    %202 = arith.select %5, %200, %201 : vector<32x8xi1>, vector<32x8xf32>
    %cst_113 = arith.constant dense<0xFF800000> : vector<32xf32>
    %203 = vector.multi_reduction <maximumf>, %202, %cst_113 [1] : vector<32x8xf32> to vector<32xf32>
    %204 = vector.shape_cast %203 : vector<32xf32> to vector<32x1xf32>
    %205 = vector.broadcast %204 : vector<32x1xf32> to vector<32x8xf32>
    %206 = arith.subf %202, %205 : vector<32x8xf32>
    %207 = math.exp %206 : vector<32x8xf32>
    %cst_114 = arith.constant dense<0.000000e+00> : vector<32xf32>
    %208 = vector.multi_reduction <add>, %207, %cst_114 [1] : vector<32x8xf32> to vector<32xf32>
    %209 = vector.shape_cast %208 : vector<32xf32> to vector<32x1xf32>
    %210 = tpu.reciprocal %209 {approx = true} : vector<32x1xf32> -> vector<32x1xf32>
    %211 = vector.broadcast %210 : vector<32x1xf32> to vector<32x8xf32>
    %212 = arith.mulf %207, %211 : vector<32x8xf32>
    %213 = vector.extract_strided_slice %212 {offsets = [0, 0], sizes = [8, 8], strides = [1, 1]} : vector<32x8xf32> to vector<8x8xf32>
    %214 = vector.extract_strided_slice %184 {offsets = [0, 0], sizes = [8, 8], strides = [1, 1]} : vector<8x32xf32> to vector<8x8xf32>
    %cst_115 = arith.constant dense<0.000000e+00> : vector<8x8xf32>
    %215 = tpu.matmul %213, %214, %cst_115 {dimension_numbers = #tpu.dot_dimension_numbers<[1], [0], [0], [1], [0, 0, 1, 1], [], []>} : vector<8x8xf32>, vector<8x8xf32>, vector<8x8xf32> -> vector<8x8xf32>
    %216 = vector.extract_strided_slice %160 {offsets = [0, 0], sizes = [8, 32], strides = [1, 1]} : vector<32x32xf32> to vector<8x32xf32>
    %cst_116 = arith.constant dense<0.000000e+00> : vector<8x32xf32>
    %217 = tpu.matmul %215, %216, %cst_116 {dimension_numbers = #tpu.dot_dimension_numbers<[1], [0], [0], [1], [0, 0, 1, 1], [], []>} : vector<8x8xf32>, vector<8x32xf32>, vector<8x32xf32> -> vector<8x32xf32>
    %218 = vector.extract_strided_slice %212 {offsets = [8, 0], sizes = [8, 8], strides = [1, 1]} : vector<32x8xf32> to vector<8x8xf32>
    %219 = vector.extract_strided_slice %184 {offsets = [0, 8], sizes = [8, 8], strides = [1, 1]} : vector<8x32xf32> to vector<8x8xf32>
    %cst_117 = arith.constant dense<0.000000e+00> : vector<8x8xf32>
    %220 = tpu.matmul %218, %219, %cst_117 {dimension_numbers = #tpu.dot_dimension_numbers<[1], [0], [0], [1], [0, 0, 1, 1], [], []>} : vector<8x8xf32>, vector<8x8xf32>, vector<8x8xf32> -> vector<8x8xf32>
    %221 = vector.extract_strided_slice %160 {offsets = [8, 0], sizes = [8, 32], strides = [1, 1]} : vector<32x32xf32> to vector<8x32xf32>
    %cst_118 = arith.constant dense<0.000000e+00> : vector<8x32xf32>
    %222 = tpu.matmul %220, %221, %cst_118 {dimension_numbers = #tpu.dot_dimension_numbers<[1], [0], [0], [1], [0, 0, 1, 1], [], []>} : vector<8x8xf32>, vector<8x32xf32>, vector<8x32xf32> -> vector<8x32xf32>
    %223 = arith.addf %217, %222 : vector<8x32xf32>
    %224 = vector.extract_strided_slice %212 {offsets = [16, 0], sizes = [8, 8], strides = [1, 1]} : vector<32x8xf32> to vector<8x8xf32>
    %225 = vector.extract_strided_slice %184 {offsets = [0, 16], sizes = [8, 8], strides = [1, 1]} : vector<8x32xf32> to vector<8x8xf32>
    %cst_119 = arith.constant dense<0.000000e+00> : vector<8x8xf32>
    %226 = tpu.matmul %224, %225, %cst_119 {dimension_numbers = #tpu.dot_dimension_numbers<[1], [0], [0], [1], [0, 0, 1, 1], [], []>} : vector<8x8xf32>, vector<8x8xf32>, vector<8x8xf32> -> vector<8x8xf32>
    %227 = vector.extract_strided_slice %160 {offsets = [16, 0], sizes = [8, 32], strides = [1, 1]} : vector<32x32xf32> to vector<8x32xf32>
    %cst_120 = arith.constant dense<0.000000e+00> : vector<8x32xf32>
    %228 = tpu.matmul %226, %227, %cst_120 {dimension_numbers = #tpu.dot_dimension_numbers<[1], [0], [0], [1], [0, 0, 1, 1], [], []>} : vector<8x8xf32>, vector<8x32xf32>, vector<8x32xf32> -> vector<8x32xf32>
    %229 = arith.addf %223, %228 : vector<8x32xf32>
    %230 = vector.extract_strided_slice %212 {offsets = [24, 0], sizes = [8, 8], strides = [1, 1]} : vector<32x8xf32> to vector<8x8xf32>
    %231 = vector.extract_strided_slice %184 {offsets = [0, 24], sizes = [8, 8], strides = [1, 1]} : vector<8x32xf32> to vector<8x8xf32>
    %cst_121 = arith.constant dense<0.000000e+00> : vector<8x8xf32>
    %232 = tpu.matmul %230, %231, %cst_121 {dimension_numbers = #tpu.dot_dimension_numbers<[1], [0], [0], [1], [0, 0, 1, 1], [], []>} : vector<8x8xf32>, vector<8x8xf32>, vector<8x8xf32> -> vector<8x8xf32>
    %233 = vector.extract_strided_slice %160 {offsets = [24, 0], sizes = [8, 32], strides = [1, 1]} : vector<32x32xf32> to vector<8x32xf32>
    %cst_122 = arith.constant dense<0.000000e+00> : vector<8x32xf32>
    %234 = tpu.matmul %232, %233, %cst_122 {dimension_numbers = #tpu.dot_dimension_numbers<[1], [0], [0], [1], [0, 0, 1, 1], [], []>} : vector<8x8xf32>, vector<8x32xf32>, vector<8x32xf32> -> vector<8x32xf32>
    %235 = arith.addf %229, %234 : vector<8x32xf32>
    %236 = vector.broadcast %162 : vector<1x32xf32> to vector<8x32xf32>
    %237 = arith.addf %235, %236 : vector<8x32xf32>
    %238 = arith.addf %237, %154 : vector<8x32xf32>
    %cst_123 = arith.constant dense<0.000000e+00> : vector<8xf32>
    %239 = vector.multi_reduction <add>, %238, %cst_123 [1] : vector<8x32xf32> to vector<8xf32>
    %240 = vector.shape_cast %239 : vector<8xf32> to vector<8x1xf32>
    %cst_124 = arith.constant 3.200000e+01 : f32
    %241 = vector.broadcast %cst_124 : f32 to vector<8x1xf32>
    %242 = arith.divf %240, %241 : vector<8x1xf32>
    %243 = vector.broadcast %242 : vector<8x1xf32> to vector<8x32xf32>
    %244 = arith.subf %238, %243 : vector<8x32xf32>
    %245 = vector.broadcast %242 : vector<8x1xf32> to vector<8x32xf32>
    %246 = arith.subf %238, %245 : vector<8x32xf32>
    %247 = arith.mulf %244, %246 : vector<8x32xf32>
    %cst_125 = arith.constant dense<0.000000e+00> : vector<8xf32>
    %248 = vector.multi_reduction <add>, %247, %cst_125 [1] : vector<8x32xf32> to vector<8xf32>
    %249 = vector.shape_cast %248 : vector<8xf32> to vector<8x1xf32>
    %cst_126 = arith.constant 3.200000e+01 : f32
    %250 = vector.broadcast %cst_126 : f32 to vector<8x1xf32>
    %251 = arith.divf %249, %250 : vector<8x1xf32>
    %252 = vector.broadcast %242 : vector<8x1xf32> to vector<8x32xf32>
    %253 = arith.subf %238, %252 : vector<8x32xf32>
    %cst_127 = arith.constant 9.99999974E-6 : f32
    %254 = vector.broadcast %cst_127 : f32 to vector<8x1xf32>
    %255 = arith.addf %251, %254 : vector<8x1xf32>
    %256 = math.rsqrt %255 : vector<8x1xf32>
    %257 = vector.broadcast %256 : vector<8x1xf32> to vector<8x32xf32>
    %258 = arith.mulf %253, %257 : vector<8x32xf32>
    %259 = vector.broadcast %164 : vector<1x32xf32> to vector<8x32xf32>
    %260 = arith.mulf %258, %259 : vector<8x32xf32>
    %261 = vector.broadcast %166 : vector<1x32xf32> to vector<8x32xf32>
    %262 = arith.addf %260, %261 : vector<8x32xf32>
    %cst_128 = arith.constant dense<0.000000e+00> : vector<8x128xf32>
    %263 = tpu.matmul %262, %172, %cst_128 {dimension_numbers = #tpu.dot_dimension_numbers<[1], [0], [0], [1], [0, 0, 1, 1], [], []>} : vector<8x32xf32>, vector<32x128xf32>, vector<8x128xf32> -> vector<8x128xf32>
    %264 = vector.broadcast %174 : vector<1x128xf32> to vector<8x128xf32>
    %265 = arith.addf %263, %264 : vector<8x128xf32>
    %cst_129 = arith.constant 0.000000e+00 : f32
    %266 = vector.broadcast %cst_129 : f32 to vector<8x128xf32>
    %267 = arith.maximumf %265, %266 : vector<8x128xf32>
    %cst_130 = arith.constant dense<0.000000e+00> : vector<8x32xf32>
    %268 = tpu.matmul %267, %176, %cst_130 {dimension_numbers = #tpu.dot_dimension_numbers<[1], [0], [0], [1], [0, 0, 1, 1], [], []>} : vector<8x128xf32>, vector<128x32xf32>, vector<8x32xf32> -> vector<8x32xf32>
    %269 = vector.broadcast %178 : vector<1x32xf32> to vector<8x32xf32>
    %270 = arith.addf %268, %269 : vector<8x32xf32>
    %271 = arith.addf %270, %262 : vector<8x32xf32>
    %cst_131 = arith.constant dense<0.000000e+00> : vector<8xf32>
    %272 = vector.multi_reduction <add>, %271, %cst_131 [1] : vector<8x32xf32> to vector<8xf32>
    %273 = vector.shape_cast %272 : vector<8xf32> to vector<8x1xf32>
    %cst_132 = arith.constant 3.200000e+01 : f32
    %274 = vector.broadcast %cst_132 : f32 to vector<8x1xf32>
    %275 = arith.divf %273, %274 : vector<8x1xf32>
    %276 = vector.broadcast %275 : vector<8x1xf32> to vector<8x32xf32>
    %277 = arith.subf %271, %276 : vector<8x32xf32>
    %278 = vector.broadcast %275 : vector<8x1xf32> to vector<8x32xf32>
    %279 = arith.subf %271, %278 : vector<8x32xf32>
    %280 = arith.mulf %277, %279 : vector<8x32xf32>
    %cst_133 = arith.constant dense<0.000000e+00> : vector<8xf32>
    %281 = vector.multi_reduction <add>, %280, %cst_133 [1] : vector<8x32xf32> to vector<8xf32>
    %282 = vector.shape_cast %281 : vector<8xf32> to vector<8x1xf32>
    %cst_134 = arith.constant 3.200000e+01 : f32
    %283 = vector.broadcast %cst_134 : f32 to vector<8x1xf32>
    %284 = arith.divf %282, %283 : vector<8x1xf32>
    %285 = vector.broadcast %275 : vector<8x1xf32> to vector<8x32xf32>
    %286 = arith.subf %271, %285 : vector<8x32xf32>
    %cst_135 = arith.constant 9.99999974E-6 : f32
    %287 = vector.broadcast %cst_135 : f32 to vector<8x1xf32>
    %288 = arith.addf %284, %287 : vector<8x1xf32>
    %289 = math.rsqrt %288 : vector<8x1xf32>
    %290 = vector.broadcast %289 : vector<8x1xf32> to vector<8x32xf32>
    %291 = arith.mulf %286, %290 : vector<8x32xf32>
    %292 = vector.broadcast %168 : vector<1x32xf32> to vector<8x32xf32>
    %293 = arith.mulf %291, %292 : vector<8x32xf32>
    %294 = vector.broadcast %170 : vector<1x32xf32> to vector<8x32xf32>
    %295 = arith.addf %293, %294 : vector<8x32xf32>
    %c0_136 = arith.constant 0 : index
    %c0_137 = arith.constant 0 : index
    %c0_138 = arith.constant 0 : index
    %296 = vector.load %arg2[%c0_136, %c0_137, %c0_138] : memref<1x8x32xf32, #tpu.memory_space<vmem>>, vector<1x8x32xf32>
    %297 = vector.shape_cast %296 : vector<1x8x32xf32> to vector<8x32xf32>
    %c0_139 = arith.constant 0 : index
    %c0_140 = arith.constant 0 : index
    %c0_141 = arith.constant 0 : index
    %298 = vector.load %arg16[%c0_139, %c0_140, %c0_141] : memref<2x32x96xf32, #tpu.memory_space<vmem>>, vector<1x32x96xf32>
    %299 = vector.shape_cast %298 : vector<1x32x96xf32> to vector<32x96xf32>
    %c0_142 = arith.constant 0 : index
    %c0_143 = arith.constant 0 : index
    %c0_144 = arith.constant 0 : index
    %300 = vector.load %arg17[%c0_142, %c0_143, %c0_144] : memref<2x1x96xf32, #tpu.memory_space<vmem>>, vector<1x1x96xf32>
    %301 = vector.shape_cast %300 : vector<1x1x96xf32> to vector<1x96xf32>
    %c0_145 = arith.constant 0 : index
    %c0_146 = arith.constant 0 : index
    %c0_147 = arith.constant 0 : index
    %302 = vector.load %arg18[%c0_145, %c0_146, %c0_147] : memref<2x32x32xf32, #tpu.memory_space<vmem>>, vector<1x32x32xf32>
    %303 = vector.shape_cast %302 : vector<1x32x32xf32> to vector<32x32xf32>
    %c0_148 = arith.constant 0 : index
    %c0_149 = arith.constant 0 : index
    %c0_150 = arith.constant 0 : index
    %304 = vector.load %arg19[%c0_148, %c0_149, %c0_150] : memref<2x1x32xf32, #tpu.memory_space<vmem>>, vector<1x1x32xf32>
    %305 = vector.shape_cast %304 : vector<1x1x32xf32> to vector<1x32xf32>
    %cst_151 = arith.constant dense<0.000000e+00> : vector<8x96xf32>
    %306 = tpu.matmul %297, %299, %cst_151 {dimension_numbers = #tpu.dot_dimension_numbers<[1], [0], [0], [1], [0, 0, 1, 1], [], []>} : vector<8x32xf32>, vector<32x96xf32>, vector<8x96xf32> -> vector<8x96xf32>
    %307 = vector.broadcast %301 : vector<1x96xf32> to vector<8x96xf32>
    %308 = arith.addf %306, %307 : vector<8x96xf32>
    %309 = vector.extract_strided_slice %308 {offsets = [0, 0], sizes = [8, 32], strides = [1, 1]} : vector<8x96xf32> to vector<8x32xf32>
    %310 = vector.extract_strided_slice %308 {offsets = [0, 32], sizes = [8, 32], strides = [1, 1]} : vector<8x96xf32> to vector<8x32xf32>
    %311 = vector.extract_strided_slice %308 {offsets = [0, 64], sizes = [8, 32], strides = [1, 1]} : vector<8x96xf32> to vector<8x32xf32>
    %312 = tpu.transpose %310, [1, 0] : vector<8x32xf32> -> vector<32x8xf32>
    %313 = vector.extract_strided_slice %309 {offsets = [0, 0], sizes = [8, 8], strides = [1, 1]} : vector<8x32xf32> to vector<8x8xf32>
    %314 = vector.extract_strided_slice %312 {offsets = [0, 0], sizes = [8, 8], strides = [1, 1]} : vector<32x8xf32> to vector<8x8xf32>
    %cst_152 = arith.constant dense<0.000000e+00> : vector<8x8xf32>
    %315 = tpu.matmul %313, %314, %cst_152 {dimension_numbers = #tpu.dot_dimension_numbers<[1], [0], [0], [1], [0, 0, 1, 1], [], []>} : vector<8x8xf32>, vector<8x8xf32>, vector<8x8xf32> -> vector<8x8xf32>
    %316 = vector.extract_strided_slice %309 {offsets = [0, 8], sizes = [8, 8], strides = [1, 1]} : vector<8x32xf32> to vector<8x8xf32>
    %317 = vector.extract_strided_slice %312 {offsets = [8, 0], sizes = [8, 8], strides = [1, 1]} : vector<32x8xf32> to vector<8x8xf32>
    %cst_153 = arith.constant dense<0.000000e+00> : vector<8x8xf32>
    %318 = tpu.matmul %316, %317, %cst_153 {dimension_numbers = #tpu.dot_dimension_numbers<[1], [0], [0], [1], [0, 0, 1, 1], [], []>} : vector<8x8xf32>, vector<8x8xf32>, vector<8x8xf32> -> vector<8x8xf32>
    %319 = vector.extract_strided_slice %309 {offsets = [0, 16], sizes = [8, 8], strides = [1, 1]} : vector<8x32xf32> to vector<8x8xf32>
    %320 = vector.extract_strided_slice %312 {offsets = [16, 0], sizes = [8, 8], strides = [1, 1]} : vector<32x8xf32> to vector<8x8xf32>
    %cst_154 = arith.constant dense<0.000000e+00> : vector<8x8xf32>
    %321 = tpu.matmul %319, %320, %cst_154 {dimension_numbers = #tpu.dot_dimension_numbers<[1], [0], [0], [1], [0, 0, 1, 1], [], []>} : vector<8x8xf32>, vector<8x8xf32>, vector<8x8xf32> -> vector<8x8xf32>
    %322 = vector.extract_strided_slice %309 {offsets = [0, 24], sizes = [8, 8], strides = [1, 1]} : vector<8x32xf32> to vector<8x8xf32>
    %323 = vector.extract_strided_slice %312 {offsets = [24, 0], sizes = [8, 8], strides = [1, 1]} : vector<32x8xf32> to vector<8x8xf32>
    %cst_155 = arith.constant dense<0.000000e+00> : vector<8x8xf32>
    %324 = tpu.matmul %322, %323, %cst_155 {dimension_numbers = #tpu.dot_dimension_numbers<[1], [0], [0], [1], [0, 0, 1, 1], [], []>} : vector<8x8xf32>, vector<8x8xf32>, vector<8x8xf32> -> vector<8x8xf32>
    %325 = tpu.concatenate %315, %318, %321, %324 in 0 : vector<8x8xf32>, vector<8x8xf32>, vector<8x8xf32>, vector<8x8xf32> -> vector<32x8xf32>
    %cst_156 = arith.constant 0.353553385 : f32
    %326 = vector.broadcast %cst_156 : f32 to vector<32x8xf32>
    %327 = arith.mulf %325, %326 : vector<32x8xf32>
    %cst_157 = arith.constant -1.000000e+09 : f32
    %328 = vector.broadcast %cst_157 : f32 to vector<32x8xf32>
    %329 = arith.select %11, %327, %328 : vector<32x8xi1>, vector<32x8xf32>
    %cst_158 = arith.constant dense<0xFF800000> : vector<32xf32>
    %330 = vector.multi_reduction <maximumf>, %329, %cst_158 [1] : vector<32x8xf32> to vector<32xf32>
    %331 = vector.shape_cast %330 : vector<32xf32> to vector<32x1xf32>
    %332 = vector.broadcast %331 : vector<32x1xf32> to vector<32x8xf32>
    %333 = arith.subf %329, %332 : vector<32x8xf32>
    %334 = math.exp %333 : vector<32x8xf32>
    %cst_159 = arith.constant dense<0.000000e+00> : vector<32xf32>
    %335 = vector.multi_reduction <add>, %334, %cst_159 [1] : vector<32x8xf32> to vector<32xf32>
    %336 = vector.shape_cast %335 : vector<32xf32> to vector<32x1xf32>
    %337 = tpu.reciprocal %336 {approx = true} : vector<32x1xf32> -> vector<32x1xf32>
    %338 = vector.broadcast %337 : vector<32x1xf32> to vector<32x8xf32>
    %339 = arith.mulf %334, %338 : vector<32x8xf32>
    %340 = vector.extract_strided_slice %339 {offsets = [0, 0], sizes = [8, 8], strides = [1, 1]} : vector<32x8xf32> to vector<8x8xf32>
    %341 = vector.extract_strided_slice %311 {offsets = [0, 0], sizes = [8, 8], strides = [1, 1]} : vector<8x32xf32> to vector<8x8xf32>
    %cst_160 = arith.constant dense<0.000000e+00> : vector<8x8xf32>
    %342 = tpu.matmul %340, %341, %cst_160 {dimension_numbers = #tpu.dot_dimension_numbers<[1], [0], [0], [1], [0, 0, 1, 1], [], []>} : vector<8x8xf32>, vector<8x8xf32>, vector<8x8xf32> -> vector<8x8xf32>
    %343 = vector.extract_strided_slice %303 {offsets = [0, 0], sizes = [8, 32], strides = [1, 1]} : vector<32x32xf32> to vector<8x32xf32>
    %cst_161 = arith.constant dense<0.000000e+00> : vector<8x32xf32>
    %344 = tpu.matmul %342, %343, %cst_161 {dimension_numbers = #tpu.dot_dimension_numbers<[1], [0], [0], [1], [0, 0, 1, 1], [], []>} : vector<8x8xf32>, vector<8x32xf32>, vector<8x32xf32> -> vector<8x32xf32>
    %345 = vector.extract_strided_slice %339 {offsets = [8, 0], sizes = [8, 8], strides = [1, 1]} : vector<32x8xf32> to vector<8x8xf32>
    %346 = vector.extract_strided_slice %311 {offsets = [0, 8], sizes = [8, 8], strides = [1, 1]} : vector<8x32xf32> to vector<8x8xf32>
    %cst_162 = arith.constant dense<0.000000e+00> : vector<8x8xf32>
    %347 = tpu.matmul %345, %346, %cst_162 {dimension_numbers = #tpu.dot_dimension_numbers<[1], [0], [0], [1], [0, 0, 1, 1], [], []>} : vector<8x8xf32>, vector<8x8xf32>, vector<8x8xf32> -> vector<8x8xf32>
    %348 = vector.extract_strided_slice %303 {offsets = [8, 0], sizes = [8, 32], strides = [1, 1]} : vector<32x32xf32> to vector<8x32xf32>
    %cst_163 = arith.constant dense<0.000000e+00> : vector<8x32xf32>
    %349 = tpu.matmul %347, %348, %cst_163 {dimension_numbers = #tpu.dot_dimension_numbers<[1], [0], [0], [1], [0, 0, 1, 1], [], []>} : vector<8x8xf32>, vector<8x32xf32>, vector<8x32xf32> -> vector<8x32xf32>
    %350 = arith.addf %344, %349 : vector<8x32xf32>
    %351 = vector.extract_strided_slice %339 {offsets = [16, 0], sizes = [8, 8], strides = [1, 1]} : vector<32x8xf32> to vector<8x8xf32>
    %352 = vector.extract_strided_slice %311 {offsets = [0, 16], sizes = [8, 8], strides = [1, 1]} : vector<8x32xf32> to vector<8x8xf32>
    %cst_164 = arith.constant dense<0.000000e+00> : vector<8x8xf32>
    %353 = tpu.matmul %351, %352, %cst_164 {dimension_numbers = #tpu.dot_dimension_numbers<[1], [0], [0], [1], [0, 0, 1, 1], [], []>} : vector<8x8xf32>, vector<8x8xf32>, vector<8x8xf32> -> vector<8x8xf32>
    %354 = vector.extract_strided_slice %303 {offsets = [16, 0], sizes = [8, 32], strides = [1, 1]} : vector<32x32xf32> to vector<8x32xf32>
    %cst_165 = arith.constant dense<0.000000e+00> : vector<8x32xf32>
    %355 = tpu.matmul %353, %354, %cst_165 {dimension_numbers = #tpu.dot_dimension_numbers<[1], [0], [0], [1], [0, 0, 1, 1], [], []>} : vector<8x8xf32>, vector<8x32xf32>, vector<8x32xf32> -> vector<8x32xf32>
    %356 = arith.addf %350, %355 : vector<8x32xf32>
    %357 = vector.extract_strided_slice %339 {offsets = [24, 0], sizes = [8, 8], strides = [1, 1]} : vector<32x8xf32> to vector<8x8xf32>
    %358 = vector.extract_strided_slice %311 {offsets = [0, 24], sizes = [8, 8], strides = [1, 1]} : vector<8x32xf32> to vector<8x8xf32>
    %cst_166 = arith.constant dense<0.000000e+00> : vector<8x8xf32>
    %359 = tpu.matmul %357, %358, %cst_166 {dimension_numbers = #tpu.dot_dimension_numbers<[1], [0], [0], [1], [0, 0, 1, 1], [], []>} : vector<8x8xf32>, vector<8x8xf32>, vector<8x8xf32> -> vector<8x8xf32>
    %360 = vector.extract_strided_slice %303 {offsets = [24, 0], sizes = [8, 32], strides = [1, 1]} : vector<32x32xf32> to vector<8x32xf32>
    %cst_167 = arith.constant dense<0.000000e+00> : vector<8x32xf32>
    %361 = tpu.matmul %359, %360, %cst_167 {dimension_numbers = #tpu.dot_dimension_numbers<[1], [0], [0], [1], [0, 0, 1, 1], [], []>} : vector<8x8xf32>, vector<8x32xf32>, vector<8x32xf32> -> vector<8x32xf32>
    %362 = arith.addf %356, %361 : vector<8x32xf32>
    %363 = vector.broadcast %305 : vector<1x32xf32> to vector<8x32xf32>
    %364 = arith.addf %362, %363 : vector<8x32xf32>
    %365 = arith.addf %364, %297 : vector<8x32xf32>
    %c0_168 = arith.constant 0 : index
    %c0_169 = arith.constant 0 : index
    %c0_170 = arith.constant 0 : index
    %366 = vector.load %arg20[%c0_168, %c0_169, %c0_170] : memref<2x1x32xf32, #tpu.memory_space<vmem>>, vector<1x1x32xf32>
    %367 = vector.shape_cast %366 : vector<1x1x32xf32> to vector<1x32xf32>
    %c0_171 = arith.constant 0 : index
    %c0_172 = arith.constant 0 : index
    %c0_173 = arith.constant 0 : index
    %368 = vector.load %arg21[%c0_171, %c0_172, %c0_173] : memref<2x1x32xf32, #tpu.memory_space<vmem>>, vector<1x1x32xf32>
    %369 = vector.shape_cast %368 : vector<1x1x32xf32> to vector<1x32xf32>
    %cst_174 = arith.constant dense<0.000000e+00> : vector<8xf32>
    %370 = vector.multi_reduction <add>, %365, %cst_174 [1] : vector<8x32xf32> to vector<8xf32>
    %371 = vector.shape_cast %370 : vector<8xf32> to vector<8x1xf32>
    %cst_175 = arith.constant 3.200000e+01 : f32
    %372 = vector.broadcast %cst_175 : f32 to vector<8x1xf32>
    %373 = arith.divf %371, %372 : vector<8x1xf32>
    %374 = vector.broadcast %373 : vector<8x1xf32> to vector<8x32xf32>
    %375 = arith.subf %365, %374 : vector<8x32xf32>
    %376 = vector.broadcast %373 : vector<8x1xf32> to vector<8x32xf32>
    %377 = arith.subf %365, %376 : vector<8x32xf32>
    %378 = arith.mulf %375, %377 : vector<8x32xf32>
    %cst_176 = arith.constant dense<0.000000e+00> : vector<8xf32>
    %379 = vector.multi_reduction <add>, %378, %cst_176 [1] : vector<8x32xf32> to vector<8xf32>
    %380 = vector.shape_cast %379 : vector<8xf32> to vector<8x1xf32>
    %cst_177 = arith.constant 3.200000e+01 : f32
    %381 = vector.broadcast %cst_177 : f32 to vector<8x1xf32>
    %382 = arith.divf %380, %381 : vector<8x1xf32>
    %383 = vector.broadcast %373 : vector<8x1xf32> to vector<8x32xf32>
    %384 = arith.subf %365, %383 : vector<8x32xf32>
    %cst_178 = arith.constant 9.99999974E-6 : f32
    %385 = vector.broadcast %cst_178 : f32 to vector<8x1xf32>
    %386 = arith.addf %382, %385 : vector<8x1xf32>
    %387 = math.rsqrt %386 : vector<8x1xf32>
    %388 = vector.broadcast %387 : vector<8x1xf32> to vector<8x32xf32>
    %389 = arith.mulf %384, %388 : vector<8x32xf32>
    %390 = vector.broadcast %367 : vector<1x32xf32> to vector<8x32xf32>
    %391 = arith.mulf %389, %390 : vector<8x32xf32>
    %392 = vector.broadcast %369 : vector<1x32xf32> to vector<8x32xf32>
    %393 = arith.addf %391, %392 : vector<8x32xf32>
    %c0_179 = arith.constant 0 : index
    %c0_180 = arith.constant 0 : index
    %c0_181 = arith.constant 0 : index
    %394 = vector.load %arg22[%c0_179, %c0_180, %c0_181] : memref<2x32x96xf32, #tpu.memory_space<vmem>>, vector<1x32x96xf32>
    %395 = vector.shape_cast %394 : vector<1x32x96xf32> to vector<32x96xf32>
    %c0_182 = arith.constant 0 : index
    %c0_183 = arith.constant 0 : index
    %c0_184 = arith.constant 0 : index
    %396 = vector.load %arg23[%c0_182, %c0_183, %c0_184] : memref<2x1x96xf32, #tpu.memory_space<vmem>>, vector<1x1x96xf32>
    %397 = vector.shape_cast %396 : vector<1x1x96xf32> to vector<1x96xf32>
    %c0_185 = arith.constant 0 : index
    %c0_186 = arith.constant 0 : index
    %c0_187 = arith.constant 0 : index
    %398 = vector.load %arg24[%c0_185, %c0_186, %c0_187] : memref<2x32x32xf32, #tpu.memory_space<vmem>>, vector<1x32x32xf32>
    %399 = vector.shape_cast %398 : vector<1x32x32xf32> to vector<32x32xf32>
    %c0_188 = arith.constant 0 : index
    %c0_189 = arith.constant 0 : index
    %c0_190 = arith.constant 0 : index
    %400 = vector.load %arg25[%c0_188, %c0_189, %c0_190] : memref<2x1x32xf32, #tpu.memory_space<vmem>>, vector<1x1x32xf32>
    %401 = vector.shape_cast %400 : vector<1x1x32xf32> to vector<1x32xf32>
    %c0_191 = arith.constant 0 : index
    %c0_192 = arith.constant 0 : index
    %c0_193 = arith.constant 0 : index
    %402 = vector.load %arg26[%c0_191, %c0_192, %c0_193] : memref<2x1x32xf32, #tpu.memory_space<vmem>>, vector<1x1x32xf32>
    %403 = vector.shape_cast %402 : vector<1x1x32xf32> to vector<1x32xf32>
    %c0_194 = arith.constant 0 : index
    %c0_195 = arith.constant 0 : index
    %c0_196 = arith.constant 0 : index
    %404 = vector.load %arg27[%c0_194, %c0_195, %c0_196] : memref<2x1x32xf32, #tpu.memory_space<vmem>>, vector<1x1x32xf32>
    %405 = vector.shape_cast %404 : vector<1x1x32xf32> to vector<1x32xf32>
    %c0_197 = arith.constant 0 : index
    %c0_198 = arith.constant 0 : index
    %c0_199 = arith.constant 0 : index
    %406 = vector.load %arg28[%c0_197, %c0_198, %c0_199] : memref<2x1x32xf32, #tpu.memory_space<vmem>>, vector<1x1x32xf32>
    %407 = vector.shape_cast %406 : vector<1x1x32xf32> to vector<1x32xf32>
    %c0_200 = arith.constant 0 : index
    %c0_201 = arith.constant 0 : index
    %c0_202 = arith.constant 0 : index
    %408 = vector.load %arg29[%c0_200, %c0_201, %c0_202] : memref<2x1x32xf32, #tpu.memory_space<vmem>>, vector<1x1x32xf32>
    %409 = vector.shape_cast %408 : vector<1x1x32xf32> to vector<1x32xf32>
    %c0_203 = arith.constant 0 : index
    %c0_204 = arith.constant 0 : index
    %c0_205 = arith.constant 0 : index
    %410 = vector.load %arg30[%c0_203, %c0_204, %c0_205] : memref<2x32x128xf32, #tpu.memory_space<vmem>>, vector<1x32x128xf32>
    %411 = vector.shape_cast %410 : vector<1x32x128xf32> to vector<32x128xf32>
    %c0_206 = arith.constant 0 : index
    %c0_207 = arith.constant 0 : index
    %c0_208 = arith.constant 0 : index
    %412 = vector.load %arg31[%c0_206, %c0_207, %c0_208] : memref<2x1x128xf32, #tpu.memory_space<vmem>>, vector<1x1x128xf32>
    %413 = vector.shape_cast %412 : vector<1x1x128xf32> to vector<1x128xf32>
    %c0_209 = arith.constant 0 : index
    %c0_210 = arith.constant 0 : index
    %c0_211 = arith.constant 0 : index
    %414 = vector.load %arg32[%c0_209, %c0_210, %c0_211] : memref<2x128x32xf32, #tpu.memory_space<vmem>>, vector<1x128x32xf32>
    %415 = vector.shape_cast %414 : vector<1x128x32xf32> to vector<128x32xf32>
    %c0_212 = arith.constant 0 : index
    %c0_213 = arith.constant 0 : index
    %c0_214 = arith.constant 0 : index
    %416 = vector.load %arg33[%c0_212, %c0_213, %c0_214] : memref<2x1x32xf32, #tpu.memory_space<vmem>>, vector<1x1x32xf32>
    %417 = vector.shape_cast %416 : vector<1x1x32xf32> to vector<1x32xf32>
    %418 = vector.extract_strided_slice %395 {offsets = [0, 0], sizes = [32, 32], strides = [1, 1]} : vector<32x96xf32> to vector<32x32xf32>
    %cst_215 = arith.constant dense<0.000000e+00> : vector<8x32xf32>
    %419 = tpu.matmul %393, %418, %cst_215 {dimension_numbers = #tpu.dot_dimension_numbers<[1], [0], [0], [1], [0, 0, 1, 1], [], []>} : vector<8x32xf32>, vector<32x32xf32>, vector<8x32xf32> -> vector<8x32xf32>
    %420 = vector.extract_strided_slice %397 {offsets = [0, 0], sizes = [1, 32], strides = [1, 1]} : vector<1x96xf32> to vector<1x32xf32>
    %421 = vector.broadcast %420 : vector<1x32xf32> to vector<8x32xf32>
    %422 = arith.addf %419, %421 : vector<8x32xf32>
    %423 = vector.extract_strided_slice %395 {offsets = [0, 32], sizes = [32, 64], strides = [1, 1]} : vector<32x96xf32> to vector<32x64xf32>
    %cst_216 = arith.constant dense<0.000000e+00> : vector<8x64xf32>
    %424 = tpu.matmul %295, %423, %cst_216 {dimension_numbers = #tpu.dot_dimension_numbers<[1], [0], [0], [1], [0, 0, 1, 1], [], []>} : vector<8x32xf32>, vector<32x64xf32>, vector<8x64xf32> -> vector<8x64xf32>
    %425 = vector.extract_strided_slice %397 {offsets = [0, 32], sizes = [1, 64], strides = [1, 1]} : vector<1x96xf32> to vector<1x64xf32>
    %426 = vector.broadcast %425 : vector<1x64xf32> to vector<8x64xf32>
    %427 = arith.addf %424, %426 : vector<8x64xf32>
    %428 = vector.extract_strided_slice %427 {offsets = [0, 0], sizes = [8, 32], strides = [1, 1]} : vector<8x64xf32> to vector<8x32xf32>
    %429 = vector.extract_strided_slice %427 {offsets = [0, 32], sizes = [8, 32], strides = [1, 1]} : vector<8x64xf32> to vector<8x32xf32>
    %430 = tpu.transpose %428, [1, 0] : vector<8x32xf32> -> vector<32x8xf32>
    %431 = vector.extract_strided_slice %422 {offsets = [0, 0], sizes = [8, 8], strides = [1, 1]} : vector<8x32xf32> to vector<8x8xf32>
    %432 = vector.extract_strided_slice %430 {offsets = [0, 0], sizes = [8, 8], strides = [1, 1]} : vector<32x8xf32> to vector<8x8xf32>
    %cst_217 = arith.constant dense<0.000000e+00> : vector<8x8xf32>
    %433 = tpu.matmul %431, %432, %cst_217 {dimension_numbers = #tpu.dot_dimension_numbers<[1], [0], [0], [1], [0, 0, 1, 1], [], []>} : vector<8x8xf32>, vector<8x8xf32>, vector<8x8xf32> -> vector<8x8xf32>
    %434 = vector.extract_strided_slice %422 {offsets = [0, 8], sizes = [8, 8], strides = [1, 1]} : vector<8x32xf32> to vector<8x8xf32>
    %435 = vector.extract_strided_slice %430 {offsets = [8, 0], sizes = [8, 8], strides = [1, 1]} : vector<32x8xf32> to vector<8x8xf32>
    %cst_218 = arith.constant dense<0.000000e+00> : vector<8x8xf32>
    %436 = tpu.matmul %434, %435, %cst_218 {dimension_numbers = #tpu.dot_dimension_numbers<[1], [0], [0], [1], [0, 0, 1, 1], [], []>} : vector<8x8xf32>, vector<8x8xf32>, vector<8x8xf32> -> vector<8x8xf32>
    %437 = vector.extract_strided_slice %422 {offsets = [0, 16], sizes = [8, 8], strides = [1, 1]} : vector<8x32xf32> to vector<8x8xf32>
    %438 = vector.extract_strided_slice %430 {offsets = [16, 0], sizes = [8, 8], strides = [1, 1]} : vector<32x8xf32> to vector<8x8xf32>
    %cst_219 = arith.constant dense<0.000000e+00> : vector<8x8xf32>
    %439 = tpu.matmul %437, %438, %cst_219 {dimension_numbers = #tpu.dot_dimension_numbers<[1], [0], [0], [1], [0, 0, 1, 1], [], []>} : vector<8x8xf32>, vector<8x8xf32>, vector<8x8xf32> -> vector<8x8xf32>
    %440 = vector.extract_strided_slice %422 {offsets = [0, 24], sizes = [8, 8], strides = [1, 1]} : vector<8x32xf32> to vector<8x8xf32>
    %441 = vector.extract_strided_slice %430 {offsets = [24, 0], sizes = [8, 8], strides = [1, 1]} : vector<32x8xf32> to vector<8x8xf32>
    %cst_220 = arith.constant dense<0.000000e+00> : vector<8x8xf32>
    %442 = tpu.matmul %440, %441, %cst_220 {dimension_numbers = #tpu.dot_dimension_numbers<[1], [0], [0], [1], [0, 0, 1, 1], [], []>} : vector<8x8xf32>, vector<8x8xf32>, vector<8x8xf32> -> vector<8x8xf32>
    %443 = tpu.concatenate %433, %436, %439, %442 in 0 : vector<8x8xf32>, vector<8x8xf32>, vector<8x8xf32>, vector<8x8xf32> -> vector<32x8xf32>
    %cst_221 = arith.constant 0.353553385 : f32
    %444 = vector.broadcast %cst_221 : f32 to vector<32x8xf32>
    %445 = arith.mulf %443, %444 : vector<32x8xf32>
    %cst_222 = arith.constant -1.000000e+09 : f32
    %446 = vector.broadcast %cst_222 : f32 to vector<32x8xf32>
    %447 = arith.select %7, %445, %446 : vector<32x8xi1>, vector<32x8xf32>
    %cst_223 = arith.constant dense<0xFF800000> : vector<32xf32>
    %448 = vector.multi_reduction <maximumf>, %447, %cst_223 [1] : vector<32x8xf32> to vector<32xf32>
    %449 = vector.shape_cast %448 : vector<32xf32> to vector<32x1xf32>
    %450 = vector.broadcast %449 : vector<32x1xf32> to vector<32x8xf32>
    %451 = arith.subf %447, %450 : vector<32x8xf32>
    %452 = math.exp %451 : vector<32x8xf32>
    %cst_224 = arith.constant dense<0.000000e+00> : vector<32xf32>
    %453 = vector.multi_reduction <add>, %452, %cst_224 [1] : vector<32x8xf32> to vector<32xf32>
    %454 = vector.shape_cast %453 : vector<32xf32> to vector<32x1xf32>
    %455 = tpu.reciprocal %454 {approx = true} : vector<32x1xf32> -> vector<32x1xf32>
    %456 = vector.broadcast %455 : vector<32x1xf32> to vector<32x8xf32>
    %457 = arith.mulf %452, %456 : vector<32x8xf32>
    %458 = vector.extract_strided_slice %457 {offsets = [0, 0], sizes = [8, 8], strides = [1, 1]} : vector<32x8xf32> to vector<8x8xf32>
    %459 = vector.extract_strided_slice %429 {offsets = [0, 0], sizes = [8, 8], strides = [1, 1]} : vector<8x32xf32> to vector<8x8xf32>
    %cst_225 = arith.constant dense<0.000000e+00> : vector<8x8xf32>
    %460 = tpu.matmul %458, %459, %cst_225 {dimension_numbers = #tpu.dot_dimension_numbers<[1], [0], [0], [1], [0, 0, 1, 1], [], []>} : vector<8x8xf32>, vector<8x8xf32>, vector<8x8xf32> -> vector<8x8xf32>
    %461 = vector.extract_strided_slice %399 {offsets = [0, 0], sizes = [8, 32], strides = [1, 1]} : vector<32x32xf32> to vector<8x32xf32>
    %cst_226 = arith.constant dense<0.000000e+00> : vector<8x32xf32>
    %462 = tpu.matmul %460, %461, %cst_226 {dimension_numbers = #tpu.dot_dimension_numbers<[1], [0], [0], [1], [0, 0, 1, 1], [], []>} : vector<8x8xf32>, vector<8x32xf32>, vector<8x32xf32> -> vector<8x32xf32>
    %463 = vector.extract_strided_slice %457 {offsets = [8, 0], sizes = [8, 8], strides = [1, 1]} : vector<32x8xf32> to vector<8x8xf32>
    %464 = vector.extract_strided_slice %429 {offsets = [0, 8], sizes = [8, 8], strides = [1, 1]} : vector<8x32xf32> to vector<8x8xf32>
    %cst_227 = arith.constant dense<0.000000e+00> : vector<8x8xf32>
    %465 = tpu.matmul %463, %464, %cst_227 {dimension_numbers = #tpu.dot_dimension_numbers<[1], [0], [0], [1], [0, 0, 1, 1], [], []>} : vector<8x8xf32>, vector<8x8xf32>, vector<8x8xf32> -> vector<8x8xf32>
    %466 = vector.extract_strided_slice %399 {offsets = [8, 0], sizes = [8, 32], strides = [1, 1]} : vector<32x32xf32> to vector<8x32xf32>
    %cst_228 = arith.constant dense<0.000000e+00> : vector<8x32xf32>
    %467 = tpu.matmul %465, %466, %cst_228 {dimension_numbers = #tpu.dot_dimension_numbers<[1], [0], [0], [1], [0, 0, 1, 1], [], []>} : vector<8x8xf32>, vector<8x32xf32>, vector<8x32xf32> -> vector<8x32xf32>
    %468 = arith.addf %462, %467 : vector<8x32xf32>
    %469 = vector.extract_strided_slice %457 {offsets = [16, 0], sizes = [8, 8], strides = [1, 1]} : vector<32x8xf32> to vector<8x8xf32>
    %470 = vector.extract_strided_slice %429 {offsets = [0, 16], sizes = [8, 8], strides = [1, 1]} : vector<8x32xf32> to vector<8x8xf32>
    %cst_229 = arith.constant dense<0.000000e+00> : vector<8x8xf32>
    %471 = tpu.matmul %469, %470, %cst_229 {dimension_numbers = #tpu.dot_dimension_numbers<[1], [0], [0], [1], [0, 0, 1, 1], [], []>} : vector<8x8xf32>, vector<8x8xf32>, vector<8x8xf32> -> vector<8x8xf32>
    %472 = vector.extract_strided_slice %399 {offsets = [16, 0], sizes = [8, 32], strides = [1, 1]} : vector<32x32xf32> to vector<8x32xf32>
    %cst_230 = arith.constant dense<0.000000e+00> : vector<8x32xf32>
    %473 = tpu.matmul %471, %472, %cst_230 {dimension_numbers = #tpu.dot_dimension_numbers<[1], [0], [0], [1], [0, 0, 1, 1], [], []>} : vector<8x8xf32>, vector<8x32xf32>, vector<8x32xf32> -> vector<8x32xf32>
    %474 = arith.addf %468, %473 : vector<8x32xf32>
    %475 = vector.extract_strided_slice %457 {offsets = [24, 0], sizes = [8, 8], strides = [1, 1]} : vector<32x8xf32> to vector<8x8xf32>
    %476 = vector.extract_strided_slice %429 {offsets = [0, 24], sizes = [8, 8], strides = [1, 1]} : vector<8x32xf32> to vector<8x8xf32>
    %cst_231 = arith.constant dense<0.000000e+00> : vector<8x8xf32>
    %477 = tpu.matmul %475, %476, %cst_231 {dimension_numbers = #tpu.dot_dimension_numbers<[1], [0], [0], [1], [0, 0, 1, 1], [], []>} : vector<8x8xf32>, vector<8x8xf32>, vector<8x8xf32> -> vector<8x8xf32>
    %478 = vector.extract_strided_slice %399 {offsets = [24, 0], sizes = [8, 32], strides = [1, 1]} : vector<32x32xf32> to vector<8x32xf32>
    %cst_232 = arith.constant dense<0.000000e+00> : vector<8x32xf32>
    %479 = tpu.matmul %477, %478, %cst_232 {dimension_numbers = #tpu.dot_dimension_numbers<[1], [0], [0], [1], [0, 0, 1, 1], [], []>} : vector<8x8xf32>, vector<8x32xf32>, vector<8x32xf32> -> vector<8x32xf32>
    %480 = arith.addf %474, %479 : vector<8x32xf32>
    %481 = vector.broadcast %401 : vector<1x32xf32> to vector<8x32xf32>
    %482 = arith.addf %480, %481 : vector<8x32xf32>
    %483 = arith.addf %482, %393 : vector<8x32xf32>
    %cst_233 = arith.constant dense<0.000000e+00> : vector<8xf32>
    %484 = vector.multi_reduction <add>, %483, %cst_233 [1] : vector<8x32xf32> to vector<8xf32>
    %485 = vector.shape_cast %484 : vector<8xf32> to vector<8x1xf32>
    %cst_234 = arith.constant 3.200000e+01 : f32
    %486 = vector.broadcast %cst_234 : f32 to vector<8x1xf32>
    %487 = arith.divf %485, %486 : vector<8x1xf32>
    %488 = vector.broadcast %487 : vector<8x1xf32> to vector<8x32xf32>
    %489 = arith.subf %483, %488 : vector<8x32xf32>
    %490 = vector.broadcast %487 : vector<8x1xf32> to vector<8x32xf32>
    %491 = arith.subf %483, %490 : vector<8x32xf32>
    %492 = arith.mulf %489, %491 : vector<8x32xf32>
    %cst_235 = arith.constant dense<0.000000e+00> : vector<8xf32>
    %493 = vector.multi_reduction <add>, %492, %cst_235 [1] : vector<8x32xf32> to vector<8xf32>
    %494 = vector.shape_cast %493 : vector<8xf32> to vector<8x1xf32>
    %cst_236 = arith.constant 3.200000e+01 : f32
    %495 = vector.broadcast %cst_236 : f32 to vector<8x1xf32>
    %496 = arith.divf %494, %495 : vector<8x1xf32>
    %497 = vector.broadcast %487 : vector<8x1xf32> to vector<8x32xf32>
    %498 = arith.subf %483, %497 : vector<8x32xf32>
    %cst_237 = arith.constant 9.99999974E-6 : f32
    %499 = vector.broadcast %cst_237 : f32 to vector<8x1xf32>
    %500 = arith.addf %496, %499 : vector<8x1xf32>
    %501 = math.rsqrt %500 : vector<8x1xf32>
    %502 = vector.broadcast %501 : vector<8x1xf32> to vector<8x32xf32>
    %503 = arith.mulf %498, %502 : vector<8x32xf32>
    %504 = vector.broadcast %403 : vector<1x32xf32> to vector<8x32xf32>
    %505 = arith.mulf %503, %504 : vector<8x32xf32>
    %506 = vector.broadcast %405 : vector<1x32xf32> to vector<8x32xf32>
    %507 = arith.addf %505, %506 : vector<8x32xf32>
    %cst_238 = arith.constant dense<0.000000e+00> : vector<8x128xf32>
    %508 = tpu.matmul %507, %411, %cst_238 {dimension_numbers = #tpu.dot_dimension_numbers<[1], [0], [0], [1], [0, 0, 1, 1], [], []>} : vector<8x32xf32>, vector<32x128xf32>, vector<8x128xf32> -> vector<8x128xf32>
    %509 = vector.broadcast %413 : vector<1x128xf32> to vector<8x128xf32>
    %510 = arith.addf %508, %509 : vector<8x128xf32>
    %cst_239 = arith.constant 0.000000e+00 : f32
    %511 = vector.broadcast %cst_239 : f32 to vector<8x128xf32>
    %512 = arith.maximumf %510, %511 : vector<8x128xf32>
    %cst_240 = arith.constant dense<0.000000e+00> : vector<8x32xf32>
    %513 = tpu.matmul %512, %415, %cst_240 {dimension_numbers = #tpu.dot_dimension_numbers<[1], [0], [0], [1], [0, 0, 1, 1], [], []>} : vector<8x128xf32>, vector<128x32xf32>, vector<8x32xf32> -> vector<8x32xf32>
    %514 = vector.broadcast %417 : vector<1x32xf32> to vector<8x32xf32>
    %515 = arith.addf %513, %514 : vector<8x32xf32>
    %516 = arith.addf %515, %507 : vector<8x32xf32>
    %cst_241 = arith.constant dense<0.000000e+00> : vector<8xf32>
    %517 = vector.multi_reduction <add>, %516, %cst_241 [1] : vector<8x32xf32> to vector<8xf32>
    %518 = vector.shape_cast %517 : vector<8xf32> to vector<8x1xf32>
    %cst_242 = arith.constant 3.200000e+01 : f32
    %519 = vector.broadcast %cst_242 : f32 to vector<8x1xf32>
    %520 = arith.divf %518, %519 : vector<8x1xf32>
    %521 = vector.broadcast %520 : vector<8x1xf32> to vector<8x32xf32>
    %522 = arith.subf %516, %521 : vector<8x32xf32>
    %523 = vector.broadcast %520 : vector<8x1xf32> to vector<8x32xf32>
    %524 = arith.subf %516, %523 : vector<8x32xf32>
    %525 = arith.mulf %522, %524 : vector<8x32xf32>
    %cst_243 = arith.constant dense<0.000000e+00> : vector<8xf32>
    %526 = vector.multi_reduction <add>, %525, %cst_243 [1] : vector<8x32xf32> to vector<8xf32>
    %527 = vector.shape_cast %526 : vector<8xf32> to vector<8x1xf32>
    %cst_244 = arith.constant 3.200000e+01 : f32
    %528 = vector.broadcast %cst_244 : f32 to vector<8x1xf32>
    %529 = arith.divf %527, %528 : vector<8x1xf32>
    %530 = vector.broadcast %520 : vector<8x1xf32> to vector<8x32xf32>
    %531 = arith.subf %516, %530 : vector<8x32xf32>
    %cst_245 = arith.constant 9.99999974E-6 : f32
    %532 = vector.broadcast %cst_245 : f32 to vector<8x1xf32>
    %533 = arith.addf %529, %532 : vector<8x1xf32>
    %534 = math.rsqrt %533 : vector<8x1xf32>
    %535 = vector.broadcast %534 : vector<8x1xf32> to vector<8x32xf32>
    %536 = arith.mulf %531, %535 : vector<8x32xf32>
    %537 = vector.broadcast %407 : vector<1x32xf32> to vector<8x32xf32>
    %538 = arith.mulf %536, %537 : vector<8x32xf32>
    %539 = vector.broadcast %409 : vector<1x32xf32> to vector<8x32xf32>
    %540 = arith.addf %538, %539 : vector<8x32xf32>
    %c1_246 = arith.constant 1 : index
    %c0_247 = arith.constant 0 : index
    %c0_248 = arith.constant 0 : index
    %541 = vector.load %arg16[%c1_246, %c0_247, %c0_248] : memref<2x32x96xf32, #tpu.memory_space<vmem>>, vector<1x32x96xf32>
    %542 = vector.shape_cast %541 : vector<1x32x96xf32> to vector<32x96xf32>
    %c1_249 = arith.constant 1 : index
    %c0_250 = arith.constant 0 : index
    %c0_251 = arith.constant 0 : index
    %543 = vector.load %arg17[%c1_249, %c0_250, %c0_251] : memref<2x1x96xf32, #tpu.memory_space<vmem>>, vector<1x1x96xf32>
    %544 = vector.shape_cast %543 : vector<1x1x96xf32> to vector<1x96xf32>
    %c1_252 = arith.constant 1 : index
    %c0_253 = arith.constant 0 : index
    %c0_254 = arith.constant 0 : index
    %545 = vector.load %arg18[%c1_252, %c0_253, %c0_254] : memref<2x32x32xf32, #tpu.memory_space<vmem>>, vector<1x32x32xf32>
    %546 = vector.shape_cast %545 : vector<1x32x32xf32> to vector<32x32xf32>
    %c1_255 = arith.constant 1 : index
    %c0_256 = arith.constant 0 : index
    %c0_257 = arith.constant 0 : index
    %547 = vector.load %arg19[%c1_255, %c0_256, %c0_257] : memref<2x1x32xf32, #tpu.memory_space<vmem>>, vector<1x1x32xf32>
    %548 = vector.shape_cast %547 : vector<1x1x32xf32> to vector<1x32xf32>
    %cst_258 = arith.constant dense<0.000000e+00> : vector<8x96xf32>
    %549 = tpu.matmul %540, %542, %cst_258 {dimension_numbers = #tpu.dot_dimension_numbers<[1], [0], [0], [1], [0, 0, 1, 1], [], []>} : vector<8x32xf32>, vector<32x96xf32>, vector<8x96xf32> -> vector<8x96xf32>
    %550 = vector.broadcast %544 : vector<1x96xf32> to vector<8x96xf32>
    %551 = arith.addf %549, %550 : vector<8x96xf32>
    %552 = vector.extract_strided_slice %551 {offsets = [0, 0], sizes = [8, 32], strides = [1, 1]} : vector<8x96xf32> to vector<8x32xf32>
    %553 = vector.extract_strided_slice %551 {offsets = [0, 32], sizes = [8, 32], strides = [1, 1]} : vector<8x96xf32> to vector<8x32xf32>
    %554 = vector.extract_strided_slice %551 {offsets = [0, 64], sizes = [8, 32], strides = [1, 1]} : vector<8x96xf32> to vector<8x32xf32>
    %555 = tpu.transpose %553, [1, 0] : vector<8x32xf32> -> vector<32x8xf32>
    %556 = vector.extract_strided_slice %552 {offsets = [0, 0], sizes = [8, 8], strides = [1, 1]} : vector<8x32xf32> to vector<8x8xf32>
    %557 = vector.extract_strided_slice %555 {offsets = [0, 0], sizes = [8, 8], strides = [1, 1]} : vector<32x8xf32> to vector<8x8xf32>
    %cst_259 = arith.constant dense<0.000000e+00> : vector<8x8xf32>
    %558 = tpu.matmul %556, %557, %cst_259 {dimension_numbers = #tpu.dot_dimension_numbers<[1], [0], [0], [1], [0, 0, 1, 1], [], []>} : vector<8x8xf32>, vector<8x8xf32>, vector<8x8xf32> -> vector<8x8xf32>
    %559 = vector.extract_strided_slice %552 {offsets = [0, 8], sizes = [8, 8], strides = [1, 1]} : vector<8x32xf32> to vector<8x8xf32>
    %560 = vector.extract_strided_slice %555 {offsets = [8, 0], sizes = [8, 8], strides = [1, 1]} : vector<32x8xf32> to vector<8x8xf32>
    %cst_260 = arith.constant dense<0.000000e+00> : vector<8x8xf32>
    %561 = tpu.matmul %559, %560, %cst_260 {dimension_numbers = #tpu.dot_dimension_numbers<[1], [0], [0], [1], [0, 0, 1, 1], [], []>} : vector<8x8xf32>, vector<8x8xf32>, vector<8x8xf32> -> vector<8x8xf32>
    %562 = vector.extract_strided_slice %552 {offsets = [0, 16], sizes = [8, 8], strides = [1, 1]} : vector<8x32xf32> to vector<8x8xf32>
    %563 = vector.extract_strided_slice %555 {offsets = [16, 0], sizes = [8, 8], strides = [1, 1]} : vector<32x8xf32> to vector<8x8xf32>
    %cst_261 = arith.constant dense<0.000000e+00> : vector<8x8xf32>
    %564 = tpu.matmul %562, %563, %cst_261 {dimension_numbers = #tpu.dot_dimension_numbers<[1], [0], [0], [1], [0, 0, 1, 1], [], []>} : vector<8x8xf32>, vector<8x8xf32>, vector<8x8xf32> -> vector<8x8xf32>
    %565 = vector.extract_strided_slice %552 {offsets = [0, 24], sizes = [8, 8], strides = [1, 1]} : vector<8x32xf32> to vector<8x8xf32>
    %566 = vector.extract_strided_slice %555 {offsets = [24, 0], sizes = [8, 8], strides = [1, 1]} : vector<32x8xf32> to vector<8x8xf32>
    %cst_262 = arith.constant dense<0.000000e+00> : vector<8x8xf32>
    %567 = tpu.matmul %565, %566, %cst_262 {dimension_numbers = #tpu.dot_dimension_numbers<[1], [0], [0], [1], [0, 0, 1, 1], [], []>} : vector<8x8xf32>, vector<8x8xf32>, vector<8x8xf32> -> vector<8x8xf32>
    %568 = tpu.concatenate %558, %561, %564, %567 in 0 : vector<8x8xf32>, vector<8x8xf32>, vector<8x8xf32>, vector<8x8xf32> -> vector<32x8xf32>
    %cst_263 = arith.constant 0.353553385 : f32
    %569 = vector.broadcast %cst_263 : f32 to vector<32x8xf32>
    %570 = arith.mulf %568, %569 : vector<32x8xf32>
    %cst_264 = arith.constant -1.000000e+09 : f32
    %571 = vector.broadcast %cst_264 : f32 to vector<32x8xf32>
    %572 = arith.select %11, %570, %571 : vector<32x8xi1>, vector<32x8xf32>
    %cst_265 = arith.constant dense<0xFF800000> : vector<32xf32>
    %573 = vector.multi_reduction <maximumf>, %572, %cst_265 [1] : vector<32x8xf32> to vector<32xf32>
    %574 = vector.shape_cast %573 : vector<32xf32> to vector<32x1xf32>
    %575 = vector.broadcast %574 : vector<32x1xf32> to vector<32x8xf32>
    %576 = arith.subf %572, %575 : vector<32x8xf32>
    %577 = math.exp %576 : vector<32x8xf32>
    %cst_266 = arith.constant dense<0.000000e+00> : vector<32xf32>
    %578 = vector.multi_reduction <add>, %577, %cst_266 [1] : vector<32x8xf32> to vector<32xf32>
    %579 = vector.shape_cast %578 : vector<32xf32> to vector<32x1xf32>
    %580 = tpu.reciprocal %579 {approx = true} : vector<32x1xf32> -> vector<32x1xf32>
    %581 = vector.broadcast %580 : vector<32x1xf32> to vector<32x8xf32>
    %582 = arith.mulf %577, %581 : vector<32x8xf32>
    %583 = vector.extract_strided_slice %582 {offsets = [0, 0], sizes = [8, 8], strides = [1, 1]} : vector<32x8xf32> to vector<8x8xf32>
    %584 = vector.extract_strided_slice %554 {offsets = [0, 0], sizes = [8, 8], strides = [1, 1]} : vector<8x32xf32> to vector<8x8xf32>
    %cst_267 = arith.constant dense<0.000000e+00> : vector<8x8xf32>
    %585 = tpu.matmul %583, %584, %cst_267 {dimension_numbers = #tpu.dot_dimension_numbers<[1], [0], [0], [1], [0, 0, 1, 1], [], []>} : vector<8x8xf32>, vector<8x8xf32>, vector<8x8xf32> -> vector<8x8xf32>
    %586 = vector.extract_strided_slice %546 {offsets = [0, 0], sizes = [8, 32], strides = [1, 1]} : vector<32x32xf32> to vector<8x32xf32>
    %cst_268 = arith.constant dense<0.000000e+00> : vector<8x32xf32>
    %587 = tpu.matmul %585, %586, %cst_268 {dimension_numbers = #tpu.dot_dimension_numbers<[1], [0], [0], [1], [0, 0, 1, 1], [], []>} : vector<8x8xf32>, vector<8x32xf32>, vector<8x32xf32> -> vector<8x32xf32>
    %588 = vector.extract_strided_slice %582 {offsets = [8, 0], sizes = [8, 8], strides = [1, 1]} : vector<32x8xf32> to vector<8x8xf32>
    %589 = vector.extract_strided_slice %554 {offsets = [0, 8], sizes = [8, 8], strides = [1, 1]} : vector<8x32xf32> to vector<8x8xf32>
    %cst_269 = arith.constant dense<0.000000e+00> : vector<8x8xf32>
    %590 = tpu.matmul %588, %589, %cst_269 {dimension_numbers = #tpu.dot_dimension_numbers<[1], [0], [0], [1], [0, 0, 1, 1], [], []>} : vector<8x8xf32>, vector<8x8xf32>, vector<8x8xf32> -> vector<8x8xf32>
    %591 = vector.extract_strided_slice %546 {offsets = [8, 0], sizes = [8, 32], strides = [1, 1]} : vector<32x32xf32> to vector<8x32xf32>
    %cst_270 = arith.constant dense<0.000000e+00> : vector<8x32xf32>
    %592 = tpu.matmul %590, %591, %cst_270 {dimension_numbers = #tpu.dot_dimension_numbers<[1], [0], [0], [1], [0, 0, 1, 1], [], []>} : vector<8x8xf32>, vector<8x32xf32>, vector<8x32xf32> -> vector<8x32xf32>
    %593 = arith.addf %587, %592 : vector<8x32xf32>
    %594 = vector.extract_strided_slice %582 {offsets = [16, 0], sizes = [8, 8], strides = [1, 1]} : vector<32x8xf32> to vector<8x8xf32>
    %595 = vector.extract_strided_slice %554 {offsets = [0, 16], sizes = [8, 8], strides = [1, 1]} : vector<8x32xf32> to vector<8x8xf32>
    %cst_271 = arith.constant dense<0.000000e+00> : vector<8x8xf32>
    %596 = tpu.matmul %594, %595, %cst_271 {dimension_numbers = #tpu.dot_dimension_numbers<[1], [0], [0], [1], [0, 0, 1, 1], [], []>} : vector<8x8xf32>, vector<8x8xf32>, vector<8x8xf32> -> vector<8x8xf32>
    %597 = vector.extract_strided_slice %546 {offsets = [16, 0], sizes = [8, 32], strides = [1, 1]} : vector<32x32xf32> to vector<8x32xf32>
    %cst_272 = arith.constant dense<0.000000e+00> : vector<8x32xf32>
    %598 = tpu.matmul %596, %597, %cst_272 {dimension_numbers = #tpu.dot_dimension_numbers<[1], [0], [0], [1], [0, 0, 1, 1], [], []>} : vector<8x8xf32>, vector<8x32xf32>, vector<8x32xf32> -> vector<8x32xf32>
    %599 = arith.addf %593, %598 : vector<8x32xf32>
    %600 = vector.extract_strided_slice %582 {offsets = [24, 0], sizes = [8, 8], strides = [1, 1]} : vector<32x8xf32> to vector<8x8xf32>
    %601 = vector.extract_strided_slice %554 {offsets = [0, 24], sizes = [8, 8], strides = [1, 1]} : vector<8x32xf32> to vector<8x8xf32>
    %cst_273 = arith.constant dense<0.000000e+00> : vector<8x8xf32>
    %602 = tpu.matmul %600, %601, %cst_273 {dimension_numbers = #tpu.dot_dimension_numbers<[1], [0], [0], [1], [0, 0, 1, 1], [], []>} : vector<8x8xf32>, vector<8x8xf32>, vector<8x8xf32> -> vector<8x8xf32>
    %603 = vector.extract_strided_slice %546 {offsets = [24, 0], sizes = [8, 32], strides = [1, 1]} : vector<32x32xf32> to vector<8x32xf32>
    %cst_274 = arith.constant dense<0.000000e+00> : vector<8x32xf32>
    %604 = tpu.matmul %602, %603, %cst_274 {dimension_numbers = #tpu.dot_dimension_numbers<[1], [0], [0], [1], [0, 0, 1, 1], [], []>} : vector<8x8xf32>, vector<8x32xf32>, vector<8x32xf32> -> vector<8x32xf32>
    %605 = arith.addf %599, %604 : vector<8x32xf32>
    %606 = vector.broadcast %548 : vector<1x32xf32> to vector<8x32xf32>
    %607 = arith.addf %605, %606 : vector<8x32xf32>
    %608 = arith.addf %607, %540 : vector<8x32xf32>
    %c1_275 = arith.constant 1 : index
    %c0_276 = arith.constant 0 : index
    %c0_277 = arith.constant 0 : index
    %609 = vector.load %arg20[%c1_275, %c0_276, %c0_277] : memref<2x1x32xf32, #tpu.memory_space<vmem>>, vector<1x1x32xf32>
    %610 = vector.shape_cast %609 : vector<1x1x32xf32> to vector<1x32xf32>
    %c1_278 = arith.constant 1 : index
    %c0_279 = arith.constant 0 : index
    %c0_280 = arith.constant 0 : index
    %611 = vector.load %arg21[%c1_278, %c0_279, %c0_280] : memref<2x1x32xf32, #tpu.memory_space<vmem>>, vector<1x1x32xf32>
    %612 = vector.shape_cast %611 : vector<1x1x32xf32> to vector<1x32xf32>
    %cst_281 = arith.constant dense<0.000000e+00> : vector<8xf32>
    %613 = vector.multi_reduction <add>, %608, %cst_281 [1] : vector<8x32xf32> to vector<8xf32>
    %614 = vector.shape_cast %613 : vector<8xf32> to vector<8x1xf32>
    %cst_282 = arith.constant 3.200000e+01 : f32
    %615 = vector.broadcast %cst_282 : f32 to vector<8x1xf32>
    %616 = arith.divf %614, %615 : vector<8x1xf32>
    %617 = vector.broadcast %616 : vector<8x1xf32> to vector<8x32xf32>
    %618 = arith.subf %608, %617 : vector<8x32xf32>
    %619 = vector.broadcast %616 : vector<8x1xf32> to vector<8x32xf32>
    %620 = arith.subf %608, %619 : vector<8x32xf32>
    %621 = arith.mulf %618, %620 : vector<8x32xf32>
    %cst_283 = arith.constant dense<0.000000e+00> : vector<8xf32>
    %622 = vector.multi_reduction <add>, %621, %cst_283 [1] : vector<8x32xf32> to vector<8xf32>
    %623 = vector.shape_cast %622 : vector<8xf32> to vector<8x1xf32>
    %cst_284 = arith.constant 3.200000e+01 : f32
    %624 = vector.broadcast %cst_284 : f32 to vector<8x1xf32>
    %625 = arith.divf %623, %624 : vector<8x1xf32>
    %626 = vector.broadcast %616 : vector<8x1xf32> to vector<8x32xf32>
    %627 = arith.subf %608, %626 : vector<8x32xf32>
    %cst_285 = arith.constant 9.99999974E-6 : f32
    %628 = vector.broadcast %cst_285 : f32 to vector<8x1xf32>
    %629 = arith.addf %625, %628 : vector<8x1xf32>
    %630 = math.rsqrt %629 : vector<8x1xf32>
    %631 = vector.broadcast %630 : vector<8x1xf32> to vector<8x32xf32>
    %632 = arith.mulf %627, %631 : vector<8x32xf32>
    %633 = vector.broadcast %610 : vector<1x32xf32> to vector<8x32xf32>
    %634 = arith.mulf %632, %633 : vector<8x32xf32>
    %635 = vector.broadcast %612 : vector<1x32xf32> to vector<8x32xf32>
    %636 = arith.addf %634, %635 : vector<8x32xf32>
    %c1_286 = arith.constant 1 : index
    %c0_287 = arith.constant 0 : index
    %c0_288 = arith.constant 0 : index
    %637 = vector.load %arg22[%c1_286, %c0_287, %c0_288] : memref<2x32x96xf32, #tpu.memory_space<vmem>>, vector<1x32x96xf32>
    %638 = vector.shape_cast %637 : vector<1x32x96xf32> to vector<32x96xf32>
    %c1_289 = arith.constant 1 : index
    %c0_290 = arith.constant 0 : index
    %c0_291 = arith.constant 0 : index
    %639 = vector.load %arg23[%c1_289, %c0_290, %c0_291] : memref<2x1x96xf32, #tpu.memory_space<vmem>>, vector<1x1x96xf32>
    %640 = vector.shape_cast %639 : vector<1x1x96xf32> to vector<1x96xf32>
    %c1_292 = arith.constant 1 : index
    %c0_293 = arith.constant 0 : index
    %c0_294 = arith.constant 0 : index
    %641 = vector.load %arg24[%c1_292, %c0_293, %c0_294] : memref<2x32x32xf32, #tpu.memory_space<vmem>>, vector<1x32x32xf32>
    %642 = vector.shape_cast %641 : vector<1x32x32xf32> to vector<32x32xf32>
    %c1_295 = arith.constant 1 : index
    %c0_296 = arith.constant 0 : index
    %c0_297 = arith.constant 0 : index
    %643 = vector.load %arg25[%c1_295, %c0_296, %c0_297] : memref<2x1x32xf32, #tpu.memory_space<vmem>>, vector<1x1x32xf32>
    %644 = vector.shape_cast %643 : vector<1x1x32xf32> to vector<1x32xf32>
    %c1_298 = arith.constant 1 : index
    %c0_299 = arith.constant 0 : index
    %c0_300 = arith.constant 0 : index
    %645 = vector.load %arg26[%c1_298, %c0_299, %c0_300] : memref<2x1x32xf32, #tpu.memory_space<vmem>>, vector<1x1x32xf32>
    %646 = vector.shape_cast %645 : vector<1x1x32xf32> to vector<1x32xf32>
    %c1_301 = arith.constant 1 : index
    %c0_302 = arith.constant 0 : index
    %c0_303 = arith.constant 0 : index
    %647 = vector.load %arg27[%c1_301, %c0_302, %c0_303] : memref<2x1x32xf32, #tpu.memory_space<vmem>>, vector<1x1x32xf32>
    %648 = vector.shape_cast %647 : vector<1x1x32xf32> to vector<1x32xf32>
    %c1_304 = arith.constant 1 : index
    %c0_305 = arith.constant 0 : index
    %c0_306 = arith.constant 0 : index
    %649 = vector.load %arg28[%c1_304, %c0_305, %c0_306] : memref<2x1x32xf32, #tpu.memory_space<vmem>>, vector<1x1x32xf32>
    %650 = vector.shape_cast %649 : vector<1x1x32xf32> to vector<1x32xf32>
    %c1_307 = arith.constant 1 : index
    %c0_308 = arith.constant 0 : index
    %c0_309 = arith.constant 0 : index
    %651 = vector.load %arg29[%c1_307, %c0_308, %c0_309] : memref<2x1x32xf32, #tpu.memory_space<vmem>>, vector<1x1x32xf32>
    %652 = vector.shape_cast %651 : vector<1x1x32xf32> to vector<1x32xf32>
    %c1_310 = arith.constant 1 : index
    %c0_311 = arith.constant 0 : index
    %c0_312 = arith.constant 0 : index
    %653 = vector.load %arg30[%c1_310, %c0_311, %c0_312] : memref<2x32x128xf32, #tpu.memory_space<vmem>>, vector<1x32x128xf32>
    %654 = vector.shape_cast %653 : vector<1x32x128xf32> to vector<32x128xf32>
    %c1_313 = arith.constant 1 : index
    %c0_314 = arith.constant 0 : index
    %c0_315 = arith.constant 0 : index
    %655 = vector.load %arg31[%c1_313, %c0_314, %c0_315] : memref<2x1x128xf32, #tpu.memory_space<vmem>>, vector<1x1x128xf32>
    %656 = vector.shape_cast %655 : vector<1x1x128xf32> to vector<1x128xf32>
    %c1_316 = arith.constant 1 : index
    %c0_317 = arith.constant 0 : index
    %c0_318 = arith.constant 0 : index
    %657 = vector.load %arg32[%c1_316, %c0_317, %c0_318] : memref<2x128x32xf32, #tpu.memory_space<vmem>>, vector<1x128x32xf32>
    %658 = vector.shape_cast %657 : vector<1x128x32xf32> to vector<128x32xf32>
    %c1_319 = arith.constant 1 : index
    %c0_320 = arith.constant 0 : index
    %c0_321 = arith.constant 0 : index
    %659 = vector.load %arg33[%c1_319, %c0_320, %c0_321] : memref<2x1x32xf32, #tpu.memory_space<vmem>>, vector<1x1x32xf32>
    %660 = vector.shape_cast %659 : vector<1x1x32xf32> to vector<1x32xf32>
    %661 = vector.extract_strided_slice %638 {offsets = [0, 0], sizes = [32, 32], strides = [1, 1]} : vector<32x96xf32> to vector<32x32xf32>
    %cst_322 = arith.constant dense<0.000000e+00> : vector<8x32xf32>
    %662 = tpu.matmul %636, %661, %cst_322 {dimension_numbers = #tpu.dot_dimension_numbers<[1], [0], [0], [1], [0, 0, 1, 1], [], []>} : vector<8x32xf32>, vector<32x32xf32>, vector<8x32xf32> -> vector<8x32xf32>
    %663 = vector.extract_strided_slice %640 {offsets = [0, 0], sizes = [1, 32], strides = [1, 1]} : vector<1x96xf32> to vector<1x32xf32>
    %664 = vector.broadcast %663 : vector<1x32xf32> to vector<8x32xf32>
    %665 = arith.addf %662, %664 : vector<8x32xf32>
    %666 = vector.extract_strided_slice %638 {offsets = [0, 32], sizes = [32, 64], strides = [1, 1]} : vector<32x96xf32> to vector<32x64xf32>
    %cst_323 = arith.constant dense<0.000000e+00> : vector<8x64xf32>
    %667 = tpu.matmul %295, %666, %cst_323 {dimension_numbers = #tpu.dot_dimension_numbers<[1], [0], [0], [1], [0, 0, 1, 1], [], []>} : vector<8x32xf32>, vector<32x64xf32>, vector<8x64xf32> -> vector<8x64xf32>
    %668 = vector.extract_strided_slice %640 {offsets = [0, 32], sizes = [1, 64], strides = [1, 1]} : vector<1x96xf32> to vector<1x64xf32>
    %669 = vector.broadcast %668 : vector<1x64xf32> to vector<8x64xf32>
    %670 = arith.addf %667, %669 : vector<8x64xf32>
    %671 = vector.extract_strided_slice %670 {offsets = [0, 0], sizes = [8, 32], strides = [1, 1]} : vector<8x64xf32> to vector<8x32xf32>
    %672 = vector.extract_strided_slice %670 {offsets = [0, 32], sizes = [8, 32], strides = [1, 1]} : vector<8x64xf32> to vector<8x32xf32>
    %673 = tpu.transpose %671, [1, 0] : vector<8x32xf32> -> vector<32x8xf32>
    %674 = vector.extract_strided_slice %665 {offsets = [0, 0], sizes = [8, 8], strides = [1, 1]} : vector<8x32xf32> to vector<8x8xf32>
    %675 = vector.extract_strided_slice %673 {offsets = [0, 0], sizes = [8, 8], strides = [1, 1]} : vector<32x8xf32> to vector<8x8xf32>
    %cst_324 = arith.constant dense<0.000000e+00> : vector<8x8xf32>
    %676 = tpu.matmul %674, %675, %cst_324 {dimension_numbers = #tpu.dot_dimension_numbers<[1], [0], [0], [1], [0, 0, 1, 1], [], []>} : vector<8x8xf32>, vector<8x8xf32>, vector<8x8xf32> -> vector<8x8xf32>
    %677 = vector.extract_strided_slice %665 {offsets = [0, 8], sizes = [8, 8], strides = [1, 1]} : vector<8x32xf32> to vector<8x8xf32>
    %678 = vector.extract_strided_slice %673 {offsets = [8, 0], sizes = [8, 8], strides = [1, 1]} : vector<32x8xf32> to vector<8x8xf32>
    %cst_325 = arith.constant dense<0.000000e+00> : vector<8x8xf32>
    %679 = tpu.matmul %677, %678, %cst_325 {dimension_numbers = #tpu.dot_dimension_numbers<[1], [0], [0], [1], [0, 0, 1, 1], [], []>} : vector<8x8xf32>, vector<8x8xf32>, vector<8x8xf32> -> vector<8x8xf32>
    %680 = vector.extract_strided_slice %665 {offsets = [0, 16], sizes = [8, 8], strides = [1, 1]} : vector<8x32xf32> to vector<8x8xf32>
    %681 = vector.extract_strided_slice %673 {offsets = [16, 0], sizes = [8, 8], strides = [1, 1]} : vector<32x8xf32> to vector<8x8xf32>
    %cst_326 = arith.constant dense<0.000000e+00> : vector<8x8xf32>
    %682 = tpu.matmul %680, %681, %cst_326 {dimension_numbers = #tpu.dot_dimension_numbers<[1], [0], [0], [1], [0, 0, 1, 1], [], []>} : vector<8x8xf32>, vector<8x8xf32>, vector<8x8xf32> -> vector<8x8xf32>
    %683 = vector.extract_strided_slice %665 {offsets = [0, 24], sizes = [8, 8], strides = [1, 1]} : vector<8x32xf32> to vector<8x8xf32>
    %684 = vector.extract_strided_slice %673 {offsets = [24, 0], sizes = [8, 8], strides = [1, 1]} : vector<32x8xf32> to vector<8x8xf32>
    %cst_327 = arith.constant dense<0.000000e+00> : vector<8x8xf32>
    %685 = tpu.matmul %683, %684, %cst_327 {dimension_numbers = #tpu.dot_dimension_numbers<[1], [0], [0], [1], [0, 0, 1, 1], [], []>} : vector<8x8xf32>, vector<8x8xf32>, vector<8x8xf32> -> vector<8x8xf32>
    %686 = tpu.concatenate %676, %679, %682, %685 in 0 : vector<8x8xf32>, vector<8x8xf32>, vector<8x8xf32>, vector<8x8xf32> -> vector<32x8xf32>
    %cst_328 = arith.constant 0.353553385 : f32
    %687 = vector.broadcast %cst_328 : f32 to vector<32x8xf32>
    %688 = arith.mulf %686, %687 : vector<32x8xf32>
    %cst_329 = arith.constant -1.000000e+09 : f32
    %689 = vector.broadcast %cst_329 : f32 to vector<32x8xf32>
    %690 = arith.select %7, %688, %689 : vector<32x8xi1>, vector<32x8xf32>
    %cst_330 = arith.constant dense<0xFF800000> : vector<32xf32>
    %691 = vector.multi_reduction <maximumf>, %690, %cst_330 [1] : vector<32x8xf32> to vector<32xf32>
    %692 = vector.shape_cast %691 : vector<32xf32> to vector<32x1xf32>
    %693 = vector.broadcast %692 : vector<32x1xf32> to vector<32x8xf32>
    %694 = arith.subf %690, %693 : vector<32x8xf32>
    %695 = math.exp %694 : vector<32x8xf32>
    %cst_331 = arith.constant dense<0.000000e+00> : vector<32xf32>
    %696 = vector.multi_reduction <add>, %695, %cst_331 [1] : vector<32x8xf32> to vector<32xf32>
    %697 = vector.shape_cast %696 : vector<32xf32> to vector<32x1xf32>
    %698 = tpu.reciprocal %697 {approx = true} : vector<32x1xf32> -> vector<32x1xf32>
    %699 = vector.broadcast %698 : vector<32x1xf32> to vector<32x8xf32>
    %700 = arith.mulf %695, %699 : vector<32x8xf32>
    %701 = vector.extract_strided_slice %700 {offsets = [0, 0], sizes = [8, 8], strides = [1, 1]} : vector<32x8xf32> to vector<8x8xf32>
    %702 = vector.extract_strided_slice %672 {offsets = [0, 0], sizes = [8, 8], strides = [1, 1]} : vector<8x32xf32> to vector<8x8xf32>
    %cst_332 = arith.constant dense<0.000000e+00> : vector<8x8xf32>
    %703 = tpu.matmul %701, %702, %cst_332 {dimension_numbers = #tpu.dot_dimension_numbers<[1], [0], [0], [1], [0, 0, 1, 1], [], []>} : vector<8x8xf32>, vector<8x8xf32>, vector<8x8xf32> -> vector<8x8xf32>
    %704 = vector.extract_strided_slice %642 {offsets = [0, 0], sizes = [8, 32], strides = [1, 1]} : vector<32x32xf32> to vector<8x32xf32>
    %cst_333 = arith.constant dense<0.000000e+00> : vector<8x32xf32>
    %705 = tpu.matmul %703, %704, %cst_333 {dimension_numbers = #tpu.dot_dimension_numbers<[1], [0], [0], [1], [0, 0, 1, 1], [], []>} : vector<8x8xf32>, vector<8x32xf32>, vector<8x32xf32> -> vector<8x32xf32>
    %706 = vector.extract_strided_slice %700 {offsets = [8, 0], sizes = [8, 8], strides = [1, 1]} : vector<32x8xf32> to vector<8x8xf32>
    %707 = vector.extract_strided_slice %672 {offsets = [0, 8], sizes = [8, 8], strides = [1, 1]} : vector<8x32xf32> to vector<8x8xf32>
    %cst_334 = arith.constant dense<0.000000e+00> : vector<8x8xf32>
    %708 = tpu.matmul %706, %707, %cst_334 {dimension_numbers = #tpu.dot_dimension_numbers<[1], [0], [0], [1], [0, 0, 1, 1], [], []>} : vector<8x8xf32>, vector<8x8xf32>, vector<8x8xf32> -> vector<8x8xf32>
    %709 = vector.extract_strided_slice %642 {offsets = [8, 0], sizes = [8, 32], strides = [1, 1]} : vector<32x32xf32> to vector<8x32xf32>
    %cst_335 = arith.constant dense<0.000000e+00> : vector<8x32xf32>
    %710 = tpu.matmul %708, %709, %cst_335 {dimension_numbers = #tpu.dot_dimension_numbers<[1], [0], [0], [1], [0, 0, 1, 1], [], []>} : vector<8x8xf32>, vector<8x32xf32>, vector<8x32xf32> -> vector<8x32xf32>
    %711 = arith.addf %705, %710 : vector<8x32xf32>
    %712 = vector.extract_strided_slice %700 {offsets = [16, 0], sizes = [8, 8], strides = [1, 1]} : vector<32x8xf32> to vector<8x8xf32>
    %713 = vector.extract_strided_slice %672 {offsets = [0, 16], sizes = [8, 8], strides = [1, 1]} : vector<8x32xf32> to vector<8x8xf32>
    %cst_336 = arith.constant dense<0.000000e+00> : vector<8x8xf32>
    %714 = tpu.matmul %712, %713, %cst_336 {dimension_numbers = #tpu.dot_dimension_numbers<[1], [0], [0], [1], [0, 0, 1, 1], [], []>} : vector<8x8xf32>, vector<8x8xf32>, vector<8x8xf32> -> vector<8x8xf32>
    %715 = vector.extract_strided_slice %642 {offsets = [16, 0], sizes = [8, 32], strides = [1, 1]} : vector<32x32xf32> to vector<8x32xf32>
    %cst_337 = arith.constant dense<0.000000e+00> : vector<8x32xf32>
    %716 = tpu.matmul %714, %715, %cst_337 {dimension_numbers = #tpu.dot_dimension_numbers<[1], [0], [0], [1], [0, 0, 1, 1], [], []>} : vector<8x8xf32>, vector<8x32xf32>, vector<8x32xf32> -> vector<8x32xf32>
    %717 = arith.addf %711, %716 : vector<8x32xf32>
    %718 = vector.extract_strided_slice %700 {offsets = [24, 0], sizes = [8, 8], strides = [1, 1]} : vector<32x8xf32> to vector<8x8xf32>
    %719 = vector.extract_strided_slice %672 {offsets = [0, 24], sizes = [8, 8], strides = [1, 1]} : vector<8x32xf32> to vector<8x8xf32>
    %cst_338 = arith.constant dense<0.000000e+00> : vector<8x8xf32>
    %720 = tpu.matmul %718, %719, %cst_338 {dimension_numbers = #tpu.dot_dimension_numbers<[1], [0], [0], [1], [0, 0, 1, 1], [], []>} : vector<8x8xf32>, vector<8x8xf32>, vector<8x8xf32> -> vector<8x8xf32>
    %721 = vector.extract_strided_slice %642 {offsets = [24, 0], sizes = [8, 32], strides = [1, 1]} : vector<32x32xf32> to vector<8x32xf32>
    %cst_339 = arith.constant dense<0.000000e+00> : vector<8x32xf32>
    %722 = tpu.matmul %720, %721, %cst_339 {dimension_numbers = #tpu.dot_dimension_numbers<[1], [0], [0], [1], [0, 0, 1, 1], [], []>} : vector<8x8xf32>, vector<8x32xf32>, vector<8x32xf32> -> vector<8x32xf32>
    %723 = arith.addf %717, %722 : vector<8x32xf32>
    %724 = vector.broadcast %644 : vector<1x32xf32> to vector<8x32xf32>
    %725 = arith.addf %723, %724 : vector<8x32xf32>
    %726 = arith.addf %725, %636 : vector<8x32xf32>
    %cst_340 = arith.constant dense<0.000000e+00> : vector<8xf32>
    %727 = vector.multi_reduction <add>, %726, %cst_340 [1] : vector<8x32xf32> to vector<8xf32>
    %728 = vector.shape_cast %727 : vector<8xf32> to vector<8x1xf32>
    %cst_341 = arith.constant 3.200000e+01 : f32
    %729 = vector.broadcast %cst_341 : f32 to vector<8x1xf32>
    %730 = arith.divf %728, %729 : vector<8x1xf32>
    %731 = vector.broadcast %730 : vector<8x1xf32> to vector<8x32xf32>
    %732 = arith.subf %726, %731 : vector<8x32xf32>
    %733 = vector.broadcast %730 : vector<8x1xf32> to vector<8x32xf32>
    %734 = arith.subf %726, %733 : vector<8x32xf32>
    %735 = arith.mulf %732, %734 : vector<8x32xf32>
    %cst_342 = arith.constant dense<0.000000e+00> : vector<8xf32>
    %736 = vector.multi_reduction <add>, %735, %cst_342 [1] : vector<8x32xf32> to vector<8xf32>
    %737 = vector.shape_cast %736 : vector<8xf32> to vector<8x1xf32>
    %cst_343 = arith.constant 3.200000e+01 : f32
    %738 = vector.broadcast %cst_343 : f32 to vector<8x1xf32>
    %739 = arith.divf %737, %738 : vector<8x1xf32>
    %740 = vector.broadcast %730 : vector<8x1xf32> to vector<8x32xf32>
    %741 = arith.subf %726, %740 : vector<8x32xf32>
    %cst_344 = arith.constant 9.99999974E-6 : f32
    %742 = vector.broadcast %cst_344 : f32 to vector<8x1xf32>
    %743 = arith.addf %739, %742 : vector<8x1xf32>
    %744 = math.rsqrt %743 : vector<8x1xf32>
    %745 = vector.broadcast %744 : vector<8x1xf32> to vector<8x32xf32>
    %746 = arith.mulf %741, %745 : vector<8x32xf32>
    %747 = vector.broadcast %646 : vector<1x32xf32> to vector<8x32xf32>
    %748 = arith.mulf %746, %747 : vector<8x32xf32>
    %749 = vector.broadcast %648 : vector<1x32xf32> to vector<8x32xf32>
    %750 = arith.addf %748, %749 : vector<8x32xf32>
    %cst_345 = arith.constant dense<0.000000e+00> : vector<8x128xf32>
    %751 = tpu.matmul %750, %654, %cst_345 {dimension_numbers = #tpu.dot_dimension_numbers<[1], [0], [0], [1], [0, 0, 1, 1], [], []>} : vector<8x32xf32>, vector<32x128xf32>, vector<8x128xf32> -> vector<8x128xf32>
    %752 = vector.broadcast %656 : vector<1x128xf32> to vector<8x128xf32>
    %753 = arith.addf %751, %752 : vector<8x128xf32>
    %cst_346 = arith.constant 0.000000e+00 : f32
    %754 = vector.broadcast %cst_346 : f32 to vector<8x128xf32>
    %755 = arith.maximumf %753, %754 : vector<8x128xf32>
    %cst_347 = arith.constant dense<0.000000e+00> : vector<8x32xf32>
    %756 = tpu.matmul %755, %658, %cst_347 {dimension_numbers = #tpu.dot_dimension_numbers<[1], [0], [0], [1], [0, 0, 1, 1], [], []>} : vector<8x128xf32>, vector<128x32xf32>, vector<8x32xf32> -> vector<8x32xf32>
    %757 = vector.broadcast %660 : vector<1x32xf32> to vector<8x32xf32>
    %758 = arith.addf %756, %757 : vector<8x32xf32>
    %759 = arith.addf %758, %750 : vector<8x32xf32>
    %cst_348 = arith.constant dense<0.000000e+00> : vector<8xf32>
    %760 = vector.multi_reduction <add>, %759, %cst_348 [1] : vector<8x32xf32> to vector<8xf32>
    %761 = vector.shape_cast %760 : vector<8xf32> to vector<8x1xf32>
    %cst_349 = arith.constant 3.200000e+01 : f32
    %762 = vector.broadcast %cst_349 : f32 to vector<8x1xf32>
    %763 = arith.divf %761, %762 : vector<8x1xf32>
    %764 = vector.broadcast %763 : vector<8x1xf32> to vector<8x32xf32>
    %765 = arith.subf %759, %764 : vector<8x32xf32>
    %766 = vector.broadcast %763 : vector<8x1xf32> to vector<8x32xf32>
    %767 = arith.subf %759, %766 : vector<8x32xf32>
    %768 = arith.mulf %765, %767 : vector<8x32xf32>
    %cst_350 = arith.constant dense<0.000000e+00> : vector<8xf32>
    %769 = vector.multi_reduction <add>, %768, %cst_350 [1] : vector<8x32xf32> to vector<8xf32>
    %770 = vector.shape_cast %769 : vector<8xf32> to vector<8x1xf32>
    %cst_351 = arith.constant 3.200000e+01 : f32
    %771 = vector.broadcast %cst_351 : f32 to vector<8x1xf32>
    %772 = arith.divf %770, %771 : vector<8x1xf32>
    %773 = vector.broadcast %763 : vector<8x1xf32> to vector<8x32xf32>
    %774 = arith.subf %759, %773 : vector<8x32xf32>
    %cst_352 = arith.constant 9.99999974E-6 : f32
    %775 = vector.broadcast %cst_352 : f32 to vector<8x1xf32>
    %776 = arith.addf %772, %775 : vector<8x1xf32>
    %777 = math.rsqrt %776 : vector<8x1xf32>
    %778 = vector.broadcast %777 : vector<8x1xf32> to vector<8x32xf32>
    %779 = arith.mulf %774, %778 : vector<8x32xf32>
    %780 = vector.broadcast %650 : vector<1x32xf32> to vector<8x32xf32>
    %781 = arith.mulf %779, %780 : vector<8x32xf32>
    %782 = vector.broadcast %652 : vector<1x32xf32> to vector<8x32xf32>
    %783 = arith.addf %781, %782 : vector<8x32xf32>
    %c0_353 = arith.constant 0 : index
    %c0_354 = arith.constant 0 : index
    %784 = vector.load %arg34[%c0_353, %c0_354] : memref<32x128xf32, #tpu.memory_space<vmem>>, vector<32x128xf32>
    %cst_355 = arith.constant dense<0.000000e+00> : vector<8x128xf32>
    %785 = tpu.matmul %783, %784, %cst_355 {dimension_numbers = #tpu.dot_dimension_numbers<[1], [0], [0], [1], [0, 0, 1, 1], [], []>} : vector<8x32xf32>, vector<32x128xf32>, vector<8x128xf32> -> vector<8x128xf32>
    %c0_356 = arith.constant 0 : index
    %c0_357 = arith.constant 0 : index
    %786 = vector.load %arg35[%c0_356, %c0_357] : memref<1x128xf32, #tpu.memory_space<vmem>>, vector<1x128xf32>
    %787 = vector.broadcast %786 : vector<1x128xf32> to vector<8x128xf32>
    %788 = arith.addf %785, %787 : vector<8x128xf32>
    %c0_358 = arith.constant 0 : index
    %c0_359 = arith.constant 0 : index
    %c0_360 = arith.constant 0 : index
    %789 = vector.load %arg36[%c0_358, %c0_359, %c0_360] : memref<1x8x128xf32, #tpu.memory_space<vmem>>, vector<1x8x128xf32>
    %790 = vector.shape_cast %789 : vector<1x8x128xf32> to vector<8x128xf32>
    %791 = vector.shape_cast %788 : vector<8x128xf32> to vector<1x8x128xf32>
    tpu.vector_store %arg36[%c0_358, %c0_359, %c0_360], %791 {strides = array<i32>} : memref<1x8x128xf32, #tpu.memory_space<vmem>>, vector<1x8x128xf32>,
    return
  }
  func.func @transform_0(%arg0: i32) -> (i32, i32, i32) {
    %c0_i32 = arith.constant 0 : i32
    %c0_i32_0 = arith.constant 0 : i32
    %c0_i32_1 = arith.constant 0 : i32
    return %arg0, %c0_i32, %c0_i32_0 : i32, i32, i32
  }
  func.func @transform_1(%arg0: i32) -> (i32, i32, i32) {
    %c0_i32 = arith.constant 0 : i32
    %c0_i32_0 = arith.constant 0 : i32
    %c0_i32_1 = arith.constant 0 : i32
    return %arg0, %c0_i32, %c0_i32_0 : i32, i32, i32
  }
  func.func @transform_2(%arg0: i32) -> (i32, i32, i32) {
    %c0_i32 = arith.constant 0 : i32
    %c0_i32_0 = arith.constant 0 : i32
    %c0_i32_1 = arith.constant 0 : i32
    return %arg0, %c0_i32, %c0_i32_0 : i32, i32, i32
  }
  func.func @transform_3(%arg0: i32) -> (i32, i32, i32) {
    %c0_i32 = arith.constant 0 : i32
    %c0_i32_0 = arith.constant 0 : i32
    %c0_i32_1 = arith.constant 0 : i32
    %c0_i32_2 = arith.constant 0 : i32
    return %c0_i32, %c0_i32_0, %c0_i32_1 : i32, i32, i32
  }
  func.func @transform_4(%arg0: i32) -> (i32, i32, i32) {
    %c0_i32 = arith.constant 0 : i32
    %c0_i32_0 = arith.constant 0 : i32
    %c0_i32_1 = arith.constant 0 : i32
    %c0_i32_2 = arith.constant 0 : i32
    return %c0_i32, %c0_i32_0, %c0_i32_1 : i32, i32, i32
  }
  func.func @transform_5(%arg0: i32) -> (i32, i32, i32) {
    %c0_i32 = arith.constant 0 : i32
    %c0_i32_0 = arith.constant 0 : i32
    %c0_i32_1 = arith.constant 0 : i32
    %c0_i32_2 = arith.constant 0 : i32
    return %c0_i32, %c0_i32_0, %c0_i32_1 : i32, i32, i32
  }
  func.func @transform_6(%arg0: i32) -> (i32, i32, i32) {
    %c0_i32 = arith.constant 0 : i32
    %c0_i32_0 = arith.constant 0 : i32
    %c0_i32_1 = arith.constant 0 : i32
    %c0_i32_2 = arith.constant 0 : i32
    return %c0_i32, %c0_i32_0, %c0_i32_1 : i32, i32, i32
  }
  func.func @transform_7(%arg0: i32) -> (i32, i32, i32) {
    %c0_i32 = arith.constant 0 : i32
    %c0_i32_0 = arith.constant 0 : i32
    %c0_i32_1 = arith.constant 0 : i32
    %c0_i32_2 = arith.constant 0 : i32
    return %c0_i32, %c0_i32_0, %c0_i32_1 : i32, i32, i32
  }
  func.func @transform_8(%arg0: i32) -> (i32, i32, i32) {
    %c0_i32 = arith.constant 0 : i32
    %c0_i32_0 = arith.constant 0 : i32
    %c0_i32_1 = arith.constant 0 : i32
    %c0_i32_2 = arith.constant 0 : i32
    return %c0_i32, %c0_i32_0, %c0_i32_1 : i32, i32, i32
  }
  func.func @transform_9(%arg0: i32) -> (i32, i32, i32) {
    %c0_i32 = arith.constant 0 : i32
    %c0_i32_0 = arith.constant 0 : i32
    %c0_i32_1 = arith.constant 0 : i32
    %c0_i32_2 = arith.constant 0 : i32
    return %c0_i32, %c0_i32_0, %c0_i32_1 : i32, i32, i32
  }
  func.func @transform_10(%arg0: i32) -> (i32, i32, i32) {
    %c0_i32 = arith.constant 0 : i32
    %c0_i32_0 = arith.constant 0 : i32
    %c0_i32_1 = arith.constant 0 : i32
    %c0_i32_2 = arith.constant 0 : i32
    return %c0_i32, %c0_i32_0, %c0_i32_1 : i32, i32, i32
  }
  func.func @transform_11(%arg0: i32) -> (i32, i32, i32) {
    %c0_i32 = arith.constant 0 : i32
    %c0_i32_0 = arith.constant 0 : i32
    %c0_i32_1 = arith.constant 0 : i32
    %c0_i32_2 = arith.constant 0 : i32
    return %c0_i32, %c0_i32_0, %c0_i32_1 : i32, i32, i32
  }
  func.func @transform_12(%arg0: i32) -> (i32, i32, i32) {
    %c0_i32 = arith.constant 0 : i32
    %c0_i32_0 = arith.constant 0 : i32
    %c0_i32_1 = arith.constant 0 : i32
    %c0_i32_2 = arith.constant 0 : i32
    return %c0_i32, %c0_i32_0, %c0_i32_1 : i32, i32, i32
  }
  func.func @transform_13(%arg0: i32) -> (i32, i32, i32) {
    %c0_i32 = arith.constant 0 : i32
    %c0_i32_0 = arith.constant 0 : i32
    %c0_i32_1 = arith.constant 0 : i32
    %c0_i32_2 = arith.constant 0 : i32
    return %c0_i32, %c0_i32_0, %c0_i32_1 : i32, i32, i32
  }
  func.func @transform_14(%arg0: i32) -> (i32, i32, i32) {
    %c0_i32 = arith.constant 0 : i32
    %c0_i32_0 = arith.constant 0 : i32
    %c0_i32_1 = arith.constant 0 : i32
    %c0_i32_2 = arith.constant 0 : i32
    return %c0_i32, %c0_i32_0, %c0_i32_1 : i32, i32, i32
  }
  func.func @transform_15(%arg0: i32) -> (i32, i32, i32) {
    %c0_i32 = arith.constant 0 : i32
    %c0_i32_0 = arith.constant 0 : i32
    %c0_i32_1 = arith.constant 0 : i32
    %c0_i32_2 = arith.constant 0 : i32
    return %c0_i32, %c0_i32_0, %c0_i32_1 : i32, i32, i32
  }
  func.func @transform_16(%arg0: i32) -> (i32, i32, i32) {
    %c0_i32 = arith.constant 0 : i32
    %c0_i32_0 = arith.constant 0 : i32
    %c0_i32_1 = arith.constant 0 : i32
    %c0_i32_2 = arith.constant 0 : i32
    return %c0_i32, %c0_i32_0, %c0_i32_1 : i32, i32, i32
  }
  func.func @transform_17(%arg0: i32) -> (i32, i32, i32) {
    %c0_i32 = arith.constant 0 : i32
    %c0_i32_0 = arith.constant 0 : i32
    %c0_i32_1 = arith.constant 0 : i32
    %c0_i32_2 = arith.constant 0 : i32
    return %c0_i32, %c0_i32_0, %c0_i32_1 : i32, i32, i32
  }
  func.func @transform_18(%arg0: i32) -> (i32, i32, i32) {
    %c0_i32 = arith.constant 0 : i32
    %c0_i32_0 = arith.constant 0 : i32
    %c0_i32_1 = arith.constant 0 : i32
    %c0_i32_2 = arith.constant 0 : i32
    return %c0_i32, %c0_i32_0, %c0_i32_1 : i32, i32, i32
  }
  func.func @transform_19(%arg0: i32) -> (i32, i32, i32) {
    %c0_i32 = arith.constant 0 : i32
    %c0_i32_0 = arith.constant 0 : i32
    %c0_i32_1 = arith.constant 0 : i32
    %c0_i32_2 = arith.constant 0 : i32
    return %c0_i32, %c0_i32_0, %c0_i32_1 : i32, i32, i32
  }
  func.func @transform_20(%arg0: i32) -> (i32, i32, i32) {
    %c0_i32 = arith.constant 0 : i32
    %c0_i32_0 = arith.constant 0 : i32
    %c0_i32_1 = arith.constant 0 : i32
    %c0_i32_2 = arith.constant 0 : i32
    return %c0_i32, %c0_i32_0, %c0_i32_1 : i32, i32, i32
  }
  func.func @transform_21(%arg0: i32) -> (i32, i32, i32) {
    %c0_i32 = arith.constant 0 : i32
    %c0_i32_0 = arith.constant 0 : i32
    %c0_i32_1 = arith.constant 0 : i32
    %c0_i32_2 = arith.constant 0 : i32
    return %c0_i32, %c0_i32_0, %c0_i32_1 : i32, i32, i32
  }
  func.func @transform_22(%arg0: i32) -> (i32, i32, i32) {
    %c0_i32 = arith.constant 0 : i32
    %c0_i32_0 = arith.constant 0 : i32
    %c0_i32_1 = arith.constant 0 : i32
    %c0_i32_2 = arith.constant 0 : i32
    return %c0_i32, %c0_i32_0, %c0_i32_1 : i32, i32, i32
  }
  func.func @transform_23(%arg0: i32) -> (i32, i32, i32) {
    %c0_i32 = arith.constant 0 : i32
    %c0_i32_0 = arith.constant 0 : i32
    %c0_i32_1 = arith.constant 0 : i32
    %c0_i32_2 = arith.constant 0 : i32
    return %c0_i32, %c0_i32_0, %c0_i32_1 : i32, i32, i32
  }
  func.func @transform_24(%arg0: i32) -> (i32, i32, i32) {
    %c0_i32 = arith.constant 0 : i32
    %c0_i32_0 = arith.constant 0 : i32
    %c0_i32_1 = arith.constant 0 : i32
    %c0_i32_2 = arith.constant 0 : i32
    return %c0_i32, %c0_i32_0, %c0_i32_1 : i32, i32, i32
  }
  func.func @transform_25(%arg0: i32) -> (i32, i32, i32) {
    %c0_i32 = arith.constant 0 : i32
    %c0_i32_0 = arith.constant 0 : i32
    %c0_i32_1 = arith.constant 0 : i32
    %c0_i32_2 = arith.constant 0 : i32
    return %c0_i32, %c0_i32_0, %c0_i32_1 : i32, i32, i32
  }
  func.func @transform_26(%arg0: i32) -> (i32, i32, i32) {
    %c0_i32 = arith.constant 0 : i32
    %c0_i32_0 = arith.constant 0 : i32
    %c0_i32_1 = arith.constant 0 : i32
    %c0_i32_2 = arith.constant 0 : i32
    return %c0_i32, %c0_i32_0, %c0_i32_1 : i32, i32, i32
  }
  func.func @transform_27(%arg0: i32) -> (i32, i32, i32) {
    %c0_i32 = arith.constant 0 : i32
    %c0_i32_0 = arith.constant 0 : i32
    %c0_i32_1 = arith.constant 0 : i32
    %c0_i32_2 = arith.constant 0 : i32
    return %c0_i32, %c0_i32_0, %c0_i32_1 : i32, i32, i32
  }
  func.func @transform_28(%arg0: i32) -> (i32, i32, i32) {
    %c0_i32 = arith.constant 0 : i32
    %c0_i32_0 = arith.constant 0 : i32
    %c0_i32_1 = arith.constant 0 : i32
    %c0_i32_2 = arith.constant 0 : i32
    return %c0_i32, %c0_i32_0, %c0_i32_1 : i32, i32, i32
  }
  func.func @transform_29(%arg0: i32) -> (i32, i32, i32) {
    %c0_i32 = arith.constant 0 : i32
    %c0_i32_0 = arith.constant 0 : i32
    %c0_i32_1 = arith.constant 0 : i32
    %c0_i32_2 = arith.constant 0 : i32
    return %c0_i32, %c0_i32_0, %c0_i32_1 : i32, i32, i32
  }
  func.func @transform_30(%arg0: i32) -> (i32, i32, i32) {
    %c0_i32 = arith.constant 0 : i32
    %c0_i32_0 = arith.constant 0 : i32
    %c0_i32_1 = arith.constant 0 : i32
    %c0_i32_2 = arith.constant 0 : i32
    return %c0_i32, %c0_i32_0, %c0_i32_1 : i32, i32, i32
  }
  func.func @transform_31(%arg0: i32) -> (i32, i32, i32) {
    %c0_i32 = arith.constant 0 : i32
    %c0_i32_0 = arith.constant 0 : i32
    %c0_i32_1 = arith.constant 0 : i32
    %c0_i32_2 = arith.constant 0 : i32
    return %c0_i32, %c0_i32_0, %c0_i32_1 : i32, i32, i32
  }
  func.func @transform_32(%arg0: i32) -> (i32, i32, i32) {
    %c0_i32 = arith.constant 0 : i32
    %c0_i32_0 = arith.constant 0 : i32
    %c0_i32_1 = arith.constant 0 : i32
    %c0_i32_2 = arith.constant 0 : i32
    return %c0_i32, %c0_i32_0, %c0_i32_1 : i32, i32, i32
  }
  func.func @transform_33(%arg0: i32) -> (i32, i32) {
    %c0_i32 = arith.constant 0 : i32
    %c0_i32_0 = arith.constant 0 : i32
    %c0_i32_1 = arith.constant 0 : i32
    return %c0_i32, %c0_i32_0 : i32, i32
  }
  func.func @transform_34(%arg0: i32) -> (i32, i32) {
    %c0_i32 = arith.constant 0 : i32
    %c0_i32_0 = arith.constant 0 : i32
    %c0_i32_1 = arith.constant 0 : i32
    return %c0_i32, %c0_i32_0 : i32, i32
  }
  func.func @transform_35(%arg0: i32) -> (i32, i32, i32) {
    %c0_i32 = arith.constant 0 : i32
    %c0_i32_0 = arith.constant 0 : i32
    %c0_i32_1 = arith.constant 0 : i32
    return %arg0, %c0_i32, %c0_i32_0 : i32, i32, i32
  }
}

</mosaic_0001>

<llo_original>
// kernel: transformer_forward.1
$region0: #{transformer_forward.1}
  #allocation0 [shape = 'u32[]', space=smem, size = 0x4, offset = 0x4, fixed_abs, tag = 'smem constant byte address 0x4 - core index']
  #allocation1 [shape = 'u32[144,128]{1,0:T(1,128)}', space=vmem, size = 0x12000, scoped, tag = 'internal scratch']
  %s0 = inlined_call_operand.smem [shape: u32[36], index: -1, kind: input, shape index: {}]
  %s1 = sld [smem:[%s0]]
  %s2 = scalar_lea.smem %s0, 1
  %s3 = sld [smem:[%s2]]
  %s4 = scalar_lea.smem %s0, 2
  %s5 = sld [smem:[%s4]]
  %s6 = scalar_lea.smem %s0, 3
  %s7 = sld [smem:[%s6]]
  %s8 = scalar_lea.smem %s0, 4
  %s9 = sld [smem:[%s8]]
  %s10 = scalar_lea.smem %s0, 5
  %s11 = sld [smem:[%s10]]
  %s12 = scalar_lea.smem %s0, 6
  %s13 = sld [smem:[%s12]]
  %s14 = scalar_lea.smem %s0, 7
  %s15 = sld [smem:[%s14]]
  %s16 = scalar_lea.smem %s0, 8
  %s17 = sld [smem:[%s16]]
  %s18 = scalar_lea.smem %s0, 9
  %s19 = sld [smem:[%s18]]
  %s20 = scalar_lea.smem %s0, 10
  %s21 = sld [smem:[%s20]]
  %s22 = scalar_lea.smem %s0, 11
  %s23 = sld [smem:[%s22]]
  %s24 = scalar_lea.smem %s0, 12
  %s25 = sld [smem:[%s24]]
  %s26 = scalar_lea.smem %s0, 13
  %s27 = sld [smem:[%s26]]
  %s28 = scalar_lea.smem %s0, 14
  %s29 = sld [smem:[%s28]]
  %s30 = scalar_lea.smem %s0, 15
  %s31 = sld [smem:[%s30]]
  %s32 = scalar_lea.smem %s0, 16
  %s33 = sld [smem:[%s32]]
  %s34 = scalar_lea.smem %s0, 17
  %s35 = sld [smem:[%s34]]
  %s36 = scalar_lea.smem %s0, 18
  %s37 = sld [smem:[%s36]]
  %s38 = scalar_lea.smem %s0, 19
  %s39 = sld [smem:[%s38]]
  %s40 = scalar_lea.smem %s0, 20
  %s41 = sld [smem:[%s40]]
  %s42 = scalar_lea.smem %s0, 21
  %s43 = sld [smem:[%s42]]
  %s44 = scalar_lea.smem %s0, 22
  %s45 = sld [smem:[%s44]]
  %s46 = scalar_lea.smem %s0, 23
  %s47 = sld [smem:[%s46]]
  %s48 = scalar_lea.smem %s0, 24
  %s49 = sld [smem:[%s48]]
  %s50 = scalar_lea.smem %s0, 25
  %s51 = sld [smem:[%s50]]
  %s52 = scalar_lea.smem %s0, 26
  %s53 = sld [smem:[%s52]]
  %s54 = scalar_lea.smem %s0, 27
  %s55 = sld [smem:[%s54]]
  %s56 = scalar_lea.smem %s0, 28
  %s57 = sld [smem:[%s56]]
  %s58 = scalar_lea.smem %s0, 29
  %s59 = sld [smem:[%s58]]
  %s60 = scalar_lea.smem %s0, 30
  %s61 = sld [smem:[%s60]]
  %s62 = scalar_lea.smem %s0, 31
  %s63 = sld [smem:[%s62]]
  %s64 = scalar_lea.smem %s0, 32
  %s65 = sld [smem:[%s64]]
  %s66 = scalar_lea.smem %s0, 33
  %s67 = sld [smem:[%s66]]
  %s68 = scalar_lea.smem %s0, 34
  %s69 = sld [smem:[%s68]]
  %s70 = scalar_lea.smem %s0, 35
  %s71 = sld [smem:[%s70]]
  %s72 = sld [smem:[#allocation0]]
  $region173: #{transformer_forward.1} parent=0
    _
  %s74 = ssub.s32 1, %s72
  %s75 = scalar_select 0, %s74, %s72
  $region1: #{transformer_forward.1} parent=0
    #allocation2 [shape = 'u8[8192]{0}', space=vmem, size = 0x2000, scoped, tag = 'output window, operand 0']
    #allocation3 [shape = 's32[2]{0}', space=sflag, size = 0x8, scoped, tag = 'scoped memory for transformer_forward.1']
    %76 = vsyncpa [#allocation3], 0
    %s77 = scalar_lea.sflag [#allocation3], 1
    %78 = vsyncpa %s77, 0
    loop: start=0, step=1, limit=4
    $region2: #{transformer_forward.1} parent=1 // loop_pre_header
      _
    $region3: #{transformer_forward.1} parent=1 // loop_header
      %s80 = sphi 0, %s84
      %p81 = scmp.ge.s32.totalorder %s80, 4
      %s90 = sphi 0, %s92
      %s93 = sphi 0, %s90
      %s94 = sphi 0, %s93
      %s110 = sphi 0, %s94
      %s116 = sphi 0, %s118
      %s119 = sphi 0, %s116
      %s120 = sphi 0, %s119
      %s136 = sphi 0, %s120
      %s142 = sphi 0, %s144
      %s145 = sphi 0, %s142
      %s146 = sphi 0, %s145
      %s162 = sphi 0, %s146
      %s166 = sphi 0, %s166
      %s168 = sphi 0, %s166
      %s169 = sphi 0, %s168
      %s183 = sphi 0, %s169
      %s187 = sphi 0, %s187
      %s189 = sphi 0, %s187
      %s190 = sphi 0, %s189
      %s204 = sphi 0, %s190
      %s208 = sphi 0, %s208
      %s210 = sphi 0, %s208
      %s211 = sphi 0, %s210
      %s225 = sphi 0, %s211
      %s229 = sphi 0, %s229
      %s231 = sphi 0, %s229
      %s232 = sphi 0, %s231
      %s246 = sphi 0, %s232
      %s250 = sphi 0, %s250
      %s252 = sphi 0, %s250
      %s253 = sphi 0, %s252
      %s267 = sphi 0, %s253
      %s271 = sphi 0, %s271
      %s273 = sphi 0, %s271
      %s274 = sphi 0, %s273
      %s288 = sphi 0, %s274
      %s292 = sphi 0, %s292
      %s294 = sphi 0, %s292
      %s295 = sphi 0, %s294
      %s309 = sphi 0, %s295
      %s313 = sphi 0, %s313
      %s315 = sphi 0, %s313
      %s316 = sphi 0, %s315
      %s330 = sphi 0, %s316
      %s334 = sphi 0, %s334
      %s336 = sphi 0, %s334
      %s337 = sphi 0, %s336
      %s351 = sphi 0, %s337
      %s355 = sphi 0, %s355
      %s357 = sphi 0, %s355
      %s358 = sphi 0, %s357
      %s372 = sphi 0, %s358
      %s376 = sphi 0, %s376
      %s378 = sphi 0, %s376
      %s379 = sphi 0, %s378
      %s393 = sphi 0, %s379
      %s397 = sphi 0, %s397
      %s399 = sphi 0, %s397
      %s400 = sphi 0, %s399
      %s414 = sphi 0, %s400
      %s418 = sphi 0, %s418
      %s420 = sphi 0, %s418
      %s421 = sphi 0, %s420
      %s435 = sphi 0, %s421
      %s439 = sphi 0, %s439
      %s441 = sphi 0, %s439
      %s442 = sphi 0, %s441
      %s456 = sphi 0, %s442
      %s460 = sphi 0, %s460
      %s462 = sphi 0, %s460
      %s463 = sphi 0, %s462
      %s477 = sphi 0, %s463
      %s481 = sphi 0, %s481
      %s483 = sphi 0, %s481
      %s484 = sphi 0, %s483
      %s498 = sphi 0, %s484
      %s502 = sphi 0, %s502
      %s504 = sphi 0, %s502
      %s505 = sphi 0, %s504
      %s519 = sphi 0, %s505
      %s523 = sphi 0, %s523
      %s525 = sphi 0, %s523
      %s526 = sphi 0, %s525
      %s540 = sphi 0, %s526
      %s544 = sphi 0, %s544
      %s546 = sphi 0, %s544
      %s547 = sphi 0, %s546
      %s561 = sphi 0, %s547
      %s565 = sphi 0, %s565
      %s567 = sphi 0, %s565
      %s568 = sphi 0, %s567
      %s582 = sphi 0, %s568
      %s586 = sphi 0, %s586
      %s588 = sphi 0, %s586
      %s589 = sphi 0, %s588
      %s603 = sphi 0, %s589
      %s607 = sphi 0, %s607
      %s609 = sphi 0, %s607
      %s610 = sphi 0, %s609
      %s624 = sphi 0, %s610
      %s628 = sphi 0, %s628
      %s630 = sphi 0, %s628
      %s631 = sphi 0, %s630
      %s645 = sphi 0, %s631
      %s649 = sphi 0, %s649
      %s651 = sphi 0, %s649
      %s652 = sphi 0, %s651
      %s666 = sphi 0, %s652
      %s670 = sphi 0, %s670
      %s672 = sphi 0, %s670
      %s673 = sphi 0, %s672
      %s687 = sphi 0, %s673
      %s691 = sphi 0, %s691
      %s693 = sphi 0, %s691
      %s694 = sphi 0, %s693
      %s708 = sphi 0, %s694
      %s712 = sphi 0, %s712
      %s714 = sphi 0, %s712
      %s715 = sphi 0, %s714
      %s729 = sphi 0, %s715
      %s733 = sphi 0, %s733
      %s735 = sphi 0, %s733
      %s736 = sphi 0, %s735
      %s750 = sphi 0, %s736
      %s754 = sphi 0, %s754
      %s756 = sphi 0, %s754
      %s757 = sphi 0, %s756
      %s771 = sphi 0, %s757
      %s775 = sphi 0, %s775
      %s777 = sphi 0, %s775
      %s778 = sphi 0, %s777
      %s792 = sphi 0, %s778
      %s796 = sphi 0, %s796
      %s798 = sphi 0, %s796
      %s799 = sphi 0, %s798
      %s813 = sphi 0, %s799
      %s817 = sphi 0, %s817
      %s819 = sphi 0, %s817
      %s820 = sphi 0, %s819
      %s834 = sphi 0, %s820
      %s840 = sphi 0, %s842
      %s843 = sphi 0, %s840
      %s844 = sphi 0, %s843
      %s860 = sphi 0, %s844
    $region4: #{transformer_forward.1} parent=1 // loop_header_branch
      %83 = sbr.rel (%p81) target = $region8
    $region5: #{transformer_forward.1} parent=1 // loop_body
      %s85 = ssub.s32 %s80, 1
      %s86 = ssub.s32 %s80, 2
      %s87 = sadd.s32 %s80, 1
      %s88 = ssub.s32 %s80, %s87
      %p89 = scmp.eq.s32.totalorder %s88, 0
      %s91 = sadd.s32 %s90, 1
      %s92 = scalar_select %p89, %s90, %s91
      %p95 = pneg %p89
      %p96 = scmp.eq.s32.totalorder %s80, 1
      %p97 = por %p95, %p96
      %p98 = scmp.ne.s32.totalorder %s90, %s93
      %p99 = scmp.eq.s32.totalorder %s80, 0
      %p100 = por %p98, %p99
      %p101 = scmp.ne.s32.totalorder %s90, %s93
      %p102 = scmp.eq.s32.totalorder %s85, 1
      %p103 = por %p101, %p102
      %p104 = scmp.ne.s32.totalorder %s93, %s94
      %p105 = scmp.eq.s32.totalorder %s85, 0
      %p106 = por %p104, %p105
      %p107 = scmp.ne.s32.totalorder %s93, %s94
      %p108 = scmp.eq.s32.totalorder %s86, 1
      %p109 = por %p107, %p108
      %p111 = scmp.ne.s32.totalorder %s94, %s110
      %p112 = scmp.eq.s32.totalorder %s86, 0
      %p113 = por %p111, %p112
      %s114 = ssub.s32 %s80, %s87
      %p115 = scmp.eq.s32.totalorder %s114, 0
      %s117 = sadd.s32 %s116, 1
      %s118 = scalar_select %p115, %s116, %s117
      %p121 = pneg %p115
      %p122 = scmp.eq.s32.totalorder %s80, 1
      %p123 = por %p121, %p122
      %p124 = scmp.ne.s32.totalorder %s116, %s119
      %p125 = scmp.eq.s32.totalorder %s80, 0
      %p126 = por %p124, %p125
      %p127 = scmp.ne.s32.totalorder %s116, %s119
      %p128 = scmp.eq.s32.totalorder %s85, 1
      %p129 = por %p127, %p128
      %p130 = scmp.ne.s32.totalorder %s119, %s120
      %p131 = scmp.eq.s32.totalorder %s85, 0
      %p132 = por %p130, %p131
      %p133 = scmp.ne.s32.totalorder %s119, %s120
      %p134 = scmp.eq.s32.totalorder %s86, 1
      %p135 = por %p133, %p134
      %p137 = scmp.ne.s32.totalorder %s120, %s136
      %p138 = scmp.eq.s32.totalorder %s86, 0
      %p139 = por %p137, %p138
      %s140 = ssub.s32 %s80, %s87
      %p141 = scmp.eq.s32.totalorder %s140, 0
      %s143 = sadd.s32 %s142, 1
      %s144 = scalar_select %p141, %s142, %s143
      %p147 = pneg %p141
      %p148 = scmp.eq.s32.totalorder %s80, 1
      %p149 = por %p147, %p148
      %p150 = scmp.ne.s32.totalorder %s142, %s145
      %p151 = scmp.eq.s32.totalorder %s80, 0
      %p152 = por %p150, %p151
      %p153 = scmp.ne.s32.totalorder %s142, %s145
      %p154 = scmp.eq.s32.totalorder %s85, 1
      %p155 = por %p153, %p154
      %p156 = scmp.ne.s32.totalorder %s145, %s146
      %p157 = scmp.eq.s32.totalorder %s85, 0
      %p158 = por %p156, %p157
      %p159 = scmp.ne.s32.totalorder %s145, %s146
      %p160 = scmp.eq.s32.totalorder %s86, 1
      %p161 = por %p159, %p160
      %p163 = scmp.ne.s32.totalorder %s146, %s162
      %p164 = scmp.eq.s32.totalorder %s86, 0
      %p165 = por %p163, %p164
      %s167 = sadd.s32 %s166, 1
      %p170 = scmp.eq.s32.totalorder %s80, 1
      %p171 = scmp.ne.s32.totalorder %s166, %s168
      %p172 = scmp.eq.s32.totalorder %s80, 0
      %p173 = por %p171, %p172
      %p174 = scmp.ne.s32.totalorder %s166, %s168
      %p175 = scmp.eq.s32.totalorder %s85, 1
      %p176 = por %p174, %p175
      %p177 = scmp.ne.s32.totalorder %s168, %s169
      %p178 = scmp.eq.s32.totalorder %s85, 0
      %p179 = por %p177, %p178
      %p180 = scmp.ne.s32.totalorder %s168, %s169
      %p181 = scmp.eq.s32.totalorder %s86, 1
      %p182 = por %p180, %p181
      %p184 = scmp.ne.s32.totalorder %s169, %s183
      %p185 = scmp.eq.s32.totalorder %s86, 0
      %p186 = por %p184, %p185
      %s188 = sadd.s32 %s187, 1
      %p191 = scmp.eq.s32.totalorder %s80, 1
      %p192 = scmp.ne.s32.totalorder %s187, %s189
      %p193 = scmp.eq.s32.totalorder %s80, 0
      %p194 = por %p192, %p193
      %p195 = scmp.ne.s32.totalorder %s187, %s189
      %p196 = scmp.eq.s32.totalorder %s85, 1
      %p197 = por %p195, %p196
      %p198 = scmp.ne.s32.totalorder %s189, %s190
      %p199 = scmp.eq.s32.totalorder %s85, 0
      %p200 = por %p198, %p199
      %p201 = scmp.ne.s32.totalorder %s189, %s190
      %p202 = scmp.eq.s32.totalorder %s86, 1
      %p203 = por %p201, %p202
      %p205 = scmp.ne.s32.totalorder %s190, %s204
      %p206 = scmp.eq.s32.totalorder %s86, 0
      %p207 = por %p205, %p206
      %s209 = sadd.s32 %s208, 1
      %p212 = scmp.eq.s32.totalorder %s80, 1
      %p213 = scmp.ne.s32.totalorder %s208, %s210
      %p214 = scmp.eq.s32.totalorder %s80, 0
      %p215 = por %p213, %p214
      %p216 = scmp.ne.s32.totalorder %s208, %s210
      %p217 = scmp.eq.s32.totalorder %s85, 1
      %p218 = por %p216, %p217
      %p219 = scmp.ne.s32.totalorder %s210, %s211
      %p220 = scmp.eq.s32.totalorder %s85, 0
      %p221 = por %p219, %p220
      %p222 = scmp.ne.s32.totalorder %s210, %s211
      %p223 = scmp.eq.s32.totalorder %s86, 1
      %p224 = por %p222, %p223
      %p226 = scmp.ne.s32.totalorder %s211, %s225
      %p227 = scmp.eq.s32.totalorder %s86, 0
      %p228 = por %p226, %p227
      %s230 = sadd.s32 %s229, 1
      %p233 = scmp.eq.s32.totalorder %s80, 1
      %p234 = scmp.ne.s32.totalorder %s229, %s231
      %p235 = scmp.eq.s32.totalorder %s80, 0
      %p236 = por %p234, %p235
      %p237 = scmp.ne.s32.totalorder %s229, %s231
      %p238 = scmp.eq.s32.totalorder %s85, 1
      %p239 = por %p237, %p238
      %p240 = scmp.ne.s32.totalorder %s231, %s232
      %p241 = scmp.eq.s32.totalorder %s85, 0
      %p242 = por %p240, %p241
      %p243 = scmp.ne.s32.totalorder %s231, %s232
      %p244 = scmp.eq.s32.totalorder %s86, 1
      %p245 = por %p243, %p244
      %p247 = scmp.ne.s32.totalorder %s232, %s246
      %p248 = scmp.eq.s32.totalorder %s86, 0
      %p249 = por %p247, %p248
      %s251 = sadd.s32 %s250, 1
      %p254 = scmp.eq.s32.totalorder %s80, 1
      %p255 = scmp.ne.s32.totalorder %s250, %s252
      %p256 = scmp.eq.s32.totalorder %s80, 0
      %p257 = por %p255, %p256
      %p258 = scmp.ne.s32.totalorder %s250, %s252
      %p259 = scmp.eq.s32.totalorder %s85, 1
      %p260 = por %p258, %p259
      %p261 = scmp.ne.s32.totalorder %s252, %s253
      %p262 = scmp.eq.s32.totalorder %s85, 0
      %p263 = por %p261, %p262
      %p264 = scmp.ne.s32.totalorder %s252, %s253
      %p265 = scmp.eq.s32.totalorder %s86, 1
      %p266 = por %p264, %p265
      %p268 = scmp.ne.s32.totalorder %s253, %s267
      %p269 = scmp.eq.s32.totalorder %s86, 0
      %p270 = por %p268, %p269
      %s272 = sadd.s32 %s271, 1
      %p275 = scmp.eq.s32.totalorder %s80, 1
      %p276 = scmp.ne.s32.totalorder %s271, %s273
      %p277 = scmp.eq.s32.totalorder %s80, 0
      %p278 = por %p276, %p277
      %p279 = scmp.ne.s32.totalorder %s271, %s273
      %p280 = scmp.eq.s32.totalorder %s85, 1
      %p281 = por %p279, %p280
      %p282 = scmp.ne.s32.totalorder %s273, %s274
      %p283 = scmp.eq.s32.totalorder %s85, 0
      %p284 = por %p282, %p283
      %p285 = scmp.ne.s32.totalorder %s273, %s274
      %p286 = scmp.eq.s32.totalorder %s86, 1
      %p287 = por %p285, %p286
      %p289 = scmp.ne.s32.totalorder %s274, %s288
      %p290 = scmp.eq.s32.totalorder %s86, 0
      %p291 = por %p289, %p290
      %s293 = sadd.s32 %s292, 1
      %p296 = scmp.eq.s32.totalorder %s80, 1
      %p297 = scmp.ne.s32.totalorder %s292, %s294
      %p298 = scmp.eq.s32.totalorder %s80, 0
      %p299 = por %p297, %p298
      %p300 = scmp.ne.s32.totalorder %s292, %s294
      %p301 = scmp.eq.s32.totalorder %s85, 1
      %p302 = por %p300, %p301
      %p303 = scmp.ne.s32.totalorder %s294, %s295
      %p304 = scmp.eq.s32.totalorder %s85, 0
      %p305 = por %p303, %p304
      %p306 = scmp.ne.s32.totalorder %s294, %s295
      %p307 = scmp.eq.s32.totalorder %s86, 1
      %p308 = por %p306, %p307
      %p310 = scmp.ne.s32.totalorder %s295, %s309
      %p311 = scmp.eq.s32.totalorder %s86, 0
      %p312 = por %p310, %p311
      %s314 = sadd.s32 %s313, 1
      %p317 = scmp.eq.s32.totalorder %s80, 1
      %p318 = scmp.ne.s32.totalorder %s313, %s315
      %p319 = scmp.eq.s32.totalorder %s80, 0
      %p320 = por %p318, %p319
      %p321 = scmp.ne.s32.totalorder %s313, %s315
      %p322 = scmp.eq.s32.totalorder %s85, 1
      %p323 = por %p321, %p322
      %p324 = scmp.ne.s32.totalorder %s315, %s316
      %p325 = scmp.eq.s32.totalorder %s85, 0
      %p326 = por %p324, %p325
      %p327 = scmp.ne.s32.totalorder %s315, %s316
      %p328 = scmp.eq.s32.totalorder %s86, 1
      %p329 = por %p327, %p328
      %p331 = scmp.ne.s32.totalorder %s316, %s330
      %p332 = scmp.eq.s32.totalorder %s86, 0
      %p333 = por %p331, %p332
      %s335 = sadd.s32 %s334, 1
      %p338 = scmp.eq.s32.totalorder %s80, 1
      %p339 = scmp.ne.s32.totalorder %s334, %s336
      %p340 = scmp.eq.s32.totalorder %s80, 0
      %p341 = por %p339, %p340
      %p342 = scmp.ne.s32.totalorder %s334, %s336
      %p343 = scmp.eq.s32.totalorder %s85, 1
      %p344 = por %p342, %p343
      %p345 = scmp.ne.s32.totalorder %s336, %s337
      %p346 = scmp.eq.s32.totalorder %s85, 0
      %p347 = por %p345, %p346
      %p348 = scmp.ne.s32.totalorder %s336, %s337
      %p349 = scmp.eq.s32.totalorder %s86, 1
      %p350 = por %p348, %p349
      %p352 = scmp.ne.s32.totalorder %s337, %s351
      %p353 = scmp.eq.s32.totalorder %s86, 0
      %p354 = por %p352, %p353
      %s356 = sadd.s32 %s355, 1
      %p359 = scmp.eq.s32.totalorder %s80, 1
      %p360 = scmp.ne.s32.totalorder %s355, %s357
      %p361 = scmp.eq.s32.totalorder %s80, 0
      %p362 = por %p360, %p361
      %p363 = scmp.ne.s32.totalorder %s355, %s357
      %p364 = scmp.eq.s32.totalorder %s85, 1
      %p365 = por %p363, %p364
      %p366 = scmp.ne.s32.totalorder %s357, %s358
      %p367 = scmp.eq.s32.totalorder %s85, 0
      %p368 = por %p366, %p367
      %p369 = scmp.ne.s32.totalorder %s357, %s358
      %p370 = scmp.eq.s32.totalorder %s86, 1
      %p371 = por %p369, %p370
      %p373 = scmp.ne.s32.totalorder %s358, %s372
      %p374 = scmp.eq.s32.totalorder %s86, 0
      %p375 = por %p373, %p374
      %s377 = sadd.s32 %s376, 1
      %p380 = scmp.eq.s32.totalorder %s80, 1
      %p381 = scmp.ne.s32.totalorder %s376, %s378
      %p382 = scmp.eq.s32.totalorder %s80, 0
      %p383 = por %p381, %p382
      %p384 = scmp.ne.s32.totalorder %s376, %s378
      %p385 = scmp.eq.s32.totalorder %s85, 1
      %p386 = por %p384, %p385
      %p387 = scmp.ne.s32.totalorder %s378, %s379
      %p388 = scmp.eq.s32.totalorder %s85, 0
      %p389 = por %p387, %p388
      %p390 = scmp.ne.s32.totalorder %s378, %s379
      %p391 = scmp.eq.s32.totalorder %s86, 1
      %p392 = por %p390, %p391
      %p394 = scmp.ne.s32.totalorder %s379, %s393
      %p395 = scmp.eq.s32.totalorder %s86, 0
      %p396 = por %p394, %p395
      %s398 = sadd.s32 %s397, 1
      %p401 = scmp.eq.s32.totalorder %s80, 1
      %p402 = scmp.ne.s32.totalorder %s397, %s399
      %p403 = scmp.eq.s32.totalorder %s80, 0
      %p404 = por %p402, %p403
      %p405 = scmp.ne.s32.totalorder %s397, %s399
      %p406 = scmp.eq.s32.totalorder %s85, 1
      %p407 = por %p405, %p406
      %p408 = scmp.ne.s32.totalorder %s399, %s400
      %p409 = scmp.eq.s32.totalorder %s85, 0
      %p410 = por %p408, %p409
      %p411 = scmp.ne.s32.totalorder %s399, %s400
      %p412 = scmp.eq.s32.totalorder %s86, 1
      %p413 = por %p411, %p412
      %p415 = scmp.ne.s32.totalorder %s400, %s414
      %p416 = scmp.eq.s32.totalorder %s86, 0
      %p417 = por %p415, %p416
      %s419 = sadd.s32 %s418, 1
      %p422 = scmp.eq.s32.totalorder %s80, 1
      %p423 = scmp.ne.s32.totalorder %s418, %s420
      %p424 = scmp.eq.s32.totalorder %s80, 0
      %p425 = por %p423, %p424
      %p426 = scmp.ne.s32.totalorder %s418, %s420
      %p427 = scmp.eq.s32.totalorder %s85, 1
      %p428 = por %p426, %p427
      %p429 = scmp.ne.s32.totalorder %s420, %s421
      %p430 = scmp.eq.s32.totalorder %s85, 0
      %p431 = por %p429, %p430
      %p432 = scmp.ne.s32.totalorder %s420, %s421
      %p433 = scmp.eq.s32.totalorder %s86, 1
      %p434 = por %p432, %p433
      %p436 = scmp.ne.s32.totalorder %s421, %s435
      %p437 = scmp.eq.s32.totalorder %s86, 0
      %p438 = por %p436, %p437
      %s440 = sadd.s32 %s439, 1
      %p443 = scmp.eq.s32.totalorder %s80, 1
      %p444 = scmp.ne.s32.totalorder %s439, %s441
      %p445 = scmp.eq.s32.totalorder %s80, 0
      %p446 = por %p444, %p445
      %p447 = scmp.ne.s32.totalorder %s439, %s441
      %p448 = scmp.eq.s32.totalorder %s85, 1
      %p449 = por %p447, %p448
      %p450 = scmp.ne.s32.totalorder %s441, %s442
      %p451 = scmp.eq.s32.totalorder %s85, 0
      %p452 = por %p450, %p451
      %p453 = scmp.ne.s32.totalorder %s441, %s442
      %p454 = scmp.eq.s32.totalorder %s86, 1
      %p455 = por %p453, %p454
      %p457 = scmp.ne.s32.totalorder %s442, %s456
      %p458 = scmp.eq.s32.totalorder %s86, 0
      %p459 = por %p457, %p458
      %s461 = sadd.s32 %s460, 1
      %p464 = scmp.eq.s32.totalorder %s80, 1
      %p465 = scmp.ne.s32.totalorder %s460, %s462
      %p466 = scmp.eq.s32.totalorder %s80, 0
      %p467 = por %p465, %p466
      %p468 = scmp.ne.s32.totalorder %s460, %s462
      %p469 = scmp.eq.s32.totalorder %s85, 1
      %p470 = por %p468, %p469
      %p471 = scmp.ne.s32.totalorder %s462, %s463
      %p472 = scmp.eq.s32.totalorder %s85, 0
      %p473 = por %p471, %p472
      %p474 = scmp.ne.s32.totalorder %s462, %s463
      %p475 = scmp.eq.s32.totalorder %s86, 1
      %p476 = por %p474, %p475
      %p478 = scmp.ne.s32.totalorder %s463, %s477
      %p479 = scmp.eq.s32.totalorder %s86, 0
      %p480 = por %p478, %p479
      %s482 = sadd.s32 %s481, 1
      %p485 = scmp.eq.s32.totalorder %s80, 1
      %p486 = scmp.ne.s32.totalorder %s481, %s483
      %p487 = scmp.eq.s32.totalorder %s80, 0
      %p488 = por %p486, %p487
      %p489 = scmp.ne.s32.totalorder %s481, %s483
      %p490 = scmp.eq.s32.totalorder %s85, 1
      %p491 = por %p489, %p490
      %p492 = scmp.ne.s32.totalorder %s483, %s484
      %p493 = scmp.eq.s32.totalorder %s85, 0
      %p494 = por %p492, %p493
      %p495 = scmp.ne.s32.totalorder %s483, %s484
      %p496 = scmp.eq.s32.totalorder %s86, 1
      %p497 = por %p495, %p496
      %p499 = scmp.ne.s32.totalorder %s484, %s498
      %p500 = scmp.eq.s32.totalorder %s86, 0
      %p501 = por %p499, %p500
      %s503 = sadd.s32 %s502, 1
      %p506 = scmp.eq.s32.totalorder %s80, 1
      %p507 = scmp.ne.s32.totalorder %s502, %s504
      %p508 = scmp.eq.s32.totalorder %s80, 0
      %p509 = por %p507, %p508
      %p510 = scmp.ne.s32.totalorder %s502, %s504
      %p511 = scmp.eq.s32.totalorder %s85, 1
      %p512 = por %p510, %p511
      %p513 = scmp.ne.s32.totalorder %s504, %s505
      %p514 = scmp.eq.s32.totalorder %s85, 0
      %p515 = por %p513, %p514
      %p516 = scmp.ne.s32.totalorder %s504, %s505
      %p517 = scmp.eq.s32.totalorder %s86, 1
      %p518 = por %p516, %p517
      %p520 = scmp.ne.s32.totalorder %s505, %s519
      %p521 = scmp.eq.s32.totalorder %s86, 0
      %p522 = por %p520, %p521
      %s524 = sadd.s32 %s523, 1
      %p527 = scmp.eq.s32.totalorder %s80, 1
      %p528 = scmp.ne.s32.totalorder %s523, %s525
      %p529 = scmp.eq.s32.totalorder %s80, 0
      %p530 = por %p528, %p529
      %p531 = scmp.ne.s32.totalorder %s523, %s525
      %p532 = scmp.eq.s32.totalorder %s85, 1
      %p533 = por %p531, %p532
      %p534 = scmp.ne.s32.totalorder %s525, %s526
      %p535 = scmp.eq.s32.totalorder %s85, 0
      %p536 = por %p534, %p535
      %p537 = scmp.ne.s32.totalorder %s525, %s526
      %p538 = scmp.eq.s32.totalorder %s86, 1
      %p539 = por %p537, %p538
      %p541 = scmp.ne.s32.totalorder %s526, %s540
      %p542 = scmp.eq.s32.totalorder %s86, 0
      %p543 = por %p541, %p542
      %s545 = sadd.s32 %s544, 1
      %p548 = scmp.eq.s32.totalorder %s80, 1
      %p549 = scmp.ne.s32.totalorder %s544, %s546
      %p550 = scmp.eq.s32.totalorder %s80, 0
      %p551 = por %p549, %p550
      %p552 = scmp.ne.s32.totalorder %s544, %s546
      %p553 = scmp.eq.s32.totalorder %s85, 1
      %p554 = por %p552, %p553
      %p555 = scmp.ne.s32.totalorder %s546, %s547
      %p556 = scmp.eq.s32.totalorder %s85, 0
      %p557 = por %p555, %p556
      %p558 = scmp.ne.s32.totalorder %s546, %s547
      %p559 = scmp.eq.s32.totalorder %s86, 1
      %p560 = por %p558, %p559
      %p562 = scmp.ne.s32.totalorder %s547, %s561
      %p563 = scmp.eq.s32.totalorder %s86, 0
      %p564 = por %p562, %p563
      %s566 = sadd.s32 %s565, 1
      %p569 = scmp.eq.s32.totalorder %s80, 1
      %p570 = scmp.ne.s32.totalorder %s565, %s567
      %p571 = scmp.eq.s32.totalorder %s80, 0
      %p572 = por %p570, %p571
      %p573 = scmp.ne.s32.totalorder %s565, %s567
      %p574 = scmp.eq.s32.totalorder %s85, 1
      %p575 = por %p573, %p574
      %p576 = scmp.ne.s32.totalorder %s567, %s568
      %p577 = scmp.eq.s32.totalorder %s85, 0
      %p578 = por %p576, %p577
      %p579 = scmp.ne.s32.totalorder %s567, %s568
      %p580 = scmp.eq.s32.totalorder %s86, 1
      %p581 = por %p579, %p580
      %p583 = scmp.ne.s32.totalorder %s568, %s582
      %p584 = scmp.eq.s32.totalorder %s86, 0
      %p585 = por %p583, %p584
      %s587 = sadd.s32 %s586, 1
      %p590 = scmp.eq.s32.totalorder %s80, 1
      %p591 = scmp.ne.s32.totalorder %s586, %s588
      %p592 = scmp.eq.s32.totalorder %s80, 0
      %p593 = por %p591, %p592
      %p594 = scmp.ne.s32.totalorder %s586, %s588
      %p595 = scmp.eq.s32.totalorder %s85, 1
      %p596 = por %p594, %p595
      %p597 = scmp.ne.s32.totalorder %s588, %s589
      %p598 = scmp.eq.s32.totalorder %s85, 0
      %p599 = por %p597, %p598
      %p600 = scmp.ne.s32.totalorder %s588, %s589
      %p601 = scmp.eq.s32.totalorder %s86, 1
      %p602 = por %p600, %p601
      %p604 = scmp.ne.s32.totalorder %s589, %s603
      %p605 = scmp.eq.s32.totalorder %s86, 0
      %p606 = por %p604, %p605
      %s608 = sadd.s32 %s607, 1
      %p611 = scmp.eq.s32.totalorder %s80, 1
      %p612 = scmp.ne.s32.totalorder %s607, %s609
      %p613 = scmp.eq.s32.totalorder %s80, 0
      %p614 = por %p612, %p613
      %p615 = scmp.ne.s32.totalorder %s607, %s609
      %p616 = scmp.eq.s32.totalorder %s85, 1
      %p617 = por %p615, %p616
      %p618 = scmp.ne.s32.totalorder %s609, %s610
      %p619 = scmp.eq.s32.totalorder %s85, 0
      %p620 = por %p618, %p619
      %p621 = scmp.ne.s32.totalorder %s609, %s610
      %p622 = scmp.eq.s32.totalorder %s86, 1
      %p623 = por %p621, %p622
      %p625 = scmp.ne.s32.totalorder %s610, %s624
      %p626 = scmp.eq.s32.totalorder %s86, 0
      %p627 = por %p625, %p626
      %s629 = sadd.s32 %s628, 1
      %p632 = scmp.eq.s32.totalorder %s80, 1
      %p633 = scmp.ne.s32.totalorder %s628, %s630
      %p634 = scmp.eq.s32.totalorder %s80, 0
      %p635 = por %p633, %p634
      %p636 = scmp.ne.s32.totalorder %s628, %s630
      %p637 = scmp.eq.s32.totalorder %s85, 1
      %p638 = por %p636, %p637
      %p639 = scmp.ne.s32.totalorder %s630, %s631
      %p640 = scmp.eq.s32.totalorder %s85, 0
      %p641 = por %p639, %p640
      %p642 = scmp.ne.s32.totalorder %s630, %s631
      %p643 = scmp.eq.s32.totalorder %s86, 1
      %p644 = por %p642, %p643
      %p646 = scmp.ne.s32.totalorder %s631, %s645
      %p647 = scmp.eq.s32.totalorder %s86, 0
      %p648 = por %p646, %p647
      %s650 = sadd.s32 %s649, 1
      %p653 = scmp.eq.s32.totalorder %s80, 1
      %p654 = scmp.ne.s32.totalorder %s649, %s651
      %p655 = scmp.eq.s32.totalorder %s80, 0
      %p656 = por %p654, %p655
      %p657 = scmp.ne.s32.totalorder %s649, %s651
      %p658 = scmp.eq.s32.totalorder %s85, 1
      %p659 = por %p657, %p658
      %p660 = scmp.ne.s32.totalorder %s651, %s652
      %p661 = scmp.eq.s32.totalorder %s85, 0
      %p662 = por %p660, %p661
      %p663 = scmp.ne.s32.totalorder %s651, %s652
      %p664 = scmp.eq.s32.totalorder %s86, 1
      %p665 = por %p663, %p664
      %p667 = scmp.ne.s32.totalorder %s652, %s666
      %p668 = scmp.eq.s32.totalorder %s86, 0
      %p669 = por %p667, %p668
      %s671 = sadd.s32 %s670, 1
      %p674 = scmp.eq.s32.totalorder %s80, 1
      %p675 = scmp.ne.s32.totalorder %s670, %s672
      %p676 = scmp.eq.s32.totalorder %s80, 0
      %p677 = por %p675, %p676
      %p678 = scmp.ne.s32.totalorder %s670, %s672
      %p679 = scmp.eq.s32.totalorder %s85, 1
      %p680 = por %p678, %p679
      %p681 = scmp.ne.s32.totalorder %s672, %s673
      %p682 = scmp.eq.s32.totalorder %s85, 0
      %p683 = por %p681, %p682
      %p684 = scmp.ne.s32.totalorder %s672, %s673
      %p685 = scmp.eq.s32.totalorder %s86, 1
      %p686 = por %p684, %p685
      %p688 = scmp.ne.s32.totalorder %s673, %s687
      %p689 = scmp.eq.s32.totalorder %s86, 0
      %p690 = por %p688, %p689
      %s692 = sadd.s32 %s691, 1
      %p695 = scmp.eq.s32.totalorder %s80, 1
      %p696 = scmp.ne.s32.totalorder %s691, %s693
      %p697 = scmp.eq.s32.totalorder %s80, 0
      %p698 = por %p696, %p697
      %p699 = scmp.ne.s32.totalorder %s691, %s693
      %p700 = scmp.eq.s32.totalorder %s85, 1
      %p701 = por %p699, %p700
      %p702 = scmp.ne.s32.totalorder %s693, %s694
      %p703 = scmp.eq.s32.totalorder %s85, 0
      %p704 = por %p702, %p703
      %p705 = scmp.ne.s32.totalorder %s693, %s694
      %p706 = scmp.eq.s32.totalorder %s86, 1
      %p707 = por %p705, %p706
      %p709 = scmp.ne.s32.totalorder %s694, %s708
      %p710 = scmp.eq.s32.totalorder %s86, 0
      %p711 = por %p709, %p710
      %s713 = sadd.s32 %s712, 1
      %p716 = scmp.eq.s32.totalorder %s80, 1
      %p717 = scmp.ne.s32.totalorder %s712, %s714
      %p718 = scmp.eq.s32.totalorder %s80, 0
      %p719 = por %p717, %p718
      %p720 = scmp.ne.s32.totalorder %s712, %s714
      %p721 = scmp.eq.s32.totalorder %s85, 1
      %p722 = por %p720, %p721
      %p723 = scmp.ne.s32.totalorder %s714, %s715
      %p724 = scmp.eq.s32.totalorder %s85, 0
      %p725 = por %p723, %p724
      %p726 = scmp.ne.s32.totalorder %s714, %s715
      %p727 = scmp.eq.s32.totalorder %s86, 1
      %p728 = por %p726, %p727
      %p730 = scmp.ne.s32.totalorder %s715, %s729
      %p731 = scmp.eq.s32.totalorder %s86, 0
      %p732 = por %p730, %p731
      %s734 = sadd.s32 %s733, 1
      %p737 = scmp.eq.s32.totalorder %s80, 1
      %p738 = scmp.ne.s32.totalorder %s733, %s735
      %p739 = scmp.eq.s32.totalorder %s80, 0
      %p740 = por %p738, %p739
      %p741 = scmp.ne.s32.totalorder %s733, %s735
      %p742 = scmp.eq.s32.totalorder %s85, 1
      %p743 = por %p741, %p742
      %p744 = scmp.ne.s32.totalorder %s735, %s736
      %p745 = scmp.eq.s32.totalorder %s85, 0
      %p746 = por %p744, %p745
      %p747 = scmp.ne.s32.totalorder %s735, %s736
      %p748 = scmp.eq.s32.totalorder %s86, 1
      %p749 = por %p747, %p748
      %p751 = scmp.ne.s32.totalorder %s736, %s750
      %p752 = scmp.eq.s32.totalorder %s86, 0
      %p753 = por %p751, %p752
      %s755 = sadd.s32 %s754, 1
      %p758 = scmp.eq.s32.totalorder %s80, 1
      %p759 = scmp.ne.s32.totalorder %s754, %s756
      %p760 = scmp.eq.s32.totalorder %s80, 0
      %p761 = por %p759, %p760
      %p762 = scmp.ne.s32.totalorder %s754, %s756
      %p763 = scmp.eq.s32.totalorder %s85, 1
      %p764 = por %p762, %p763
      %p765 = scmp.ne.s32.totalorder %s756, %s757
      %p766 = scmp.eq.s32.totalorder %s85, 0
      %p767 = por %p765, %p766
      %p768 = scmp.ne.s32.totalorder %s756, %s757
      %p769 = scmp.eq.s32.totalorder %s86, 1
      %p770 = por %p768, %p769
      %p772 = scmp.ne.s32.totalorder %s757, %s771
      %p773 = scmp.eq.s32.totalorder %s86, 0
      %p774 = por %p772, %p773
      %s776 = sadd.s32 %s775, 1
      %p779 = scmp.eq.s32.totalorder %s80, 1
      %p780 = scmp.ne.s32.totalorder %s775, %s777
      %p781 = scmp.eq.s32.totalorder %s80, 0
      %p782 = por %p780, %p781
      %p783 = scmp.ne.s32.totalorder %s775, %s777
      %p784 = scmp.eq.s32.totalorder %s85, 1
      %p785 = por %p783, %p784
      %p786 = scmp.ne.s32.totalorder %s777, %s778
      %p787 = scmp.eq.s32.totalorder %s85, 0
      %p788 = por %p786, %p787
      %p789 = scmp.ne.s32.totalorder %s777, %s778
      %p790 = scmp.eq.s32.totalorder %s86, 1
      %p791 = por %p789, %p790
      %p793 = scmp.ne.s32.totalorder %s778, %s792
      %p794 = scmp.eq.s32.totalorder %s86, 0
      %p795 = por %p793, %p794
      %s797 = sadd.s32 %s796, 1
      %p800 = scmp.eq.s32.totalorder %s80, 1
      %p801 = scmp.ne.s32.totalorder %s796, %s798
      %p802 = scmp.eq.s32.totalorder %s80, 0
      %p803 = por %p801, %p802
      %p804 = scmp.ne.s32.totalorder %s796, %s798
      %p805 = scmp.eq.s32.totalorder %s85, 1
      %p806 = por %p804, %p805
      %p807 = scmp.ne.s32.totalorder %s798, %s799
      %p808 = scmp.eq.s32.totalorder %s85, 0
      %p809 = por %p807, %p808
      %p810 = scmp.ne.s32.totalorder %s798, %s799
      %p811 = scmp.eq.s32.totalorder %s86, 1
      %p812 = por %p810, %p811
      %p814 = scmp.ne.s32.totalorder %s799, %s813
      %p815 = scmp.eq.s32.totalorder %s86, 0
      %p816 = por %p814, %p815
      %s818 = sadd.s32 %s817, 1
      %p821 = scmp.eq.s32.totalorder %s80, 1
      %p822 = scmp.ne.s32.totalorder %s817, %s819
      %p823 = scmp.eq.s32.totalorder %s80, 0
      %p824 = por %p822, %p823
      %p825 = scmp.ne.s32.totalorder %s817, %s819
      %p826 = scmp.eq.s32.totalorder %s85, 1
      %p827 = por %p825, %p826
      %p828 = scmp.ne.s32.totalorder %s819, %s820
      %p829 = scmp.eq.s32.totalorder %s85, 0
      %p830 = por %p828, %p829
      %p831 = scmp.ne.s32.totalorder %s819, %s820
      %p832 = scmp.eq.s32.totalorder %s86, 1
      %p833 = por %p831, %p832
      %p835 = scmp.ne.s32.totalorder %s820, %s834
      %p836 = scmp.eq.s32.totalorder %s86, 0
      %p837 = por %p835, %p836
      %s838 = ssub.s32 %s80, %s87
      %p839 = scmp.eq.s32.totalorder %s838, 0
      %s841 = sadd.s32 %s840, 1
      %s842 = scalar_select %p839, %s840, %s841
      %p845 = pneg %p839
      %p846 = scmp.eq.s32.totalorder %s80, 1
      %p847 = por %p845, %p846
      %p848 = scmp.ne.s32.totalorder %s840, %s843
      %p849 = scmp.eq.s32.totalorder %s80, 0
      %p850 = por %p848, %p849
      %p851 = scmp.ne.s32.totalorder %s840, %s843
      %p852 = scmp.eq.s32.totalorder %s85, 1
      %p853 = por %p851, %p852
      %p854 = scmp.ne.s32.totalorder %s843, %s844
      %p855 = scmp.eq.s32.totalorder %s85, 0
      %p856 = por %p854, %p855
      %p857 = scmp.ne.s32.totalorder %s843, %s844
      %p858 = scmp.eq.s32.totalorder %s86, 1
      %p859 = por %p857, %p858
      %p861 = scmp.ne.s32.totalorder %s844, %s860
      %p862 = scmp.eq.s32.totalorder %s86, 0
      %p863 = por %p861, %p862
      %p864 = scmp.le.s32.totalorder 1, %s80
      %p865 = scmp.lt.s32.totalorder %s80, 3
      %p866 = pnand %p864, %p865
      %p867 = pneg %p866
      // Predicated region
      $region9: #{transformer_forward.1} parent=5 // pred_check
        _
      $region10: #{transformer_forward.1} parent=5 // pred_check_branch
        %869 = sbr.rel (%p866) target = $region12
      $region11: #{transformer_forward.1} parent=5 // pred_region
        %s870 = ssub.s32 %s80, 1
        // Predicated region
        $region13: #{transformer_forward.1} parent=11 // pred_check
          %p871 = pneg %p179
        $region14: #{transformer_forward.1} parent=11 // pred_check_branch
          %873 = sbr.rel (%p871) target = $region16
        $region15: #{transformer_forward.1} parent=11 // pred_region
          _
        $region16: #{transformer_forward.1} parent=11 // pred_fallthru
          _
        // Predicated region
        $region17: #{transformer_forward.1} parent=11 // pred_check
          %p874 = pneg %p200
        $region18: #{transformer_forward.1} parent=11 // pred_check_branch
          %876 = sbr.rel (%p874) target = $region20
        $region19: #{transformer_forward.1} parent=11 // pred_region
          _
        $region20: #{transformer_forward.1} parent=11 // pred_fallthru
          _
        // Predicated region
        $region21: #{transformer_forward.1} parent=11 // pred_check
          %p877 = pneg %p221
        $region22: #{transformer_forward.1} parent=11 // pred_check_branch
          %879 = sbr.rel (%p877) target = $region24
        $region23: #{transformer_forward.1} parent=11 // pred_region
          _
        $region24: #{transformer_forward.1} parent=11 // pred_fallthru
          _
        // Predicated region
        $region25: #{transformer_forward.1} parent=11 // pred_check
          %p880 = pneg %p242
        $region26: #{transformer_forward.1} parent=11 // pred_check_branch
          %882 = sbr.rel (%p880) target = $region28
        $region27: #{transformer_forward.1} parent=11 // pred_region
          _
        $region28: #{transformer_forward.1} parent=11 // pred_fallthru
          _
        // Predicated region
        $region29: #{transformer_forward.1} parent=11 // pred_check
          %p883 = pneg %p263
        $region30: #{transformer_forward.1} parent=11 // pred_check_branch
          %885 = sbr.rel (%p883) target = $region32
        $region31: #{transformer_forward.1} parent=11 // pred_region
          _
        $region32: #{transformer_forward.1} parent=11 // pred_fallthru
          _
        // Predicated region
        $region33: #{transformer_forward.1} parent=11 // pred_check
          %p886 = pneg %p284
        $region34: #{transformer_forward.1} parent=11 // pred_check_branch
          %888 = sbr.rel (%p886) target = $region36
        $region35: #{transformer_forward.1} parent=11 // pred_region
          _
        $region36: #{transformer_forward.1} parent=11 // pred_fallthru
          _
        // Predicated region
        $region37: #{transformer_forward.1} parent=11 // pred_check
          %p889 = pneg %p305
        $region38: #{transformer_forward.1} parent=11 // pred_check_branch
          %891 = sbr.rel (%p889) target = $region40
        $region39: #{transformer_forward.1} parent=11 // pred_region
          _
        $region40: #{transformer_forward.1} parent=11 // pred_fallthru
          _
        // Predicated region
        $region41: #{transformer_forward.1} parent=11 // pred_check
          %p892 = pneg %p326
        $region42: #{transformer_forward.1} parent=11 // pred_check_branch
          %894 = sbr.rel (%p892) target = $region44
        $region43: #{transformer_forward.1} parent=11 // pred_region
          _
        $region44: #{transformer_forward.1} parent=11 // pred_fallthru
          _
        // Predicated region
        $region45: #{transformer_forward.1} parent=11 // pred_check
          %p895 = pneg %p347
        $region46: #{transformer_forward.1} parent=11 // pred_check_branch
          %897 = sbr.rel (%p895) target = $region48
        $region47: #{transformer_forward.1} parent=11 // pred_region
          _
        $region48: #{transformer_forward.1} parent=11 // pred_fallthru
          _
        // Predicated region
        $region49: #{transformer_forward.1} parent=11 // pred_check
          %p898 = pneg %p368
        $region50: #{transformer_forward.1} parent=11 // pred_check_branch
          %900 = sbr.rel (%p898) target = $region52
        $region51: #{transformer_forward.1} parent=11 // pred_region
          _
        $region52: #{transformer_forward.1} parent=11 // pred_fallthru
          _
        // Predicated region
        $region53: #{transformer_forward.1} parent=11 // pred_check
          %p901 = pneg %p389
        $region54: #{transformer_forward.1} parent=11 // pred_check_branch
          %903 = sbr.rel (%p901) target = $region56
        $region55: #{transformer_forward.1} parent=11 // pred_region
          _
        $region56: #{transformer_forward.1} parent=11 // pred_fallthru
          _
        // Predicated region
        $region57: #{transformer_forward.1} parent=11 // pred_check
          %p904 = pneg %p410
        $region58: #{transformer_forward.1} parent=11 // pred_check_branch
          %906 = sbr.rel (%p904) target = $region60
        $region59: #{transformer_forward.1} parent=11 // pred_region
          _
        $region60: #{transformer_forward.1} parent=11 // pred_fallthru
          _
        // Predicated region
        $region61: #{transformer_forward.1} parent=11 // pred_check
          %p907 = pneg %p431
        $region62: #{transformer_forward.1} parent=11 // pred_check_branch
          %909 = sbr.rel (%p907) target = $region64
        $region63: #{transformer_forward.1} parent=11 // pred_region
          _
        $region64: #{transformer_forward.1} parent=11 // pred_fallthru
          _
        // Predicated region
        $region65: #{transformer_forward.1} parent=11 // pred_check
          %p910 = pneg %p452
        $region66: #{transformer_forward.1} parent=11 // pred_check_branch
          %912 = sbr.rel (%p910) target = $region68
        $region67: #{transformer_forward.1} parent=11 // pred_region
          _
        $region68: #{transformer_forward.1} parent=11 // pred_fallthru
          _
        // Predicated region
        $region69: #{transformer_forward.1} parent=11 // pred_check
          %p913 = pneg %p473
        $region70: #{transformer_forward.1} parent=11 // pred_check_branch
          %915 = sbr.rel (%p913) target = $region72
        $region71: #{transformer_forward.1} parent=11 // pred_region
          _
        $region72: #{transformer_forward.1} parent=11 // pred_fallthru
          _
        // Predicated region
        $region73: #{transformer_forward.1} parent=11 // pred_check
          %p916 = pneg %p494
        $region74: #{transformer_forward.1} parent=11 // pred_check_branch
          %918 = sbr.rel (%p916) target = $region76
        $region75: #{transformer_forward.1} parent=11 // pred_region
          _
        $region76: #{transformer_forward.1} parent=11 // pred_fallthru
          _
        // Predicated region
        $region77: #{transformer_forward.1} parent=11 // pred_check
          %p919 = pneg %p515
        $region78: #{transformer_forward.1} parent=11 // pred_check_branch
          %921 = sbr.rel (%p919) target = $region80
        $region79: #{transformer_forward.1} parent=11 // pred_region
          _
        $region80: #{transformer_forward.1} parent=11 // pred_fallthru
          _
        // Predicated region
        $region81: #{transformer_forward.1} parent=11 // pred_check
          %p922 = pneg %p536
        $region82: #{transformer_forward.1} parent=11 // pred_check_branch
          %924 = sbr.rel (%p922) target = $region84
        $region83: #{transformer_forward.1} parent=11 // pred_region
          _
        $region84: #{transformer_forward.1} parent=11 // pred_fallthru
          _
        // Predicated region
        $region85: #{transformer_forward.1} parent=11 // pred_check
          %p925 = pneg %p557
        $region86: #{transformer_forward.1} parent=11 // pred_check_branch
          %927 = sbr.rel (%p925) target = $region88
        $region87: #{transformer_forward.1} parent=11 // pred_region
          _
        $region88: #{transformer_forward.1} parent=11 // pred_fallthru
          _
        // Predicated region
        $region89: #{transformer_forward.1} parent=11 // pred_check
          %p928 = pneg %p578
        $region90: #{transformer_forward.1} parent=11 // pred_check_branch
          %930 = sbr.rel (%p928) target = $region92
        $region91: #{transformer_forward.1} parent=11 // pred_region
          _
        $region92: #{transformer_forward.1} parent=11 // pred_fallthru
          _
        // Predicated region
        $region93: #{transformer_forward.1} parent=11 // pred_check
          %p931 = pneg %p599
        $region94: #{transformer_forward.1} parent=11 // pred_check_branch
          %933 = sbr.rel (%p931) target = $region96
        $region95: #{transformer_forward.1} parent=11 // pred_region
          _
        $region96: #{transformer_forward.1} parent=11 // pred_fallthru
          _
        // Predicated region
        $region97: #{transformer_forward.1} parent=11 // pred_check
          %p934 = pneg %p620
        $region98: #{transformer_forward.1} parent=11 // pred_check_branch
          %936 = sbr.rel (%p934) target = $region100
        $region99: #{transformer_forward.1} parent=11 // pred_region
          _
        $region100: #{transformer_forward.1} parent=11 // pred_fallthru
          _
        // Predicated region
        $region101: #{transformer_forward.1} parent=11 // pred_check
          %p937 = pneg %p641
        $region102: #{transformer_forward.1} parent=11 // pred_check_branch
          %939 = sbr.rel (%p937) target = $region104
        $region103: #{transformer_forward.1} parent=11 // pred_region
          _
        $region104: #{transformer_forward.1} parent=11 // pred_fallthru
          _
        // Predicated region
        $region105: #{transformer_forward.1} parent=11 // pred_check
          %p940 = pneg %p662
        $region106: #{transformer_forward.1} parent=11 // pred_check_branch
          %942 = sbr.rel (%p940) target = $region108
        $region107: #{transformer_forward.1} parent=11 // pred_region
          _
        $region108: #{transformer_forward.1} parent=11 // pred_fallthru
          _
        // Predicated region
        $region109: #{transformer_forward.1} parent=11 // pred_check
          %p943 = pneg %p683
        $region110: #{transformer_forward.1} parent=11 // pred_check_branch
          %945 = sbr.rel (%p943) target = $region112
        $region111: #{transformer_forward.1} parent=11 // pred_region
          _
        $region112: #{transformer_forward.1} parent=11 // pred_fallthru
          _
        // Predicated region
        $region113: #{transformer_forward.1} parent=11 // pred_check
          %p946 = pneg %p704
        $region114: #{transformer_forward.1} parent=11 // pred_check_branch
          %948 = sbr.rel (%p946) target = $region116
        $region115: #{transformer_forward.1} parent=11 // pred_region
          _
        $region116: #{transformer_forward.1} parent=11 // pred_fallthru
          _
        // Predicated region
        $region117: #{transformer_forward.1} parent=11 // pred_check
          %p949 = pneg %p725
        $region118: #{transformer_forward.1} parent=11 // pred_check_branch
          %951 = sbr.rel (%p949) target = $region120
        $region119: #{transformer_forward.1} parent=11 // pred_region
          _
        $region120: #{transformer_forward.1} parent=11 // pred_fallthru
          _
        // Predicated region
        $region121: #{transformer_forward.1} parent=11 // pred_check
          %p952 = pneg %p746
        $region122: #{transformer_forward.1} parent=11 // pred_check_branch
          %954 = sbr.rel (%p952) target = $region124
        $region123: #{transformer_forward.1} parent=11 // pred_region
          _
        $region124: #{transformer_forward.1} parent=11 // pred_fallthru
          _
        // Predicated region
        $region125: #{transformer_forward.1} parent=11 // pred_check
          %p955 = pneg %p767
        $region126: #{transformer_forward.1} parent=11 // pred_check_branch
          %957 = sbr.rel (%p955) target = $region128
        $region127: #{transformer_forward.1} parent=11 // pred_region
          _
        $region128: #{transformer_forward.1} parent=11 // pred_fallthru
          _
        // Predicated region
        $region129: #{transformer_forward.1} parent=11 // pred_check
          %p958 = pneg %p788
        $region130: #{transformer_forward.1} parent=11 // pred_check_branch
          %960 = sbr.rel (%p958) target = $region132
        $region131: #{transformer_forward.1} parent=11 // pred_region
          _
        $region132: #{transformer_forward.1} parent=11 // pred_fallthru
          _
        // Predicated region
        $region133: #{transformer_forward.1} parent=11 // pred_check
          %p961 = pneg %p809
        $region134: #{transformer_forward.1} parent=11 // pred_check_branch
          %963 = sbr.rel (%p961) target = $region136
        $region135: #{transformer_forward.1} parent=11 // pred_region
          _
        $region136: #{transformer_forward.1} parent=11 // pred_fallthru
          _
        // Predicated region
        $region137: #{transformer_forward.1} parent=11 // pred_check
          %p964 = pneg %p830
        $region138: #{transformer_forward.1} parent=11 // pred_check_branch
          %966 = sbr.rel (%p964) target = $region140
        $region139: #{transformer_forward.1} parent=11 // pred_region
          _
        $region140: #{transformer_forward.1} parent=11 // pred_fallthru
          _
      $region12: #{transformer_forward.1} parent=5 // pred_fallthru
        _
      %p967 = scmp.lt.s32.totalorder %s80, 2
      // Predicated region
      $region141: #{transformer_forward.1} parent=5 // pred_check
        %p968 = pneg %p967
      $region142: #{transformer_forward.1} parent=5 // pred_check_branch
        %970 = sbr.rel (%p968) target = $region144
      $region143: #{transformer_forward.1} parent=5 // pred_region
        // Predicated region
        $region145: #{transformer_forward.1} parent=143 // pred_check
          %p971 = pneg %p100
        $region146: #{transformer_forward.1} parent=143 // pred_check_branch
          %973 = sbr.rel (%p971) target = $region148
        $region147: #{transformer_forward.1} parent=143 // pred_region
          %p974 = scmp.lt.s32.totalorder %s80, 1
          %s975 = scalar_select %p974, %s80, 1
          %s976 = smul.addr %s975, 8
          %s977 = scalar_lea.vmem %s1, %s976
        $region148: #{transformer_forward.1} parent=143 // pred_fallthru
          _
        // Predicated region
        $region149: #{transformer_forward.1} parent=143 // pred_check
          %p978 = pneg %p126
        $region150: #{transformer_forward.1} parent=143 // pred_check_branch
          %980 = sbr.rel (%p978) target = $region152
        $region151: #{transformer_forward.1} parent=143 // pred_region
          %p981 = scmp.lt.s32.totalorder %s80, 1
          %s982 = scalar_select %p981, %s80, 1
          %s983 = smul.addr %s982, 8
          %s984 = scalar_lea.vmem %s3, %s983
        $region152: #{transformer_forward.1} parent=143 // pred_fallthru
          _
        // Predicated region
        $region153: #{transformer_forward.1} parent=143 // pred_check
          %p985 = pneg %p152
        $region154: #{transformer_forward.1} parent=143 // pred_check_branch
          %987 = sbr.rel (%p985) target = $region156
        $region155: #{transformer_forward.1} parent=143 // pred_region
          %p988 = scmp.lt.s32.totalorder %s80, 1
          %s989 = scalar_select %p988, %s80, 1
          %s990 = scalar_lea.vmem %s5, %s989
        $region156: #{transformer_forward.1} parent=143 // pred_fallthru
          _
      $region144: #{transformer_forward.1} parent=5 // pred_fallthru
        _
      %p991 = scmp.le.s32.totalorder 1, %s80
      %p992 = scmp.lt.s32.totalorder %s80, 3
      %p993 = pnand %p991, %p992
      %p994 = pneg %p993
      // Predicated region
      $region157: #{transformer_forward.1} parent=5 // pred_check
        _
      $region158: #{transformer_forward.1} parent=5 // pred_check_branch
        %996 = sbr.rel (%p993) target = $region160
      $region159: #{transformer_forward.1} parent=5 // pred_region
        %s997 = ssub.s32 %s80, 1
        %p998 = scmp.lt.s32.totalorder %s85, 1
        %s999 = scalar_select %p998, %s85, 1
        %s1000 = smul.addr %s999, 8
        %s1001 = scalar_lea.vmem %s1, %s1000
        %p1002 = pneg %p106
        %p1003 = pneg %p103
        %p1004 = scmp.lt.s32.totalorder %s85, 1
        %s1005 = scalar_select %p1004, %s85, 1
        %s1006 = smul.addr %s1005, 8
        %s1007 = scalar_lea.vmem %s3, %s1006
        %p1008 = pneg %p132
        %p1009 = pneg %p129
        %p1010 = scmp.lt.s32.totalorder %s85, 1
        %s1011 = scalar_select %p1010, %s85, 1
        %s1012 = scalar_lea.vmem %s5, %s1011
        %p1013 = pneg %p158
        %p1014 = pneg %p155
        %p1015 = pneg %p179
        %p1016 = pneg %p176
        %p1017 = pneg %p200
        %p1018 = pneg %p197
        %p1019 = pneg %p221
        %p1020 = pneg %p218
        %p1021 = pneg %p242
        %p1022 = pneg %p239
        %p1023 = pneg %p263
        %p1024 = pneg %p260
        %p1025 = pneg %p284
        %p1026 = pneg %p281
        %p1027 = pneg %p305
        %p1028 = pneg %p302
        %p1029 = pneg %p326
        %p1030 = pneg %p323
        %p1031 = pneg %p347
        %p1032 = pneg %p344
        %p1033 = pneg %p368
        %p1034 = pneg %p365
        %p1035 = pneg %p389
        %p1036 = pneg %p386
        %p1037 = pneg %p410
        %p1038 = pneg %p407
        %p1039 = pneg %p431
        %p1040 = pneg %p428
        %p1041 = pneg %p452
        %p1042 = pneg %p449
        %p1043 = pneg %p473
        %p1044 = pneg %p470
        %p1045 = pneg %p494
        %p1046 = pneg %p491
        %p1047 = pneg %p515
        %p1048 = pneg %p512
        %p1049 = pneg %p536
        %p1050 = pneg %p533
        %p1051 = pneg %p557
        %p1052 = pneg %p554
        %p1053 = pneg %p578
        %p1054 = pneg %p575
        %p1055 = pneg %p599
        %p1056 = pneg %p596
        %p1057 = pneg %p620
        %p1058 = pneg %p617
        %p1059 = pneg %p641
        %p1060 = pneg %p638
        %p1061 = pneg %p662
        %p1062 = pneg %p659
        %p1063 = pneg %p683
        %p1064 = pneg %p680
        %p1065 = pneg %p704
        %p1066 = pneg %p701
        %p1067 = pneg %p725
        %p1068 = pneg %p722
        %p1069 = pneg %p746
        %p1070 = pneg %p743
        %p1071 = pneg %p767
        %p1072 = pneg %p764
        %p1073 = pneg %p788
        %p1074 = pneg %p785
        %p1075 = pneg %p809
        %p1076 = pneg %p806
        %p1077 = pneg %p830
        %p1078 = pneg %p827
        %p1079 = pneg %p856
        %p1080 = pneg %p853
        %s1081 = sand.u32 %s843, 1
        %s1082 = scalar_lea.sflag [#allocation3], %s1081
        %s1083 = sand.u32 %s843, 1
        %s1084 = smul.addr %s1083, 8
        %s1085 = scalar_lea.vmem [#allocation2], %s1084
        %p1086 = scmp.lt.s32.totalorder %s85, 1
        %s1087 = scalar_select %p1086, %s85, 1
        %s1088 = smul.addr %s1087, 8
        %s1089 = scalar_lea.vmem %s1, %s1088
        %p1090 = scmp.lt.s32.totalorder %s85, 1
        %s1091 = scalar_select %p1090, %s85, 1
        %s1092 = smul.addr %s1091, 8
        %s1093 = scalar_lea.vmem %s3, %s1092
        %p1094 = scmp.lt.s32.totalorder %s85, 1
        %s1095 = scalar_select %p1094, %s85, 1
        %s1096 = scalar_lea.vmem %s5, %s1095
        %v1097 = vld [vmem:[%s1096] sm:$0x1]
        %vm1098 = vcmp.ne.f32.partialorder %v1097, 0.0
        %v1099 = vsel %vm1098, 1, 0
        %v1100 = vlaneseq
        %v1101 = vshrl.u32 %v1100, 7
        %v1102 = vsub.s32 0, %v1101
        %v1103 = vrot.slane %v1099, %v1102
        %vm1104 = vcmp.eq.s32.totalorder %v1103, 1
        %v1105 = vlaneseq
        %v1106 = vshrl.u32 %v1105, 7
        %v1107 = vlaneseq
        %v1108 = vand.u32 %v1107, 127
        %vm1109 = vcmp.ge.s32.totalorder %v1106, %v1108
        %v1110 = vld [vmem:[%s1089] sm:$0xff]
        %v1111 = vld [vmem:[%s7] sm:$0xff]
        %v1112 = vld [vmem:[%s7 + $0x8] sm:$0xff]
        %v1113 = vld [vmem:[%s7 + $0x10] sm:$0xff]
        %v1114 = vld [vmem:[%s7 + $0x18] sm:$0xff]
        %v1115 = vld [vmem:[%s9] sm:$0x1]
        %v1116 = vld [vmem:[%s11] sm:$0xff]
        %v1117 = vld [vmem:[%s11 + $0x8] sm:$0xff]
        %v1118 = vld [vmem:[%s11 + $0x10] sm:$0xff]
        %v1119 = vld [vmem:[%s11 + $0x18] sm:$0xff]
        %v1120 = vld [vmem:[%s13] sm:$0x1]
        %v1121 = vld [vmem:[%s15] sm:$0x1]
        %v1122 = vld [vmem:[%s17] sm:$0x1]
        %v1123 = vld [vmem:[%s19] sm:$0x1]
        %v1124 = vld [vmem:[%s21] sm:$0x1]
        %v1125 = vld [vmem:[%s23] sm:$0xff]
        %v1126 = vld [vmem:[%s23 + $0x8] sm:$0xff]
        %v1127 = vld [vmem:[%s23 + $0x10] sm:$0xff]
        %v1128 = vld [vmem:[%s23 + $0x18] sm:$0xff]
        %v1129 = vld [vmem:[%s25] sm:$0x1]
        %v1130 = vld [vmem:[%s27] sm:$0xff]
        %v1131 = vld [vmem:[%s27 + $0x8] sm:$0xff]
        %v1132 = vld [vmem:[%s27 + $0x10] sm:$0xff]
        %v1133 = vld [vmem:[%s27 + $0x18] sm:$0xff]
        %v1134 = vld [vmem:[%s27 + $0x20] sm:$0xff]
        %v1135 = vld [vmem:[%s27 + $0x28] sm:$0xff]
        %v1136 = vld [vmem:[%s27 + $0x30] sm:$0xff]
        %v1137 = vld [vmem:[%s27 + $0x38] sm:$0xff]
        %v1138 = vld [vmem:[%s27 + $0x40] sm:$0xff]
        %v1139 = vld [vmem:[%s27 + $0x48] sm:$0xff]
        %v1140 = vld [vmem:[%s27 + $0x50] sm:$0xff]
        %v1141 = vld [vmem:[%s27 + $0x58] sm:$0xff]
        %v1142 = vld [vmem:[%s27 + $0x60] sm:$0xff]
        %v1143 = vld [vmem:[%s27 + $0x68] sm:$0xff]
        %v1144 = vld [vmem:[%s27 + $0x70] sm:$0xff]
        %v1145 = vld [vmem:[%s27 + $0x78] sm:$0xff]
        %v1146 = vld [vmem:[%s29] sm:$0x1]
        %v1148 = vlaneseq
        %v1149 = vshrl.u32 %v1148, 7
        %v1150 = vsub.s32 0, %v1149
        %v1151 = vrot.slane %v1115, %v1150
        %vm1153 = vcmask 261120
        %v1155 = vsel %vm1153, %v1110, 0
        %1157 = vmatprep.subr.mxu0 0.0
        %1158 = vmatpush1.msra.mxu0 %v1111
        %1159 = vmatprep.subr.mxu0 0.0
        %1160 = vmatpush1.msra.mxu0 %v1112
        %1161 = vmatprep.subr.mxu0 0.0
        %1162 = vmatpush1.msra.mxu0 %v1113
        %1163 = vmatprep.subr.mxu0 0.0
        %1164 = vmatpush1.msra.mxu0 %v1114
        %1165 = vmatprep.subr.mxu0 0.0
        %1166 = vmatpush1.msra.mxu0 0.0
        %1167 = vmatprep.subr.mxu0 0.0
        %1168 = vmatpush1.msra.mxu0 0.0
        %1169 = vmatprep.subr.mxu0 0.0
        %1170 = vmatpush1.msra.mxu0 0.0
        %1171 = vmatprep.subr.mxu0 0.0
        %1172 = vmatpush1.msra.mxu0 0.0
        %1173 = vmatprep.subr.mxu0 0.0
        %1174 = vmatpush1.msra.mxu0 0.0
        %1175 = vmatprep.subr.mxu0 0.0
        %1176 = vmatpush1.msra.mxu0 0.0
        %1177 = vmatprep.subr.mxu0 0.0
        %1178 = vmatpush1.msra.mxu0 0.0
        %1179 = vmatprep.subr.mxu0 0.0
        %1180 = vmatpush1.msra.mxu0 0.0
        %1181 = vmatprep.subr.mxu0 0.0
        %1182 = vmatpush1.msra.mxu0 0.0
        %1183 = vmatprep.subr.mxu0 0.0
        %1184 = vmatpush1.msra.mxu0 0.0
        %1185 = vmatprep.subr.mxu0 0.0
        %1186 = vmatpush1.msra.mxu0 0.0
        %1187 = vmatprep.subr.mxu0 0.0
        %1188 = vmatpush1.msra.mxu0 0.0
        %1189 = vmatprep.subr.mxu0 0.0
        %1190 = vmatpush1.msra.mxu0 0.0
        %1191 = vmatprep.subr.mxu0 0.0
        %1192 = vmatpush1.msra.mxu0 0.0
        %1193 = vmatprep.subr.mxu0 0.0
        %1194 = vmatpush1.msra.mxu0 0.0
        %1195 = vmatprep.subr.mxu0 0.0
        %1196 = vmatpush1.msra.mxu0 0.0
        %1197 = vmatprep.subr.mxu0 0.0
        %1198 = vmatpush1.msra.mxu0 0.0
        %1199 = vmatprep.subr.mxu0 0.0
        %1200 = vmatpush1.msra.mxu0 0.0
        %1201 = vmatprep.subr.mxu0 0.0
        %1202 = vmatpush1.msra.mxu0 0.0
        %1203 = vmatprep.subr.mxu0 0.0
        %1204 = vmatpush1.msra.mxu0 0.0
        %1205 = vmatprep.subr.mxu0 0.0
        %1206 = vmatpush1.msra.mxu0 0.0
        %1207 = vmatprep.subr.mxu0 0.0
        %1208 = vmatpush1.msra.mxu0 0.0
        %1209 = vmatprep.subr.mxu0 0.0
        %1210 = vmatpush1.msra.mxu0 0.0
        %1211 = vmatprep.subr.mxu0 0.0
        %1212 = vmatpush1.msra.mxu0 0.0
        %1213 = vmatprep.subr.mxu0 0.0
        %1214 = vmatpush1.msra.mxu0 0.0
        %1215 = vmatprep.subr.mxu0 0.0
        %1216 = vmatpush1.msra.mxu0 0.0
        %1217 = vmatprep.subr.mxu0 0.0
        %1218 = vmatpush1.msra.mxu0 0.0
        %1219 = vmatprep.subr.mxu0 0.0
        %1220 = vmatpush1.msra.mxu0 0.0
        %1221 = vmatprep.mubr.f32.mxu0 0.0
        %1222 = vmatmul.mubr.f32.gmra.mrb[0].mxu0 %v1155
        %v1223 = vpop.f32.mrb[0].mxu0
        %v1224 = vadd.f32 %v1151, %v1223
        %v1225 = vpop.f32.mrb[0].mxu0
        %1226 = vdwg.mxu0
        %1228 = vrot.lane.b32.xlu0 %v1224, 96
        %v1229 = vpop.permute.xlu0 %1228
        %vm1230 = vcmask 64512
        %v1231 = vsel %vm1230, %v1224, 0
        %v1233 = vsel %vm1230, %v1229, 0
        %1235 = vmatprep.subr.mxu0 0.0
        %1236 = vmatpush1.xpose.msra.mxu0 %v1233
        %1237 = vmatprep.subr.mxu0 0.0
        %1238 = vmatpush1.xpose.msra.mxu0 0.0
        %1239 = vmatprep.subr.mxu0 0.0
        %1240 = vmatpush1.xpose.msra.mxu0 0.0
        %1241 = vmatprep.subr.mxu0 0.0
        %1242 = vmatpush1.xpose.msra.mxu0 0.0
        %1243 = vmatprep.subr.mxu0 0.0
        %1244 = vmatpush1.xpose.msra.mxu0 0.0
        %1245 = vmatprep.subr.mxu0 0.0
        %1246 = vmatpush1.xpose.msra.mxu0 0.0
        %1247 = vmatprep.subr.mxu0 0.0
        %1248 = vmatpush1.xpose.msra.mxu0 0.0
        %1249 = vmatprep.subr.mxu0 0.0
        %1250 = vmatpush1.xpose.msra.mxu0 0.0
        %1251 = vmatprep.subr.mxu0 0.0
        %1252 = vmatpush1.xpose.msra.mxu0 0.0
        %1253 = vmatprep.subr.mxu0 0.0
        %1254 = vmatpush1.xpose.msra.mxu0 0.0
        %1255 = vmatprep.subr.mxu0 0.0
        %1256 = vmatpush1.xpose.msra.mxu0 0.0
        %1257 = vmatprep.subr.mxu0 0.0
        %1258 = vmatpush1.xpose.msra.mxu0 0.0
        %1259 = vmatprep.subr.mxu0 0.0
        %1260 = vmatpush1.xpose.msra.mxu0 0.0
        %1261 = vmatprep.subr.mxu0 0.0
        %1262 = vmatpush1.xpose.msra.mxu0 0.0
        %1263 = vmatprep.subr.mxu0 0.0
        %1264 = vmatpush1.xpose.msra.mxu0 0.0
        %1265 = vmatprep.subr.mxu0 0.0
        %1266 = vmatpush1.xpose.msra.mxu0 0.0
        %1267 = vmatprep.subr.mxu0 0.0
        %1268 = vmatpush1.xpose.msra.mxu0 0.0
        %1269 = vmatprep.subr.mxu0 0.0
        %1270 = vmatpush1.xpose.msra.mxu0 0.0
        %1271 = vmatprep.subr.mxu0 0.0
        %1272 = vmatpush1.xpose.msra.mxu0 0.0
        %1273 = vmatprep.subr.mxu0 0.0
        %1274 = vmatpush1.xpose.msra.mxu0 0.0
        %1275 = vmatprep.subr.mxu0 0.0
        %1276 = vmatpush1.xpose.msra.mxu0 0.0
        %1277 = vmatprep.subr.mxu0 0.0
        %1278 = vmatpush1.xpose.msra.mxu0 0.0
        %1279 = vmatprep.subr.mxu0 0.0
        %1280 = vmatpush1.xpose.msra.mxu0 0.0
        %1281 = vmatprep.subr.mxu0 0.0
        %1282 = vmatpush1.xpose.msra.mxu0 0.0
        %1283 = vmatprep.subr.mxu0 0.0
        %1284 = vmatpush1.xpose.msra.mxu0 0.0
        %1285 = vmatprep.subr.mxu0 0.0
        %1286 = vmatpush1.xpose.msra.mxu0 0.0
        %1287 = vmatprep.subr.mxu0 0.0
        %1288 = vmatpush1.xpose.msra.mxu0 0.0
        %1289 = vmatprep.subr.mxu0 0.0
        %1290 = vmatpush1.xpose.msra.mxu0 0.0
        %1291 = vmatprep.subr.mxu0 0.0
        %1292 = vmatpush1.xpose.msra.mxu0 0.0
        %1293 = vmatprep.subr.mxu0 0.0
        %1294 = vmatpush1.xpose.msra.mxu0 0.0
        %1295 = vmatprep.subr.mxu0 0.0
        %1296 = vmatpush1.xpose.msra.mxu0 0.0
        %1297 = vmatprep.subr.mxu0 0.0
        %1298 = vmatpush1.xpose.msra.mxu0 0.0
        %1299 = vmatprep.mubr.f32.mxu0 0.0
        %1300 = vmatmul.mubr.f32.gmra.mrb[0].mxu0 %v1231
        %v1301 = vpop.f32.mrb[0].mxu0
        %v1302 = vadd.f32 0.0, %v1301
        %v1303 = vpop.f32.mrb[0].mxu0
        %1304 = vdwg.mxu0
        %1305 = vrot.lane.b32.xlu0 %v1224, 120
        %v1306 = vpop.permute.xlu0 %1305
        %1307 = vrot.lane.b32.xlu0 %v1224, 88
        %v1308 = vpop.permute.xlu0 %1307
        %v1309 = vsel %vm1230, %v1306, 0
        %v1311 = vsel %vm1230, %v1308, 0
        %1313 = vmatprep.subr.mxu0 0.0
        %1314 = vmatpush1.xpose.msra.mxu0 %v1311
        %1315 = vmatprep.subr.mxu0 0.0
        %1316 = vmatpush1.xpose.msra.mxu0 0.0
        %1317 = vmatprep.subr.mxu0 0.0
        %1318 = vmatpush1.xpose.msra.mxu0 0.0
        %1319 = vmatprep.subr.mxu0 0.0
        %1320 = vmatpush1.xpose.msra.mxu0 0.0
        %1321 = vmatprep.subr.mxu0 0.0
        %1322 = vmatpush1.xpose.msra.mxu0 0.0
        %1323 = vmatprep.subr.mxu0 0.0
        %1324 = vmatpush1.xpose.msra.mxu0 0.0
        %1325 = vmatprep.subr.mxu0 0.0
        %1326 = vmatpush1.xpose.msra.mxu0 0.0
        %1327 = vmatprep.subr.mxu0 0.0
        %1328 = vmatpush1.xpose.msra.mxu0 0.0
        %1329 = vmatprep.subr.mxu0 0.0
        %1330 = vmatpush1.xpose.msra.mxu0 0.0
        %1331 = vmatprep.subr.mxu0 0.0
        %1332 = vmatpush1.xpose.msra.mxu0 0.0
        %1333 = vmatprep.subr.mxu0 0.0
        %1334 = vmatpush1.xpose.msra.mxu0 0.0
        %1335 = vmatprep.subr.mxu0 0.0
        %1336 = vmatpush1.xpose.msra.mxu0 0.0
        %1337 = vmatprep.subr.mxu0 0.0
        %1338 = vmatpush1.xpose.msra.mxu0 0.0
        %1339 = vmatprep.subr.mxu0 0.0
        %1340 = vmatpush1.xpose.msra.mxu0 0.0
        %1341 = vmatprep.subr.mxu0 0.0
        %1342 = vmatpush1.xpose.msra.mxu0 0.0
        %1343 = vmatprep.subr.mxu0 0.0
        %1344 = vmatpush1.xpose.msra.mxu0 0.0
        %1345 = vmatprep.subr.mxu0 0.0
        %1346 = vmatpush1.xpose.msra.mxu0 0.0
        %1347 = vmatprep.subr.mxu0 0.0
        %1348 = vmatpush1.xpose.msra.mxu0 0.0
        %1349 = vmatprep.subr.mxu0 0.0
        %1350 = vmatpush1.xpose.msra.mxu0 0.0
        %1351 = vmatprep.subr.mxu0 0.0
        %1352 = vmatpush1.xpose.msra.mxu0 0.0
        %1353 = vmatprep.subr.mxu0 0.0
        %1354 = vmatpush1.xpose.msra.mxu0 0.0
        %1355 = vmatprep.subr.mxu0 0.0
        %1356 = vmatpush1.xpose.msra.mxu0 0.0
        %1357 = vmatprep.subr.mxu0 0.0
        %1358 = vmatpush1.xpose.msra.mxu0 0.0
        %1359 = vmatprep.subr.mxu0 0.0
        %1360 = vmatpush1.xpose.msra.mxu0 0.0
        %1361 = vmatprep.subr.mxu0 0.0
        %1362 = vmatpush1.xpose.msra.mxu0 0.0
        %1363 = vmatprep.subr.mxu0 0.0
        %1364 = vmatpush1.xpose.msra.mxu0 0.0
        %1365 = vmatprep.subr.mxu0 0.0
        %1366 = vmatpush1.xpose.msra.mxu0 0.0
        %1367 = vmatprep.subr.mxu0 0.0
        %1368 = vmatpush1.xpose.msra.mxu0 0.0
        %1369 = vmatprep.subr.mxu0 0.0
        %1370 = vmatpush1.xpose.msra.mxu0 0.0
        %1371 = vmatprep.subr.mxu0 0.0
        %1372 = vmatpush1.xpose.msra.mxu0 0.0
        %1373 = vmatprep.subr.mxu0 0.0
        %1374 = vmatpush1.xpose.msra.mxu0 0.0
        %1375 = vmatprep.subr.mxu0 0.0
        %1376 = vmatpush1.xpose.msra.mxu0 0.0
        %1377 = vmatprep.mubr.f32.mxu0 0.0
        %1378 = vmatmul.mubr.f32.gmra.mrb[0].mxu0 %v1309
        %v1379 = vpop.f32.mrb[0].mxu0
        %v1380 = vadd.f32 0.0, %v1379
        %v1381 = vpop.f32.mrb[0].mxu0
        %1382 = vdwg.mxu0
        %1383 = vrot.lane.b32.xlu0 %v1224, 112
        %v1384 = vpop.permute.xlu0 %1383
        %1385 = vrot.lane.b32.xlu0 %v1224, 80
        %v1386 = vpop.permute.xlu0 %1385
        %v1387 = vsel %vm1230, %v1384, 0
        %v1389 = vsel %vm1230, %v1386, 0
        %1391 = vmatprep.subr.mxu0 0.0
        %1392 = vmatpush1.xpose.msra.mxu0 %v1389
        %1393 = vmatprep.subr.mxu0 0.0
        %1394 = vmatpush1.xpose.msra.mxu0 0.0
        %1395 = vmatprep.subr.mxu0 0.0
        %1396 = vmatpush1.xpose.msra.mxu0 0.0
        %1397 = vmatprep.subr.mxu0 0.0
        %1398 = vmatpush1.xpose.msra.mxu0 0.0
        %1399 = vmatprep.subr.mxu0 0.0
        %1400 = vmatpush1.xpose.msra.mxu0 0.0
        %1401 = vmatprep.subr.mxu0 0.0
        %1402 = vmatpush1.xpose.msra.mxu0 0.0
        %1403 = vmatprep.subr.mxu0 0.0
        %1404 = vmatpush1.xpose.msra.mxu0 0.0
        %1405 = vmatprep.subr.mxu0 0.0
        %1406 = vmatpush1.xpose.msra.mxu0 0.0
        %1407 = vmatprep.subr.mxu0 0.0
        %1408 = vmatpush1.xpose.msra.mxu0 0.0
        %1409 = vmatprep.subr.mxu0 0.0
        %1410 = vmatpush1.xpose.msra.mxu0 0.0
        %1411 = vmatprep.subr.mxu0 0.0
        %1412 = vmatpush1.xpose.msra.mxu0 0.0
        %1413 = vmatprep.subr.mxu0 0.0
        %1414 = vmatpush1.xpose.msra.mxu0 0.0
        %1415 = vmatprep.subr.mxu0 0.0
        %1416 = vmatpush1.xpose.msra.mxu0 0.0
        %1417 = vmatprep.subr.mxu0 0.0
        %1418 = vmatpush1.xpose.msra.mxu0 0.0
        %1419 = vmatprep.subr.mxu0 0.0
        %1420 = vmatpush1.xpose.msra.mxu0 0.0
        %1421 = vmatprep.subr.mxu0 0.0
        %1422 = vmatpush1.xpose.msra.mxu0 0.0
        %1423 = vmatprep.subr.mxu0 0.0
        %1424 = vmatpush1.xpose.msra.mxu0 0.0
        %1425 = vmatprep.subr.mxu0 0.0
        %1426 = vmatpush1.xpose.msra.mxu0 0.0
        %1427 = vmatprep.subr.mxu0 0.0
        %1428 = vmatpush1.xpose.msra.mxu0 0.0
        %1429 = vmatprep.subr.mxu0 0.0
        %1430 = vmatpush1.xpose.msra.mxu0 0.0
        %1431 = vmatprep.subr.mxu0 0.0
        %1432 = vmatpush1.xpose.msra.mxu0 0.0
        %1433 = vmatprep.subr.mxu0 0.0
        %1434 = vmatpush1.xpose.msra.mxu0 0.0
        %1435 = vmatprep.subr.mxu0 0.0
        %1436 = vmatpush1.xpose.msra.mxu0 0.0
        %1437 = vmatprep.subr.mxu0 0.0
        %1438 = vmatpush1.xpose.msra.mxu0 0.0
        %1439 = vmatprep.subr.mxu0 0.0
        %1440 = vmatpush1.xpose.msra.mxu0 0.0
        %1441 = vmatprep.subr.mxu0 0.0
        %1442 = vmatpush1.xpose.msra.mxu0 0.0
        %1443 = vmatprep.subr.mxu0 0.0
        %1444 = vmatpush1.xpose.msra.mxu0 0.0
        %1445 = vmatprep.subr.mxu0 0.0
        %1446 = vmatpush1.xpose.msra.mxu0 0.0
        %1447 = vmatprep.subr.mxu0 0.0
        %1448 = vmatpush1.xpose.msra.mxu0 0.0
        %1449 = vmatprep.subr.mxu0 0.0
        %1450 = vmatpush1.xpose.msra.mxu0 0.0
        %1451 = vmatprep.subr.mxu0 0.0
        %1452 = vmatpush1.xpose.msra.mxu0 0.0
        %1453 = vmatprep.subr.mxu0 0.0
        %1454 = vmatpush1.xpose.msra.mxu0 0.0
        %1455 = vmatprep.mubr.f32.mxu0 0.0
        %1456 = vmatmul.mubr.f32.gmra.mrb[0].mxu0 %v1387
        %v1457 = vpop.f32.mrb[0].mxu0
        %v1458 = vadd.f32 0.0, %v1457
        %v1459 = vpop.f32.mrb[0].mxu0
        %1460 = vdwg.mxu0
        %1461 = vrot.lane.b32.xlu0 %v1224, 104
        %v1462 = vpop.permute.xlu0 %1461
        %1463 = vrot.lane.b32.xlu0 %v1224, 72
        %v1464 = vpop.permute.xlu0 %1463
        %v1465 = vsel %vm1230, %v1462, 0
        %v1467 = vsel %vm1230, %v1464, 0
        %1469 = vmatprep.subr.mxu0 0.0
        %1470 = vmatpush1.xpose.msra.mxu0 %v1467
        %1471 = vmatprep.subr.mxu0 0.0
        %1472 = vmatpush1.xpose.msra.mxu0 0.0
        %1473 = vmatprep.subr.mxu0 0.0
        %1474 = vmatpush1.xpose.msra.mxu0 0.0
        %1475 = vmatprep.subr.mxu0 0.0
        %1476 = vmatpush1.xpose.msra.mxu0 0.0
        %1477 = vmatprep.subr.mxu0 0.0
        %1478 = vmatpush1.xpose.msra.mxu0 0.0
        %1479 = vmatprep.subr.mxu0 0.0
        %1480 = vmatpush1.xpose.msra.mxu0 0.0
        %1481 = vmatprep.subr.mxu0 0.0
        %1482 = vmatpush1.xpose.msra.mxu0 0.0
        %1483 = vmatprep.subr.mxu0 0.0
        %1484 = vmatpush1.xpose.msra.mxu0 0.0
        %1485 = vmatprep.subr.mxu0 0.0
        %1486 = vmatpush1.xpose.msra.mxu0 0.0
        %1487 = vmatprep.subr.mxu0 0.0
        %1488 = vmatpush1.xpose.msra.mxu0 0.0
        %1489 = vmatprep.subr.mxu0 0.0
        %1490 = vmatpush1.xpose.msra.mxu0 0.0
        %1491 = vmatprep.subr.mxu0 0.0
        %1492 = vmatpush1.xpose.msra.mxu0 0.0
        %1493 = vmatprep.subr.mxu0 0.0
        %1494 = vmatpush1.xpose.msra.mxu0 0.0
        %1495 = vmatprep.subr.mxu0 0.0
        %1496 = vmatpush1.xpose.msra.mxu0 0.0
        %1497 = vmatprep.subr.mxu0 0.0
        %1498 = vmatpush1.xpose.msra.mxu0 0.0
        %1499 = vmatprep.subr.mxu0 0.0
        %1500 = vmatpush1.xpose.msra.mxu0 0.0
        %1501 = vmatprep.subr.mxu0 0.0
        %1502 = vmatpush1.xpose.msra.mxu0 0.0
        %1503 = vmatprep.subr.mxu0 0.0
        %1504 = vmatpush1.xpose.msra.mxu0 0.0
        %1505 = vmatprep.subr.mxu0 0.0
        %1506 = vmatpush1.xpose.msra.mxu0 0.0
        %1507 = vmatprep.subr.mxu0 0.0
        %1508 = vmatpush1.xpose.msra.mxu0 0.0
        %1509 = vmatprep.subr.mxu0 0.0
        %1510 = vmatpush1.xpose.msra.mxu0 0.0
        %1511 = vmatprep.subr.mxu0 0.0
        %1512 = vmatpush1.xpose.msra.mxu0 0.0
        %1513 = vmatprep.subr.mxu0 0.0
        %1514 = vmatpush1.xpose.msra.mxu0 0.0
        %1515 = vmatprep.subr.mxu0 0.0
        %1516 = vmatpush1.xpose.msra.mxu0 0.0
        %1517 = vmatprep.subr.mxu0 0.0
        %1518 = vmatpush1.xpose.msra.mxu0 0.0
        %1519 = vmatprep.subr.mxu0 0.0
        %1520 = vmatpush1.xpose.msra.mxu0 0.0
        %1521 = vmatprep.subr.mxu0 0.0
        %1522 = vmatpush1.xpose.msra.mxu0 0.0
        %1523 = vmatprep.subr.mxu0 0.0
        %1524 = vmatpush1.xpose.msra.mxu0 0.0
        %1525 = vmatprep.subr.mxu0 0.0
        %1526 = vmatpush1.xpose.msra.mxu0 0.0
        %1527 = vmatprep.subr.mxu0 0.0
        %1528 = vmatpush1.xpose.msra.mxu0 0.0
        %1529 = vmatprep.subr.mxu0 0.0
        %1530 = vmatpush1.xpose.msra.mxu0 0.0
        %1531 = vmatprep.subr.mxu0 0.0
        %1532 = vmatpush1.xpose.msra.mxu0 0.0
        %1533 = vmatprep.mubr.f32.mxu0 0.0
        %1534 = vmatmul.mubr.f32.gmra.mrb[0].mxu0 %v1465
        %v1535 = vpop.f32.mrb[0].mxu0
        %v1536 = vadd.f32 0.0, %v1535
        %v1537 = vpop.f32.mrb[0].mxu0
        %1538 = vdwg.mxu0
        %v1539 = vmul.f32 %v1302, 0.35355338
        %v1540 = vmul.f32 %v1380, 0.35355338
        %v1541 = vmul.f32 %v1458, 0.35355338
        %v1542 = vmul.f32 %v1536, 0.35355338
        %v1543 = vsel %vm1104, %v1539, -1e+09
        %v1544 = vsel %vm1104, %v1540, -1e+09
        %v1545 = vsel %vm1104, %v1541, -1e+09
        %v1546 = vsel %vm1104, %v1542, -1e+09
        %v1547 = vsel %vm1230, %v1543, -inf
        %1548 = vmax.xlane.f32.xlu0 %v1547
        %v1549 = vpop.xlane.xlu0 %1548
        %v1550 = vsel %vm1230, %v1544, -inf
        %1551 = vmax.xlane.f32.xlu0 %v1550
        %v1552 = vpop.xlane.xlu0 %1551
        %v1553 = vsel %vm1230, %v1545, -inf
        %1554 = vmax.xlane.f32.xlu0 %v1553
        %v1555 = vpop.xlane.xlu0 %1554
        %v1556 = vsel %vm1230, %v1546, -inf
        %1557 = vmax.xlane.f32.xlu0 %v1556
        %v1558 = vpop.xlane.xlu0 %1557
        %v1559 = vsub.f32 %v1543, %v1549
        %v1560 = vsub.f32 %v1544, %v1552
        %v1561 = vsub.f32 %v1545, %v1555
        %v1562 = vsub.f32 %v1546, %v1558
        %v1563 = vmul.f32 %v1559, 1.442695
        %v1564 = vpow.pop %v1563
        %v1565 = vmul.f32 %v1560, 1.442695
        %v1566 = vpow.pop %v1565
        %v1567 = vmul.f32 %v1561, 1.442695
        %v1568 = vpow.pop %v1567
        %v1569 = vmul.f32 %v1562, 1.442695
        %v1570 = vpow.pop %v1569
        %v1571 = vsel %vm1230, %v1564, 0.0
        %1572 = vadd.xlane.f32.xlu0 %v1571
        %v1573 = vpop.xlane.xlu0 %1572
        %v1574 = vsel %vm1230, %v1566, 0.0
        %1575 = vadd.xlane.f32.xlu0 %v1574
        %v1576 = vpop.xlane.xlu0 %1575
        %v1577 = vsel %vm1230, %v1568, 0.0
        %1578 = vadd.xlane.f32.xlu0 %v1577
        %v1579 = vpop.xlane.xlu0 %1578
        %v1580 = vsel %vm1230, %v1570, 0.0
        %1581 = vadd.xlane.f32.xlu0 %v1580
        %v1582 = vpop.xlane.xlu0 %1581
        %v1583 = vrcp.pop %v1573
        %v1584 = vrcp.pop %v1576
        %v1585 = vrcp.pop %v1579
        %v1586 = vrcp.pop %v1582
        %v1587 = vmul.f32 %v1564, %v1583
        %v1588 = vmul.f32 %v1566, %v1584
        %v1589 = vmul.f32 %v1568, %v1585
        %v1590 = vmul.f32 %v1570, %v1586
        %1591 = vrot.lane.b32.xlu0 %v1224, 64
        %v1592 = vpop.permute.xlu0 %1591
        %v1595 = vsel %vm1230, %v1587, 0
        %1597 = vmatprep.subr.mxu0 0.0
        %1598 = vmatpush1.msra.mxu0 %v1592
        %1599 = vmatprep.subr.mxu0 0.0
        %1600 = vmatpush1.msra.mxu0 0.0
        %1601 = vmatprep.subr.mxu0 0.0
        %1602 = vmatpush1.msra.mxu0 0.0
        %1603 = vmatprep.subr.mxu0 0.0
        %1604 = vmatpush1.msra.mxu0 0.0
        %1605 = vmatprep.subr.mxu0 0.0
        %1606 = vmatpush1.msra.mxu0 0.0
        %1607 = vmatprep.subr.mxu0 0.0
        %1608 = vmatpush1.msra.mxu0 0.0
        %1609 = vmatprep.subr.mxu0 0.0
        %1610 = vmatpush1.msra.mxu0 0.0
        %1611 = vmatprep.subr.mxu0 0.0
        %1612 = vmatpush1.msra.mxu0 0.0
        %1613 = vmatprep.subr.mxu0 0.0
        %1614 = vmatpush1.msra.mxu0 0.0
        %1615 = vmatprep.subr.mxu0 0.0
        %1616 = vmatpush1.msra.mxu0 0.0
        %1617 = vmatprep.subr.mxu0 0.0
        %1618 = vmatpush1.msra.mxu0 0.0
        %1619 = vmatprep.subr.mxu0 0.0
        %1620 = vmatpush1.msra.mxu0 0.0
        %1621 = vmatprep.subr.mxu0 0.0
        %1622 = vmatpush1.msra.mxu0 0.0
        %1623 = vmatprep.subr.mxu0 0.0
        %1624 = vmatpush1.msra.mxu0 0.0
        %1625 = vmatprep.subr.mxu0 0.0
        %1626 = vmatpush1.msra.mxu0 0.0
        %1627 = vmatprep.subr.mxu0 0.0
        %1628 = vmatpush1.msra.mxu0 0.0
        %1629 = vmatprep.subr.mxu0 0.0
        %1630 = vmatpush1.msra.mxu0 0.0
        %1631 = vmatprep.subr.mxu0 0.0
        %1632 = vmatpush1.msra.mxu0 0.0
        %1633 = vmatprep.subr.mxu0 0.0
        %1634 = vmatpush1.msra.mxu0 0.0
        %1635 = vmatprep.subr.mxu0 0.0
        %1636 = vmatpush1.msra.mxu0 0.0
        %1637 = vmatprep.subr.mxu0 0.0
        %1638 = vmatpush1.msra.mxu0 0.0
        %1639 = vmatprep.subr.mxu0 0.0
        %1640 = vmatpush1.msra.mxu0 0.0
        %1641 = vmatprep.subr.mxu0 0.0
        %1642 = vmatpush1.msra.mxu0 0.0
        %1643 = vmatprep.subr.mxu0 0.0
        %1644 = vmatpush1.msra.mxu0 0.0
        %1645 = vmatprep.subr.mxu0 0.0
        %1646 = vmatpush1.msra.mxu0 0.0
        %1647 = vmatprep.subr.mxu0 0.0
        %1648 = vmatpush1.msra.mxu0 0.0
        %1649 = vmatprep.subr.mxu0 0.0
        %1650 = vmatpush1.msra.mxu0 0.0
        %1651 = vmatprep.subr.mxu0 0.0
        %1652 = vmatpush1.msra.mxu0 0.0
        %1653 = vmatprep.subr.mxu0 0.0
        %1654 = vmatpush1.msra.mxu0 0.0
        %1655 = vmatprep.subr.mxu0 0.0
        %1656 = vmatpush1.msra.mxu0 0.0
        %1657 = vmatprep.subr.mxu0 0.0
        %1658 = vmatpush1.msra.mxu0 0.0
        %1659 = vmatprep.subr.mxu0 0.0
        %1660 = vmatpush1.msra.mxu0 0.0
        %1661 = vmatprep.mubr.f32.mxu0 0.0
        %1662 = vmatmul.mubr.f32.gmra.mrb[0].mxu0 %v1595
        %v1663 = vpop.f32.mrb[0].mxu0
        %v1664 = vadd.f32 0.0, %v1663
        %v1665 = vpop.f32.mrb[0].mxu0
        %1666 = vdwg.mxu0
        %1667 = vrot.lane.b32.xlu0 %v1224, 56
        %v1668 = vpop.permute.xlu0 %1667
        %v1671 = vsel %vm1230, %v1588, 0
        %1673 = vmatprep.subr.mxu0 0.0
        %1674 = vmatpush1.msra.mxu0 %v1668
        %1675 = vmatprep.subr.mxu0 0.0
        %1676 = vmatpush1.msra.mxu0 0.0
        %1677 = vmatprep.subr.mxu0 0.0
        %1678 = vmatpush1.msra.mxu0 0.0
        %1679 = vmatprep.subr.mxu0 0.0
        %1680 = vmatpush1.msra.mxu0 0.0
        %1681 = vmatprep.subr.mxu0 0.0
        %1682 = vmatpush1.msra.mxu0 0.0
        %1683 = vmatprep.subr.mxu0 0.0
        %1684 = vmatpush1.msra.mxu0 0.0
        %1685 = vmatprep.subr.mxu0 0.0
        %1686 = vmatpush1.msra.mxu0 0.0
        %1687 = vmatprep.subr.mxu0 0.0
        %1688 = vmatpush1.msra.mxu0 0.0
        %1689 = vmatprep.subr.mxu0 0.0
        %1690 = vmatpush1.msra.mxu0 0.0
        %1691 = vmatprep.subr.mxu0 0.0
        %1692 = vmatpush1.msra.mxu0 0.0
        %1693 = vmatprep.subr.mxu0 0.0
        %1694 = vmatpush1.msra.mxu0 0.0
        %1695 = vmatprep.subr.mxu0 0.0
        %1696 = vmatpush1.msra.mxu0 0.0
        %1697 = vmatprep.subr.mxu0 0.0
        %1698 = vmatpush1.msra.mxu0 0.0
        %1699 = vmatprep.subr.mxu0 0.0
        %1700 = vmatpush1.msra.mxu0 0.0
        %1701 = vmatprep.subr.mxu0 0.0
        %1702 = vmatpush1.msra.mxu0 0.0
        %1703 = vmatprep.subr.mxu0 0.0
        %1704 = vmatpush1.msra.mxu0 0.0
        %1705 = vmatprep.subr.mxu0 0.0
        %1706 = vmatpush1.msra.mxu0 0.0
        %1707 = vmatprep.subr.mxu0 0.0
        %1708 = vmatpush1.msra.mxu0 0.0
        %1709 = vmatprep.subr.mxu0 0.0
        %1710 = vmatpush1.msra.mxu0 0.0
        %1711 = vmatprep.subr.mxu0 0.0
        %1712 = vmatpush1.msra.mxu0 0.0
        %1713 = vmatprep.subr.mxu0 0.0
        %1714 = vmatpush1.msra.mxu0 0.0
        %1715 = vmatprep.subr.mxu0 0.0
        %1716 = vmatpush1.msra.mxu0 0.0
        %1717 = vmatprep.subr.mxu0 0.0
        %1718 = vmatpush1.msra.mxu0 0.0
        %1719 = vmatprep.subr.mxu0 0.0
        %1720 = vmatpush1.msra.mxu0 0.0
        %1721 = vmatprep.subr.mxu0 0.0
        %1722 = vmatpush1.msra.mxu0 0.0
        %1723 = vmatprep.subr.mxu0 0.0
        %1724 = vmatpush1.msra.mxu0 0.0
        %1725 = vmatprep.subr.mxu0 0.0
        %1726 = vmatpush1.msra.mxu0 0.0
        %1727 = vmatprep.subr.mxu0 0.0
        %1728 = vmatpush1.msra.mxu0 0.0
        %1729 = vmatprep.subr.mxu0 0.0
        %1730 = vmatpush1.msra.mxu0 0.0
        %1731 = vmatprep.subr.mxu0 0.0
        %1732 = vmatpush1.msra.mxu0 0.0
        %1733 = vmatprep.subr.mxu0 0.0
        %1734 = vmatpush1.msra.mxu0 0.0
        %1735 = vmatprep.subr.mxu0 0.0
        %1736 = vmatpush1.msra.mxu0 0.0
        %1737 = vmatprep.mubr.f32.mxu0 0.0
        %1738 = vmatmul.mubr.f32.gmra.mrb[0].mxu0 %v1671
        %v1739 = vpop.f32.mrb[0].mxu0
        %v1740 = vadd.f32 0.0, %v1739
        %v1741 = vpop.f32.mrb[0].mxu0
        %1742 = vdwg.mxu0
        %v1744 = vsel %vm1230, %v1740, 0
        %1746 = vmatprep.subr.mxu0 0.0
        %1747 = vmatpush1.msra.mxu0 %v1117
        %1748 = vmatprep.subr.mxu0 0.0
        %1749 = vmatpush1.msra.mxu0 0.0
        %1750 = vmatprep.subr.mxu0 0.0
        %1751 = vmatpush1.msra.mxu0 0.0
        %1752 = vmatprep.subr.mxu0 0.0
        %1753 = vmatpush1.msra.mxu0 0.0
        %1754 = vmatprep.subr.mxu0 0.0
        %1755 = vmatpush1.msra.mxu0 0.0
        %1756 = vmatprep.subr.mxu0 0.0
        %1757 = vmatpush1.msra.mxu0 0.0
        %1758 = vmatprep.subr.mxu0 0.0
        %1759 = vmatpush1.msra.mxu0 0.0
        %1760 = vmatprep.subr.mxu0 0.0
        %1761 = vmatpush1.msra.mxu0 0.0
        %1762 = vmatprep.subr.mxu0 0.0
        %1763 = vmatpush1.msra.mxu0 0.0
        %1764 = vmatprep.subr.mxu0 0.0
        %1765 = vmatpush1.msra.mxu0 0.0
        %1766 = vmatprep.subr.mxu0 0.0
        %1767 = vmatpush1.msra.mxu0 0.0
        %1768 = vmatprep.subr.mxu0 0.0
        %1769 = vmatpush1.msra.mxu0 0.0
        %1770 = vmatprep.subr.mxu0 0.0
        %1771 = vmatpush1.msra.mxu0 0.0
        %1772 = vmatprep.subr.mxu0 0.0
        %1773 = vmatpush1.msra.mxu0 0.0
        %1774 = vmatprep.subr.mxu0 0.0
        %1775 = vmatpush1.msra.mxu0 0.0
        %1776 = vmatprep.subr.mxu0 0.0
        %1777 = vmatpush1.msra.mxu0 0.0
        %1778 = vmatprep.subr.mxu0 0.0
        %1779 = vmatpush1.msra.mxu0 0.0
        %1780 = vmatprep.subr.mxu0 0.0
        %1781 = vmatpush1.msra.mxu0 0.0
        %1782 = vmatprep.subr.mxu0 0.0
        %1783 = vmatpush1.msra.mxu0 0.0
        %1784 = vmatprep.subr.mxu0 0.0
        %1785 = vmatpush1.msra.mxu0 0.0
        %1786 = vmatprep.subr.mxu0 0.0
        %1787 = vmatpush1.msra.mxu0 0.0
        %1788 = vmatprep.subr.mxu0 0.0
        %1789 = vmatpush1.msra.mxu0 0.0
        %1790 = vmatprep.subr.mxu0 0.0
        %1791 = vmatpush1.msra.mxu0 0.0
        %1792 = vmatprep.subr.mxu0 0.0
        %1793 = vmatpush1.msra.mxu0 0.0
        %1794 = vmatprep.subr.mxu0 0.0
        %1795 = vmatpush1.msra.mxu0 0.0
        %1796 = vmatprep.subr.mxu0 0.0
        %1797 = vmatpush1.msra.mxu0 0.0
        %1798 = vmatprep.subr.mxu0 0.0
        %1799 = vmatpush1.msra.mxu0 0.0
        %1800 = vmatprep.subr.mxu0 0.0
        %1801 = vmatpush1.msra.mxu0 0.0
        %1802 = vmatprep.subr.mxu0 0.0
        %1803 = vmatpush1.msra.mxu0 0.0
        %1804 = vmatprep.subr.mxu0 0.0
        %1805 = vmatpush1.msra.mxu0 0.0
        %1806 = vmatprep.subr.mxu0 0.0
        %1807 = vmatpush1.msra.mxu0 0.0
        %1808 = vmatprep.subr.mxu0 0.0
        %1809 = vmatpush1.msra.mxu0 0.0
        %1810 = vmatprep.mubr.f32.mxu0 0.0
        %1811 = vmatmul.mubr.f32.gmra.mrb[0].mxu0 %v1744
        %v1812 = vpop.f32.mrb[0].mxu0
        %v1813 = vadd.f32 0.0, %v1812
        %v1814 = vpop.f32.mrb[0].mxu0
        %1815 = vdwg.mxu0
        %v1817 = vsel %vm1230, %v1664, 0
        %1819 = vmatprep.subr.mxu0 0.0
        %1820 = vmatpush1.msra.mxu0 %v1116
        %1821 = vmatprep.subr.mxu0 0.0
        %1822 = vmatpush1.msra.mxu0 0.0
        %1823 = vmatprep.subr.mxu0 0.0
        %1824 = vmatpush1.msra.mxu0 0.0
        %1825 = vmatprep.subr.mxu0 0.0
        %1826 = vmatpush1.msra.mxu0 0.0
        %1827 = vmatprep.subr.mxu0 0.0
        %1828 = vmatpush1.msra.mxu0 0.0
        %1829 = vmatprep.subr.mxu0 0.0
        %1830 = vmatpush1.msra.mxu0 0.0
        %1831 = vmatprep.subr.mxu0 0.0
        %1832 = vmatpush1.msra.mxu0 0.0
        %1833 = vmatprep.subr.mxu0 0.0
        %1834 = vmatpush1.msra.mxu0 0.0
        %1835 = vmatprep.subr.mxu0 0.0
        %1836 = vmatpush1.msra.mxu0 0.0
        %1837 = vmatprep.subr.mxu0 0.0
        %1838 = vmatpush1.msra.mxu0 0.0
        %1839 = vmatprep.subr.mxu0 0.0
        %1840 = vmatpush1.msra.mxu0 0.0
        %1841 = vmatprep.subr.mxu0 0.0
        %1842 = vmatpush1.msra.mxu0 0.0
        %1843 = vmatprep.subr.mxu0 0.0
        %1844 = vmatpush1.msra.mxu0 0.0
        %1845 = vmatprep.subr.mxu0 0.0
        %1846 = vmatpush1.msra.mxu0 0.0
        %1847 = vmatprep.subr.mxu0 0.0
        %1848 = vmatpush1.msra.mxu0 0.0
        %1849 = vmatprep.subr.mxu0 0.0
        %1850 = vmatpush1.msra.mxu0 0.0
        %1851 = vmatprep.subr.mxu0 0.0
        %1852 = vmatpush1.msra.mxu0 0.0
        %1853 = vmatprep.subr.mxu0 0.0
        %1854 = vmatpush1.msra.mxu0 0.0
        %1855 = vmatprep.subr.mxu0 0.0
        %1856 = vmatpush1.msra.mxu0 0.0
        %1857 = vmatprep.subr.mxu0 0.0
        %1858 = vmatpush1.msra.mxu0 0.0
        %1859 = vmatprep.subr.mxu0 0.0
        %1860 = vmatpush1.msra.mxu0 0.0
        %1861 = vmatprep.subr.mxu0 0.0
        %1862 = vmatpush1.msra.mxu0 0.0
        %1863 = vmatprep.subr.mxu0 0.0
        %1864 = vmatpush1.msra.mxu0 0.0
        %1865 = vmatprep.subr.mxu0 0.0
        %1866 = vmatpush1.msra.mxu0 0.0
        %1867 = vmatprep.subr.mxu0 0.0
        %1868 = vmatpush1.msra.mxu0 0.0
        %1869 = vmatprep.subr.mxu0 0.0
        %1870 = vmatpush1.msra.mxu0 0.0
        %1871 = vmatprep.subr.mxu0 0.0
        %1872 = vmatpush1.msra.mxu0 0.0
        %1873 = vmatprep.subr.mxu0 0.0
        %1874 = vmatpush1.msra.mxu0 0.0
        %1875 = vmatprep.subr.mxu0 0.0
        %1876 = vmatpush1.msra.mxu0 0.0
        %1877 = vmatprep.subr.mxu0 0.0
        %1878 = vmatpush1.msra.mxu0 0.0
        %1879 = vmatprep.subr.mxu0 0.0
        %1880 = vmatpush1.msra.mxu0 0.0
        %1881 = vmatprep.subr.mxu0 0.0
        %1882 = vmatpush1.msra.mxu0 0.0
        %1883 = vmatprep.mubr.f32.mxu0 0.0
        %1884 = vmatmul.mubr.f32.gmra.mrb[0].mxu0 %v1817
        %v1885 = vpop.f32.mrb[0].mxu0
        %v1886 = vadd.f32 %v1813, %v1885
        %v1887 = vpop.f32.mrb[0].mxu0
        %1888 = vdwg.mxu0
        %1889 = vrot.lane.b32.xlu0 %v1224, 48
        %v1890 = vpop.permute.xlu0 %1889
        %v1893 = vsel %vm1230, %v1589, 0
        %1895 = vmatprep.subr.mxu0 0.0
        %1896 = vmatpush1.msra.mxu0 %v1890
        %1897 = vmatprep.subr.mxu0 0.0
        %1898 = vmatpush1.msra.mxu0 0.0
        %1899 = vmatprep.subr.mxu0 0.0
        %1900 = vmatpush1.msra.mxu0 0.0
        %1901 = vmatprep.subr.mxu0 0.0
        %1902 = vmatpush1.msra.mxu0 0.0
        %1903 = vmatprep.subr.mxu0 0.0
        %1904 = vmatpush1.msra.mxu0 0.0
        %1905 = vmatprep.subr.mxu0 0.0
        %1906 = vmatpush1.msra.mxu0 0.0
        %1907 = vmatprep.subr.mxu0 0.0
        %1908 = vmatpush1.msra.mxu0 0.0
        %1909 = vmatprep.subr.mxu0 0.0
        %1910 = vmatpush1.msra.mxu0 0.0
        %1911 = vmatprep.subr.mxu0 0.0
        %1912 = vmatpush1.msra.mxu0 0.0
        %1913 = vmatprep.subr.mxu0 0.0
        %1914 = vmatpush1.msra.mxu0 0.0
        %1915 = vmatprep.subr.mxu0 0.0
        %1916 = vmatpush1.msra.mxu0 0.0
        %1917 = vmatprep.subr.mxu0 0.0
        %1918 = vmatpush1.msra.mxu0 0.0
        %1919 = vmatprep.subr.mxu0 0.0
        %1920 = vmatpush1.msra.mxu0 0.0
        %1921 = vmatprep.subr.mxu0 0.0
        %1922 = vmatpush1.msra.mxu0 0.0
        %1923 = vmatprep.subr.mxu0 0.0
        %1924 = vmatpush1.msra.mxu0 0.0
        %1925 = vmatprep.subr.mxu0 0.0
        %1926 = vmatpush1.msra.mxu0 0.0
        %1927 = vmatprep.subr.mxu0 0.0
        %1928 = vmatpush1.msra.mxu0 0.0
        %1929 = vmatprep.subr.mxu0 0.0
        %1930 = vmatpush1.msra.mxu0 0.0
        %1931 = vmatprep.subr.mxu0 0.0
        %1932 = vmatpush1.msra.mxu0 0.0
        %1933 = vmatprep.subr.mxu0 0.0
        %1934 = vmatpush1.msra.mxu0 0.0
        %1935 = vmatprep.subr.mxu0 0.0
        %1936 = vmatpush1.msra.mxu0 0.0
        %1937 = vmatprep.subr.mxu0 0.0
        %1938 = vmatpush1.msra.mxu0 0.0
        %1939 = vmatprep.subr.mxu0 0.0
        %1940 = vmatpush1.msra.mxu0 0.0
        %1941 = vmatprep.subr.mxu0 0.0
        %1942 = vmatpush1.msra.mxu0 0.0
        %1943 = vmatprep.subr.mxu0 0.0
        %1944 = vmatpush1.msra.mxu0 0.0
        %1945 = vmatprep.subr.mxu0 0.0
        %1946 = vmatpush1.msra.mxu0 0.0
        %1947 = vmatprep.subr.mxu0 0.0
        %1948 = vmatpush1.msra.mxu0 0.0
        %1949 = vmatprep.subr.mxu0 0.0
        %1950 = vmatpush1.msra.mxu0 0.0
        %1951 = vmatprep.subr.mxu0 0.0
        %1952 = vmatpush1.msra.mxu0 0.0
        %1953 = vmatprep.subr.mxu0 0.0
        %1954 = vmatpush1.msra.mxu0 0.0
        %1955 = vmatprep.subr.mxu0 0.0
        %1956 = vmatpush1.msra.mxu0 0.0
        %1957 = vmatprep.subr.mxu0 0.0
        %1958 = vmatpush1.msra.mxu0 0.0
        %1959 = vmatprep.mubr.f32.mxu0 0.0
        %1960 = vmatmul.mubr.f32.gmra.mrb[0].mxu0 %v1893
        %v1961 = vpop.f32.mrb[0].mxu0
        %v1962 = vadd.f32 0.0, %v1961
        %v1963 = vpop.f32.mrb[0].mxu0
        %1964 = vdwg.mxu0
        %v1966 = vsel %vm1230, %v1962, 0
        %1968 = vmatprep.subr.mxu0 0.0
        %1969 = vmatpush1.msra.mxu0 %v1118
        %1970 = vmatprep.subr.mxu0 0.0
        %1971 = vmatpush1.msra.mxu0 0.0
        %1972 = vmatprep.subr.mxu0 0.0
        %1973 = vmatpush1.msra.mxu0 0.0
        %1974 = vmatprep.subr.mxu0 0.0
        %1975 = vmatpush1.msra.mxu0 0.0
        %1976 = vmatprep.subr.mxu0 0.0
        %1977 = vmatpush1.msra.mxu0 0.0
        %1978 = vmatprep.subr.mxu0 0.0
        %1979 = vmatpush1.msra.mxu0 0.0
        %1980 = vmatprep.subr.mxu0 0.0
        %1981 = vmatpush1.msra.mxu0 0.0
        %1982 = vmatprep.subr.mxu0 0.0
        %1983 = vmatpush1.msra.mxu0 0.0
        %1984 = vmatprep.subr.mxu0 0.0
        %1985 = vmatpush1.msra.mxu0 0.0
        %1986 = vmatprep.subr.mxu0 0.0
        %1987 = vmatpush1.msra.mxu0 0.0
        %1988 = vmatprep.subr.mxu0 0.0
        %1989 = vmatpush1.msra.mxu0 0.0
        %1990 = vmatprep.subr.mxu0 0.0
        %1991 = vmatpush1.msra.mxu0 0.0
        %1992 = vmatprep.subr.mxu0 0.0
        %1993 = vmatpush1.msra.mxu0 0.0
        %1994 = vmatprep.subr.mxu0 0.0
        %1995 = vmatpush1.msra.mxu0 0.0
        %1996 = vmatprep.subr.mxu0 0.0
        %1997 = vmatpush1.msra.mxu0 0.0
        %1998 = vmatprep.subr.mxu0 0.0
        %1999 = vmatpush1.msra.mxu0 0.0
        %2000 = vmatprep.subr.mxu0 0.0
        %2001 = vmatpush1.msra.mxu0 0.0
        %2002 = vmatprep.subr.mxu0 0.0
        %2003 = vmatpush1.msra.mxu0 0.0
        %2004 = vmatprep.subr.mxu0 0.0
        %2005 = vmatpush1.msra.mxu0 0.0
        %2006 = vmatprep.subr.mxu0 0.0
        %2007 = vmatpush1.msra.mxu0 0.0
        %2008 = vmatprep.subr.mxu0 0.0
        %2009 = vmatpush1.msra.mxu0 0.0
        %2010 = vmatprep.subr.mxu0 0.0
        %2011 = vmatpush1.msra.mxu0 0.0
        %2012 = vmatprep.subr.mxu0 0.0
        %2013 = vmatpush1.msra.mxu0 0.0
        %2014 = vmatprep.subr.mxu0 0.0
        %2015 = vmatpush1.msra.mxu0 0.0
        %2016 = vmatprep.subr.mxu0 0.0
        %2017 = vmatpush1.msra.mxu0 0.0
        %2018 = vmatprep.subr.mxu0 0.0
        %2019 = vmatpush1.msra.mxu0 0.0
        %2020 = vmatprep.subr.mxu0 0.0
        %2021 = vmatpush1.msra.mxu0 0.0
        %2022 = vmatprep.subr.mxu0 0.0
        %2023 = vmatpush1.msra.mxu0 0.0
        %2024 = vmatprep.subr.mxu0 0.0
        %2025 = vmatpush1.msra.mxu0 0.0
        %2026 = vmatprep.subr.mxu0 0.0
        %2027 = vmatpush1.msra.mxu0 0.0
        %2028 = vmatprep.subr.mxu0 0.0
        %2029 = vmatpush1.msra.mxu0 0.0
        %2030 = vmatprep.subr.mxu0 0.0
        %2031 = vmatpush1.msra.mxu0 0.0
        %2032 = vmatprep.mubr.f32.mxu0 0.0
        %2033 = vmatmul.mubr.f32.gmra.mrb[0].mxu0 %v1966
        %v2034 = vpop.f32.mrb[0].mxu0
        %v2035 = vadd.f32 0.0, %v2034
        %v2036 = vpop.f32.mrb[0].mxu0
        %2037 = vdwg.mxu0
        %v2038 = vadd.f32 %v1886, %v2035
        %2039 = vrot.lane.b32.xlu0 %v1224, 40
        %v2040 = vpop.permute.xlu0 %2039
        %v2043 = vsel %vm1230, %v1590, 0
        %2045 = vmatprep.subr.mxu0 0.0
        %2046 = vmatpush1.msra.mxu0 %v2040
        %2047 = vmatprep.subr.mxu0 0.0
        %2048 = vmatpush1.msra.mxu0 0.0
        %2049 = vmatprep.subr.mxu0 0.0
        %2050 = vmatpush1.msra.mxu0 0.0
        %2051 = vmatprep.subr.mxu0 0.0
        %2052 = vmatpush1.msra.mxu0 0.0
        %2053 = vmatprep.subr.mxu0 0.0
        %2054 = vmatpush1.msra.mxu0 0.0
        %2055 = vmatprep.subr.mxu0 0.0
        %2056 = vmatpush1.msra.mxu0 0.0
        %2057 = vmatprep.subr.mxu0 0.0
        %2058 = vmatpush1.msra.mxu0 0.0
        %2059 = vmatprep.subr.mxu0 0.0
        %2060 = vmatpush1.msra.mxu0 0.0
        %2061 = vmatprep.subr.mxu0 0.0
        %2062 = vmatpush1.msra.mxu0 0.0
        %2063 = vmatprep.subr.mxu0 0.0
        %2064 = vmatpush1.msra.mxu0 0.0
        %2065 = vmatprep.subr.mxu0 0.0
        %2066 = vmatpush1.msra.mxu0 0.0
        %2067 = vmatprep.subr.mxu0 0.0
        %2068 = vmatpush1.msra.mxu0 0.0
        %2069 = vmatprep.subr.mxu0 0.0
        %2070 = vmatpush1.msra.mxu0 0.0
        %2071 = vmatprep.subr.mxu0 0.0
        %2072 = vmatpush1.msra.mxu0 0.0
        %2073 = vmatprep.subr.mxu0 0.0
        %2074 = vmatpush1.msra.mxu0 0.0
        %2075 = vmatprep.subr.mxu0 0.0
        %2076 = vmatpush1.msra.mxu0 0.0
        %2077 = vmatprep.subr.mxu0 0.0
        %2078 = vmatpush1.msra.mxu0 0.0
        %2079 = vmatprep.subr.mxu0 0.0
        %2080 = vmatpush1.msra.mxu0 0.0
        %2081 = vmatprep.subr.mxu0 0.0
        %2082 = vmatpush1.msra.mxu0 0.0
        %2083 = vmatprep.subr.mxu0 0.0
        %2084 = vmatpush1.msra.mxu0 0.0
        %2085 = vmatprep.subr.mxu0 0.0
        %2086 = vmatpush1.msra.mxu0 0.0
        %2087 = vmatprep.subr.mxu0 0.0
        %2088 = vmatpush1.msra.mxu0 0.0
        %2089 = vmatprep.subr.mxu0 0.0
        %2090 = vmatpush1.msra.mxu0 0.0
        %2091 = vmatprep.subr.mxu0 0.0
        %2092 = vmatpush1.msra.mxu0 0.0
        %2093 = vmatprep.subr.mxu0 0.0
        %2094 = vmatpush1.msra.mxu0 0.0
        %2095 = vmatprep.subr.mxu0 0.0
        %2096 = vmatpush1.msra.mxu0 0.0
        %2097 = vmatprep.subr.mxu0 0.0
        %2098 = vmatpush1.msra.mxu0 0.0
        %2099 = vmatprep.subr.mxu0 0.0
        %2100 = vmatpush1.msra.mxu0 0.0
        %2101 = vmatprep.subr.mxu0 0.0
        %2102 = vmatpush1.msra.mxu0 0.0
        %2103 = vmatprep.subr.mxu0 0.0
        %2104 = vmatpush1.msra.mxu0 0.0
        %2105 = vmatprep.subr.mxu0 0.0
        %2106 = vmatpush1.msra.mxu0 0.0
        %2107 = vmatprep.subr.mxu0 0.0
        %2108 = vmatpush1.msra.mxu0 0.0
        %2109 = vmatprep.mubr.f32.mxu0 0.0
        %2110 = vmatmul.mubr.f32.gmra.mrb[0].mxu0 %v2043
        %v2111 = vpop.f32.mrb[0].mxu0
        %v2112 = vadd.f32 0.0, %v2111
        %v2113 = vpop.f32.mrb[0].mxu0
        %2114 = vdwg.mxu0
        %v2116 = vsel %vm1230, %v2112, 0
        %2118 = vmatprep.subr.mxu0 0.0
        %2119 = vmatpush1.msra.mxu0 %v1119
        %2120 = vmatprep.subr.mxu0 0.0
        %2121 = vmatpush1.msra.mxu0 0.0
        %2122 = vmatprep.subr.mxu0 0.0
        %2123 = vmatpush1.msra.mxu0 0.0
        %2124 = vmatprep.subr.mxu0 0.0
        %2125 = vmatpush1.msra.mxu0 0.0
        %2126 = vmatprep.subr.mxu0 0.0
        %2127 = vmatpush1.msra.mxu0 0.0
        %2128 = vmatprep.subr.mxu0 0.0
        %2129 = vmatpush1.msra.mxu0 0.0
        %2130 = vmatprep.subr.mxu0 0.0
        %2131 = vmatpush1.msra.mxu0 0.0
        %2132 = vmatprep.subr.mxu0 0.0
        %2133 = vmatpush1.msra.mxu0 0.0
        %2134 = vmatprep.subr.mxu0 0.0
        %2135 = vmatpush1.msra.mxu0 0.0
        %2136 = vmatprep.subr.mxu0 0.0
        %2137 = vmatpush1.msra.mxu0 0.0
        %2138 = vmatprep.subr.mxu0 0.0
        %2139 = vmatpush1.msra.mxu0 0.0
        %2140 = vmatprep.subr.mxu0 0.0
        %2141 = vmatpush1.msra.mxu0 0.0
        %2142 = vmatprep.subr.mxu0 0.0
        %2143 = vmatpush1.msra.mxu0 0.0
        %2144 = vmatprep.subr.mxu0 0.0
        %2145 = vmatpush1.msra.mxu0 0.0
        %2146 = vmatprep.subr.mxu0 0.0
        %2147 = vmatpush1.msra.mxu0 0.0
        %2148 = vmatprep.subr.mxu0 0.0
        %2149 = vmatpush1.msra.mxu0 0.0
        %2150 = vmatprep.subr.mxu0 0.0
        %2151 = vmatpush1.msra.mxu0 0.0
        %2152 = vmatprep.subr.mxu0 0.0
        %2153 = vmatpush1.msra.mxu0 0.0
        %2154 = vmatprep.subr.mxu0 0.0
        %2155 = vmatpush1.msra.mxu0 0.0
        %2156 = vmatprep.subr.mxu0 0.0
        %2157 = vmatpush1.msra.mxu0 0.0
        %2158 = vmatprep.subr.mxu0 0.0
        %2159 = vmatpush1.msra.mxu0 0.0
        %2160 = vmatprep.subr.mxu0 0.0
        %2161 = vmatpush1.msra.mxu0 0.0
        %2162 = vmatprep.subr.mxu0 0.0
        %2163 = vmatpush1.msra.mxu0 0.0
        %2164 = vmatprep.subr.mxu0 0.0
        %2165 = vmatpush1.msra.mxu0 0.0
        %2166 = vmatprep.subr.mxu0 0.0
        %2167 = vmatpush1.msra.mxu0 0.0
        %2168 = vmatprep.subr.mxu0 0.0
        %2169 = vmatpush1.msra.mxu0 0.0
        %2170 = vmatprep.subr.mxu0 0.0
        %2171 = vmatpush1.msra.mxu0 0.0
        %2172 = vmatprep.subr.mxu0 0.0
        %2173 = vmatpush1.msra.mxu0 0.0
        %2174 = vmatprep.subr.mxu0 0.0
        %2175 = vmatpush1.msra.mxu0 0.0
        %2176 = vmatprep.subr.mxu0 0.0
        %2177 = vmatpush1.msra.mxu0 0.0
        %2178 = vmatprep.subr.mxu0 0.0
        %2179 = vmatpush1.msra.mxu0 0.0
        %2180 = vmatprep.subr.mxu0 0.0
        %2181 = vmatpush1.msra.mxu0 0.0
        %2182 = vmatprep.mubr.f32.mxu0 0.0
        %2183 = vmatmul.mubr.f32.gmra.mrb[0].mxu0 %v2116
        %v2184 = vpop.f32.mrb[0].mxu0
        %v2185 = vadd.f32 0.0, %v2184
        %v2186 = vpop.f32.mrb[0].mxu0
        %2187 = vdwg.mxu0
        %v2188 = vadd.f32 %v2038, %v2185
        %v2190 = vlaneseq
        %v2191 = vshrl.u32 %v2190, 7
        %v2192 = vsub.s32 0, %v2191
        %v2193 = vrot.slane %v1120, %v2192
        %v2195 = vadd.f32 %v2188, %v2193
        %v2196 = vadd.f32 %v2195, %v1110
        %v2197 = vsel %vm1153, %v2196, 0.0
        %2198 = vadd.xlane.f32.xlu0 %v2197
        %v2199 = vpop.xlane.xlu0 %2198
        %v2200 = vrcp.pop 32.0
        %v2201 = vmul.f32 %v2199, %v2200
        %v2202 = vsub.f32 %v2196, %v2201
        %v2203 = vmul.f32 %v2202, %v2202
        %v2204 = vsel %vm1153, %v2203, 0.0
        %2205 = vadd.xlane.f32.xlu0 %v2204
        %v2206 = vpop.xlane.xlu0 %2205
        %v2207 = vmul.f32 %v2206, %v2200
        %v2208 = vadd.f32 %v2207, 1e-05
        %v2209 = vrsqrt.pop %v2208
        %v2210 = vmul.f32 %v2202, %v2209
        %v2212 = vlaneseq
        %v2213 = vshrl.u32 %v2212, 7
        %v2214 = vsub.s32 0, %v2213
        %v2215 = vrot.slane %v1121, %v2214
        %v2217 = vmul.f32 %v2210, %v2215
        %v2219 = vlaneseq
        %v2220 = vshrl.u32 %v2219, 7
        %v2221 = vsub.s32 0, %v2220
        %v2222 = vrot.slane %v1122, %v2221
        %v2224 = vadd.f32 %v2217, %v2222
        %v2226 = vlaneseq
        %v2227 = vshrl.u32 %v2226, 7
        %v2228 = vsub.s32 0, %v2227
        %v2229 = vrot.slane %v1129, %v2228
        %v2232 = vsel %vm1153, %v2224, 0
        %2234 = vmatprep.subr.mxu0 0.0
        %2235 = vmatpush1.msra.mxu0 %v1125
        %2236 = vmatprep.subr.mxu0 0.0
        %2237 = vmatpush1.msra.mxu0 %v1126
        %2238 = vmatprep.subr.mxu0 0.0
        %2239 = vmatpush1.msra.mxu0 %v1127
        %2240 = vmatprep.subr.mxu0 0.0
        %2241 = vmatpush1.msra.mxu0 %v1128
        %2242 = vmatprep.subr.mxu0 0.0
        %2243 = vmatpush1.msra.mxu0 0.0
        %2244 = vmatprep.subr.mxu0 0.0
        %2245 = vmatpush1.msra.mxu0 0.0
        %2246 = vmatprep.subr.mxu0 0.0
        %2247 = vmatpush1.msra.mxu0 0.0
        %2248 = vmatprep.subr.mxu0 0.0
        %2249 = vmatpush1.msra.mxu0 0.0
        %2250 = vmatprep.subr.mxu0 0.0
        %2251 = vmatpush1.msra.mxu0 0.0
        %2252 = vmatprep.subr.mxu0 0.0
        %2253 = vmatpush1.msra.mxu0 0.0
        %2254 = vmatprep.subr.mxu0 0.0
        %2255 = vmatpush1.msra.mxu0 0.0
        %2256 = vmatprep.subr.mxu0 0.0
        %2257 = vmatpush1.msra.mxu0 0.0
        %2258 = vmatprep.subr.mxu0 0.0
        %2259 = vmatpush1.msra.mxu0 0.0
        %2260 = vmatprep.subr.mxu0 0.0
        %2261 = vmatpush1.msra.mxu0 0.0
        %2262 = vmatprep.subr.mxu0 0.0
        %2263 = vmatpush1.msra.mxu0 0.0
        %2264 = vmatprep.subr.mxu0 0.0
        %2265 = vmatpush1.msra.mxu0 0.0
        %2266 = vmatprep.subr.mxu0 0.0
        %2267 = vmatpush1.msra.mxu0 0.0
        %2268 = vmatprep.subr.mxu0 0.0
        %2269 = vmatpush1.msra.mxu0 0.0
        %2270 = vmatprep.subr.mxu0 0.0
        %2271 = vmatpush1.msra.mxu0 0.0
        %2272 = vmatprep.subr.mxu0 0.0
        %2273 = vmatpush1.msra.mxu0 0.0
        %2274 = vmatprep.subr.mxu0 0.0
        %2275 = vmatpush1.msra.mxu0 0.0
        %2276 = vmatprep.subr.mxu0 0.0
        %2277 = vmatpush1.msra.mxu0 0.0
        %2278 = vmatprep.subr.mxu0 0.0
        %2279 = vmatpush1.msra.mxu0 0.0
        %2280 = vmatprep.subr.mxu0 0.0
        %2281 = vmatpush1.msra.mxu0 0.0
        %2282 = vmatprep.subr.mxu0 0.0
        %2283 = vmatpush1.msra.mxu0 0.0
        %2284 = vmatprep.subr.mxu0 0.0
        %2285 = vmatpush1.msra.mxu0 0.0
        %2286 = vmatprep.subr.mxu0 0.0
        %2287 = vmatpush1.msra.mxu0 0.0
        %2288 = vmatprep.subr.mxu0 0.0
        %2289 = vmatpush1.msra.mxu0 0.0
        %2290 = vmatprep.subr.mxu0 0.0
        %2291 = vmatpush1.msra.mxu0 0.0
        %2292 = vmatprep.subr.mxu0 0.0
        %2293 = vmatpush1.msra.mxu0 0.0
        %2294 = vmatprep.subr.mxu0 0.0
        %2295 = vmatpush1.msra.mxu0 0.0
        %2296 = vmatprep.subr.mxu0 0.0
        %2297 = vmatpush1.msra.mxu0 0.0
        %2298 = vmatprep.mubr.f32.mxu0 0.0
        %2299 = vmatmul.mubr.f32.gmra.mrb[0].mxu0 %v2232
        %v2300 = vpop.f32.mrb[0].mxu0
        %v2301 = vadd.f32 %v2229, %v2300
        %v2302 = vpop.f32.mrb[0].mxu0
        %2303 = vdwg.mxu0
        %v2304 = vmax.f32 %v2301, 0.0
        %v2306 = vlaneseq
        %v2307 = vshrl.u32 %v2306, 7
        %v2308 = vsub.s32 0, %v2307
        %v2309 = vrot.slane %v1146, %v2308
        %2311 = vmatprep.subr.mxu0 0.0
        %2312 = vmatpush1.msra.mxu0 %v1130
        %2313 = vmatprep.subr.mxu0 0.0
        %2314 = vmatpush1.msra.mxu0 %v1131
        %2315 = vmatprep.subr.mxu0 0.0
        %2316 = vmatpush1.msra.mxu0 %v1132
        %2317 = vmatprep.subr.mxu0 0.0
        %2318 = vmatpush1.msra.mxu0 %v1133
        %2319 = vmatprep.subr.mxu0 0.0
        %2320 = vmatpush1.msra.mxu0 %v1134
        %2321 = vmatprep.subr.mxu0 0.0
        %2322 = vmatpush1.msra.mxu0 %v1135
        %2323 = vmatprep.subr.mxu0 0.0
        %2324 = vmatpush1.msra.mxu0 %v1136
        %2325 = vmatprep.subr.mxu0 0.0
        %2326 = vmatpush1.msra.mxu0 %v1137
        %2327 = vmatprep.subr.mxu0 0.0
        %2328 = vmatpush1.msra.mxu0 %v1138
        %2329 = vmatprep.subr.mxu0 0.0
        %2330 = vmatpush1.msra.mxu0 %v1139
        %2331 = vmatprep.subr.mxu0 0.0
        %2332 = vmatpush1.msra.mxu0 %v1140
        %2333 = vmatprep.subr.mxu0 0.0
        %2334 = vmatpush1.msra.mxu0 %v1141
        %2335 = vmatprep.subr.mxu0 0.0
        %2336 = vmatpush1.msra.mxu0 %v1142
        %2337 = vmatprep.subr.mxu0 0.0
        %2338 = vmatpush1.msra.mxu0 %v1143
        %2339 = vmatprep.subr.mxu0 0.0
        %2340 = vmatpush1.msra.mxu0 %v1144
        %2341 = vmatprep.subr.mxu0 0.0
        %2342 = vmatpush1.msra.mxu0 %v1145
        %2343 = vmatprep.subr.mxu0 0.0
        %2344 = vmatpush1.msra.mxu0 0.0
        %2345 = vmatprep.subr.mxu0 0.0
        %2346 = vmatpush1.msra.mxu0 0.0
        %2347 = vmatprep.subr.mxu0 0.0
        %2348 = vmatpush1.msra.mxu0 0.0
        %2349 = vmatprep.subr.mxu0 0.0
        %2350 = vmatpush1.msra.mxu0 0.0
        %2351 = vmatprep.subr.mxu0 0.0
        %2352 = vmatpush1.msra.mxu0 0.0
        %2353 = vmatprep.subr.mxu0 0.0
        %2354 = vmatpush1.msra.mxu0 0.0
        %2355 = vmatprep.subr.mxu0 0.0
        %2356 = vmatpush1.msra.mxu0 0.0
        %2357 = vmatprep.subr.mxu0 0.0
        %2358 = vmatpush1.msra.mxu0 0.0
        %2359 = vmatprep.subr.mxu0 0.0
        %2360 = vmatpush1.msra.mxu0 0.0
        %2361 = vmatprep.subr.mxu0 0.0
        %2362 = vmatpush1.msra.mxu0 0.0
        %2363 = vmatprep.subr.mxu0 0.0
        %2364 = vmatpush1.msra.mxu0 0.0
        %2365 = vmatprep.subr.mxu0 0.0
        %2366 = vmatpush1.msra.mxu0 0.0
        %2367 = vmatprep.subr.mxu0 0.0
        %2368 = vmatpush1.msra.mxu0 0.0
        %2369 = vmatprep.subr.mxu0 0.0
        %2370 = vmatpush1.msra.mxu0 0.0
        %2371 = vmatprep.subr.mxu0 0.0
        %2372 = vmatpush1.msra.mxu0 0.0
        %2373 = vmatprep.subr.mxu0 0.0
        %2374 = vmatpush1.msra.mxu0 0.0
        %2375 = vmatprep.mubr.f32.mxu0 0.0
        %2376 = vmatmul.mubr.f32.gmra.mrb[0].mxu0 %v2304
        %v2377 = vpop.f32.mrb[0].mxu0
        %v2378 = vadd.f32 %v2309, %v2377
        %v2379 = vpop.f32.mrb[0].mxu0
        %2380 = vdwg.mxu0
        %v2381 = vadd.f32 %v2378, %v2224
        %v2382 = vsel %vm1153, %v2381, 0.0
        %2383 = vadd.xlane.f32.xlu0 %v2382
        %v2384 = vpop.xlane.xlu0 %2383
        %v2385 = vmul.f32 %v2384, %v2200
        %v2386 = vsub.f32 %v2381, %v2385
        %v2387 = vmul.f32 %v2386, %v2386
        %v2388 = vsel %vm1153, %v2387, 0.0
        %2389 = vadd.xlane.f32.xlu0 %v2388
        %v2390 = vpop.xlane.xlu0 %2389
        %v2391 = vmul.f32 %v2390, %v2200
        %v2392 = vadd.f32 %v2391, 1e-05
        %v2393 = vrsqrt.pop %v2392
        %v2394 = vmul.f32 %v2386, %v2393
        %v2396 = vlaneseq
        %v2397 = vshrl.u32 %v2396, 7
        %v2398 = vsub.s32 0, %v2397
        %v2399 = vrot.slane %v1123, %v2398
        %v2401 = vmul.f32 %v2394, %v2399
        %v2403 = vlaneseq
        %v2404 = vshrl.u32 %v2403, 7
        %v2405 = vsub.s32 0, %v2404
        %v2406 = vrot.slane %v1124, %v2405
        %v2408 = vadd.f32 %v2401, %v2406
        %s2409 = scalar_lea.vmem %s7, 32
        %v2410 = vld [vmem:[%s2409] sm:$0xff]
        %v2411 = vld [vmem:[%s2409 + $0x8] sm:$0xff]
        %v2412 = vld [vmem:[%s2409 + $0x10] sm:$0xff]
        %v2413 = vld [vmem:[%s2409 + $0x18] sm:$0xff]
        %s2414 = scalar_lea.vmem %s9, 1
        %v2415 = vld [vmem:[%s2414] sm:$0x1]
        %s2416 = scalar_lea.vmem %s11, 32
        %v2417 = vld [vmem:[%s2416] sm:$0xff]
        %v2418 = vld [vmem:[%s2416 + $0x8] sm:$0xff]
        %v2419 = vld [vmem:[%s2416 + $0x10] sm:$0xff]
        %v2420 = vld [vmem:[%s2416 + $0x18] sm:$0xff]
        %s2421 = scalar_lea.vmem %s13, 1
        %v2422 = vld [vmem:[%s2421] sm:$0x1]
        %s2423 = scalar_lea.vmem %s15, 1
        %v2424 = vld [vmem:[%s2423] sm:$0x1]
        %s2425 = scalar_lea.vmem %s17, 1
        %v2426 = vld [vmem:[%s2425] sm:$0x1]
        %s2427 = scalar_lea.vmem %s19, 1
        %v2428 = vld [vmem:[%s2427] sm:$0x1]
        %s2429 = scalar_lea.vmem %s21, 1
        %v2430 = vld [vmem:[%s2429] sm:$0x1]
        %s2431 = scalar_lea.vmem %s23, 32
        %v2432 = vld [vmem:[%s2431] sm:$0xff]
        %v2433 = vld [vmem:[%s2431 + $0x8] sm:$0xff]
        %v2434 = vld [vmem:[%s2431 + $0x10] sm:$0xff]
        %v2435 = vld [vmem:[%s2431 + $0x18] sm:$0xff]
        %s2436 = scalar_lea.vmem %s25, 1
        %v2437 = vld [vmem:[%s2436] sm:$0x1]
        %s2438 = scalar_lea.vmem %s27, 128
        %v2439 = vld [vmem:[%s2438] sm:$0xff]
        %v2440 = vld [vmem:[%s2438 + $0x8] sm:$0xff]
        %v2441 = vld [vmem:[%s2438 + $0x10] sm:$0xff]
        %v2442 = vld [vmem:[%s2438 + $0x18] sm:$0xff]
        %v2443 = vld [vmem:[%s2438 + $0x20] sm:$0xff]
        %v2444 = vld [vmem:[%s2438 + $0x28] sm:$0xff]
        %v2445 = vld [vmem:[%s2438 + $0x30] sm:$0xff]
        %v2446 = vld [vmem:[%s2438 + $0x38] sm:$0xff]
        %v2447 = vld [vmem:[%s2438 + $0x40] sm:$0xff]
        %v2448 = vld [vmem:[%s2438 + $0x48] sm:$0xff]
        %v2449 = vld [vmem:[%s2438 + $0x50] sm:$0xff]
        %v2450 = vld [vmem:[%s2438 + $0x58] sm:$0xff]
        %v2451 = vld [vmem:[%s2438 + $0x60] sm:$0xff]
        %v2452 = vld [vmem:[%s2438 + $0x68] sm:$0xff]
        %v2453 = vld [vmem:[%s2438 + $0x70] sm:$0xff]
        %v2454 = vld [vmem:[%s2438 + $0x78] sm:$0xff]
        %s2455 = scalar_lea.vmem %s29, 1
        %v2456 = vld [vmem:[%s2455] sm:$0x1]
        %v2458 = vlaneseq
        %v2459 = vshrl.u32 %v2458, 7
        %v2460 = vsub.s32 0, %v2459
        %v2461 = vrot.slane %v2415, %v2460
        %v2464 = vsel %vm1153, %v2408, 0
        %2466 = vmatprep.subr.mxu0 0.0
        %2467 = vmatpush1.msra.mxu0 %v2410
        %2468 = vmatprep.subr.mxu0 0.0
        %2469 = vmatpush1.msra.mxu0 %v2411
        %2470 = vmatprep.subr.mxu0 0.0
        %2471 = vmatpush1.msra.mxu0 %v2412
        %2472 = vmatprep.subr.mxu0 0.0
        %2473 = vmatpush1.msra.mxu0 %v2413
        %2474 = vmatprep.subr.mxu0 0.0
        %2475 = vmatpush1.msra.mxu0 0.0
        %2476 = vmatprep.subr.mxu0 0.0
        %2477 = vmatpush1.msra.mxu0 0.0
        %2478 = vmatprep.subr.mxu0 0.0
        %2479 = vmatpush1.msra.mxu0 0.0
        %2480 = vmatprep.subr.mxu0 0.0
        %2481 = vmatpush1.msra.mxu0 0.0
        %2482 = vmatprep.subr.mxu0 0.0
        %2483 = vmatpush1.msra.mxu0 0.0
        %2484 = vmatprep.subr.mxu0 0.0
        %2485 = vmatpush1.msra.mxu0 0.0
        %2486 = vmatprep.subr.mxu0 0.0
        %2487 = vmatpush1.msra.mxu0 0.0
        %2488 = vmatprep.subr.mxu0 0.0
        %2489 = vmatpush1.msra.mxu0 0.0
        %2490 = vmatprep.subr.mxu0 0.0
        %2491 = vmatpush1.msra.mxu0 0.0
        %2492 = vmatprep.subr.mxu0 0.0
        %2493 = vmatpush1.msra.mxu0 0.0
        %2494 = vmatprep.subr.mxu0 0.0
        %2495 = vmatpush1.msra.mxu0 0.0
        %2496 = vmatprep.subr.mxu0 0.0
        %2497 = vmatpush1.msra.mxu0 0.0
        %2498 = vmatprep.subr.mxu0 0.0
        %2499 = vmatpush1.msra.mxu0 0.0
        %2500 = vmatprep.subr.mxu0 0.0
        %2501 = vmatpush1.msra.mxu0 0.0
        %2502 = vmatprep.subr.mxu0 0.0
        %2503 = vmatpush1.msra.mxu0 0.0
        %2504 = vmatprep.subr.mxu0 0.0
        %2505 = vmatpush1.msra.mxu0 0.0
        %2506 = vmatprep.subr.mxu0 0.0
        %2507 = vmatpush1.msra.mxu0 0.0
        %2508 = vmatprep.subr.mxu0 0.0
        %2509 = vmatpush1.msra.mxu0 0.0
        %2510 = vmatprep.subr.mxu0 0.0
        %2511 = vmatpush1.msra.mxu0 0.0
        %2512 = vmatprep.subr.mxu0 0.0
        %2513 = vmatpush1.msra.mxu0 0.0
        %2514 = vmatprep.subr.mxu0 0.0
        %2515 = vmatpush1.msra.mxu0 0.0
        %2516 = vmatprep.subr.mxu0 0.0
        %2517 = vmatpush1.msra.mxu0 0.0
        %2518 = vmatprep.subr.mxu0 0.0
        %2519 = vmatpush1.msra.mxu0 0.0
        %2520 = vmatprep.subr.mxu0 0.0
        %2521 = vmatpush1.msra.mxu0 0.0
        %2522 = vmatprep.subr.mxu0 0.0
        %2523 = vmatpush1.msra.mxu0 0.0
        %2524 = vmatprep.subr.mxu0 0.0
        %2525 = vmatpush1.msra.mxu0 0.0
        %2526 = vmatprep.subr.mxu0 0.0
        %2527 = vmatpush1.msra.mxu0 0.0
        %2528 = vmatprep.subr.mxu0 0.0
        %2529 = vmatpush1.msra.mxu0 0.0
        %2530 = vmatprep.mubr.f32.mxu0 0.0
        %2531 = vmatmul.mubr.f32.gmra.mrb[0].mxu0 %v2464
        %v2532 = vpop.f32.mrb[0].mxu0
        %v2533 = vadd.f32 %v2461, %v2532
        %v2534 = vpop.f32.mrb[0].mxu0
        %2535 = vdwg.mxu0
        %2537 = vrot.lane.b32.xlu0 %v2533, 96
        %v2538 = vpop.permute.xlu0 %2537
        %v2539 = vsel %vm1230, %v2533, 0
        %v2541 = vsel %vm1230, %v2538, 0
        %2543 = vmatprep.subr.mxu0 0.0
        %2544 = vmatpush1.xpose.msra.mxu0 %v2541
        %2545 = vmatprep.subr.mxu0 0.0
        %2546 = vmatpush1.xpose.msra.mxu0 0.0
        %2547 = vmatprep.subr.mxu0 0.0
        %2548 = vmatpush1.xpose.msra.mxu0 0.0
        %2549 = vmatprep.subr.mxu0 0.0
        %2550 = vmatpush1.xpose.msra.mxu0 0.0
        %2551 = vmatprep.subr.mxu0 0.0
        %2552 = vmatpush1.xpose.msra.mxu0 0.0
        %2553 = vmatprep.subr.mxu0 0.0
        %2554 = vmatpush1.xpose.msra.mxu0 0.0
        %2555 = vmatprep.subr.mxu0 0.0
        %2556 = vmatpush1.xpose.msra.mxu0 0.0
        %2557 = vmatprep.subr.mxu0 0.0
        %2558 = vmatpush1.xpose.msra.mxu0 0.0
        %2559 = vmatprep.subr.mxu0 0.0
        %2560 = vmatpush1.xpose.msra.mxu0 0.0
        %2561 = vmatprep.subr.mxu0 0.0
        %2562 = vmatpush1.xpose.msra.mxu0 0.0
        %2563 = vmatprep.subr.mxu0 0.0
        %2564 = vmatpush1.xpose.msra.mxu0 0.0
        %2565 = vmatprep.subr.mxu0 0.0
        %2566 = vmatpush1.xpose.msra.mxu0 0.0
        %2567 = vmatprep.subr.mxu0 0.0
        %2568 = vmatpush1.xpose.msra.mxu0 0.0
        %2569 = vmatprep.subr.mxu0 0.0
        %2570 = vmatpush1.xpose.msra.mxu0 0.0
        %2571 = vmatprep.subr.mxu0 0.0
        %2572 = vmatpush1.xpose.msra.mxu0 0.0
        %2573 = vmatprep.subr.mxu0 0.0
        %2574 = vmatpush1.xpose.msra.mxu0 0.0
        %2575 = vmatprep.subr.mxu0 0.0
        %2576 = vmatpush1.xpose.msra.mxu0 0.0
        %2577 = vmatprep.subr.mxu0 0.0
        %2578 = vmatpush1.xpose.msra.mxu0 0.0
        %2579 = vmatprep.subr.mxu0 0.0
        %2580 = vmatpush1.xpose.msra.mxu0 0.0
        %2581 = vmatprep.subr.mxu0 0.0
        %2582 = vmatpush1.xpose.msra.mxu0 0.0
        %2583 = vmatprep.subr.mxu0 0.0
        %2584 = vmatpush1.xpose.msra.mxu0 0.0
        %2585 = vmatprep.subr.mxu0 0.0
        %2586 = vmatpush1.xpose.msra.mxu0 0.0
        %2587 = vmatprep.subr.mxu0 0.0
        %2588 = vmatpush1.xpose.msra.mxu0 0.0
        %2589 = vmatprep.subr.mxu0 0.0
        %2590 = vmatpush1.xpose.msra.mxu0 0.0
        %2591 = vmatprep.subr.mxu0 0.0
        %2592 = vmatpush1.xpose.msra.mxu0 0.0
        %2593 = vmatprep.subr.mxu0 0.0
        %2594 = vmatpush1.xpose.msra.mxu0 0.0
        %2595 = vmatprep.subr.mxu0 0.0
        %2596 = vmatpush1.xpose.msra.mxu0 0.0
        %2597 = vmatprep.subr.mxu0 0.0
        %2598 = vmatpush1.xpose.msra.mxu0 0.0
        %2599 = vmatprep.subr.mxu0 0.0
        %2600 = vmatpush1.xpose.msra.mxu0 0.0
        %2601 = vmatprep.subr.mxu0 0.0
        %2602 = vmatpush1.xpose.msra.mxu0 0.0
        %2603 = vmatprep.subr.mxu0 0.0
        %2604 = vmatpush1.xpose.msra.mxu0 0.0
        %2605 = vmatprep.subr.mxu0 0.0
        %2606 = vmatpush1.xpose.msra.mxu0 0.0
        %2607 = vmatprep.mubr.f32.mxu0 0.0
        %2608 = vmatmul.mubr.f32.gmra.mrb[0].mxu0 %v2539
        %v2609 = vpop.f32.mrb[0].mxu0
        %v2610 = vadd.f32 0.0, %v2609
        %v2611 = vpop.f32.mrb[0].mxu0
        %2612 = vdwg.mxu0
        %2613 = vrot.lane.b32.xlu0 %v2533, 120
        %v2614 = vpop.permute.xlu0 %2613
        %2615 = vrot.lane.b32.xlu0 %v2533, 88
        %v2616 = vpop.permute.xlu0 %2615
        %v2617 = vsel %vm1230, %v2614, 0
        %v2619 = vsel %vm1230, %v2616, 0
        %2621 = vmatprep.subr.mxu0 0.0
        %2622 = vmatpush1.xpose.msra.mxu0 %v2619
        %2623 = vmatprep.subr.mxu0 0.0
        %2624 = vmatpush1.xpose.msra.mxu0 0.0
        %2625 = vmatprep.subr.mxu0 0.0
        %2626 = vmatpush1.xpose.msra.mxu0 0.0
        %2627 = vmatprep.subr.mxu0 0.0
        %2628 = vmatpush1.xpose.msra.mxu0 0.0
        %2629 = vmatprep.subr.mxu0 0.0
        %2630 = vmatpush1.xpose.msra.mxu0 0.0
        %2631 = vmatprep.subr.mxu0 0.0
        %2632 = vmatpush1.xpose.msra.mxu0 0.0
        %2633 = vmatprep.subr.mxu0 0.0
        %2634 = vmatpush1.xpose.msra.mxu0 0.0
        %2635 = vmatprep.subr.mxu0 0.0
        %2636 = vmatpush1.xpose.msra.mxu0 0.0
        %2637 = vmatprep.subr.mxu0 0.0
        %2638 = vmatpush1.xpose.msra.mxu0 0.0
        %2639 = vmatprep.subr.mxu0 0.0
        %2640 = vmatpush1.xpose.msra.mxu0 0.0
        %2641 = vmatprep.subr.mxu0 0.0
        %2642 = vmatpush1.xpose.msra.mxu0 0.0
        %2643 = vmatprep.subr.mxu0 0.0
        %2644 = vmatpush1.xpose.msra.mxu0 0.0
        %2645 = vmatprep.subr.mxu0 0.0
        %2646 = vmatpush1.xpose.msra.mxu0 0.0
        %2647 = vmatprep.subr.mxu0 0.0
        %2648 = vmatpush1.xpose.msra.mxu0 0.0
        %2649 = vmatprep.subr.mxu0 0.0
        %2650 = vmatpush1.xpose.msra.mxu0 0.0
        %2651 = vmatprep.subr.mxu0 0.0
        %2652 = vmatpush1.xpose.msra.mxu0 0.0
        %2653 = vmatprep.subr.mxu0 0.0
        %2654 = vmatpush1.xpose.msra.mxu0 0.0
        %2655 = vmatprep.subr.mxu0 0.0
        %2656 = vmatpush1.xpose.msra.mxu0 0.0
        %2657 = vmatprep.subr.mxu0 0.0
        %2658 = vmatpush1.xpose.msra.mxu0 0.0
        %2659 = vmatprep.subr.mxu0 0.0
        %2660 = vmatpush1.xpose.msra.mxu0 0.0
        %2661 = vmatprep.subr.mxu0 0.0
        %2662 = vmatpush1.xpose.msra.mxu0 0.0
        %2663 = vmatprep.subr.mxu0 0.0
        %2664 = vmatpush1.xpose.msra.mxu0 0.0
        %2665 = vmatprep.subr.mxu0 0.0
        %2666 = vmatpush1.xpose.msra.mxu0 0.0
        %2667 = vmatprep.subr.mxu0 0.0
        %2668 = vmatpush1.xpose.msra.mxu0 0.0
        %2669 = vmatprep.subr.mxu0 0.0
        %2670 = vmatpush1.xpose.msra.mxu0 0.0
        %2671 = vmatprep.subr.mxu0 0.0
        %2672 = vmatpush1.xpose.msra.mxu0 0.0
        %2673 = vmatprep.subr.mxu0 0.0
        %2674 = vmatpush1.xpose.msra.mxu0 0.0
        %2675 = vmatprep.subr.mxu0 0.0
        %2676 = vmatpush1.xpose.msra.mxu0 0.0
        %2677 = vmatprep.subr.mxu0 0.0
        %2678 = vmatpush1.xpose.msra.mxu0 0.0
        %2679 = vmatprep.subr.mxu0 0.0
        %2680 = vmatpush1.xpose.msra.mxu0 0.0
        %2681 = vmatprep.subr.mxu0 0.0
        %2682 = vmatpush1.xpose.msra.mxu0 0.0
        %2683 = vmatprep.subr.mxu0 0.0
        %2684 = vmatpush1.xpose.msra.mxu0 0.0
        %2685 = vmatprep.mubr.f32.mxu0 0.0
        %2686 = vmatmul.mubr.f32.gmra.mrb[0].mxu0 %v2617
        %v2687 = vpop.f32.mrb[0].mxu0
        %v2688 = vadd.f32 0.0, %v2687
        %v2689 = vpop.f32.mrb[0].mxu0
        %2690 = vdwg.mxu0
        %2691 = vrot.lane.b32.xlu0 %v2533, 112
        %v2692 = vpop.permute.xlu0 %2691
        %2693 = vrot.lane.b32.xlu0 %v2533, 80
        %v2694 = vpop.permute.xlu0 %2693
        %v2695 = vsel %vm1230, %v2692, 0
        %v2697 = vsel %vm1230, %v2694, 0
        %2699 = vmatprep.subr.mxu0 0.0
        %2700 = vmatpush1.xpose.msra.mxu0 %v2697
        %2701 = vmatprep.subr.mxu0 0.0
        %2702 = vmatpush1.xpose.msra.mxu0 0.0
        %2703 = vmatprep.subr.mxu0 0.0
        %2704 = vmatpush1.xpose.msra.mxu0 0.0
        %2705 = vmatprep.subr.mxu0 0.0
        %2706 = vmatpush1.xpose.msra.mxu0 0.0
        %2707 = vmatprep.subr.mxu0 0.0
        %2708 = vmatpush1.xpose.msra.mxu0 0.0
        %2709 = vmatprep.subr.mxu0 0.0
        %2710 = vmatpush1.xpose.msra.mxu0 0.0
        %2711 = vmatprep.subr.mxu0 0.0
        %2712 = vmatpush1.xpose.msra.mxu0 0.0
        %2713 = vmatprep.subr.mxu0 0.0
        %2714 = vmatpush1.xpose.msra.mxu0 0.0
        %2715 = vmatprep.subr.mxu0 0.0
        %2716 = vmatpush1.xpose.msra.mxu0 0.0
        %2717 = vmatprep.subr.mxu0 0.0
        %2718 = vmatpush1.xpose.msra.mxu0 0.0
        %2719 = vmatprep.subr.mxu0 0.0
        %2720 = vmatpush1.xpose.msra.mxu0 0.0
        %2721 = vmatprep.subr.mxu0 0.0
        %2722 = vmatpush1.xpose.msra.mxu0 0.0
        %2723 = vmatprep.subr.mxu0 0.0
        %2724 = vmatpush1.xpose.msra.mxu0 0.0
        %2725 = vmatprep.subr.mxu0 0.0
        %2726 = vmatpush1.xpose.msra.mxu0 0.0
        %2727 = vmatprep.subr.mxu0 0.0
        %2728 = vmatpush1.xpose.msra.mxu0 0.0
        %2729 = vmatprep.subr.mxu0 0.0
        %2730 = vmatpush1.xpose.msra.mxu0 0.0
        %2731 = vmatprep.subr.mxu0 0.0
        %2732 = vmatpush1.xpose.msra.mxu0 0.0
        %2733 = vmatprep.subr.mxu0 0.0
        %2734 = vmatpush1.xpose.msra.mxu0 0.0
        %2735 = vmatprep.subr.mxu0 0.0
        %2736 = vmatpush1.xpose.msra.mxu0 0.0
        %2737 = vmatprep.subr.mxu0 0.0
        %2738 = vmatpush1.xpose.msra.mxu0 0.0
        %2739 = vmatprep.subr.mxu0 0.0
        %2740 = vmatpush1.xpose.msra.mxu0 0.0
        %2741 = vmatprep.subr.mxu0 0.0
        %2742 = vmatpush1.xpose.msra.mxu0 0.0
        %2743 = vmatprep.subr.mxu0 0.0
        %2744 = vmatpush1.xpose.msra.mxu0 0.0
        %2745 = vmatprep.subr.mxu0 0.0
        %2746 = vmatpush1.xpose.msra.mxu0 0.0
        %2747 = vmatprep.subr.mxu0 0.0
        %2748 = vmatpush1.xpose.msra.mxu0 0.0
        %2749 = vmatprep.subr.mxu0 0.0
        %2750 = vmatpush1.xpose.msra.mxu0 0.0
        %2751 = vmatprep.subr.mxu0 0.0
        %2752 = vmatpush1.xpose.msra.mxu0 0.0
        %2753 = vmatprep.subr.mxu0 0.0
        %2754 = vmatpush1.xpose.msra.mxu0 0.0
        %2755 = vmatprep.subr.mxu0 0.0
        %2756 = vmatpush1.xpose.msra.mxu0 0.0
        %2757 = vmatprep.subr.mxu0 0.0
        %2758 = vmatpush1.xpose.msra.mxu0 0.0
        %2759 = vmatprep.subr.mxu0 0.0
        %2760 = vmatpush1.xpose.msra.mxu0 0.0
        %2761 = vmatprep.subr.mxu0 0.0
        %2762 = vmatpush1.xpose.msra.mxu0 0.0
        %2763 = vmatprep.mubr.f32.mxu0 0.0
        %2764 = vmatmul.mubr.f32.gmra.mrb[0].mxu0 %v2695
        %v2765 = vpop.f32.mrb[0].mxu0
        %v2766 = vadd.f32 0.0, %v2765
        %v2767 = vpop.f32.mrb[0].mxu0
        %2768 = vdwg.mxu0
        %2769 = vrot.lane.b32.xlu0 %v2533, 104
        %v2770 = vpop.permute.xlu0 %2769
        %2771 = vrot.lane.b32.xlu0 %v2533, 72
        %v2772 = vpop.permute.xlu0 %2771
        %v2773 = vsel %vm1230, %v2770, 0
        %v2775 = vsel %vm1230, %v2772, 0
        %2777 = vmatprep.subr.mxu0 0.0
        %2778 = vmatpush1.xpose.msra.mxu0 %v2775
        %2779 = vmatprep.subr.mxu0 0.0
        %2780 = vmatpush1.xpose.msra.mxu0 0.0
        %2781 = vmatprep.subr.mxu0 0.0
        %2782 = vmatpush1.xpose.msra.mxu0 0.0
        %2783 = vmatprep.subr.mxu0 0.0
        %2784 = vmatpush1.xpose.msra.mxu0 0.0
        %2785 = vmatprep.subr.mxu0 0.0
        %2786 = vmatpush1.xpose.msra.mxu0 0.0
        %2787 = vmatprep.subr.mxu0 0.0
        %2788 = vmatpush1.xpose.msra.mxu0 0.0
        %2789 = vmatprep.subr.mxu0 0.0
        %2790 = vmatpush1.xpose.msra.mxu0 0.0
        %2791 = vmatprep.subr.mxu0 0.0
        %2792 = vmatpush1.xpose.msra.mxu0 0.0
        %2793 = vmatprep.subr.mxu0 0.0
        %2794 = vmatpush1.xpose.msra.mxu0 0.0
        %2795 = vmatprep.subr.mxu0 0.0
        %2796 = vmatpush1.xpose.msra.mxu0 0.0
        %2797 = vmatprep.subr.mxu0 0.0
        %2798 = vmatpush1.xpose.msra.mxu0 0.0
        %2799 = vmatprep.subr.mxu0 0.0
        %2800 = vmatpush1.xpose.msra.mxu0 0.0
        %2801 = vmatprep.subr.mxu0 0.0
        %2802 = vmatpush1.xpose.msra.mxu0 0.0
        %2803 = vmatprep.subr.mxu0 0.0
        %2804 = vmatpush1.xpose.msra.mxu0 0.0
        %2805 = vmatprep.subr.mxu0 0.0
        %2806 = vmatpush1.xpose.msra.mxu0 0.0
        %2807 = vmatprep.subr.mxu0 0.0
        %2808 = vmatpush1.xpose.msra.mxu0 0.0
        %2809 = vmatprep.subr.mxu0 0.0
        %2810 = vmatpush1.xpose.msra.mxu0 0.0
        %2811 = vmatprep.subr.mxu0 0.0
        %2812 = vmatpush1.xpose.msra.mxu0 0.0
        %2813 = vmatprep.subr.mxu0 0.0
        %2814 = vmatpush1.xpose.msra.mxu0 0.0
        %2815 = vmatprep.subr.mxu0 0.0
        %2816 = vmatpush1.xpose.msra.mxu0 0.0
        %2817 = vmatprep.subr.mxu0 0.0
        %2818 = vmatpush1.xpose.msra.mxu0 0.0
        %2819 = vmatprep.subr.mxu0 0.0
        %2820 = vmatpush1.xpose.msra.mxu0 0.0
        %2821 = vmatprep.subr.mxu0 0.0
        %2822 = vmatpush1.xpose.msra.mxu0 0.0
        %2823 = vmatprep.subr.mxu0 0.0
        %2824 = vmatpush1.xpose.msra.mxu0 0.0
        %2825 = vmatprep.subr.mxu0 0.0
        %2826 = vmatpush1.xpose.msra.mxu0 0.0
        %2827 = vmatprep.subr.mxu0 0.0
        %2828 = vmatpush1.xpose.msra.mxu0 0.0
        %2829 = vmatprep.subr.mxu0 0.0
        %2830 = vmatpush1.xpose.msra.mxu0 0.0
        %2831 = vmatprep.subr.mxu0 0.0
        %2832 = vmatpush1.xpose.msra.mxu0 0.0
        %2833 = vmatprep.subr.mxu0 0.0
        %2834 = vmatpush1.xpose.msra.mxu0 0.0
        %2835 = vmatprep.subr.mxu0 0.0
        %2836 = vmatpush1.xpose.msra.mxu0 0.0
        %2837 = vmatprep.subr.mxu0 0.0
        %2838 = vmatpush1.xpose.msra.mxu0 0.0
        %2839 = vmatprep.subr.mxu0 0.0
        %2840 = vmatpush1.xpose.msra.mxu0 0.0
        %2841 = vmatprep.mubr.f32.mxu0 0.0
        %2842 = vmatmul.mubr.f32.gmra.mrb[0].mxu0 %v2773
        %v2843 = vpop.f32.mrb[0].mxu0
        %v2844 = vadd.f32 0.0, %v2843
        %v2845 = vpop.f32.mrb[0].mxu0
        %2846 = vdwg.mxu0
        %v2847 = vmul.f32 %v2610, 0.35355338
        %v2848 = vmul.f32 %v2688, 0.35355338
        %v2849 = vmul.f32 %v2766, 0.35355338
        %v2850 = vmul.f32 %v2844, 0.35355338
        %v2851 = vsel %vm1104, %v2847, -1e+09
        %v2852 = vsel %vm1104, %v2848, -1e+09
        %v2853 = vsel %vm1104, %v2849, -1e+09
        %v2854 = vsel %vm1104, %v2850, -1e+09
        %v2855 = vsel %vm1230, %v2851, -inf
        %2856 = vmax.xlane.f32.xlu0 %v2855
        %v2857 = vpop.xlane.xlu0 %2856
        %v2858 = vsel %vm1230, %v2852, -inf
        %2859 = vmax.xlane.f32.xlu0 %v2858
        %v2860 = vpop.xlane.xlu0 %2859
        %v2861 = vsel %vm1230, %v2853, -inf
        %2862 = vmax.xlane.f32.xlu0 %v2861
        %v2863 = vpop.xlane.xlu0 %2862
        %v2864 = vsel %vm1230, %v2854, -inf
        %2865 = vmax.xlane.f32.xlu0 %v2864
        %v2866 = vpop.xlane.xlu0 %2865
        %v2867 = vsub.f32 %v2851, %v2857
        %v2868 = vsub.f32 %v2852, %v2860
        %v2869 = vsub.f32 %v2853, %v2863
        %v2870 = vsub.f32 %v2854, %v2866
        %v2871 = vmul.f32 %v2867, 1.442695
        %v2872 = vpow.pop %v2871
        %v2873 = vmul.f32 %v2868, 1.442695
        %v2874 = vpow.pop %v2873
        %v2875 = vmul.f32 %v2869, 1.442695
        %v2876 = vpow.pop %v2875
        %v2877 = vmul.f32 %v2870, 1.442695
        %v2878 = vpow.pop %v2877
        %v2879 = vsel %vm1230, %v2872, 0.0
        %2880 = vadd.xlane.f32.xlu0 %v2879
        %v2881 = vpop.xlane.xlu0 %2880
        %v2882 = vsel %vm1230, %v2874, 0.0
        %2883 = vadd.xlane.f32.xlu0 %v2882
        %v2884 = vpop.xlane.xlu0 %2883
        %v2885 = vsel %vm1230, %v2876, 0.0
        %2886 = vadd.xlane.f32.xlu0 %v2885
        %v2887 = vpop.xlane.xlu0 %2886
        %v2888 = vsel %vm1230, %v2878, 0.0
        %2889 = vadd.xlane.f32.xlu0 %v2888
        %v2890 = vpop.xlane.xlu0 %2889
        %v2891 = vrcp.pop %v2881
        %v2892 = vrcp.pop %v2884
        %v2893 = vrcp.pop %v2887
        %v2894 = vrcp.pop %v2890
        %v2895 = vmul.f32 %v2872, %v2891
        %v2896 = vmul.f32 %v2874, %v2892
        %v2897 = vmul.f32 %v2876, %v2893
        %v2898 = vmul.f32 %v2878, %v2894
        %2899 = vrot.lane.b32.xlu0 %v2533, 64
        %v2900 = vpop.permute.xlu0 %2899
        %v2903 = vsel %vm1230, %v2895, 0
        %2905 = vmatprep.subr.mxu0 0.0
        %2906 = vmatpush1.msra.mxu0 %v2900
        %2907 = vmatprep.subr.mxu0 0.0
        %2908 = vmatpush1.msra.mxu0 0.0
        %2909 = vmatprep.subr.mxu0 0.0
        %2910 = vmatpush1.msra.mxu0 0.0
        %2911 = vmatprep.subr.mxu0 0.0
        %2912 = vmatpush1.msra.mxu0 0.0
        %2913 = vmatprep.subr.mxu0 0.0
        %2914 = vmatpush1.msra.mxu0 0.0
        %2915 = vmatprep.subr.mxu0 0.0
        %2916 = vmatpush1.msra.mxu0 0.0
        %2917 = vmatprep.subr.mxu0 0.0
        %2918 = vmatpush1.msra.mxu0 0.0
        %2919 = vmatprep.subr.mxu0 0.0
        %2920 = vmatpush1.msra.mxu0 0.0
        %2921 = vmatprep.subr.mxu0 0.0
        %2922 = vmatpush1.msra.mxu0 0.0
        %2923 = vmatprep.subr.mxu0 0.0
        %2924 = vmatpush1.msra.mxu0 0.0
        %2925 = vmatprep.subr.mxu0 0.0
        %2926 = vmatpush1.msra.mxu0 0.0
        %2927 = vmatprep.subr.mxu0 0.0
        %2928 = vmatpush1.msra.mxu0 0.0
        %2929 = vmatprep.subr.mxu0 0.0
        %2930 = vmatpush1.msra.mxu0 0.0
        %2931 = vmatprep.subr.mxu0 0.0
        %2932 = vmatpush1.msra.mxu0 0.0
        %2933 = vmatprep.subr.mxu0 0.0
        %2934 = vmatpush1.msra.mxu0 0.0
        %2935 = vmatprep.subr.mxu0 0.0
        %2936 = vmatpush1.msra.mxu0 0.0
        %2937 = vmatprep.subr.mxu0 0.0
        %2938 = vmatpush1.msra.mxu0 0.0
        %2939 = vmatprep.subr.mxu0 0.0
        %2940 = vmatpush1.msra.mxu0 0.0
        %2941 = vmatprep.subr.mxu0 0.0
        %2942 = vmatpush1.msra.mxu0 0.0
        %2943 = vmatprep.subr.mxu0 0.0
        %2944 = vmatpush1.msra.mxu0 0.0
        %2945 = vmatprep.subr.mxu0 0.0
        %2946 = vmatpush1.msra.mxu0 0.0
        %2947 = vmatprep.subr.mxu0 0.0
        %2948 = vmatpush1.msra.mxu0 0.0
        %2949 = vmatprep.subr.mxu0 0.0
        %2950 = vmatpush1.msra.mxu0 0.0
        %2951 = vmatprep.subr.mxu0 0.0
        %2952 = vmatpush1.msra.mxu0 0.0
        %2953 = vmatprep.subr.mxu0 0.0
        %2954 = vmatpush1.msra.mxu0 0.0
        %2955 = vmatprep.subr.mxu0 0.0
        %2956 = vmatpush1.msra.mxu0 0.0
        %2957 = vmatprep.subr.mxu0 0.0
        %2958 = vmatpush1.msra.mxu0 0.0
        %2959 = vmatprep.subr.mxu0 0.0
        %2960 = vmatpush1.msra.mxu0 0.0
        %2961 = vmatprep.subr.mxu0 0.0
        %2962 = vmatpush1.msra.mxu0 0.0
        %2963 = vmatprep.subr.mxu0 0.0
        %2964 = vmatpush1.msra.mxu0 0.0
        %2965 = vmatprep.subr.mxu0 0.0
        %2966 = vmatpush1.msra.mxu0 0.0
        %2967 = vmatprep.subr.mxu0 0.0
        %2968 = vmatpush1.msra.mxu0 0.0
        %2969 = vmatprep.mubr.f32.mxu0 0.0
        %2970 = vmatmul.mubr.f32.gmra.mrb[0].mxu0 %v2903
        %v2971 = vpop.f32.mrb[0].mxu0
        %v2972 = vadd.f32 0.0, %v2971
        %v2973 = vpop.f32.mrb[0].mxu0
        %2974 = vdwg.mxu0
        %2975 = vrot.lane.b32.xlu0 %v2533, 56
        %v2976 = vpop.permute.xlu0 %2975
        %v2979 = vsel %vm1230, %v2896, 0
        %2981 = vmatprep.subr.mxu0 0.0
        %2982 = vmatpush1.msra.mxu0 %v2976
        %2983 = vmatprep.subr.mxu0 0.0
        %2984 = vmatpush1.msra.mxu0 0.0
        %2985 = vmatprep.subr.mxu0 0.0
        %2986 = vmatpush1.msra.mxu0 0.0
        %2987 = vmatprep.subr.mxu0 0.0
        %2988 = vmatpush1.msra.mxu0 0.0
        %2989 = vmatprep.subr.mxu0 0.0
        %2990 = vmatpush1.msra.mxu0 0.0
        %2991 = vmatprep.subr.mxu0 0.0
        %2992 = vmatpush1.msra.mxu0 0.0
        %2993 = vmatprep.subr.mxu0 0.0
        %2994 = vmatpush1.msra.mxu0 0.0
        %2995 = vmatprep.subr.mxu0 0.0
        %2996 = vmatpush1.msra.mxu0 0.0
        %2997 = vmatprep.subr.mxu0 0.0
        %2998 = vmatpush1.msra.mxu0 0.0
        %2999 = vmatprep.subr.mxu0 0.0
        %3000 = vmatpush1.msra.mxu0 0.0
        %3001 = vmatprep.subr.mxu0 0.0
        %3002 = vmatpush1.msra.mxu0 0.0
        %3003 = vmatprep.subr.mxu0 0.0
        %3004 = vmatpush1.msra.mxu0 0.0
        %3005 = vmatprep.subr.mxu0 0.0
        %3006 = vmatpush1.msra.mxu0 0.0
        %3007 = vmatprep.subr.mxu0 0.0
        %3008 = vmatpush1.msra.mxu0 0.0
        %3009 = vmatprep.subr.mxu0 0.0
        %3010 = vmatpush1.msra.mxu0 0.0
        %3011 = vmatprep.subr.mxu0 0.0
        %3012 = vmatpush1.msra.mxu0 0.0
        %3013 = vmatprep.subr.mxu0 0.0
        %3014 = vmatpush1.msra.mxu0 0.0
        %3015 = vmatprep.subr.mxu0 0.0
        %3016 = vmatpush1.msra.mxu0 0.0
        %3017 = vmatprep.subr.mxu0 0.0
        %3018 = vmatpush1.msra.mxu0 0.0
        %3019 = vmatprep.subr.mxu0 0.0
        %3020 = vmatpush1.msra.mxu0 0.0
        %3021 = vmatprep.subr.mxu0 0.0
        %3022 = vmatpush1.msra.mxu0 0.0
        %3023 = vmatprep.subr.mxu0 0.0
        %3024 = vmatpush1.msra.mxu0 0.0
        %3025 = vmatprep.subr.mxu0 0.0
        %3026 = vmatpush1.msra.mxu0 0.0
        %3027 = vmatprep.subr.mxu0 0.0
        %3028 = vmatpush1.msra.mxu0 0.0
        %3029 = vmatprep.subr.mxu0 0.0
        %3030 = vmatpush1.msra.mxu0 0.0
        %3031 = vmatprep.subr.mxu0 0.0
        %3032 = vmatpush1.msra.mxu0 0.0
        %3033 = vmatprep.subr.mxu0 0.0
        %3034 = vmatpush1.msra.mxu0 0.0
        %3035 = vmatprep.subr.mxu0 0.0
        %3036 = vmatpush1.msra.mxu0 0.0
        %3037 = vmatprep.subr.mxu0 0.0
        %3038 = vmatpush1.msra.mxu0 0.0
        %3039 = vmatprep.subr.mxu0 0.0
        %3040 = vmatpush1.msra.mxu0 0.0
        %3041 = vmatprep.subr.mxu0 0.0
        %3042 = vmatpush1.msra.mxu0 0.0
        %3043 = vmatprep.subr.mxu0 0.0
        %3044 = vmatpush1.msra.mxu0 0.0
        %3045 = vmatprep.mubr.f32.mxu0 0.0
        %3046 = vmatmul.mubr.f32.gmra.mrb[0].mxu0 %v2979
        %v3047 = vpop.f32.mrb[0].mxu0
        %v3048 = vadd.f32 0.0, %v3047
        %v3049 = vpop.f32.mrb[0].mxu0
        %3050 = vdwg.mxu0
        %v3052 = vsel %vm1230, %v3048, 0
        %3054 = vmatprep.subr.mxu0 0.0
        %3055 = vmatpush1.msra.mxu0 %v2418
        %3056 = vmatprep.subr.mxu0 0.0
        %3057 = vmatpush1.msra.mxu0 0.0
        %3058 = vmatprep.subr.mxu0 0.0
        %3059 = vmatpush1.msra.mxu0 0.0
        %3060 = vmatprep.subr.mxu0 0.0
        %3061 = vmatpush1.msra.mxu0 0.0
        %3062 = vmatprep.subr.mxu0 0.0
        %3063 = vmatpush1.msra.mxu0 0.0
        %3064 = vmatprep.subr.mxu0 0.0
        %3065 = vmatpush1.msra.mxu0 0.0
        %3066 = vmatprep.subr.mxu0 0.0
        %3067 = vmatpush1.msra.mxu0 0.0
        %3068 = vmatprep.subr.mxu0 0.0
        %3069 = vmatpush1.msra.mxu0 0.0
        %3070 = vmatprep.subr.mxu0 0.0
        %3071 = vmatpush1.msra.mxu0 0.0
        %3072 = vmatprep.subr.mxu0 0.0
        %3073 = vmatpush1.msra.mxu0 0.0
        %3074 = vmatprep.subr.mxu0 0.0
        %3075 = vmatpush1.msra.mxu0 0.0
        %3076 = vmatprep.subr.mxu0 0.0
        %3077 = vmatpush1.msra.mxu0 0.0
        %3078 = vmatprep.subr.mxu0 0.0
        %3079 = vmatpush1.msra.mxu0 0.0
        %3080 = vmatprep.subr.mxu0 0.0
        %3081 = vmatpush1.msra.mxu0 0.0
        %3082 = vmatprep.subr.mxu0 0.0
        %3083 = vmatpush1.msra.mxu0 0.0
        %3084 = vmatprep.subr.mxu0 0.0
        %3085 = vmatpush1.msra.mxu0 0.0
        %3086 = vmatprep.subr.mxu0 0.0
        %3087 = vmatpush1.msra.mxu0 0.0
        %3088 = vmatprep.subr.mxu0 0.0
        %3089 = vmatpush1.msra.mxu0 0.0
        %3090 = vmatprep.subr.mxu0 0.0
        %3091 = vmatpush1.msra.mxu0 0.0
        %3092 = vmatprep.subr.mxu0 0.0
        %3093 = vmatpush1.msra.mxu0 0.0
        %3094 = vmatprep.subr.mxu0 0.0
        %3095 = vmatpush1.msra.mxu0 0.0
        %3096 = vmatprep.subr.mxu0 0.0
        %3097 = vmatpush1.msra.mxu0 0.0
        %3098 = vmatprep.subr.mxu0 0.0
        %3099 = vmatpush1.msra.mxu0 0.0
        %3100 = vmatprep.subr.mxu0 0.0
        %3101 = vmatpush1.msra.mxu0 0.0
        %3102 = vmatprep.subr.mxu0 0.0
        %3103 = vmatpush1.msra.mxu0 0.0
        %3104 = vmatprep.subr.mxu0 0.0
        %3105 = vmatpush1.msra.mxu0 0.0
        %3106 = vmatprep.subr.mxu0 0.0
        %3107 = vmatpush1.msra.mxu0 0.0
        %3108 = vmatprep.subr.mxu0 0.0
        %3109 = vmatpush1.msra.mxu0 0.0
        %3110 = vmatprep.subr.mxu0 0.0
        %3111 = vmatpush1.msra.mxu0 0.0
        %3112 = vmatprep.subr.mxu0 0.0
        %3113 = vmatpush1.msra.mxu0 0.0
        %3114 = vmatprep.subr.mxu0 0.0
        %3115 = vmatpush1.msra.mxu0 0.0
        %3116 = vmatprep.subr.mxu0 0.0
        %3117 = vmatpush1.msra.mxu0 0.0
        %3118 = vmatprep.mubr.f32.mxu0 0.0
        %3119 = vmatmul.mubr.f32.gmra.mrb[0].mxu0 %v3052
        %v3120 = vpop.f32.mrb[0].mxu0
        %v3121 = vadd.f32 0.0, %v3120
        %v3122 = vpop.f32.mrb[0].mxu0
        %3123 = vdwg.mxu0
        %v3125 = vsel %vm1230, %v2972, 0
        %3127 = vmatprep.subr.mxu0 0.0
        %3128 = vmatpush1.msra.mxu0 %v2417
        %3129 = vmatprep.subr.mxu0 0.0
        %3130 = vmatpush1.msra.mxu0 0.0
        %3131 = vmatprep.subr.mxu0 0.0
        %3132 = vmatpush1.msra.mxu0 0.0
        %3133 = vmatprep.subr.mxu0 0.0
        %3134 = vmatpush1.msra.mxu0 0.0
        %3135 = vmatprep.subr.mxu0 0.0
        %3136 = vmatpush1.msra.mxu0 0.0
        %3137 = vmatprep.subr.mxu0 0.0
        %3138 = vmatpush1.msra.mxu0 0.0
        %3139 = vmatprep.subr.mxu0 0.0
        %3140 = vmatpush1.msra.mxu0 0.0
        %3141 = vmatprep.subr.mxu0 0.0
        %3142 = vmatpush1.msra.mxu0 0.0
        %3143 = vmatprep.subr.mxu0 0.0
        %3144 = vmatpush1.msra.mxu0 0.0
        %3145 = vmatprep.subr.mxu0 0.0
        %3146 = vmatpush1.msra.mxu0 0.0
        %3147 = vmatprep.subr.mxu0 0.0
        %3148 = vmatpush1.msra.mxu0 0.0
        %3149 = vmatprep.subr.mxu0 0.0
        %3150 = vmatpush1.msra.mxu0 0.0
        %3151 = vmatprep.subr.mxu0 0.0
        %3152 = vmatpush1.msra.mxu0 0.0
        %3153 = vmatprep.subr.mxu0 0.0
        %3154 = vmatpush1.msra.mxu0 0.0
        %3155 = vmatprep.subr.mxu0 0.0
        %3156 = vmatpush1.msra.mxu0 0.0
        %3157 = vmatprep.subr.mxu0 0.0
        %3158 = vmatpush1.msra.mxu0 0.0
        %3159 = vmatprep.subr.mxu0 0.0
        %3160 = vmatpush1.msra.mxu0 0.0
        %3161 = vmatprep.subr.mxu0 0.0
        %3162 = vmatpush1.msra.mxu0 0.0
        %3163 = vmatprep.subr.mxu0 0.0
        %3164 = vmatpush1.msra.mxu0 0.0
        %3165 = vmatprep.subr.mxu0 0.0
        %3166 = vmatpush1.msra.mxu0 0.0
        %3167 = vmatprep.subr.mxu0 0.0
        %3168 = vmatpush1.msra.mxu0 0.0
        %3169 = vmatprep.subr.mxu0 0.0
        %3170 = vmatpush1.msra.mxu0 0.0
        %3171 = vmatprep.subr.mxu0 0.0
        %3172 = vmatpush1.msra.mxu0 0.0
        %3173 = vmatprep.subr.mxu0 0.0
        %3174 = vmatpush1.msra.mxu0 0.0
        %3175 = vmatprep.subr.mxu0 0.0
        %3176 = vmatpush1.msra.mxu0 0.0
        %3177 = vmatprep.subr.mxu0 0.0
        %3178 = vmatpush1.msra.mxu0 0.0
        %3179 = vmatprep.subr.mxu0 0.0
        %3180 = vmatpush1.msra.mxu0 0.0
        %3181 = vmatprep.subr.mxu0 0.0
        %3182 = vmatpush1.msra.mxu0 0.0
        %3183 = vmatprep.subr.mxu0 0.0
        %3184 = vmatpush1.msra.mxu0 0.0
        %3185 = vmatprep.subr.mxu0 0.0
        %3186 = vmatpush1.msra.mxu0 0.0
        %3187 = vmatprep.subr.mxu0 0.0
        %3188 = vmatpush1.msra.mxu0 0.0
        %3189 = vmatprep.subr.mxu0 0.0
        %3190 = vmatpush1.msra.mxu0 0.0
        %3191 = vmatprep.mubr.f32.mxu0 0.0
        %3192 = vmatmul.mubr.f32.gmra.mrb[0].mxu0 %v3125
        %v3193 = vpop.f32.mrb[0].mxu0
        %v3194 = vadd.f32 %v3121, %v3193
        %v3195 = vpop.f32.mrb[0].mxu0
        %3196 = vdwg.mxu0
        %3197 = vrot.lane.b32.xlu0 %v2533, 48
        %v3198 = vpop.permute.xlu0 %3197
        %v3201 = vsel %vm1230, %v2897, 0
        %3203 = vmatprep.subr.mxu0 0.0
        %3204 = vmatpush1.msra.mxu0 %v3198
        %3205 = vmatprep.subr.mxu0 0.0
        %3206 = vmatpush1.msra.mxu0 0.0
        %3207 = vmatprep.subr.mxu0 0.0
        %3208 = vmatpush1.msra.mxu0 0.0
        %3209 = vmatprep.subr.mxu0 0.0
        %3210 = vmatpush1.msra.mxu0 0.0
        %3211 = vmatprep.subr.mxu0 0.0
        %3212 = vmatpush1.msra.mxu0 0.0
        %3213 = vmatprep.subr.mxu0 0.0
        %3214 = vmatpush1.msra.mxu0 0.0
        %3215 = vmatprep.subr.mxu0 0.0
        %3216 = vmatpush1.msra.mxu0 0.0
        %3217 = vmatprep.subr.mxu0 0.0
        %3218 = vmatpush1.msra.mxu0 0.0
        %3219 = vmatprep.subr.mxu0 0.0
        %3220 = vmatpush1.msra.mxu0 0.0
        %3221 = vmatprep.subr.mxu0 0.0
        %3222 = vmatpush1.msra.mxu0 0.0
        %3223 = vmatprep.subr.mxu0 0.0
        %3224 = vmatpush1.msra.mxu0 0.0
        %3225 = vmatprep.subr.mxu0 0.0
        %3226 = vmatpush1.msra.mxu0 0.0
        %3227 = vmatprep.subr.mxu0 0.0
        %3228 = vmatpush1.msra.mxu0 0.0
        %3229 = vmatprep.subr.mxu0 0.0
        %3230 = vmatpush1.msra.mxu0 0.0
        %3231 = vmatprep.subr.mxu0 0.0
        %3232 = vmatpush1.msra.mxu0 0.0
        %3233 = vmatprep.subr.mxu0 0.0
        %3234 = vmatpush1.msra.mxu0 0.0
        %3235 = vmatprep.subr.mxu0 0.0
        %3236 = vmatpush1.msra.mxu0 0.0
        %3237 = vmatprep.subr.mxu0 0.0
        %3238 = vmatpush1.msra.mxu0 0.0
        %3239 = vmatprep.subr.mxu0 0.0
        %3240 = vmatpush1.msra.mxu0 0.0
        %3241 = vmatprep.subr.mxu0 0.0
        %3242 = vmatpush1.msra.mxu0 0.0
        %3243 = vmatprep.subr.mxu0 0.0
        %3244 = vmatpush1.msra.mxu0 0.0
        %3245 = vmatprep.subr.mxu0 0.0
        %3246 = vmatpush1.msra.mxu0 0.0
        %3247 = vmatprep.subr.mxu0 0.0
        %3248 = vmatpush1.msra.mxu0 0.0
        %3249 = vmatprep.subr.mxu0 0.0
        %3250 = vmatpush1.msra.mxu0 0.0
        %3251 = vmatprep.subr.mxu0 0.0
        %3252 = vmatpush1.msra.mxu0 0.0
        %3253 = vmatprep.subr.mxu0 0.0
        %3254 = vmatpush1.msra.mxu0 0.0
        %3255 = vmatprep.subr.mxu0 0.0
        %3256 = vmatpush1.msra.mxu0 0.0
        %3257 = vmatprep.subr.mxu0 0.0
        %3258 = vmatpush1.msra.mxu0 0.0
        %3259 = vmatprep.subr.mxu0 0.0
        %3260 = vmatpush1.msra.mxu0 0.0
        %3261 = vmatprep.subr.mxu0 0.0
        %3262 = vmatpush1.msra.mxu0 0.0
        %3263 = vmatprep.subr.mxu0 0.0
        %3264 = vmatpush1.msra.mxu0 0.0
        %3265 = vmatprep.subr.mxu0 0.0
        %3266 = vmatpush1.msra.mxu0 0.0
        %3267 = vmatprep.mubr.f32.mxu0 0.0
        %3268 = vmatmul.mubr.f32.gmra.mrb[0].mxu0 %v3201
        %v3269 = vpop.f32.mrb[0].mxu0
        %v3270 = vadd.f32 0.0, %v3269
        %v3271 = vpop.f32.mrb[0].mxu0
        %3272 = vdwg.mxu0
        %v3274 = vsel %vm1230, %v3270, 0
        %3276 = vmatprep.subr.mxu0 0.0
        %3277 = vmatpush1.msra.mxu0 %v2419
        %3278 = vmatprep.subr.mxu0 0.0
        %3279 = vmatpush1.msra.mxu0 0.0
        %3280 = vmatprep.subr.mxu0 0.0
        %3281 = vmatpush1.msra.mxu0 0.0
        %3282 = vmatprep.subr.mxu0 0.0
        %3283 = vmatpush1.msra.mxu0 0.0
        %3284 = vmatprep.subr.mxu0 0.0
        %3285 = vmatpush1.msra.mxu0 0.0
        %3286 = vmatprep.subr.mxu0 0.0
        %3287 = vmatpush1.msra.mxu0 0.0
        %3288 = vmatprep.subr.mxu0 0.0
        %3289 = vmatpush1.msra.mxu0 0.0
        %3290 = vmatprep.subr.mxu0 0.0
        %3291 = vmatpush1.msra.mxu0 0.0
        %3292 = vmatprep.subr.mxu0 0.0
        %3293 = vmatpush1.msra.mxu0 0.0
        %3294 = vmatprep.subr.mxu0 0.0
        %3295 = vmatpush1.msra.mxu0 0.0
        %3296 = vmatprep.subr.mxu0 0.0
        %3297 = vmatpush1.msra.mxu0 0.0
        %3298 = vmatprep.subr.mxu0 0.0
        %3299 = vmatpush1.msra.mxu0 0.0
        %3300 = vmatprep.subr.mxu0 0.0
        %3301 = vmatpush1.msra.mxu0 0.0
        %3302 = vmatprep.subr.mxu0 0.0
        %3303 = vmatpush1.msra.mxu0 0.0
        %3304 = vmatprep.subr.mxu0 0.0
        %3305 = vmatpush1.msra.mxu0 0.0
        %3306 = vmatprep.subr.mxu0 0.0
        %3307 = vmatpush1.msra.mxu0 0.0
        %3308 = vmatprep.subr.mxu0 0.0
        %3309 = vmatpush1.msra.mxu0 0.0
        %3310 = vmatprep.subr.mxu0 0.0
        %3311 = vmatpush1.msra.mxu0 0.0
        %3312 = vmatprep.subr.mxu0 0.0
        %3313 = vmatpush1.msra.mxu0 0.0
        %3314 = vmatprep.subr.mxu0 0.0
        %3315 = vmatpush1.msra.mxu0 0.0
        %3316 = vmatprep.subr.mxu0 0.0
        %3317 = vmatpush1.msra.mxu0 0.0
        %3318 = vmatprep.subr.mxu0 0.0
        %3319 = vmatpush1.msra.mxu0 0.0
        %3320 = vmatprep.subr.mxu0 0.0
        %3321 = vmatpush1.msra.mxu0 0.0
        %3322 = vmatprep.subr.mxu0 0.0
        %3323 = vmatpush1.msra.mxu0 0.0
        %3324 = vmatprep.subr.mxu0 0.0
        %3325 = vmatpush1.msra.mxu0 0.0
        %3326 = vmatprep.subr.mxu0 0.0
        %3327 = vmatpush1.msra.mxu0 0.0
        %3328 = vmatprep.subr.mxu0 0.0
        %3329 = vmatpush1.msra.mxu0 0.0
        %3330 = vmatprep.subr.mxu0 0.0
        %3331 = vmatpush1.msra.mxu0 0.0
        %3332 = vmatprep.subr.mxu0 0.0
        %3333 = vmatpush1.msra.mxu0 0.0
        %3334 = vmatprep.subr.mxu0 0.0
        %3335 = vmatpush1.msra.mxu0 0.0
        %3336 = vmatprep.subr.mxu0 0.0
        %3337 = vmatpush1.msra.mxu0 0.0
        %3338 = vmatprep.subr.mxu0 0.0
        %3339 = vmatpush1.msra.mxu0 0.0
        %3340 = vmatprep.mubr.f32.mxu0 0.0
        %3341 = vmatmul.mubr.f32.gmra.mrb[0].mxu0 %v3274
        %v3342 = vpop.f32.mrb[0].mxu0
        %v3343 = vadd.f32 0.0, %v3342
        %v3344 = vpop.f32.mrb[0].mxu0
        %3345 = vdwg.mxu0
        %v3346 = vadd.f32 %v3194, %v3343
        %3347 = vrot.lane.b32.xlu0 %v2533, 40
        %v3348 = vpop.permute.xlu0 %3347
        %v3351 = vsel %vm1230, %v2898, 0
        %3353 = vmatprep.subr.mxu0 0.0
        %3354 = vmatpush1.msra.mxu0 %v3348
        %3355 = vmatprep.subr.mxu0 0.0
        %3356 = vmatpush1.msra.mxu0 0.0
        %3357 = vmatprep.subr.mxu0 0.0
        %3358 = vmatpush1.msra.mxu0 0.0
        %3359 = vmatprep.subr.mxu0 0.0
        %3360 = vmatpush1.msra.mxu0 0.0
        %3361 = vmatprep.subr.mxu0 0.0
        %3362 = vmatpush1.msra.mxu0 0.0
        %3363 = vmatprep.subr.mxu0 0.0
        %3364 = vmatpush1.msra.mxu0 0.0
        %3365 = vmatprep.subr.mxu0 0.0
        %3366 = vmatpush1.msra.mxu0 0.0
        %3367 = vmatprep.subr.mxu0 0.0
        %3368 = vmatpush1.msra.mxu0 0.0
        %3369 = vmatprep.subr.mxu0 0.0
        %3370 = vmatpush1.msra.mxu0 0.0
        %3371 = vmatprep.subr.mxu0 0.0
        %3372 = vmatpush1.msra.mxu0 0.0
        %3373 = vmatprep.subr.mxu0 0.0
        %3374 = vmatpush1.msra.mxu0 0.0
        %3375 = vmatprep.subr.mxu0 0.0
        %3376 = vmatpush1.msra.mxu0 0.0
        %3377 = vmatprep.subr.mxu0 0.0
        %3378 = vmatpush1.msra.mxu0 0.0
        %3379 = vmatprep.subr.mxu0 0.0
        %3380 = vmatpush1.msra.mxu0 0.0
        %3381 = vmatprep.subr.mxu0 0.0
        %3382 = vmatpush1.msra.mxu0 0.0
        %3383 = vmatprep.subr.mxu0 0.0
        %3384 = vmatpush1.msra.mxu0 0.0
        %3385 = vmatprep.subr.mxu0 0.0
        %3386 = vmatpush1.msra.mxu0 0.0
        %3387 = vmatprep.subr.mxu0 0.0
        %3388 = vmatpush1.msra.mxu0 0.0
        %3389 = vmatprep.subr.mxu0 0.0
        %3390 = vmatpush1.msra.mxu0 0.0
        %3391 = vmatprep.subr.mxu0 0.0
        %3392 = vmatpush1.msra.mxu0 0.0
        %3393 = vmatprep.subr.mxu0 0.0
        %3394 = vmatpush1.msra.mxu0 0.0
        %3395 = vmatprep.subr.mxu0 0.0
        %3396 = vmatpush1.msra.mxu0 0.0
        %3397 = vmatprep.subr.mxu0 0.0
        %3398 = vmatpush1.msra.mxu0 0.0
        %3399 = vmatprep.subr.mxu0 0.0
        %3400 = vmatpush1.msra.mxu0 0.0
        %3401 = vmatprep.subr.mxu0 0.0
        %3402 = vmatpush1.msra.mxu0 0.0
        %3403 = vmatprep.subr.mxu0 0.0
        %3404 = vmatpush1.msra.mxu0 0.0
        %3405 = vmatprep.subr.mxu0 0.0
        %3406 = vmatpush1.msra.mxu0 0.0
        %3407 = vmatprep.subr.mxu0 0.0
        %3408 = vmatpush1.msra.mxu0 0.0
        %3409 = vmatprep.subr.mxu0 0.0
        %3410 = vmatpush1.msra.mxu0 0.0
        %3411 = vmatprep.subr.mxu0 0.0
        %3412 = vmatpush1.msra.mxu0 0.0
        %3413 = vmatprep.subr.mxu0 0.0
        %3414 = vmatpush1.msra.mxu0 0.0
        %3415 = vmatprep.subr.mxu0 0.0
        %3416 = vmatpush1.msra.mxu0 0.0
        %3417 = vmatprep.mubr.f32.mxu0 0.0
        %3418 = vmatmul.mubr.f32.gmra.mrb[0].mxu0 %v3351
        %v3419 = vpop.f32.mrb[0].mxu0
        %v3420 = vadd.f32 0.0, %v3419
        %v3421 = vpop.f32.mrb[0].mxu0
        %3422 = vdwg.mxu0
        %v3424 = vsel %vm1230, %v3420, 0
        %3426 = vmatprep.subr.mxu0 0.0
        %3427 = vmatpush1.msra.mxu0 %v2420
        %3428 = vmatprep.subr.mxu0 0.0
        %3429 = vmatpush1.msra.mxu0 0.0
        %3430 = vmatprep.subr.mxu0 0.0
        %3431 = vmatpush1.msra.mxu0 0.0
        %3432 = vmatprep.subr.mxu0 0.0
        %3433 = vmatpush1.msra.mxu0 0.0
        %3434 = vmatprep.subr.mxu0 0.0
        %3435 = vmatpush1.msra.mxu0 0.0
        %3436 = vmatprep.subr.mxu0 0.0
        %3437 = vmatpush1.msra.mxu0 0.0
        %3438 = vmatprep.subr.mxu0 0.0
        %3439 = vmatpush1.msra.mxu0 0.0
        %3440 = vmatprep.subr.mxu0 0.0
        %3441 = vmatpush1.msra.mxu0 0.0
        %3442 = vmatprep.subr.mxu0 0.0
        %3443 = vmatpush1.msra.mxu0 0.0
        %3444 = vmatprep.subr.mxu0 0.0
        %3445 = vmatpush1.msra.mxu0 0.0
        %3446 = vmatprep.subr.mxu0 0.0
        %3447 = vmatpush1.msra.mxu0 0.0
        %3448 = vmatprep.subr.mxu0 0.0
        %3449 = vmatpush1.msra.mxu0 0.0
        %3450 = vmatprep.subr.mxu0 0.0
        %3451 = vmatpush1.msra.mxu0 0.0
        %3452 = vmatprep.subr.mxu0 0.0
        %3453 = vmatpush1.msra.mxu0 0.0
        %3454 = vmatprep.subr.mxu0 0.0
        %3455 = vmatpush1.msra.mxu0 0.0
        %3456 = vmatprep.subr.mxu0 0.0
        %3457 = vmatpush1.msra.mxu0 0.0
        %3458 = vmatprep.subr.mxu0 0.0
        %3459 = vmatpush1.msra.mxu0 0.0
        %3460 = vmatprep.subr.mxu0 0.0
        %3461 = vmatpush1.msra.mxu0 0.0
        %3462 = vmatprep.subr.mxu0 0.0
        %3463 = vmatpush1.msra.mxu0 0.0
        %3464 = vmatprep.subr.mxu0 0.0
        %3465 = vmatpush1.msra.mxu0 0.0
        %3466 = vmatprep.subr.mxu0 0.0
        %3467 = vmatpush1.msra.mxu0 0.0
        %3468 = vmatprep.subr.mxu0 0.0
        %3469 = vmatpush1.msra.mxu0 0.0
        %3470 = vmatprep.subr.mxu0 0.0
        %3471 = vmatpush1.msra.mxu0 0.0
        %3472 = vmatprep.subr.mxu0 0.0
        %3473 = vmatpush1.msra.mxu0 0.0
        %3474 = vmatprep.subr.mxu0 0.0
        %3475 = vmatpush1.msra.mxu0 0.0
        %3476 = vmatprep.subr.mxu0 0.0
        %3477 = vmatpush1.msra.mxu0 0.0
        %3478 = vmatprep.subr.mxu0 0.0
        %3479 = vmatpush1.msra.mxu0 0.0
        %3480 = vmatprep.subr.mxu0 0.0
        %3481 = vmatpush1.msra.mxu0 0.0
        %3482 = vmatprep.subr.mxu0 0.0
        %3483 = vmatpush1.msra.mxu0 0.0
        %3484 = vmatprep.subr.mxu0 0.0
        %3485 = vmatpush1.msra.mxu0 0.0
        %3486 = vmatprep.subr.mxu0 0.0
        %3487 = vmatpush1.msra.mxu0 0.0
        %3488 = vmatprep.subr.mxu0 0.0
        %3489 = vmatpush1.msra.mxu0 0.0
        %3490 = vmatprep.mubr.f32.mxu0 0.0
        %3491 = vmatmul.mubr.f32.gmra.mrb[0].mxu0 %v3424
        %v3492 = vpop.f32.mrb[0].mxu0
        %v3493 = vadd.f32 0.0, %v3492
        %v3494 = vpop.f32.mrb[0].mxu0
        %3495 = vdwg.mxu0
        %v3496 = vadd.f32 %v3346, %v3493
        %v3498 = vlaneseq
        %v3499 = vshrl.u32 %v3498, 7
        %v3500 = vsub.s32 0, %v3499
        %v3501 = vrot.slane %v2422, %v3500
        %v3503 = vadd.f32 %v3496, %v3501
        %v3504 = vadd.f32 %v3503, %v2408
        %v3505 = vsel %vm1153, %v3504, 0.0
        %3506 = vadd.xlane.f32.xlu0 %v3505
        %v3507 = vpop.xlane.xlu0 %3506
        %v3508 = vmul.f32 %v3507, %v2200
        %v3509 = vsub.f32 %v3504, %v3508
        %v3510 = vmul.f32 %v3509, %v3509
        %v3511 = vsel %vm1153, %v3510, 0.0
        %3512 = vadd.xlane.f32.xlu0 %v3511
        %v3513 = vpop.xlane.xlu0 %3512
        %v3514 = vmul.f32 %v3513, %v2200
        %v3515 = vadd.f32 %v3514, 1e-05
        %v3516 = vrsqrt.pop %v3515
        %v3517 = vmul.f32 %v3509, %v3516
        %v3519 = vlaneseq
        %v3520 = vshrl.u32 %v3519, 7
        %v3521 = vsub.s32 0, %v3520
        %v3522 = vrot.slane %v2424, %v3521
        %v3524 = vmul.f32 %v3517, %v3522
        %v3526 = vlaneseq
        %v3527 = vshrl.u32 %v3526, 7
        %v3528 = vsub.s32 0, %v3527
        %v3529 = vrot.slane %v2426, %v3528
        %v3531 = vadd.f32 %v3524, %v3529
        %v3533 = vlaneseq
        %v3534 = vshrl.u32 %v3533, 7
        %v3535 = vsub.s32 0, %v3534
        %v3536 = vrot.slane %v2437, %v3535
        %v3539 = vsel %vm1153, %v3531, 0
        %3541 = vmatprep.subr.mxu0 0.0
        %3542 = vmatpush1.msra.mxu0 %v2432
        %3543 = vmatprep.subr.mxu0 0.0
        %3544 = vmatpush1.msra.mxu0 %v2433
        %3545 = vmatprep.subr.mxu0 0.0
        %3546 = vmatpush1.msra.mxu0 %v2434
        %3547 = vmatprep.subr.mxu0 0.0
        %3548 = vmatpush1.msra.mxu0 %v2435
        %3549 = vmatprep.subr.mxu0 0.0
        %3550 = vmatpush1.msra.mxu0 0.0
        %3551 = vmatprep.subr.mxu0 0.0
        %3552 = vmatpush1.msra.mxu0 0.0
        %3553 = vmatprep.subr.mxu0 0.0
        %3554 = vmatpush1.msra.mxu0 0.0
        %3555 = vmatprep.subr.mxu0 0.0
        %3556 = vmatpush1.msra.mxu0 0.0
        %3557 = vmatprep.subr.mxu0 0.0
        %3558 = vmatpush1.msra.mxu0 0.0
        %3559 = vmatprep.subr.mxu0 0.0
        %3560 = vmatpush1.msra.mxu0 0.0
        %3561 = vmatprep.subr.mxu0 0.0
        %3562 = vmatpush1.msra.mxu0 0.0
        %3563 = vmatprep.subr.mxu0 0.0
        %3564 = vmatpush1.msra.mxu0 0.0
        %3565 = vmatprep.subr.mxu0 0.0
        %3566 = vmatpush1.msra.mxu0 0.0
        %3567 = vmatprep.subr.mxu0 0.0
        %3568 = vmatpush1.msra.mxu0 0.0
        %3569 = vmatprep.subr.mxu0 0.0
        %3570 = vmatpush1.msra.mxu0 0.0
        %3571 = vmatprep.subr.mxu0 0.0
        %3572 = vmatpush1.msra.mxu0 0.0
        %3573 = vmatprep.subr.mxu0 0.0
        %3574 = vmatpush1.msra.mxu0 0.0
        %3575 = vmatprep.subr.mxu0 0.0
        %3576 = vmatpush1.msra.mxu0 0.0
        %3577 = vmatprep.subr.mxu0 0.0
        %3578 = vmatpush1.msra.mxu0 0.0
        %3579 = vmatprep.subr.mxu0 0.0
        %3580 = vmatpush1.msra.mxu0 0.0
        %3581 = vmatprep.subr.mxu0 0.0
        %3582 = vmatpush1.msra.mxu0 0.0
        %3583 = vmatprep.subr.mxu0 0.0
        %3584 = vmatpush1.msra.mxu0 0.0
        %3585 = vmatprep.subr.mxu0 0.0
        %3586 = vmatpush1.msra.mxu0 0.0
        %3587 = vmatprep.subr.mxu0 0.0
        %3588 = vmatpush1.msra.mxu0 0.0
        %3589 = vmatprep.subr.mxu0 0.0
        %3590 = vmatpush1.msra.mxu0 0.0
        %3591 = vmatprep.subr.mxu0 0.0
        %3592 = vmatpush1.msra.mxu0 0.0
        %3593 = vmatprep.subr.mxu0 0.0
        %3594 = vmatpush1.msra.mxu0 0.0
        %3595 = vmatprep.subr.mxu0 0.0
        %3596 = vmatpush1.msra.mxu0 0.0
        %3597 = vmatprep.subr.mxu0 0.0
        %3598 = vmatpush1.msra.mxu0 0.0
        %3599 = vmatprep.subr.mxu0 0.0
        %3600 = vmatpush1.msra.mxu0 0.0
        %3601 = vmatprep.subr.mxu0 0.0
        %3602 = vmatpush1.msra.mxu0 0.0
        %3603 = vmatprep.subr.mxu0 0.0
        %3604 = vmatpush1.msra.mxu0 0.0
        %3605 = vmatprep.mubr.f32.mxu0 0.0
        %3606 = vmatmul.mubr.f32.gmra.mrb[0].mxu0 %v3539
        %v3607 = vpop.f32.mrb[0].mxu0
        %v3608 = vadd.f32 %v3536, %v3607
        %v3609 = vpop.f32.mrb[0].mxu0
        %3610 = vdwg.mxu0
        %v3611 = vmax.f32 %v3608, 0.0
        %v3613 = vlaneseq
        %v3614 = vshrl.u32 %v3613, 7
        %v3615 = vsub.s32 0, %v3614
        %v3616 = vrot.slane %v2456, %v3615
        %3618 = vmatprep.subr.mxu0 0.0
        %3619 = vmatpush1.msra.mxu0 %v2439
        %3620 = vmatprep.subr.mxu0 0.0
        %3621 = vmatpush1.msra.mxu0 %v2440
        %3622 = vmatprep.subr.mxu0 0.0
        %3623 = vmatpush1.msra.mxu0 %v2441
        %3624 = vmatprep.subr.mxu0 0.0
        %3625 = vmatpush1.msra.mxu0 %v2442
        %3626 = vmatprep.subr.mxu0 0.0
        %3627 = vmatpush1.msra.mxu0 %v2443
        %3628 = vmatprep.subr.mxu0 0.0
        %3629 = vmatpush1.msra.mxu0 %v2444
        %3630 = vmatprep.subr.mxu0 0.0
        %3631 = vmatpush1.msra.mxu0 %v2445
        %3632 = vmatprep.subr.mxu0 0.0
        %3633 = vmatpush1.msra.mxu0 %v2446
        %3634 = vmatprep.subr.mxu0 0.0
        %3635 = vmatpush1.msra.mxu0 %v2447
        %3636 = vmatprep.subr.mxu0 0.0
        %3637 = vmatpush1.msra.mxu0 %v2448
        %3638 = vmatprep.subr.mxu0 0.0
        %3639 = vmatpush1.msra.mxu0 %v2449
        %3640 = vmatprep.subr.mxu0 0.0
        %3641 = vmatpush1.msra.mxu0 %v2450
        %3642 = vmatprep.subr.mxu0 0.0
        %3643 = vmatpush1.msra.mxu0 %v2451
        %3644 = vmatprep.subr.mxu0 0.0
        %3645 = vmatpush1.msra.mxu0 %v2452
        %3646 = vmatprep.subr.mxu0 0.0
        %3647 = vmatpush1.msra.mxu0 %v2453
        %3648 = vmatprep.subr.mxu0 0.0
        %3649 = vmatpush1.msra.mxu0 %v2454
        %3650 = vmatprep.subr.mxu0 0.0
        %3651 = vmatpush1.msra.mxu0 0.0
        %3652 = vmatprep.subr.mxu0 0.0
        %3653 = vmatpush1.msra.mxu0 0.0
        %3654 = vmatprep.subr.mxu0 0.0
        %3655 = vmatpush1.msra.mxu0 0.0
        %3656 = vmatprep.subr.mxu0 0.0
        %3657 = vmatpush1.msra.mxu0 0.0
        %3658 = vmatprep.subr.mxu0 0.0
        %3659 = vmatpush1.msra.mxu0 0.0
        %3660 = vmatprep.subr.mxu0 0.0
        %3661 = vmatpush1.msra.mxu0 0.0
        %3662 = vmatprep.subr.mxu0 0.0
        %3663 = vmatpush1.msra.mxu0 0.0
        %3664 = vmatprep.subr.mxu0 0.0
        %3665 = vmatpush1.msra.mxu0 0.0
        %3666 = vmatprep.subr.mxu0 0.0
        %3667 = vmatpush1.msra.mxu0 0.0
        %3668 = vmatprep.subr.mxu0 0.0
        %3669 = vmatpush1.msra.mxu0 0.0
        %3670 = vmatprep.subr.mxu0 0.0
        %3671 = vmatpush1.msra.mxu0 0.0
        %3672 = vmatprep.subr.mxu0 0.0
        %3673 = vmatpush1.msra.mxu0 0.0
        %3674 = vmatprep.subr.mxu0 0.0
        %3675 = vmatpush1.msra.mxu0 0.0
        %3676 = vmatprep.subr.mxu0 0.0
        %3677 = vmatpush1.msra.mxu0 0.0
        %3678 = vmatprep.subr.mxu0 0.0
        %3679 = vmatpush1.msra.mxu0 0.0
        %3680 = vmatprep.subr.mxu0 0.0
        %3681 = vmatpush1.msra.mxu0 0.0
        %3682 = vmatprep.mubr.f32.mxu0 0.0
        %3683 = vmatmul.mubr.f32.gmra.mrb[0].mxu0 %v3611
        %v3684 = vpop.f32.mrb[0].mxu0
        %v3685 = vadd.f32 %v3616, %v3684
        %v3686 = vpop.f32.mrb[0].mxu0
        %3687 = vdwg.mxu0
        %v3688 = vadd.f32 %v3685, %v3531
        %v3689 = vsel %vm1153, %v3688, 0.0
        %3690 = vadd.xlane.f32.xlu0 %v3689
        %v3691 = vpop.xlane.xlu0 %3690
        %v3692 = vmul.f32 %v3691, %v2200
        %v3693 = vsub.f32 %v3688, %v3692
        %v3694 = vmul.f32 %v3693, %v3693
        %v3695 = vsel %vm1153, %v3694, 0.0
        %3696 = vadd.xlane.f32.xlu0 %v3695
        %v3697 = vpop.xlane.xlu0 %3696
        %v3698 = vmul.f32 %v3697, %v2200
        %v3699 = vadd.f32 %v3698, 1e-05
        %v3700 = vrsqrt.pop %v3699
        %v3701 = vmul.f32 %v3693, %v3700
        %v3703 = vlaneseq
        %v3704 = vshrl.u32 %v3703, 7
        %v3705 = vsub.s32 0, %v3704
        %v3706 = vrot.slane %v2428, %v3705
        %v3708 = vmul.f32 %v3701, %v3706
        %v3710 = vlaneseq
        %v3711 = vshrl.u32 %v3710, 7
        %v3712 = vsub.s32 0, %v3711
        %v3713 = vrot.slane %v2430, %v3712
        %v3715 = vadd.f32 %v3708, %v3713
        %v3716 = vld [vmem:[%s1093] sm:$0xff]
        %v3717 = vld [vmem:[%s31] sm:$0xff]
        %v3718 = vld [vmem:[%s31 + $0x8] sm:$0xff]
        %v3719 = vld [vmem:[%s31 + $0x10] sm:$0xff]
        %v3720 = vld [vmem:[%s31 + $0x18] sm:$0xff]
        %v3721 = vld [vmem:[%s33] sm:$0x1]
        %v3722 = vld [vmem:[%s35] sm:$0xff]
        %v3723 = vld [vmem:[%s35 + $0x8] sm:$0xff]
        %v3724 = vld [vmem:[%s35 + $0x10] sm:$0xff]
        %v3725 = vld [vmem:[%s35 + $0x18] sm:$0xff]
        %v3726 = vld [vmem:[%s37] sm:$0x1]
        %v3728 = vlaneseq
        %v3729 = vshrl.u32 %v3728, 7
        %v3730 = vsub.s32 0, %v3729
        %v3731 = vrot.slane %v3721, %v3730
        %v3734 = vsel %vm1153, %v3716, 0
        %3736 = vmatprep.subr.mxu0 0.0
        %3737 = vmatpush1.msra.mxu0 %v3717
        %3738 = vmatprep.subr.mxu0 0.0
        %3739 = vmatpush1.msra.mxu0 %v3718
        %3740 = vmatprep.subr.mxu0 0.0
        %3741 = vmatpush1.msra.mxu0 %v3719
        %3742 = vmatprep.subr.mxu0 0.0
        %3743 = vmatpush1.msra.mxu0 %v3720
        %3744 = vmatprep.subr.mxu0 0.0
        %3745 = vmatpush1.msra.mxu0 0.0
        %3746 = vmatprep.subr.mxu0 0.0
        %3747 = vmatpush1.msra.mxu0 0.0
        %3748 = vmatprep.subr.mxu0 0.0
        %3749 = vmatpush1.msra.mxu0 0.0
        %3750 = vmatprep.subr.mxu0 0.0
        %3751 = vmatpush1.msra.mxu0 0.0
        %3752 = vmatprep.subr.mxu0 0.0
        %3753 = vmatpush1.msra.mxu0 0.0
        %3754 = vmatprep.subr.mxu0 0.0
        %3755 = vmatpush1.msra.mxu0 0.0
        %3756 = vmatprep.subr.mxu0 0.0
        %3757 = vmatpush1.msra.mxu0 0.0
        %3758 = vmatprep.subr.mxu0 0.0
        %3759 = vmatpush1.msra.mxu0 0.0
        %3760 = vmatprep.subr.mxu0 0.0
        %3761 = vmatpush1.msra.mxu0 0.0
        %3762 = vmatprep.subr.mxu0 0.0
        %3763 = vmatpush1.msra.mxu0 0.0
        %3764 = vmatprep.subr.mxu0 0.0
        %3765 = vmatpush1.msra.mxu0 0.0
        %3766 = vmatprep.subr.mxu0 0.0
        %3767 = vmatpush1.msra.mxu0 0.0
        %3768 = vmatprep.subr.mxu0 0.0
        %3769 = vmatpush1.msra.mxu0 0.0
        %3770 = vmatprep.subr.mxu0 0.0
        %3771 = vmatpush1.msra.mxu0 0.0
        %3772 = vmatprep.subr.mxu0 0.0
        %3773 = vmatpush1.msra.mxu0 0.0
        %3774 = vmatprep.subr.mxu0 0.0
        %3775 = vmatpush1.msra.mxu0 0.0
        %3776 = vmatprep.subr.mxu0 0.0
        %3777 = vmatpush1.msra.mxu0 0.0
        %3778 = vmatprep.subr.mxu0 0.0
        %3779 = vmatpush1.msra.mxu0 0.0
        %3780 = vmatprep.subr.mxu0 0.0
        %3781 = vmatpush1.msra.mxu0 0.0
        %3782 = vmatprep.subr.mxu0 0.0
        %3783 = vmatpush1.msra.mxu0 0.0
        %3784 = vmatprep.subr.mxu0 0.0
        %3785 = vmatpush1.msra.mxu0 0.0
        %3786 = vmatprep.subr.mxu0 0.0
        %3787 = vmatpush1.msra.mxu0 0.0
        %3788 = vmatprep.subr.mxu0 0.0
        %3789 = vmatpush1.msra.mxu0 0.0
        %3790 = vmatprep.subr.mxu0 0.0
        %3791 = vmatpush1.msra.mxu0 0.0
        %3792 = vmatprep.subr.mxu0 0.0
        %3793 = vmatpush1.msra.mxu0 0.0
        %3794 = vmatprep.subr.mxu0 0.0
        %3795 = vmatpush1.msra.mxu0 0.0
        %3796 = vmatprep.subr.mxu0 0.0
        %3797 = vmatpush1.msra.mxu0 0.0
        %3798 = vmatprep.subr.mxu0 0.0
        %3799 = vmatpush1.msra.mxu0 0.0
        %3800 = vmatprep.mubr.f32.mxu0 0.0
        %3801 = vmatmul.mubr.f32.gmra.mrb[0].mxu0 %v3734
        %v3802 = vpop.f32.mrb[0].mxu0
        %v3803 = vadd.f32 %v3731, %v3802
        %v3804 = vpop.f32.mrb[0].mxu0
        %3805 = vdwg.mxu0
        %3807 = vrot.lane.b32.xlu0 %v3803, 96
        %v3808 = vpop.permute.xlu0 %3807
        %v3809 = vsel %vm1230, %v3803, 0
        %v3811 = vsel %vm1230, %v3808, 0
        %3813 = vmatprep.subr.mxu0 0.0
        %3814 = vmatpush1.xpose.msra.mxu0 %v3811
        %3815 = vmatprep.subr.mxu0 0.0
        %3816 = vmatpush1.xpose.msra.mxu0 0.0
        %3817 = vmatprep.subr.mxu0 0.0
        %3818 = vmatpush1.xpose.msra.mxu0 0.0
        %3819 = vmatprep.subr.mxu0 0.0
        %3820 = vmatpush1.xpose.msra.mxu0 0.0
        %3821 = vmatprep.subr.mxu0 0.0
        %3822 = vmatpush1.xpose.msra.mxu0 0.0
        %3823 = vmatprep.subr.mxu0 0.0
        %3824 = vmatpush1.xpose.msra.mxu0 0.0
        %3825 = vmatprep.subr.mxu0 0.0
        %3826 = vmatpush1.xpose.msra.mxu0 0.0
        %3827 = vmatprep.subr.mxu0 0.0
        %3828 = vmatpush1.xpose.msra.mxu0 0.0
        %3829 = vmatprep.subr.mxu0 0.0
        %3830 = vmatpush1.xpose.msra.mxu0 0.0
        %3831 = vmatprep.subr.mxu0 0.0
        %3832 = vmatpush1.xpose.msra.mxu0 0.0
        %3833 = vmatprep.subr.mxu0 0.0
        %3834 = vmatpush1.xpose.msra.mxu0 0.0
        %3835 = vmatprep.subr.mxu0 0.0
        %3836 = vmatpush1.xpose.msra.mxu0 0.0
        %3837 = vmatprep.subr.mxu0 0.0
        %3838 = vmatpush1.xpose.msra.mxu0 0.0
        %3839 = vmatprep.subr.mxu0 0.0
        %3840 = vmatpush1.xpose.msra.mxu0 0.0
        %3841 = vmatprep.subr.mxu0 0.0
        %3842 = vmatpush1.xpose.msra.mxu0 0.0
        %3843 = vmatprep.subr.mxu0 0.0
        %3844 = vmatpush1.xpose.msra.mxu0 0.0
        %3845 = vmatprep.subr.mxu0 0.0
        %3846 = vmatpush1.xpose.msra.mxu0 0.0
        %3847 = vmatprep.subr.mxu0 0.0
        %3848 = vmatpush1.xpose.msra.mxu0 0.0
        %3849 = vmatprep.subr.mxu0 0.0
        %3850 = vmatpush1.xpose.msra.mxu0 0.0
        %3851 = vmatprep.subr.mxu0 0.0
        %3852 = vmatpush1.xpose.msra.mxu0 0.0
        %3853 = vmatprep.subr.mxu0 0.0
        %3854 = vmatpush1.xpose.msra.mxu0 0.0
        %3855 = vmatprep.subr.mxu0 0.0
        %3856 = vmatpush1.xpose.msra.mxu0 0.0
        %3857 = vmatprep.subr.mxu0 0.0
        %3858 = vmatpush1.xpose.msra.mxu0 0.0
        %3859 = vmatprep.subr.mxu0 0.0
        %3860 = vmatpush1.xpose.msra.mxu0 0.0
        %3861 = vmatprep.subr.mxu0 0.0
        %3862 = vmatpush1.xpose.msra.mxu0 0.0
        %3863 = vmatprep.subr.mxu0 0.0
        %3864 = vmatpush1.xpose.msra.mxu0 0.0
        %3865 = vmatprep.subr.mxu0 0.0
        %3866 = vmatpush1.xpose.msra.mxu0 0.0
        %3867 = vmatprep.subr.mxu0 0.0
        %3868 = vmatpush1.xpose.msra.mxu0 0.0
        %3869 = vmatprep.subr.mxu0 0.0
        %3870 = vmatpush1.xpose.msra.mxu0 0.0
        %3871 = vmatprep.subr.mxu0 0.0
        %3872 = vmatpush1.xpose.msra.mxu0 0.0
        %3873 = vmatprep.subr.mxu0 0.0
        %3874 = vmatpush1.xpose.msra.mxu0 0.0
        %3875 = vmatprep.subr.mxu0 0.0
        %3876 = vmatpush1.xpose.msra.mxu0 0.0
        %3877 = vmatprep.mubr.f32.mxu0 0.0
        %3878 = vmatmul.mubr.f32.gmra.mrb[0].mxu0 %v3809
        %v3879 = vpop.f32.mrb[0].mxu0
        %v3880 = vadd.f32 0.0, %v3879
        %v3881 = vpop.f32.mrb[0].mxu0
        %3882 = vdwg.mxu0
        %3883 = vrot.lane.b32.xlu0 %v3803, 120
        %v3884 = vpop.permute.xlu0 %3883
        %3885 = vrot.lane.b32.xlu0 %v3803, 88
        %v3886 = vpop.permute.xlu0 %3885
        %v3887 = vsel %vm1230, %v3884, 0
        %v3889 = vsel %vm1230, %v3886, 0
        %3891 = vmatprep.subr.mxu0 0.0
        %3892 = vmatpush1.xpose.msra.mxu0 %v3889
        %3893 = vmatprep.subr.mxu0 0.0
        %3894 = vmatpush1.xpose.msra.mxu0 0.0
        %3895 = vmatprep.subr.mxu0 0.0
        %3896 = vmatpush1.xpose.msra.mxu0 0.0
        %3897 = vmatprep.subr.mxu0 0.0
        %3898 = vmatpush1.xpose.msra.mxu0 0.0
        %3899 = vmatprep.subr.mxu0 0.0
        %3900 = vmatpush1.xpose.msra.mxu0 0.0
        %3901 = vmatprep.subr.mxu0 0.0
        %3902 = vmatpush1.xpose.msra.mxu0 0.0
        %3903 = vmatprep.subr.mxu0 0.0
        %3904 = vmatpush1.xpose.msra.mxu0 0.0
        %3905 = vmatprep.subr.mxu0 0.0
        %3906 = vmatpush1.xpose.msra.mxu0 0.0
        %3907 = vmatprep.subr.mxu0 0.0
        %3908 = vmatpush1.xpose.msra.mxu0 0.0
        %3909 = vmatprep.subr.mxu0 0.0
        %3910 = vmatpush1.xpose.msra.mxu0 0.0
        %3911 = vmatprep.subr.mxu0 0.0
        %3912 = vmatpush1.xpose.msra.mxu0 0.0
        %3913 = vmatprep.subr.mxu0 0.0
        %3914 = vmatpush1.xpose.msra.mxu0 0.0
        %3915 = vmatprep.subr.mxu0 0.0
        %3916 = vmatpush1.xpose.msra.mxu0 0.0
        %3917 = vmatprep.subr.mxu0 0.0
        %3918 = vmatpush1.xpose.msra.mxu0 0.0
        %3919 = vmatprep.subr.mxu0 0.0
        %3920 = vmatpush1.xpose.msra.mxu0 0.0
        %3921 = vmatprep.subr.mxu0 0.0
        %3922 = vmatpush1.xpose.msra.mxu0 0.0
        %3923 = vmatprep.subr.mxu0 0.0
        %3924 = vmatpush1.xpose.msra.mxu0 0.0
        %3925 = vmatprep.subr.mxu0 0.0
        %3926 = vmatpush1.xpose.msra.mxu0 0.0
        %3927 = vmatprep.subr.mxu0 0.0
        %3928 = vmatpush1.xpose.msra.mxu0 0.0
        %3929 = vmatprep.subr.mxu0 0.0
        %3930 = vmatpush1.xpose.msra.mxu0 0.0
        %3931 = vmatprep.subr.mxu0 0.0
        %3932 = vmatpush1.xpose.msra.mxu0 0.0
        %3933 = vmatprep.subr.mxu0 0.0
        %3934 = vmatpush1.xpose.msra.mxu0 0.0
        %3935 = vmatprep.subr.mxu0 0.0
        %3936 = vmatpush1.xpose.msra.mxu0 0.0
        %3937 = vmatprep.subr.mxu0 0.0
        %3938 = vmatpush1.xpose.msra.mxu0 0.0
        %3939 = vmatprep.subr.mxu0 0.0
        %3940 = vmatpush1.xpose.msra.mxu0 0.0
        %3941 = vmatprep.subr.mxu0 0.0
        %3942 = vmatpush1.xpose.msra.mxu0 0.0
        %3943 = vmatprep.subr.mxu0 0.0
        %3944 = vmatpush1.xpose.msra.mxu0 0.0
        %3945 = vmatprep.subr.mxu0 0.0
        %3946 = vmatpush1.xpose.msra.mxu0 0.0
        %3947 = vmatprep.subr.mxu0 0.0
        %3948 = vmatpush1.xpose.msra.mxu0 0.0
        %3949 = vmatprep.subr.mxu0 0.0
        %3950 = vmatpush1.xpose.msra.mxu0 0.0
        %3951 = vmatprep.subr.mxu0 0.0
        %3952 = vmatpush1.xpose.msra.mxu0 0.0
        %3953 = vmatprep.subr.mxu0 0.0
        %3954 = vmatpush1.xpose.msra.mxu0 0.0
        %3955 = vmatprep.mubr.f32.mxu0 0.0
        %3956 = vmatmul.mubr.f32.gmra.mrb[0].mxu0 %v3887
        %v3957 = vpop.f32.mrb[0].mxu0
        %v3958 = vadd.f32 0.0, %v3957
        %v3959 = vpop.f32.mrb[0].mxu0
        %3960 = vdwg.mxu0
        %3961 = vrot.lane.b32.xlu0 %v3803, 112
        %v3962 = vpop.permute.xlu0 %3961
        %3963 = vrot.lane.b32.xlu0 %v3803, 80
        %v3964 = vpop.permute.xlu0 %3963
        %v3965 = vsel %vm1230, %v3962, 0
        %v3967 = vsel %vm1230, %v3964, 0
        %3969 = vmatprep.subr.mxu0 0.0
        %3970 = vmatpush1.xpose.msra.mxu0 %v3967
        %3971 = vmatprep.subr.mxu0 0.0
        %3972 = vmatpush1.xpose.msra.mxu0 0.0
        %3973 = vmatprep.subr.mxu0 0.0
        %3974 = vmatpush1.xpose.msra.mxu0 0.0
        %3975 = vmatprep.subr.mxu0 0.0
        %3976 = vmatpush1.xpose.msra.mxu0 0.0
        %3977 = vmatprep.subr.mxu0 0.0
        %3978 = vmatpush1.xpose.msra.mxu0 0.0
        %3979 = vmatprep.subr.mxu0 0.0
        %3980 = vmatpush1.xpose.msra.mxu0 0.0
        %3981 = vmatprep.subr.mxu0 0.0
        %3982 = vmatpush1.xpose.msra.mxu0 0.0
        %3983 = vmatprep.subr.mxu0 0.0
        %3984 = vmatpush1.xpose.msra.mxu0 0.0
        %3985 = vmatprep.subr.mxu0 0.0
        %3986 = vmatpush1.xpose.msra.mxu0 0.0
        %3987 = vmatprep.subr.mxu0 0.0
        %3988 = vmatpush1.xpose.msra.mxu0 0.0
        %3989 = vmatprep.subr.mxu0 0.0
        %3990 = vmatpush1.xpose.msra.mxu0 0.0
        %3991 = vmatprep.subr.mxu0 0.0
        %3992 = vmatpush1.xpose.msra.mxu0 0.0
        %3993 = vmatprep.subr.mxu0 0.0
        %3994 = vmatpush1.xpose.msra.mxu0 0.0
        %3995 = vmatprep.subr.mxu0 0.0
        %3996 = vmatpush1.xpose.msra.mxu0 0.0
        %3997 = vmatprep.subr.mxu0 0.0
        %3998 = vmatpush1.xpose.msra.mxu0 0.0
        %3999 = vmatprep.subr.mxu0 0.0
        %4000 = vmatpush1.xpose.msra.mxu0 0.0
        %4001 = vmatprep.subr.mxu0 0.0
        %4002 = vmatpush1.xpose.msra.mxu0 0.0
        %4003 = vmatprep.subr.mxu0 0.0
        %4004 = vmatpush1.xpose.msra.mxu0 0.0
        %4005 = vmatprep.subr.mxu0 0.0
        %4006 = vmatpush1.xpose.msra.mxu0 0.0
        %4007 = vmatprep.subr.mxu0 0.0
        %4008 = vmatpush1.xpose.msra.mxu0 0.0
        %4009 = vmatprep.subr.mxu0 0.0
        %4010 = vmatpush1.xpose.msra.mxu0 0.0
        %4011 = vmatprep.subr.mxu0 0.0
        %4012 = vmatpush1.xpose.msra.mxu0 0.0
        %4013 = vmatprep.subr.mxu0 0.0
        %4014 = vmatpush1.xpose.msra.mxu0 0.0
        %4015 = vmatprep.subr.mxu0 0.0
        %4016 = vmatpush1.xpose.msra.mxu0 0.0
        %4017 = vmatprep.subr.mxu0 0.0
        %4018 = vmatpush1.xpose.msra.mxu0 0.0
        %4019 = vmatprep.subr.mxu0 0.0
        %4020 = vmatpush1.xpose.msra.mxu0 0.0
        %4021 = vmatprep.subr.mxu0 0.0
        %4022 = vmatpush1.xpose.msra.mxu0 0.0
        %4023 = vmatprep.subr.mxu0 0.0
        %4024 = vmatpush1.xpose.msra.mxu0 0.0
        %4025 = vmatprep.subr.mxu0 0.0
        %4026 = vmatpush1.xpose.msra.mxu0 0.0
        %4027 = vmatprep.subr.mxu0 0.0
        %4028 = vmatpush1.xpose.msra.mxu0 0.0
        %4029 = vmatprep.subr.mxu0 0.0
        %4030 = vmatpush1.xpose.msra.mxu0 0.0
        %4031 = vmatprep.subr.mxu0 0.0
        %4032 = vmatpush1.xpose.msra.mxu0 0.0
        %4033 = vmatprep.mubr.f32.mxu0 0.0
        %4034 = vmatmul.mubr.f32.gmra.mrb[0].mxu0 %v3965
        %v4035 = vpop.f32.mrb[0].mxu0
        %v4036 = vadd.f32 0.0, %v4035
        %v4037 = vpop.f32.mrb[0].mxu0
        %4038 = vdwg.mxu0
        %4039 = vrot.lane.b32.xlu0 %v3803, 104
        %v4040 = vpop.permute.xlu0 %4039
        %4041 = vrot.lane.b32.xlu0 %v3803, 72
        %v4042 = vpop.permute.xlu0 %4041
        %v4043 = vsel %vm1230, %v4040, 0
        %v4045 = vsel %vm1230, %v4042, 0
        %4047 = vmatprep.subr.mxu0 0.0
        %4048 = vmatpush1.xpose.msra.mxu0 %v4045
        %4049 = vmatprep.subr.mxu0 0.0
        %4050 = vmatpush1.xpose.msra.mxu0 0.0
        %4051 = vmatprep.subr.mxu0 0.0
        %4052 = vmatpush1.xpose.msra.mxu0 0.0
        %4053 = vmatprep.subr.mxu0 0.0
        %4054 = vmatpush1.xpose.msra.mxu0 0.0
        %4055 = vmatprep.subr.mxu0 0.0
        %4056 = vmatpush1.xpose.msra.mxu0 0.0
        %4057 = vmatprep.subr.mxu0 0.0
        %4058 = vmatpush1.xpose.msra.mxu0 0.0
        %4059 = vmatprep.subr.mxu0 0.0
        %4060 = vmatpush1.xpose.msra.mxu0 0.0
        %4061 = vmatprep.subr.mxu0 0.0
        %4062 = vmatpush1.xpose.msra.mxu0 0.0
        %4063 = vmatprep.subr.mxu0 0.0
        %4064 = vmatpush1.xpose.msra.mxu0 0.0
        %4065 = vmatprep.subr.mxu0 0.0
        %4066 = vmatpush1.xpose.msra.mxu0 0.0
        %4067 = vmatprep.subr.mxu0 0.0
        %4068 = vmatpush1.xpose.msra.mxu0 0.0
        %4069 = vmatprep.subr.mxu0 0.0
        %4070 = vmatpush1.xpose.msra.mxu0 0.0
        %4071 = vmatprep.subr.mxu0 0.0
        %4072 = vmatpush1.xpose.msra.mxu0 0.0
        %4073 = vmatprep.subr.mxu0 0.0
        %4074 = vmatpush1.xpose.msra.mxu0 0.0
        %4075 = vmatprep.subr.mxu0 0.0
        %4076 = vmatpush1.xpose.msra.mxu0 0.0
        %4077 = vmatprep.subr.mxu0 0.0
        %4078 = vmatpush1.xpose.msra.mxu0 0.0
        %4079 = vmatprep.subr.mxu0 0.0
        %4080 = vmatpush1.xpose.msra.mxu0 0.0
        %4081 = vmatprep.subr.mxu0 0.0
        %4082 = vmatpush1.xpose.msra.mxu0 0.0
        %4083 = vmatprep.subr.mxu0 0.0
        %4084 = vmatpush1.xpose.msra.mxu0 0.0
        %4085 = vmatprep.subr.mxu0 0.0
        %4086 = vmatpush1.xpose.msra.mxu0 0.0
        %4087 = vmatprep.subr.mxu0 0.0
        %4088 = vmatpush1.xpose.msra.mxu0 0.0
        %4089 = vmatprep.subr.mxu0 0.0
        %4090 = vmatpush1.xpose.msra.mxu0 0.0
        %4091 = vmatprep.subr.mxu0 0.0
        %4092 = vmatpush1.xpose.msra.mxu0 0.0
        %4093 = vmatprep.subr.mxu0 0.0
        %4094 = vmatpush1.xpose.msra.mxu0 0.0
        %4095 = vmatprep.subr.mxu0 0.0
        %4096 = vmatpush1.xpose.msra.mxu0 0.0
        %4097 = vmatprep.subr.mxu0 0.0
        %4098 = vmatpush1.xpose.msra.mxu0 0.0
        %4099 = vmatprep.subr.mxu0 0.0
        %4100 = vmatpush1.xpose.msra.mxu0 0.0
        %4101 = vmatprep.subr.mxu0 0.0
        %4102 = vmatpush1.xpose.msra.mxu0 0.0
        %4103 = vmatprep.subr.mxu0 0.0
        %4104 = vmatpush1.xpose.msra.mxu0 0.0
        %4105 = vmatprep.subr.mxu0 0.0
        %4106 = vmatpush1.xpose.msra.mxu0 0.0
        %4107 = vmatprep.subr.mxu0 0.0
        %4108 = vmatpush1.xpose.msra.mxu0 0.0
        %4109 = vmatprep.subr.mxu0 0.0
        %4110 = vmatpush1.xpose.msra.mxu0 0.0
        %4111 = vmatprep.mubr.f32.mxu0 0.0
        %4112 = vmatmul.mubr.f32.gmra.mrb[0].mxu0 %v4043
        %v4113 = vpop.f32.mrb[0].mxu0
        %v4114 = vadd.f32 0.0, %v4113
        %v4115 = vpop.f32.mrb[0].mxu0
        %4116 = vdwg.mxu0
        %v4117 = vmul.f32 %v3880, 0.35355338
        %v4118 = vmul.f32 %v3958, 0.35355338
        %v4119 = vmul.f32 %v4036, 0.35355338
        %v4120 = vmul.f32 %v4114, 0.35355338
        %v4121 = vsel %vm1109, %v4117, -1e+09
        %v4122 = vsel %vm1109, %v4118, -1e+09
        %v4123 = vsel %vm1109, %v4119, -1e+09
        %v4124 = vsel %vm1109, %v4120, -1e+09
        %v4125 = vsel %vm1230, %v4121, -inf
        %4126 = vmax.xlane.f32.xlu0 %v4125
        %v4127 = vpop.xlane.xlu0 %4126
        %v4128 = vsel %vm1230, %v4122, -inf
        %4129 = vmax.xlane.f32.xlu0 %v4128
        %v4130 = vpop.xlane.xlu0 %4129
        %v4131 = vsel %vm1230, %v4123, -inf
        %4132 = vmax.xlane.f32.xlu0 %v4131
        %v4133 = vpop.xlane.xlu0 %4132
        %v4134 = vsel %vm1230, %v4124, -inf
        %4135 = vmax.xlane.f32.xlu0 %v4134
        %v4136 = vpop.xlane.xlu0 %4135
        %v4137 = vsub.f32 %v4121, %v4127
        %v4138 = vsub.f32 %v4122, %v4130
        %v4139 = vsub.f32 %v4123, %v4133
        %v4140 = vsub.f32 %v4124, %v4136
        %v4141 = vmul.f32 %v4137, 1.442695
        %v4142 = vpow.pop %v4141
        %v4143 = vmul.f32 %v4138, 1.442695
        %v4144 = vpow.pop %v4143
        %v4145 = vmul.f32 %v4139, 1.442695
        %v4146 = vpow.pop %v4145
        %v4147 = vmul.f32 %v4140, 1.442695
        %v4148 = vpow.pop %v4147
        %v4149 = vsel %vm1230, %v4142, 0.0
        %4150 = vadd.xlane.f32.xlu0 %v4149
        %v4151 = vpop.xlane.xlu0 %4150
        %v4152 = vsel %vm1230, %v4144, 0.0
        %4153 = vadd.xlane.f32.xlu0 %v4152
        %v4154 = vpop.xlane.xlu0 %4153
        %v4155 = vsel %vm1230, %v4146, 0.0
        %4156 = vadd.xlane.f32.xlu0 %v4155
        %v4157 = vpop.xlane.xlu0 %4156
        %v4158 = vsel %vm1230, %v4148, 0.0
        %4159 = vadd.xlane.f32.xlu0 %v4158
        %v4160 = vpop.xlane.xlu0 %4159
        %v4161 = vrcp.pop %v4151
        %v4162 = vrcp.pop %v4154
        %v4163 = vrcp.pop %v4157
        %v4164 = vrcp.pop %v4160
        %v4165 = vmul.f32 %v4142, %v4161
        %v4166 = vmul.f32 %v4144, %v4162
        %v4167 = vmul.f32 %v4146, %v4163
        %v4168 = vmul.f32 %v4148, %v4164
        %4169 = vrot.lane.b32.xlu0 %v3803, 64
        %v4170 = vpop.permute.xlu0 %4169
        %v4173 = vsel %vm1230, %v4165, 0
        %4175 = vmatprep.subr.mxu0 0.0
        %4176 = vmatpush1.msra.mxu0 %v4170
        %4177 = vmatprep.subr.mxu0 0.0
        %4178 = vmatpush1.msra.mxu0 0.0
        %4179 = vmatprep.subr.mxu0 0.0
        %4180 = vmatpush1.msra.mxu0 0.0
        %4181 = vmatprep.subr.mxu0 0.0
        %4182 = vmatpush1.msra.mxu0 0.0
        %4183 = vmatprep.subr.mxu0 0.0
        %4184 = vmatpush1.msra.mxu0 0.0
        %4185 = vmatprep.subr.mxu0 0.0
        %4186 = vmatpush1.msra.mxu0 0.0
        %4187 = vmatprep.subr.mxu0 0.0
        %4188 = vmatpush1.msra.mxu0 0.0
        %4189 = vmatprep.subr.mxu0 0.0
        %4190 = vmatpush1.msra.mxu0 0.0
        %4191 = vmatprep.subr.mxu0 0.0
        %4192 = vmatpush1.msra.mxu0 0.0
        %4193 = vmatprep.subr.mxu0 0.0
        %4194 = vmatpush1.msra.mxu0 0.0
        %4195 = vmatprep.subr.mxu0 0.0
        %4196 = vmatpush1.msra.mxu0 0.0
        %4197 = vmatprep.subr.mxu0 0.0
        %4198 = vmatpush1.msra.mxu0 0.0
        %4199 = vmatprep.subr.mxu0 0.0
        %4200 = vmatpush1.msra.mxu0 0.0
        %4201 = vmatprep.subr.mxu0 0.0
        %4202 = vmatpush1.msra.mxu0 0.0
        %4203 = vmatprep.subr.mxu0 0.0
        %4204 = vmatpush1.msra.mxu0 0.0
        %4205 = vmatprep.subr.mxu0 0.0
        %4206 = vmatpush1.msra.mxu0 0.0
        %4207 = vmatprep.subr.mxu0 0.0
        %4208 = vmatpush1.msra.mxu0 0.0
        %4209 = vmatprep.subr.mxu0 0.0
        %4210 = vmatpush1.msra.mxu0 0.0
        %4211 = vmatprep.subr.mxu0 0.0
        %4212 = vmatpush1.msra.mxu0 0.0
        %4213 = vmatprep.subr.mxu0 0.0
        %4214 = vmatpush1.msra.mxu0 0.0
        %4215 = vmatprep.subr.mxu0 0.0
        %4216 = vmatpush1.msra.mxu0 0.0
        %4217 = vmatprep.subr.mxu0 0.0
        %4218 = vmatpush1.msra.mxu0 0.0
        %4219 = vmatprep.subr.mxu0 0.0
        %4220 = vmatpush1.msra.mxu0 0.0
        %4221 = vmatprep.subr.mxu0 0.0
        %4222 = vmatpush1.msra.mxu0 0.0
        %4223 = vmatprep.subr.mxu0 0.0
        %4224 = vmatpush1.msra.mxu0 0.0
        %4225 = vmatprep.subr.mxu0 0.0
        %4226 = vmatpush1.msra.mxu0 0.0
        %4227 = vmatprep.subr.mxu0 0.0
        %4228 = vmatpush1.msra.mxu0 0.0
        %4229 = vmatprep.subr.mxu0 0.0
        %4230 = vmatpush1.msra.mxu0 0.0
        %4231 = vmatprep.subr.mxu0 0.0
        %4232 = vmatpush1.msra.mxu0 0.0
        %4233 = vmatprep.subr.mxu0 0.0
        %4234 = vmatpush1.msra.mxu0 0.0
        %4235 = vmatprep.subr.mxu0 0.0
        %4236 = vmatpush1.msra.mxu0 0.0
        %4237 = vmatprep.subr.mxu0 0.0
        %4238 = vmatpush1.msra.mxu0 0.0
        %4239 = vmatprep.mubr.f32.mxu0 0.0
        %4240 = vmatmul.mubr.f32.gmra.mrb[0].mxu0 %v4173
        %v4241 = vpop.f32.mrb[0].mxu0
        %v4242 = vadd.f32 0.0, %v4241
        %v4243 = vpop.f32.mrb[0].mxu0
        %4244 = vdwg.mxu0
        %4245 = vrot.lane.b32.xlu0 %v3803, 56
        %v4246 = vpop.permute.xlu0 %4245
        %v4249 = vsel %vm1230, %v4166, 0
        %4251 = vmatprep.subr.mxu0 0.0
        %4252 = vmatpush1.msra.mxu0 %v4246
        %4253 = vmatprep.subr.mxu0 0.0
        %4254 = vmatpush1.msra.mxu0 0.0
        %4255 = vmatprep.subr.mxu0 0.0
        %4256 = vmatpush1.msra.mxu0 0.0
        %4257 = vmatprep.subr.mxu0 0.0
        %4258 = vmatpush1.msra.mxu0 0.0
        %4259 = vmatprep.subr.mxu0 0.0
        %4260 = vmatpush1.msra.mxu0 0.0
        %4261 = vmatprep.subr.mxu0 0.0
        %4262 = vmatpush1.msra.mxu0 0.0
        %4263 = vmatprep.subr.mxu0 0.0
        %4264 = vmatpush1.msra.mxu0 0.0
        %4265 = vmatprep.subr.mxu0 0.0
        %4266 = vmatpush1.msra.mxu0 0.0
        %4267 = vmatprep.subr.mxu0 0.0
        %4268 = vmatpush1.msra.mxu0 0.0
        %4269 = vmatprep.subr.mxu0 0.0
        %4270 = vmatpush1.msra.mxu0 0.0
        %4271 = vmatprep.subr.mxu0 0.0
        %4272 = vmatpush1.msra.mxu0 0.0
        %4273 = vmatprep.subr.mxu0 0.0
        %4274 = vmatpush1.msra.mxu0 0.0
        %4275 = vmatprep.subr.mxu0 0.0
        %4276 = vmatpush1.msra.mxu0 0.0
        %4277 = vmatprep.subr.mxu0 0.0
        %4278 = vmatpush1.msra.mxu0 0.0
        %4279 = vmatprep.subr.mxu0 0.0
        %4280 = vmatpush1.msra.mxu0 0.0
        %4281 = vmatprep.subr.mxu0 0.0
        %4282 = vmatpush1.msra.mxu0 0.0
        %4283 = vmatprep.subr.mxu0 0.0
        %4284 = vmatpush1.msra.mxu0 0.0
        %4285 = vmatprep.subr.mxu0 0.0
        %4286 = vmatpush1.msra.mxu0 0.0
        %4287 = vmatprep.subr.mxu0 0.0
        %4288 = vmatpush1.msra.mxu0 0.0
        %4289 = vmatprep.subr.mxu0 0.0
        %4290 = vmatpush1.msra.mxu0 0.0
        %4291 = vmatprep.subr.mxu0 0.0
        %4292 = vmatpush1.msra.mxu0 0.0
        %4293 = vmatprep.subr.mxu0 0.0
        %4294 = vmatpush1.msra.mxu0 0.0
        %4295 = vmatprep.subr.mxu0 0.0
        %4296 = vmatpush1.msra.mxu0 0.0
        %4297 = vmatprep.subr.mxu0 0.0
        %4298 = vmatpush1.msra.mxu0 0.0
        %4299 = vmatprep.subr.mxu0 0.0
        %4300 = vmatpush1.msra.mxu0 0.0
        %4301 = vmatprep.subr.mxu0 0.0
        %4302 = vmatpush1.msra.mxu0 0.0
        %4303 = vmatprep.subr.mxu0 0.0
        %4304 = vmatpush1.msra.mxu0 0.0
        %4305 = vmatprep.subr.mxu0 0.0
        %4306 = vmatpush1.msra.mxu0 0.0
        %4307 = vmatprep.subr.mxu0 0.0
        %4308 = vmatpush1.msra.mxu0 0.0
        %4309 = vmatprep.subr.mxu0 0.0
        %4310 = vmatpush1.msra.mxu0 0.0
        %4311 = vmatprep.subr.mxu0 0.0
        %4312 = vmatpush1.msra.mxu0 0.0
        %4313 = vmatprep.subr.mxu0 0.0
        %4314 = vmatpush1.msra.mxu0 0.0
        %4315 = vmatprep.mubr.f32.mxu0 0.0
        %4316 = vmatmul.mubr.f32.gmra.mrb[0].mxu0 %v4249
        %v4317 = vpop.f32.mrb[0].mxu0
        %v4318 = vadd.f32 0.0, %v4317
        %v4319 = vpop.f32.mrb[0].mxu0
        %4320 = vdwg.mxu0
        %v4322 = vsel %vm1230, %v4318, 0
        %4324 = vmatprep.subr.mxu0 0.0
        %4325 = vmatpush1.msra.mxu0 %v3723
        %4326 = vmatprep.subr.mxu0 0.0
        %4327 = vmatpush1.msra.mxu0 0.0
        %4328 = vmatprep.subr.mxu0 0.0
        %4329 = vmatpush1.msra.mxu0 0.0
        %4330 = vmatprep.subr.mxu0 0.0
        %4331 = vmatpush1.msra.mxu0 0.0
        %4332 = vmatprep.subr.mxu0 0.0
        %4333 = vmatpush1.msra.mxu0 0.0
        %4334 = vmatprep.subr.mxu0 0.0
        %4335 = vmatpush1.msra.mxu0 0.0
        %4336 = vmatprep.subr.mxu0 0.0
        %4337 = vmatpush1.msra.mxu0 0.0
        %4338 = vmatprep.subr.mxu0 0.0
        %4339 = vmatpush1.msra.mxu0 0.0
        %4340 = vmatprep.subr.mxu0 0.0
        %4341 = vmatpush1.msra.mxu0 0.0
        %4342 = vmatprep.subr.mxu0 0.0
        %4343 = vmatpush1.msra.mxu0 0.0
        %4344 = vmatprep.subr.mxu0 0.0
        %4345 = vmatpush1.msra.mxu0 0.0
        %4346 = vmatprep.subr.mxu0 0.0
        %4347 = vmatpush1.msra.mxu0 0.0
        %4348 = vmatprep.subr.mxu0 0.0
        %4349 = vmatpush1.msra.mxu0 0.0
        %4350 = vmatprep.subr.mxu0 0.0
        %4351 = vmatpush1.msra.mxu0 0.0
        %4352 = vmatprep.subr.mxu0 0.0
        %4353 = vmatpush1.msra.mxu0 0.0
        %4354 = vmatprep.subr.mxu0 0.0
        %4355 = vmatpush1.msra.mxu0 0.0
        %4356 = vmatprep.subr.mxu0 0.0
        %4357 = vmatpush1.msra.mxu0 0.0
        %4358 = vmatprep.subr.mxu0 0.0
        %4359 = vmatpush1.msra.mxu0 0.0
        %4360 = vmatprep.subr.mxu0 0.0
        %4361 = vmatpush1.msra.mxu0 0.0
        %4362 = vmatprep.subr.mxu0 0.0
        %4363 = vmatpush1.msra.mxu0 0.0
        %4364 = vmatprep.subr.mxu0 0.0
        %4365 = vmatpush1.msra.mxu0 0.0
        %4366 = vmatprep.subr.mxu0 0.0
        %4367 = vmatpush1.msra.mxu0 0.0
        %4368 = vmatprep.subr.mxu0 0.0
        %4369 = vmatpush1.msra.mxu0 0.0
        %4370 = vmatprep.subr.mxu0 0.0
        %4371 = vmatpush1.msra.mxu0 0.0
        %4372 = vmatprep.subr.mxu0 0.0
        %4373 = vmatpush1.msra.mxu0 0.0
        %4374 = vmatprep.subr.mxu0 0.0
        %4375 = vmatpush1.msra.mxu0 0.0
        %4376 = vmatprep.subr.mxu0 0.0
        %4377 = vmatpush1.msra.mxu0 0.0
        %4378 = vmatprep.subr.mxu0 0.0
        %4379 = vmatpush1.msra.mxu0 0.0
        %4380 = vmatprep.subr.mxu0 0.0
        %4381 = vmatpush1.msra.mxu0 0.0
        %4382 = vmatprep.subr.mxu0 0.0
        %4383 = vmatpush1.msra.mxu0 0.0
        %4384 = vmatprep.subr.mxu0 0.0
        %4385 = vmatpush1.msra.mxu0 0.0
        %4386 = vmatprep.subr.mxu0 0.0
        %4387 = vmatpush1.msra.mxu0 0.0
        %4388 = vmatprep.mubr.f32.mxu0 0.0
        %4389 = vmatmul.mubr.f32.gmra.mrb[0].mxu0 %v4322
        %v4390 = vpop.f32.mrb[0].mxu0
        %v4391 = vadd.f32 0.0, %v4390
        %v4392 = vpop.f32.mrb[0].mxu0
        %4393 = vdwg.mxu0
        %v4395 = vsel %vm1230, %v4242, 0
        %4397 = vmatprep.subr.mxu0 0.0
        %4398 = vmatpush1.msra.mxu0 %v3722
        %4399 = vmatprep.subr.mxu0 0.0
        %4400 = vmatpush1.msra.mxu0 0.0
        %4401 = vmatprep.subr.mxu0 0.0
        %4402 = vmatpush1.msra.mxu0 0.0
        %4403 = vmatprep.subr.mxu0 0.0
        %4404 = vmatpush1.msra.mxu0 0.0
        %4405 = vmatprep.subr.mxu0 0.0
        %4406 = vmatpush1.msra.mxu0 0.0
        %4407 = vmatprep.subr.mxu0 0.0
        %4408 = vmatpush1.msra.mxu0 0.0
        %4409 = vmatprep.subr.mxu0 0.0
        %4410 = vmatpush1.msra.mxu0 0.0
        %4411 = vmatprep.subr.mxu0 0.0
        %4412 = vmatpush1.msra.mxu0 0.0
        %4413 = vmatprep.subr.mxu0 0.0
        %4414 = vmatpush1.msra.mxu0 0.0
        %4415 = vmatprep.subr.mxu0 0.0
        %4416 = vmatpush1.msra.mxu0 0.0
        %4417 = vmatprep.subr.mxu0 0.0
        %4418 = vmatpush1.msra.mxu0 0.0
        %4419 = vmatprep.subr.mxu0 0.0
        %4420 = vmatpush1.msra.mxu0 0.0
        %4421 = vmatprep.subr.mxu0 0.0
        %4422 = vmatpush1.msra.mxu0 0.0
        %4423 = vmatprep.subr.mxu0 0.0
        %4424 = vmatpush1.msra.mxu0 0.0
        %4425 = vmatprep.subr.mxu0 0.0
        %4426 = vmatpush1.msra.mxu0 0.0
        %4427 = vmatprep.subr.mxu0 0.0
        %4428 = vmatpush1.msra.mxu0 0.0
        %4429 = vmatprep.subr.mxu0 0.0
        %4430 = vmatpush1.msra.mxu0 0.0
        %4431 = vmatprep.subr.mxu0 0.0
        %4432 = vmatpush1.msra.mxu0 0.0
        %4433 = vmatprep.subr.mxu0 0.0
        %4434 = vmatpush1.msra.mxu0 0.0
        %4435 = vmatprep.subr.mxu0 0.0
        %4436 = vmatpush1.msra.mxu0 0.0
        %4437 = vmatprep.subr.mxu0 0.0
        %4438 = vmatpush1.msra.mxu0 0.0
        %4439 = vmatprep.subr.mxu0 0.0
        %4440 = vmatpush1.msra.mxu0 0.0
        %4441 = vmatprep.subr.mxu0 0.0
        %4442 = vmatpush1.msra.mxu0 0.0
        %4443 = vmatprep.subr.mxu0 0.0
        %4444 = vmatpush1.msra.mxu0 0.0
        %4445 = vmatprep.subr.mxu0 0.0
        %4446 = vmatpush1.msra.mxu0 0.0
        %4447 = vmatprep.subr.mxu0 0.0
        %4448 = vmatpush1.msra.mxu0 0.0
        %4449 = vmatprep.subr.mxu0 0.0
        %4450 = vmatpush1.msra.mxu0 0.0
        %4451 = vmatprep.subr.mxu0 0.0
        %4452 = vmatpush1.msra.mxu0 0.0
        %4453 = vmatprep.subr.mxu0 0.0
        %4454 = vmatpush1.msra.mxu0 0.0
        %4455 = vmatprep.subr.mxu0 0.0
        %4456 = vmatpush1.msra.mxu0 0.0
        %4457 = vmatprep.subr.mxu0 0.0
        %4458 = vmatpush1.msra.mxu0 0.0
        %4459 = vmatprep.subr.mxu0 0.0
        %4460 = vmatpush1.msra.mxu0 0.0
        %4461 = vmatprep.mubr.f32.mxu0 0.0
        %4462 = vmatmul.mubr.f32.gmra.mrb[0].mxu0 %v4395
        %v4463 = vpop.f32.mrb[0].mxu0
        %v4464 = vadd.f32 %v4391, %v4463
        %v4465 = vpop.f32.mrb[0].mxu0
        %4466 = vdwg.mxu0
        %4467 = vrot.lane.b32.xlu0 %v3803, 48
        %v4468 = vpop.permute.xlu0 %4467
        %v4471 = vsel %vm1230, %v4167, 0
        %4473 = vmatprep.subr.mxu0 0.0
        %4474 = vmatpush1.msra.mxu0 %v4468
        %4475 = vmatprep.subr.mxu0 0.0
        %4476 = vmatpush1.msra.mxu0 0.0
        %4477 = vmatprep.subr.mxu0 0.0
        %4478 = vmatpush1.msra.mxu0 0.0
        %4479 = vmatprep.subr.mxu0 0.0
        %4480 = vmatpush1.msra.mxu0 0.0
        %4481 = vmatprep.subr.mxu0 0.0
        %4482 = vmatpush1.msra.mxu0 0.0
        %4483 = vmatprep.subr.mxu0 0.0
        %4484 = vmatpush1.msra.mxu0 0.0
        %4485 = vmatprep.subr.mxu0 0.0
        %4486 = vmatpush1.msra.mxu0 0.0
        %4487 = vmatprep.subr.mxu0 0.0
        %4488 = vmatpush1.msra.mxu0 0.0
        %4489 = vmatprep.subr.mxu0 0.0
        %4490 = vmatpush1.msra.mxu0 0.0
        %4491 = vmatprep.subr.mxu0 0.0
        %4492 = vmatpush1.msra.mxu0 0.0
        %4493 = vmatprep.subr.mxu0 0.0
        %4494 = vmatpush1.msra.mxu0 0.0
        %4495 = vmatprep.subr.mxu0 0.0
        %4496 = vmatpush1.msra.mxu0 0.0
        %4497 = vmatprep.subr.mxu0 0.0
        %4498 = vmatpush1.msra.mxu0 0.0
        %4499 = vmatprep.subr.mxu0 0.0
        %4500 = vmatpush1.msra.mxu0 0.0
        %4501 = vmatprep.subr.mxu0 0.0
        %4502 = vmatpush1.msra.mxu0 0.0
        %4503 = vmatprep.subr.mxu0 0.0
        %4504 = vmatpush1.msra.mxu0 0.0
        %4505 = vmatprep.subr.mxu0 0.0
        %4506 = vmatpush1.msra.mxu0 0.0
        %4507 = vmatprep.subr.mxu0 0.0
        %4508 = vmatpush1.msra.mxu0 0.0
        %4509 = vmatprep.subr.mxu0 0.0
        %4510 = vmatpush1.msra.mxu0 0.0
        %4511 = vmatprep.subr.mxu0 0.0
        %4512 = vmatpush1.msra.mxu0 0.0
        %4513 = vmatprep.subr.mxu0 0.0
        %4514 = vmatpush1.msra.mxu0 0.0
        %4515 = vmatprep.subr.mxu0 0.0
        %4516 = vmatpush1.msra.mxu0 0.0
        %4517 = vmatprep.subr.mxu0 0.0
        %4518 = vmatpush1.msra.mxu0 0.0
        %4519 = vmatprep.subr.mxu0 0.0
        %4520 = vmatpush1.msra.mxu0 0.0
        %4521 = vmatprep.subr.mxu0 0.0
        %4522 = vmatpush1.msra.mxu0 0.0
        %4523 = vmatprep.subr.mxu0 0.0
        %4524 = vmatpush1.msra.mxu0 0.0
        %4525 = vmatprep.subr.mxu0 0.0
        %4526 = vmatpush1.msra.mxu0 0.0
        %4527 = vmatprep.subr.mxu0 0.0
        %4528 = vmatpush1.msra.mxu0 0.0
        %4529 = vmatprep.subr.mxu0 0.0
        %4530 = vmatpush1.msra.mxu0 0.0
        %4531 = vmatprep.subr.mxu0 0.0
        %4532 = vmatpush1.msra.mxu0 0.0
        %4533 = vmatprep.subr.mxu0 0.0
        %4534 = vmatpush1.msra.mxu0 0.0
        %4535 = vmatprep.subr.mxu0 0.0
        %4536 = vmatpush1.msra.mxu0 0.0
        %4537 = vmatprep.mubr.f32.mxu0 0.0
        %4538 = vmatmul.mubr.f32.gmra.mrb[0].mxu0 %v4471
        %v4539 = vpop.f32.mrb[0].mxu0
        %v4540 = vadd.f32 0.0, %v4539
        %v4541 = vpop.f32.mrb[0].mxu0
        %4542 = vdwg.mxu0
        %v4544 = vsel %vm1230, %v4540, 0
        %4546 = vmatprep.subr.mxu0 0.0
        %4547 = vmatpush1.msra.mxu0 %v3724
        %4548 = vmatprep.subr.mxu0 0.0
        %4549 = vmatpush1.msra.mxu0 0.0
        %4550 = vmatprep.subr.mxu0 0.0
        %4551 = vmatpush1.msra.mxu0 0.0
        %4552 = vmatprep.subr.mxu0 0.0
        %4553 = vmatpush1.msra.mxu0 0.0
        %4554 = vmatprep.subr.mxu0 0.0
        %4555 = vmatpush1.msra.mxu0 0.0
        %4556 = vmatprep.subr.mxu0 0.0
        %4557 = vmatpush1.msra.mxu0 0.0
        %4558 = vmatprep.subr.mxu0 0.0
        %4559 = vmatpush1.msra.mxu0 0.0
        %4560 = vmatprep.subr.mxu0 0.0
        %4561 = vmatpush1.msra.mxu0 0.0
        %4562 = vmatprep.subr.mxu0 0.0
        %4563 = vmatpush1.msra.mxu0 0.0
        %4564 = vmatprep.subr.mxu0 0.0
        %4565 = vmatpush1.msra.mxu0 0.0
        %4566 = vmatprep.subr.mxu0 0.0
        %4567 = vmatpush1.msra.mxu0 0.0
        %4568 = vmatprep.subr.mxu0 0.0
        %4569 = vmatpush1.msra.mxu0 0.0
        %4570 = vmatprep.subr.mxu0 0.0
        %4571 = vmatpush1.msra.mxu0 0.0
        %4572 = vmatprep.subr.mxu0 0.0
        %4573 = vmatpush1.msra.mxu0 0.0
        %4574 = vmatprep.subr.mxu0 0.0
        %4575 = vmatpush1.msra.mxu0 0.0
        %4576 = vmatprep.subr.mxu0 0.0
        %4577 = vmatpush1.msra.mxu0 0.0
        %4578 = vmatprep.subr.mxu0 0.0
        %4579 = vmatpush1.msra.mxu0 0.0
        %4580 = vmatprep.subr.mxu0 0.0
        %4581 = vmatpush1.msra.mxu0 0.0
        %4582 = vmatprep.subr.mxu0 0.0
        %4583 = vmatpush1.msra.mxu0 0.0
        %4584 = vmatprep.subr.mxu0 0.0
        %4585 = vmatpush1.msra.mxu0 0.0
        %4586 = vmatprep.subr.mxu0 0.0
        %4587 = vmatpush1.msra.mxu0 0.0
        %4588 = vmatprep.subr.mxu0 0.0
        %4589 = vmatpush1.msra.mxu0 0.0
        %4590 = vmatprep.subr.mxu0 0.0
        %4591 = vmatpush1.msra.mxu0 0.0
        %4592 = vmatprep.subr.mxu0 0.0
        %4593 = vmatpush1.msra.mxu0 0.0
        %4594 = vmatprep.subr.mxu0 0.0
        %4595 = vmatpush1.msra.mxu0 0.0
        %4596 = vmatprep.subr.mxu0 0.0
        %4597 = vmatpush1.msra.mxu0 0.0
        %4598 = vmatprep.subr.mxu0 0.0
        %4599 = vmatpush1.msra.mxu0 0.0
        %4600 = vmatprep.subr.mxu0 0.0
        %4601 = vmatpush1.msra.mxu0 0.0
        %4602 = vmatprep.subr.mxu0 0.0
        %4603 = vmatpush1.msra.mxu0 0.0
        %4604 = vmatprep.subr.mxu0 0.0
        %4605 = vmatpush1.msra.mxu0 0.0
        %4606 = vmatprep.subr.mxu0 0.0
        %4607 = vmatpush1.msra.mxu0 0.0
        %4608 = vmatprep.subr.mxu0 0.0
        %4609 = vmatpush1.msra.mxu0 0.0
        %4610 = vmatprep.mubr.f32.mxu0 0.0
        %4611 = vmatmul.mubr.f32.gmra.mrb[0].mxu0 %v4544
        %v4612 = vpop.f32.mrb[0].mxu0
        %v4613 = vadd.f32 0.0, %v4612
        %v4614 = vpop.f32.mrb[0].mxu0
        %4615 = vdwg.mxu0
        %v4616 = vadd.f32 %v4464, %v4613
        %4617 = vrot.lane.b32.xlu0 %v3803, 40
        %v4618 = vpop.permute.xlu0 %4617
        %v4621 = vsel %vm1230, %v4168, 0
        %4623 = vmatprep.subr.mxu0 0.0
        %4624 = vmatpush1.msra.mxu0 %v4618
        %4625 = vmatprep.subr.mxu0 0.0
        %4626 = vmatpush1.msra.mxu0 0.0
        %4627 = vmatprep.subr.mxu0 0.0
        %4628 = vmatpush1.msra.mxu0 0.0
        %4629 = vmatprep.subr.mxu0 0.0
        %4630 = vmatpush1.msra.mxu0 0.0
        %4631 = vmatprep.subr.mxu0 0.0
        %4632 = vmatpush1.msra.mxu0 0.0
        %4633 = vmatprep.subr.mxu0 0.0
        %4634 = vmatpush1.msra.mxu0 0.0
        %4635 = vmatprep.subr.mxu0 0.0
        %4636 = vmatpush1.msra.mxu0 0.0
        %4637 = vmatprep.subr.mxu0 0.0
        %4638 = vmatpush1.msra.mxu0 0.0
        %4639 = vmatprep.subr.mxu0 0.0
        %4640 = vmatpush1.msra.mxu0 0.0
        %4641 = vmatprep.subr.mxu0 0.0
        %4642 = vmatpush1.msra.mxu0 0.0
        %4643 = vmatprep.subr.mxu0 0.0
        %4644 = vmatpush1.msra.mxu0 0.0
        %4645 = vmatprep.subr.mxu0 0.0
        %4646 = vmatpush1.msra.mxu0 0.0
        %4647 = vmatprep.subr.mxu0 0.0
        %4648 = vmatpush1.msra.mxu0 0.0
        %4649 = vmatprep.subr.mxu0 0.0
        %4650 = vmatpush1.msra.mxu0 0.0
        %4651 = vmatprep.subr.mxu0 0.0
        %4652 = vmatpush1.msra.mxu0 0.0
        %4653 = vmatprep.subr.mxu0 0.0
        %4654 = vmatpush1.msra.mxu0 0.0
        %4655 = vmatprep.subr.mxu0 0.0
        %4656 = vmatpush1.msra.mxu0 0.0
        %4657 = vmatprep.subr.mxu0 0.0
        %4658 = vmatpush1.msra.mxu0 0.0
        %4659 = vmatprep.subr.mxu0 0.0
        %4660 = vmatpush1.msra.mxu0 0.0
        %4661 = vmatprep.subr.mxu0 0.0
        %4662 = vmatpush1.msra.mxu0 0.0
        %4663 = vmatprep.subr.mxu0 0.0
        %4664 = vmatpush1.msra.mxu0 0.0
        %4665 = vmatprep.subr.mxu0 0.0
        %4666 = vmatpush1.msra.mxu0 0.0
        %4667 = vmatprep.subr.mxu0 0.0
        %4668 = vmatpush1.msra.mxu0 0.0
        %4669 = vmatprep.subr.mxu0 0.0
        %4670 = vmatpush1.msra.mxu0 0.0
        %4671 = vmatprep.subr.mxu0 0.0
        %4672 = vmatpush1.msra.mxu0 0.0
        %4673 = vmatprep.subr.mxu0 0.0
        %4674 = vmatpush1.msra.mxu0 0.0
        %4675 = vmatprep.subr.mxu0 0.0
        %4676 = vmatpush1.msra.mxu0 0.0
        %4677 = vmatprep.subr.mxu0 0.0
        %4678 = vmatpush1.msra.mxu0 0.0
        %4679 = vmatprep.subr.mxu0 0.0
        %4680 = vmatpush1.msra.mxu0 0.0
        %4681 = vmatprep.subr.mxu0 0.0
        %4682 = vmatpush1.msra.mxu0 0.0
        %4683 = vmatprep.subr.mxu0 0.0
        %4684 = vmatpush1.msra.mxu0 0.0
        %4685 = vmatprep.subr.mxu0 0.0
        %4686 = vmatpush1.msra.mxu0 0.0
        %4687 = vmatprep.mubr.f32.mxu0 0.0
        %4688 = vmatmul.mubr.f32.gmra.mrb[0].mxu0 %v4621
        %v4689 = vpop.f32.mrb[0].mxu0
        %v4690 = vadd.f32 0.0, %v4689
        %v4691 = vpop.f32.mrb[0].mxu0
        %4692 = vdwg.mxu0
        %v4694 = vsel %vm1230, %v4690, 0
        %4696 = vmatprep.subr.mxu0 0.0
        %4697 = vmatpush1.msra.mxu0 %v3725
        %4698 = vmatprep.subr.mxu0 0.0
        %4699 = vmatpush1.msra.mxu0 0.0
        %4700 = vmatprep.subr.mxu0 0.0
        %4701 = vmatpush1.msra.mxu0 0.0
        %4702 = vmatprep.subr.mxu0 0.0
        %4703 = vmatpush1.msra.mxu0 0.0
        %4704 = vmatprep.subr.mxu0 0.0
        %4705 = vmatpush1.msra.mxu0 0.0
        %4706 = vmatprep.subr.mxu0 0.0
        %4707 = vmatpush1.msra.mxu0 0.0
        %4708 = vmatprep.subr.mxu0 0.0
        %4709 = vmatpush1.msra.mxu0 0.0
        %4710 = vmatprep.subr.mxu0 0.0
        %4711 = vmatpush1.msra.mxu0 0.0
        %4712 = vmatprep.subr.mxu0 0.0
        %4713 = vmatpush1.msra.mxu0 0.0
        %4714 = vmatprep.subr.mxu0 0.0
        %4715 = vmatpush1.msra.mxu0 0.0
        %4716 = vmatprep.subr.mxu0 0.0
        %4717 = vmatpush1.msra.mxu0 0.0
        %4718 = vmatprep.subr.mxu0 0.0
        %4719 = vmatpush1.msra.mxu0 0.0
        %4720 = vmatprep.subr.mxu0 0.0
        %4721 = vmatpush1.msra.mxu0 0.0
        %4722 = vmatprep.subr.mxu0 0.0
        %4723 = vmatpush1.msra.mxu0 0.0
        %4724 = vmatprep.subr.mxu0 0.0
        %4725 = vmatpush1.msra.mxu0 0.0
        %4726 = vmatprep.subr.mxu0 0.0
        %4727 = vmatpush1.msra.mxu0 0.0
        %4728 = vmatprep.subr.mxu0 0.0
        %4729 = vmatpush1.msra.mxu0 0.0
        %4730 = vmatprep.subr.mxu0 0.0
        %4731 = vmatpush1.msra.mxu0 0.0
        %4732 = vmatprep.subr.mxu0 0.0
        %4733 = vmatpush1.msra.mxu0 0.0
        %4734 = vmatprep.subr.mxu0 0.0
        %4735 = vmatpush1.msra.mxu0 0.0
        %4736 = vmatprep.subr.mxu0 0.0
        %4737 = vmatpush1.msra.mxu0 0.0
        %4738 = vmatprep.subr.mxu0 0.0
        %4739 = vmatpush1.msra.mxu0 0.0
        %4740 = vmatprep.subr.mxu0 0.0
        %4741 = vmatpush1.msra.mxu0 0.0
        %4742 = vmatprep.subr.mxu0 0.0
        %4743 = vmatpush1.msra.mxu0 0.0
        %4744 = vmatprep.subr.mxu0 0.0
        %4745 = vmatpush1.msra.mxu0 0.0
        %4746 = vmatprep.subr.mxu0 0.0
        %4747 = vmatpush1.msra.mxu0 0.0
        %4748 = vmatprep.subr.mxu0 0.0
        %4749 = vmatpush1.msra.mxu0 0.0
        %4750 = vmatprep.subr.mxu0 0.0
        %4751 = vmatpush1.msra.mxu0 0.0
        %4752 = vmatprep.subr.mxu0 0.0
        %4753 = vmatpush1.msra.mxu0 0.0
        %4754 = vmatprep.subr.mxu0 0.0
        %4755 = vmatpush1.msra.mxu0 0.0
        %4756 = vmatprep.subr.mxu0 0.0
        %4757 = vmatpush1.msra.mxu0 0.0
        %4758 = vmatprep.subr.mxu0 0.0
        %4759 = vmatpush1.msra.mxu0 0.0
        %4760 = vmatprep.mubr.f32.mxu0 0.0
        %4761 = vmatmul.mubr.f32.gmra.mrb[0].mxu0 %v4694
        %v4762 = vpop.f32.mrb[0].mxu0
        %v4763 = vadd.f32 0.0, %v4762
        %v4764 = vpop.f32.mrb[0].mxu0
        %4765 = vdwg.mxu0
        %v4766 = vadd.f32 %v4616, %v4763
        %v4768 = vlaneseq
        %v4769 = vshrl.u32 %v4768, 7
        %v4770 = vsub.s32 0, %v4769
        %v4771 = vrot.slane %v3726, %v4770
        %v4773 = vadd.f32 %v4766, %v4771
        %v4774 = vadd.f32 %v4773, %v3716
        %v4775 = vld [vmem:[%s39] sm:$0x1]
        %v4776 = vld [vmem:[%s41] sm:$0x1]
        %v4777 = vsel %vm1153, %v4774, 0.0
        %4778 = vadd.xlane.f32.xlu0 %v4777
        %v4779 = vpop.xlane.xlu0 %4778
        %v4780 = vmul.f32 %v4779, %v2200
        %v4781 = vsub.f32 %v4774, %v4780
        %v4782 = vmul.f32 %v4781, %v4781
        %v4783 = vsel %vm1153, %v4782, 0.0
        %4784 = vadd.xlane.f32.xlu0 %v4783
        %v4785 = vpop.xlane.xlu0 %4784
        %v4786 = vmul.f32 %v4785, %v2200
        %v4787 = vadd.f32 %v4786, 1e-05
        %v4788 = vrsqrt.pop %v4787
        %v4789 = vmul.f32 %v4781, %v4788
        %v4791 = vlaneseq
        %v4792 = vshrl.u32 %v4791, 7
        %v4793 = vsub.s32 0, %v4792
        %v4794 = vrot.slane %v4775, %v4793
        %v4796 = vmul.f32 %v4789, %v4794
        %v4798 = vlaneseq
        %v4799 = vshrl.u32 %v4798, 7
        %v4800 = vsub.s32 0, %v4799
        %v4801 = vrot.slane %v4776, %v4800
        %v4803 = vadd.f32 %v4796, %v4801
        %v4804 = vld [vmem:[%s43] sm:$0xff]
        %v4805 = vld [vmem:[%s43 + $0x8] sm:$0xff]
        %v4806 = vld [vmem:[%s43 + $0x10] sm:$0xff]
        %v4807 = vld [vmem:[%s43 + $0x18] sm:$0xff]
        %v4808 = vld [vmem:[%s45] sm:$0x1]
        %v4809 = vld [vmem:[%s47] sm:$0xff]
        %v4810 = vld [vmem:[%s47 + $0x8] sm:$0xff]
        %v4811 = vld [vmem:[%s47 + $0x10] sm:$0xff]
        %v4812 = vld [vmem:[%s47 + $0x18] sm:$0xff]
        %v4813 = vld [vmem:[%s49] sm:$0x1]
        %v4814 = vld [vmem:[%s51] sm:$0x1]
        %v4815 = vld [vmem:[%s53] sm:$0x1]
        %v4816 = vld [vmem:[%s55] sm:$0x1]
        %v4817 = vld [vmem:[%s57] sm:$0x1]
        %v4818 = vld [vmem:[%s59] sm:$0xff]
        %v4819 = vld [vmem:[%s59 + $0x8] sm:$0xff]
        %v4820 = vld [vmem:[%s59 + $0x10] sm:$0xff]
        %v4821 = vld [vmem:[%s59 + $0x18] sm:$0xff]
        %v4822 = vld [vmem:[%s61] sm:$0x1]
        %v4823 = vld [vmem:[%s63] sm:$0xff]
        %v4824 = vld [vmem:[%s63 + $0x8] sm:$0xff]
        %v4825 = vld [vmem:[%s63 + $0x10] sm:$0xff]
        %v4826 = vld [vmem:[%s63 + $0x18] sm:$0xff]
        %v4827 = vld [vmem:[%s63 + $0x20] sm:$0xff]
        %v4828 = vld [vmem:[%s63 + $0x28] sm:$0xff]
        %v4829 = vld [vmem:[%s63 + $0x30] sm:$0xff]
        %v4830 = vld [vmem:[%s63 + $0x38] sm:$0xff]
        %v4831 = vld [vmem:[%s63 + $0x40] sm:$0xff]
        %v4832 = vld [vmem:[%s63 + $0x48] sm:$0xff]
        %v4833 = vld [vmem:[%s63 + $0x50] sm:$0xff]
        %v4834 = vld [vmem:[%s63 + $0x58] sm:$0xff]
        %v4835 = vld [vmem:[%s63 + $0x60] sm:$0xff]
        %v4836 = vld [vmem:[%s63 + $0x68] sm:$0xff]
        %v4837 = vld [vmem:[%s63 + $0x70] sm:$0xff]
        %v4838 = vld [vmem:[%s63 + $0x78] sm:$0xff]
        %v4839 = vld [vmem:[%s65] sm:$0x1]
        %v4841 = vlaneseq
        %v4842 = vshrl.u32 %v4841, 7
        %v4843 = vsub.s32 0, %v4842
        %v4844 = vrot.slane %v4808, %v4843
        %v4847 = vsel %vm1153, %v4803, 0
        %4849 = vmatprep.subr.mxu0 0.0
        %4850 = vmatpush1.msra.mxu0 %v4804
        %4851 = vmatprep.subr.mxu0 0.0
        %4852 = vmatpush1.msra.mxu0 %v4805
        %4853 = vmatprep.subr.mxu0 0.0
        %4854 = vmatpush1.msra.mxu0 %v4806
        %4855 = vmatprep.subr.mxu0 0.0
        %4856 = vmatpush1.msra.mxu0 %v4807
        %4857 = vmatprep.subr.mxu0 0.0
        %4858 = vmatpush1.msra.mxu0 0.0
        %4859 = vmatprep.subr.mxu0 0.0
        %4860 = vmatpush1.msra.mxu0 0.0
        %4861 = vmatprep.subr.mxu0 0.0
        %4862 = vmatpush1.msra.mxu0 0.0
        %4863 = vmatprep.subr.mxu0 0.0
        %4864 = vmatpush1.msra.mxu0 0.0
        %4865 = vmatprep.subr.mxu0 0.0
        %4866 = vmatpush1.msra.mxu0 0.0
        %4867 = vmatprep.subr.mxu0 0.0
        %4868 = vmatpush1.msra.mxu0 0.0
        %4869 = vmatprep.subr.mxu0 0.0
        %4870 = vmatpush1.msra.mxu0 0.0
        %4871 = vmatprep.subr.mxu0 0.0
        %4872 = vmatpush1.msra.mxu0 0.0
        %4873 = vmatprep.subr.mxu0 0.0
        %4874 = vmatpush1.msra.mxu0 0.0
        %4875 = vmatprep.subr.mxu0 0.0
        %4876 = vmatpush1.msra.mxu0 0.0
        %4877 = vmatprep.subr.mxu0 0.0
        %4878 = vmatpush1.msra.mxu0 0.0
        %4879 = vmatprep.subr.mxu0 0.0
        %4880 = vmatpush1.msra.mxu0 0.0
        %4881 = vmatprep.subr.mxu0 0.0
        %4882 = vmatpush1.msra.mxu0 0.0
        %4883 = vmatprep.subr.mxu0 0.0
        %4884 = vmatpush1.msra.mxu0 0.0
        %4885 = vmatprep.subr.mxu0 0.0
        %4886 = vmatpush1.msra.mxu0 0.0
        %4887 = vmatprep.subr.mxu0 0.0
        %4888 = vmatpush1.msra.mxu0 0.0
        %4889 = vmatprep.subr.mxu0 0.0
        %4890 = vmatpush1.msra.mxu0 0.0
        %4891 = vmatprep.subr.mxu0 0.0
        %4892 = vmatpush1.msra.mxu0 0.0
        %4893 = vmatprep.subr.mxu0 0.0
        %4894 = vmatpush1.msra.mxu0 0.0
        %4895 = vmatprep.subr.mxu0 0.0
        %4896 = vmatpush1.msra.mxu0 0.0
        %4897 = vmatprep.subr.mxu0 0.0
        %4898 = vmatpush1.msra.mxu0 0.0
        %4899 = vmatprep.subr.mxu0 0.0
        %4900 = vmatpush1.msra.mxu0 0.0
        %4901 = vmatprep.subr.mxu0 0.0
        %4902 = vmatpush1.msra.mxu0 0.0
        %4903 = vmatprep.subr.mxu0 0.0
        %4904 = vmatpush1.msra.mxu0 0.0
        %4905 = vmatprep.subr.mxu0 0.0
        %4906 = vmatpush1.msra.mxu0 0.0
        %4907 = vmatprep.subr.mxu0 0.0
        %4908 = vmatpush1.msra.mxu0 0.0
        %4909 = vmatprep.subr.mxu0 0.0
        %4910 = vmatpush1.msra.mxu0 0.0
        %4911 = vmatprep.subr.mxu0 0.0
        %4912 = vmatpush1.msra.mxu0 0.0
        %4913 = vmatprep.mubr.f32.mxu0 0.0
        %4914 = vmatmul.mubr.f32.gmra.mrb[0].mxu0 %v4847
        %v4915 = vpop.f32.mrb[0].mxu0
        %v4916 = vadd.f32 %v4844, %v4915
        %v4917 = vpop.f32.mrb[0].mxu0
        %4918 = vdwg.mxu0
        %4923 = vrot.lane.b32.xlu0 %v4804, 96
        %v4924 = vpop.permute.xlu0 %4923
        %4925 = vrot.lane.b32.xlu0 %v4805, 96
        %v4926 = vpop.permute.xlu0 %4925
        %4927 = vrot.lane.b32.xlu0 %v4806, 96
        %v4928 = vpop.permute.xlu0 %4927
        %4929 = vrot.lane.b32.xlu0 %v4807, 96
        %v4930 = vpop.permute.xlu0 %4929
        %4935 = vrot.lane.b32.xlu0 %v4844, 96
        %v4936 = vpop.permute.xlu0 %4935
        %v4939 = vsel %vm1153, %v3715, 0
        %4941 = vmatprep.subr.mxu0 0.0
        %4942 = vmatpush1.msra.mxu0 %v4924
        %4943 = vmatprep.subr.mxu0 0.0
        %4944 = vmatpush1.msra.mxu0 %v4926
        %4945 = vmatprep.subr.mxu0 0.0
        %4946 = vmatpush1.msra.mxu0 %v4928
        %4947 = vmatprep.subr.mxu0 0.0
        %4948 = vmatpush1.msra.mxu0 %v4930
        %4949 = vmatprep.subr.mxu0 0.0
        %4950 = vmatpush1.msra.mxu0 0.0
        %4951 = vmatprep.subr.mxu0 0.0
        %4952 = vmatpush1.msra.mxu0 0.0
        %4953 = vmatprep.subr.mxu0 0.0
        %4954 = vmatpush1.msra.mxu0 0.0
        %4955 = vmatprep.subr.mxu0 0.0
        %4956 = vmatpush1.msra.mxu0 0.0
        %4957 = vmatprep.subr.mxu0 0.0
        %4958 = vmatpush1.msra.mxu0 0.0
        %4959 = vmatprep.subr.mxu0 0.0
        %4960 = vmatpush1.msra.mxu0 0.0
        %4961 = vmatprep.subr.mxu0 0.0
        %4962 = vmatpush1.msra.mxu0 0.0
        %4963 = vmatprep.subr.mxu0 0.0
        %4964 = vmatpush1.msra.mxu0 0.0
        %4965 = vmatprep.subr.mxu0 0.0
        %4966 = vmatpush1.msra.mxu0 0.0
        %4967 = vmatprep.subr.mxu0 0.0
        %4968 = vmatpush1.msra.mxu0 0.0
        %4969 = vmatprep.subr.mxu0 0.0
        %4970 = vmatpush1.msra.mxu0 0.0
        %4971 = vmatprep.subr.mxu0 0.0
        %4972 = vmatpush1.msra.mxu0 0.0
        %4973 = vmatprep.subr.mxu0 0.0
        %4974 = vmatpush1.msra.mxu0 0.0
        %4975 = vmatprep.subr.mxu0 0.0
        %4976 = vmatpush1.msra.mxu0 0.0
        %4977 = vmatprep.subr.mxu0 0.0
        %4978 = vmatpush1.msra.mxu0 0.0
        %4979 = vmatprep.subr.mxu0 0.0
        %4980 = vmatpush1.msra.mxu0 0.0
        %4981 = vmatprep.subr.mxu0 0.0
        %4982 = vmatpush1.msra.mxu0 0.0
        %4983 = vmatprep.subr.mxu0 0.0
        %4984 = vmatpush1.msra.mxu0 0.0
        %4985 = vmatprep.subr.mxu0 0.0
        %4986 = vmatpush1.msra.mxu0 0.0
        %4987 = vmatprep.subr.mxu0 0.0
        %4988 = vmatpush1.msra.mxu0 0.0
        %4989 = vmatprep.subr.mxu0 0.0
        %4990 = vmatpush1.msra.mxu0 0.0
        %4991 = vmatprep.subr.mxu0 0.0
        %4992 = vmatpush1.msra.mxu0 0.0
        %4993 = vmatprep.subr.mxu0 0.0
        %4994 = vmatpush1.msra.mxu0 0.0
        %4995 = vmatprep.subr.mxu0 0.0
        %4996 = vmatpush1.msra.mxu0 0.0
        %4997 = vmatprep.subr.mxu0 0.0
        %4998 = vmatpush1.msra.mxu0 0.0
        %4999 = vmatprep.subr.mxu0 0.0
        %5000 = vmatpush1.msra.mxu0 0.0
        %5001 = vmatprep.subr.mxu0 0.0
        %5002 = vmatpush1.msra.mxu0 0.0
        %5003 = vmatprep.subr.mxu0 0.0
        %5004 = vmatpush1.msra.mxu0 0.0
        %5005 = vmatprep.mubr.f32.mxu0 0.0
        %5006 = vmatmul.mubr.f32.gmra.mrb[0].mxu0 %v4939
        %v5007 = vpop.f32.mrb[0].mxu0
        %v5008 = vadd.f32 %v4936, %v5007
        %v5009 = vpop.f32.mrb[0].mxu0
        %5010 = vdwg.mxu0
        %v5012 = vsel %vm1230, %v4916, 0
        %v5015 = vsel %vm1230, %v5008, 0
        %5017 = vmatprep.subr.mxu0 0.0
        %5018 = vmatpush1.xpose.msra.mxu0 %v5015
        %5019 = vmatprep.subr.mxu0 0.0
        %5020 = vmatpush1.xpose.msra.mxu0 0.0
        %5021 = vmatprep.subr.mxu0 0.0
        %5022 = vmatpush1.xpose.msra.mxu0 0.0
        %5023 = vmatprep.subr.mxu0 0.0
        %5024 = vmatpush1.xpose.msra.mxu0 0.0
        %5025 = vmatprep.subr.mxu0 0.0
        %5026 = vmatpush1.xpose.msra.mxu0 0.0
        %5027 = vmatprep.subr.mxu0 0.0
        %5028 = vmatpush1.xpose.msra.mxu0 0.0
        %5029 = vmatprep.subr.mxu0 0.0
        %5030 = vmatpush1.xpose.msra.mxu0 0.0
        %5031 = vmatprep.subr.mxu0 0.0
        %5032 = vmatpush1.xpose.msra.mxu0 0.0
        %5033 = vmatprep.subr.mxu0 0.0
        %5034 = vmatpush1.xpose.msra.mxu0 0.0
        %5035 = vmatprep.subr.mxu0 0.0
        %5036 = vmatpush1.xpose.msra.mxu0 0.0
        %5037 = vmatprep.subr.mxu0 0.0
        %5038 = vmatpush1.xpose.msra.mxu0 0.0
        %5039 = vmatprep.subr.mxu0 0.0
        %5040 = vmatpush1.xpose.msra.mxu0 0.0
        %5041 = vmatprep.subr.mxu0 0.0
        %5042 = vmatpush1.xpose.msra.mxu0 0.0
        %5043 = vmatprep.subr.mxu0 0.0
        %5044 = vmatpush1.xpose.msra.mxu0 0.0
        %5045 = vmatprep.subr.mxu0 0.0
        %5046 = vmatpush1.xpose.msra.mxu0 0.0
        %5047 = vmatprep.subr.mxu0 0.0
        %5048 = vmatpush1.xpose.msra.mxu0 0.0
        %5049 = vmatprep.subr.mxu0 0.0
        %5050 = vmatpush1.xpose.msra.mxu0 0.0
        %5051 = vmatprep.subr.mxu0 0.0
        %5052 = vmatpush1.xpose.msra.mxu0 0.0
        %5053 = vmatprep.subr.mxu0 0.0
        %5054 = vmatpush1.xpose.msra.mxu0 0.0
        %5055 = vmatprep.subr.mxu0 0.0
        %5056 = vmatpush1.xpose.msra.mxu0 0.0
        %5057 = vmatprep.subr.mxu0 0.0
        %5058 = vmatpush1.xpose.msra.mxu0 0.0
        %5059 = vmatprep.subr.mxu0 0.0
        %5060 = vmatpush1.xpose.msra.mxu0 0.0
        %5061 = vmatprep.subr.mxu0 0.0
        %5062 = vmatpush1.xpose.msra.mxu0 0.0
        %5063 = vmatprep.subr.mxu0 0.0
        %5064 = vmatpush1.xpose.msra.mxu0 0.0
        %5065 = vmatprep.subr.mxu0 0.0
        %5066 = vmatpush1.xpose.msra.mxu0 0.0
        %5067 = vmatprep.subr.mxu0 0.0
        %5068 = vmatpush1.xpose.msra.mxu0 0.0
        %5069 = vmatprep.subr.mxu0 0.0
        %5070 = vmatpush1.xpose.msra.mxu0 0.0
        %5071 = vmatprep.subr.mxu0 0.0
        %5072 = vmatpush1.xpose.msra.mxu0 0.0
        %5073 = vmatprep.subr.mxu0 0.0
        %5074 = vmatpush1.xpose.msra.mxu0 0.0
        %5075 = vmatprep.subr.mxu0 0.0
        %5076 = vmatpush1.xpose.msra.mxu0 0.0
        %5077 = vmatprep.subr.mxu0 0.0
        %5078 = vmatpush1.xpose.msra.mxu0 0.0
        %5079 = vmatprep.subr.mxu0 0.0
        %5080 = vmatpush1.xpose.msra.mxu0 0.0
        %5081 = vmatprep.mubr.f32.mxu0 0.0
        %5082 = vmatmul.mubr.f32.gmra.mrb[0].mxu0 %v5012
        %v5083 = vpop.f32.mrb[0].mxu0
        %v5084 = vadd.f32 0.0, %v5083
        %v5085 = vpop.f32.mrb[0].mxu0
        %5086 = vdwg.mxu0
        %5087 = vrot.lane.b32.xlu0 %v4916, 120
        %v5088 = vpop.permute.xlu0 %5087
        %5089 = vrot.lane.b32.xlu0 %v5008, 120
        %v5090 = vpop.permute.xlu0 %5089
        %v5091 = vsel %vm1230, %v5088, 0
        %v5093 = vsel %vm1230, %v5090, 0
        %5095 = vmatprep.subr.mxu0 0.0
        %5096 = vmatpush1.xpose.msra.mxu0 %v5093
        %5097 = vmatprep.subr.mxu0 0.0
        %5098 = vmatpush1.xpose.msra.mxu0 0.0
        %5099 = vmatprep.subr.mxu0 0.0
        %5100 = vmatpush1.xpose.msra.mxu0 0.0
        %5101 = vmatprep.subr.mxu0 0.0
        %5102 = vmatpush1.xpose.msra.mxu0 0.0
        %5103 = vmatprep.subr.mxu0 0.0
        %5104 = vmatpush1.xpose.msra.mxu0 0.0
        %5105 = vmatprep.subr.mxu0 0.0
        %5106 = vmatpush1.xpose.msra.mxu0 0.0
        %5107 = vmatprep.subr.mxu0 0.0
        %5108 = vmatpush1.xpose.msra.mxu0 0.0
        %5109 = vmatprep.subr.mxu0 0.0
        %5110 = vmatpush1.xpose.msra.mxu0 0.0
        %5111 = vmatprep.subr.mxu0 0.0
        %5112 = vmatpush1.xpose.msra.mxu0 0.0
        %5113 = vmatprep.subr.mxu0 0.0
        %5114 = vmatpush1.xpose.msra.mxu0 0.0
        %5115 = vmatprep.subr.mxu0 0.0
        %5116 = vmatpush1.xpose.msra.mxu0 0.0
        %5117 = vmatprep.subr.mxu0 0.0
        %5118 = vmatpush1.xpose.msra.mxu0 0.0
        %5119 = vmatprep.subr.mxu0 0.0
        %5120 = vmatpush1.xpose.msra.mxu0 0.0
        %5121 = vmatprep.subr.mxu0 0.0
        %5122 = vmatpush1.xpose.msra.mxu0 0.0
        %5123 = vmatprep.subr.mxu0 0.0
        %5124 = vmatpush1.xpose.msra.mxu0 0.0
        %5125 = vmatprep.subr.mxu0 0.0
        %5126 = vmatpush1.xpose.msra.mxu0 0.0
        %5127 = vmatprep.subr.mxu0 0.0
        %5128 = vmatpush1.xpose.msra.mxu0 0.0
        %5129 = vmatprep.subr.mxu0 0.0
        %5130 = vmatpush1.xpose.msra.mxu0 0.0
        %5131 = vmatprep.subr.mxu0 0.0
        %5132 = vmatpush1.xpose.msra.mxu0 0.0
        %5133 = vmatprep.subr.mxu0 0.0
        %5134 = vmatpush1.xpose.msra.mxu0 0.0
        %5135 = vmatprep.subr.mxu0 0.0
        %5136 = vmatpush1.xpose.msra.mxu0 0.0
        %5137 = vmatprep.subr.mxu0 0.0
        %5138 = vmatpush1.xpose.msra.mxu0 0.0
        %5139 = vmatprep.subr.mxu0 0.0
        %5140 = vmatpush1.xpose.msra.mxu0 0.0
        %5141 = vmatprep.subr.mxu0 0.0
        %5142 = vmatpush1.xpose.msra.mxu0 0.0
        %5143 = vmatprep.subr.mxu0 0.0
        %5144 = vmatpush1.xpose.msra.mxu0 0.0
        %5145 = vmatprep.subr.mxu0 0.0
        %5146 = vmatpush1.xpose.msra.mxu0 0.0
        %5147 = vmatprep.subr.mxu0 0.0
        %5148 = vmatpush1.xpose.msra.mxu0 0.0
        %5149 = vmatprep.subr.mxu0 0.0
        %5150 = vmatpush1.xpose.msra.mxu0 0.0
        %5151 = vmatprep.subr.mxu0 0.0
        %5152 = vmatpush1.xpose.msra.mxu0 0.0
        %5153 = vmatprep.subr.mxu0 0.0
        %5154 = vmatpush1.xpose.msra.mxu0 0.0
        %5155 = vmatprep.subr.mxu0 0.0
        %5156 = vmatpush1.xpose.msra.mxu0 0.0
        %5157 = vmatprep.subr.mxu0 0.0
        %5158 = vmatpush1.xpose.msra.mxu0 0.0
        %5159 = vmatprep.mubr.f32.mxu0 0.0
        %5160 = vmatmul.mubr.f32.gmra.mrb[0].mxu0 %v5091
        %v5161 = vpop.f32.mrb[0].mxu0
        %v5162 = vadd.f32 0.0, %v5161
        %v5163 = vpop.f32.mrb[0].mxu0
        %5164 = vdwg.mxu0
        %5165 = vrot.lane.b32.xlu0 %v4916, 112
        %v5166 = vpop.permute.xlu0 %5165
        %5167 = vrot.lane.b32.xlu0 %v5008, 112
        %v5168 = vpop.permute.xlu0 %5167
        %v5169 = vsel %vm1230, %v5166, 0
        %v5171 = vsel %vm1230, %v5168, 0
        %5173 = vmatprep.subr.mxu0 0.0
        %5174 = vmatpush1.xpose.msra.mxu0 %v5171
        %5175 = vmatprep.subr.mxu0 0.0
        %5176 = vmatpush1.xpose.msra.mxu0 0.0
        %5177 = vmatprep.subr.mxu0 0.0
        %5178 = vmatpush1.xpose.msra.mxu0 0.0
        %5179 = vmatprep.subr.mxu0 0.0
        %5180 = vmatpush1.xpose.msra.mxu0 0.0
        %5181 = vmatprep.subr.mxu0 0.0
        %5182 = vmatpush1.xpose.msra.mxu0 0.0
        %5183 = vmatprep.subr.mxu0 0.0
        %5184 = vmatpush1.xpose.msra.mxu0 0.0
        %5185 = vmatprep.subr.mxu0 0.0
        %5186 = vmatpush1.xpose.msra.mxu0 0.0
        %5187 = vmatprep.subr.mxu0 0.0
        %5188 = vmatpush1.xpose.msra.mxu0 0.0
        %5189 = vmatprep.subr.mxu0 0.0
        %5190 = vmatpush1.xpose.msra.mxu0 0.0
        %5191 = vmatprep.subr.mxu0 0.0
        %5192 = vmatpush1.xpose.msra.mxu0 0.0
        %5193 = vmatprep.subr.mxu0 0.0
        %5194 = vmatpush1.xpose.msra.mxu0 0.0
        %5195 = vmatprep.subr.mxu0 0.0
        %5196 = vmatpush1.xpose.msra.mxu0 0.0
        %5197 = vmatprep.subr.mxu0 0.0
        %5198 = vmatpush1.xpose.msra.mxu0 0.0
        %5199 = vmatprep.subr.mxu0 0.0
        %5200 = vmatpush1.xpose.msra.mxu0 0.0
        %5201 = vmatprep.subr.mxu0 0.0
        %5202 = vmatpush1.xpose.msra.mxu0 0.0
        %5203 = vmatprep.subr.mxu0 0.0
        %5204 = vmatpush1.xpose.msra.mxu0 0.0
        %5205 = vmatprep.subr.mxu0 0.0
        %5206 = vmatpush1.xpose.msra.mxu0 0.0
        %5207 = vmatprep.subr.mxu0 0.0
        %5208 = vmatpush1.xpose.msra.mxu0 0.0
        %5209 = vmatprep.subr.mxu0 0.0
        %5210 = vmatpush1.xpose.msra.mxu0 0.0
        %5211 = vmatprep.subr.mxu0 0.0
        %5212 = vmatpush1.xpose.msra.mxu0 0.0
        %5213 = vmatprep.subr.mxu0 0.0
        %5214 = vmatpush1.xpose.msra.mxu0 0.0
        %5215 = vmatprep.subr.mxu0 0.0
        %5216 = vmatpush1.xpose.msra.mxu0 0.0
        %5217 = vmatprep.subr.mxu0 0.0
        %5218 = vmatpush1.xpose.msra.mxu0 0.0
        %5219 = vmatprep.subr.mxu0 0.0
        %5220 = vmatpush1.xpose.msra.mxu0 0.0
        %5221 = vmatprep.subr.mxu0 0.0
        %5222 = vmatpush1.xpose.msra.mxu0 0.0
        %5223 = vmatprep.subr.mxu0 0.0
        %5224 = vmatpush1.xpose.msra.mxu0 0.0
        %5225 = vmatprep.subr.mxu0 0.0
        %5226 = vmatpush1.xpose.msra.mxu0 0.0
        %5227 = vmatprep.subr.mxu0 0.0
        %5228 = vmatpush1.xpose.msra.mxu0 0.0
        %5229 = vmatprep.subr.mxu0 0.0
        %5230 = vmatpush1.xpose.msra.mxu0 0.0
        %5231 = vmatprep.subr.mxu0 0.0
        %5232 = vmatpush1.xpose.msra.mxu0 0.0
        %5233 = vmatprep.subr.mxu0 0.0
        %5234 = vmatpush1.xpose.msra.mxu0 0.0
        %5235 = vmatprep.subr.mxu0 0.0
        %5236 = vmatpush1.xpose.msra.mxu0 0.0
        %5237 = vmatprep.mubr.f32.mxu0 0.0
        %5238 = vmatmul.mubr.f32.gmra.mrb[0].mxu0 %v5169
        %v5239 = vpop.f32.mrb[0].mxu0
        %v5240 = vadd.f32 0.0, %v5239
        %v5241 = vpop.f32.mrb[0].mxu0
        %5242 = vdwg.mxu0
        %5243 = vrot.lane.b32.xlu0 %v4916, 104
        %v5244 = vpop.permute.xlu0 %5243
        %5245 = vrot.lane.b32.xlu0 %v5008, 104
        %v5246 = vpop.permute.xlu0 %5245
        %v5247 = vsel %vm1230, %v5244, 0
        %v5249 = vsel %vm1230, %v5246, 0
        %5251 = vmatprep.subr.mxu0 0.0
        %5252 = vmatpush1.xpose.msra.mxu0 %v5249
        %5253 = vmatprep.subr.mxu0 0.0
        %5254 = vmatpush1.xpose.msra.mxu0 0.0
        %5255 = vmatprep.subr.mxu0 0.0
        %5256 = vmatpush1.xpose.msra.mxu0 0.0
        %5257 = vmatprep.subr.mxu0 0.0
        %5258 = vmatpush1.xpose.msra.mxu0 0.0
        %5259 = vmatprep.subr.mxu0 0.0
        %5260 = vmatpush1.xpose.msra.mxu0 0.0
        %5261 = vmatprep.subr.mxu0 0.0
        %5262 = vmatpush1.xpose.msra.mxu0 0.0
        %5263 = vmatprep.subr.mxu0 0.0
        %5264 = vmatpush1.xpose.msra.mxu0 0.0
        %5265 = vmatprep.subr.mxu0 0.0
        %5266 = vmatpush1.xpose.msra.mxu0 0.0
        %5267 = vmatprep.subr.mxu0 0.0
        %5268 = vmatpush1.xpose.msra.mxu0 0.0
        %5269 = vmatprep.subr.mxu0 0.0
        %5270 = vmatpush1.xpose.msra.mxu0 0.0
        %5271 = vmatprep.subr.mxu0 0.0
        %5272 = vmatpush1.xpose.msra.mxu0 0.0
        %5273 = vmatprep.subr.mxu0 0.0
        %5274 = vmatpush1.xpose.msra.mxu0 0.0
        %5275 = vmatprep.subr.mxu0 0.0
        %5276 = vmatpush1.xpose.msra.mxu0 0.0
        %5277 = vmatprep.subr.mxu0 0.0
        %5278 = vmatpush1.xpose.msra.mxu0 0.0
        %5279 = vmatprep.subr.mxu0 0.0
        %5280 = vmatpush1.xpose.msra.mxu0 0.0
        %5281 = vmatprep.subr.mxu0 0.0
        %5282 = vmatpush1.xpose.msra.mxu0 0.0
        %5283 = vmatprep.subr.mxu0 0.0
        %5284 = vmatpush1.xpose.msra.mxu0 0.0
        %5285 = vmatprep.subr.mxu0 0.0
        %5286 = vmatpush1.xpose.msra.mxu0 0.0
        %5287 = vmatprep.subr.mxu0 0.0
        %5288 = vmatpush1.xpose.msra.mxu0 0.0
        %5289 = vmatprep.subr.mxu0 0.0
        %5290 = vmatpush1.xpose.msra.mxu0 0.0
        %5291 = vmatprep.subr.mxu0 0.0
        %5292 = vmatpush1.xpose.msra.mxu0 0.0
        %5293 = vmatprep.subr.mxu0 0.0
        %5294 = vmatpush1.xpose.msra.mxu0 0.0
        %5295 = vmatprep.subr.mxu0 0.0
        %5296 = vmatpush1.xpose.msra.mxu0 0.0
        %5297 = vmatprep.subr.mxu0 0.0
        %5298 = vmatpush1.xpose.msra.mxu0 0.0
        %5299 = vmatprep.subr.mxu0 0.0
        %5300 = vmatpush1.xpose.msra.mxu0 0.0
        %5301 = vmatprep.subr.mxu0 0.0
        %5302 = vmatpush1.xpose.msra.mxu0 0.0
        %5303 = vmatprep.subr.mxu0 0.0
        %5304 = vmatpush1.xpose.msra.mxu0 0.0
        %5305 = vmatprep.subr.mxu0 0.0
        %5306 = vmatpush1.xpose.msra.mxu0 0.0
        %5307 = vmatprep.subr.mxu0 0.0
        %5308 = vmatpush1.xpose.msra.mxu0 0.0
        %5309 = vmatprep.subr.mxu0 0.0
        %5310 = vmatpush1.xpose.msra.mxu0 0.0
        %5311 = vmatprep.subr.mxu0 0.0
        %5312 = vmatpush1.xpose.msra.mxu0 0.0
        %5313 = vmatprep.subr.mxu0 0.0
        %5314 = vmatpush1.xpose.msra.mxu0 0.0
        %5315 = vmatprep.mubr.f32.mxu0 0.0
        %5316 = vmatmul.mubr.f32.gmra.mrb[0].mxu0 %v5247
        %v5317 = vpop.f32.mrb[0].mxu0
        %v5318 = vadd.f32 0.0, %v5317
        %v5319 = vpop.f32.mrb[0].mxu0
        %5320 = vdwg.mxu0
        %v5321 = vmul.f32 %v5084, 0.35355338
        %v5322 = vmul.f32 %v5162, 0.35355338
        %v5323 = vmul.f32 %v5240, 0.35355338
        %v5324 = vmul.f32 %v5318, 0.35355338
        %v5325 = vsel %vm1104, %v5321, -1e+09
        %v5326 = vsel %vm1104, %v5322, -1e+09
        %v5327 = vsel %vm1104, %v5323, -1e+09
        %v5328 = vsel %vm1104, %v5324, -1e+09
        %v5329 = vsel %vm1230, %v5325, -inf
        %5330 = vmax.xlane.f32.xlu0 %v5329
        %v5331 = vpop.xlane.xlu0 %5330
        %v5332 = vsel %vm1230, %v5326, -inf
        %5333 = vmax.xlane.f32.xlu0 %v5332
        %v5334 = vpop.xlane.xlu0 %5333
        %v5335 = vsel %vm1230, %v5327, -inf
        %5336 = vmax.xlane.f32.xlu0 %v5335
        %v5337 = vpop.xlane.xlu0 %5336
        %v5338 = vsel %vm1230, %v5328, -inf
        %5339 = vmax.xlane.f32.xlu0 %v5338
        %v5340 = vpop.xlane.xlu0 %5339
        %v5341 = vsub.f32 %v5325, %v5331
        %v5342 = vsub.f32 %v5326, %v5334
        %v5343 = vsub.f32 %v5327, %v5337
        %v5344 = vsub.f32 %v5328, %v5340
        %v5345 = vmul.f32 %v5341, 1.442695
        %v5346 = vpow.pop %v5345
        %v5347 = vmul.f32 %v5342, 1.442695
        %v5348 = vpow.pop %v5347
        %v5349 = vmul.f32 %v5343, 1.442695
        %v5350 = vpow.pop %v5349
        %v5351 = vmul.f32 %v5344, 1.442695
        %v5352 = vpow.pop %v5351
        %v5353 = vsel %vm1230, %v5346, 0.0
        %5354 = vadd.xlane.f32.xlu0 %v5353
        %v5355 = vpop.xlane.xlu0 %5354
        %v5356 = vsel %vm1230, %v5348, 0.0
        %5357 = vadd.xlane.f32.xlu0 %v5356
        %v5358 = vpop.xlane.xlu0 %5357
        %v5359 = vsel %vm1230, %v5350, 0.0
        %5360 = vadd.xlane.f32.xlu0 %v5359
        %v5361 = vpop.xlane.xlu0 %5360
        %v5362 = vsel %vm1230, %v5352, 0.0
        %5363 = vadd.xlane.f32.xlu0 %v5362
        %v5364 = vpop.xlane.xlu0 %5363
        %v5365 = vrcp.pop %v5355
        %v5366 = vrcp.pop %v5358
        %v5367 = vrcp.pop %v5361
        %v5368 = vrcp.pop %v5364
        %v5369 = vmul.f32 %v5346, %v5365
        %v5370 = vmul.f32 %v5348, %v5366
        %v5371 = vmul.f32 %v5350, %v5367
        %v5372 = vmul.f32 %v5352, %v5368
        %5373 = vrot.lane.b32.xlu0 %v5008, 96
        %v5374 = vpop.permute.xlu0 %5373
        %v5377 = vsel %vm1230, %v5369, 0
        %5379 = vmatprep.subr.mxu0 0.0
        %5380 = vmatpush1.msra.mxu0 %v5374
        %5381 = vmatprep.subr.mxu0 0.0
        %5382 = vmatpush1.msra.mxu0 0.0
        %5383 = vmatprep.subr.mxu0 0.0
        %5384 = vmatpush1.msra.mxu0 0.0
        %5385 = vmatprep.subr.mxu0 0.0
        %5386 = vmatpush1.msra.mxu0 0.0
        %5387 = vmatprep.subr.mxu0 0.0
        %5388 = vmatpush1.msra.mxu0 0.0
        %5389 = vmatprep.subr.mxu0 0.0
        %5390 = vmatpush1.msra.mxu0 0.0
        %5391 = vmatprep.subr.mxu0 0.0
        %5392 = vmatpush1.msra.mxu0 0.0
        %5393 = vmatprep.subr.mxu0 0.0
        %5394 = vmatpush1.msra.mxu0 0.0
        %5395 = vmatprep.subr.mxu0 0.0
        %5396 = vmatpush1.msra.mxu0 0.0
        %5397 = vmatprep.subr.mxu0 0.0
        %5398 = vmatpush1.msra.mxu0 0.0
        %5399 = vmatprep.subr.mxu0 0.0
        %5400 = vmatpush1.msra.mxu0 0.0
        %5401 = vmatprep.subr.mxu0 0.0
        %5402 = vmatpush1.msra.mxu0 0.0
        %5403 = vmatprep.subr.mxu0 0.0
        %5404 = vmatpush1.msra.mxu0 0.0
        %5405 = vmatprep.subr.mxu0 0.0
        %5406 = vmatpush1.msra.mxu0 0.0
        %5407 = vmatprep.subr.mxu0 0.0
        %5408 = vmatpush1.msra.mxu0 0.0
        %5409 = vmatprep.subr.mxu0 0.0
        %5410 = vmatpush1.msra.mxu0 0.0
        %5411 = vmatprep.subr.mxu0 0.0
        %5412 = vmatpush1.msra.mxu0 0.0
        %5413 = vmatprep.subr.mxu0 0.0
        %5414 = vmatpush1.msra.mxu0 0.0
        %5415 = vmatprep.subr.mxu0 0.0
        %5416 = vmatpush1.msra.mxu0 0.0
        %5417 = vmatprep.subr.mxu0 0.0
        %5418 = vmatpush1.msra.mxu0 0.0
        %5419 = vmatprep.subr.mxu0 0.0
        %5420 = vmatpush1.msra.mxu0 0.0
        %5421 = vmatprep.subr.mxu0 0.0
        %5422 = vmatpush1.msra.mxu0 0.0
        %5423 = vmatprep.subr.mxu0 0.0
        %5424 = vmatpush1.msra.mxu0 0.0
        %5425 = vmatprep.subr.mxu0 0.0
        %5426 = vmatpush1.msra.mxu0 0.0
        %5427 = vmatprep.subr.mxu0 0.0
        %5428 = vmatpush1.msra.mxu0 0.0
        %5429 = vmatprep.subr.mxu0 0.0
        %5430 = vmatpush1.msra.mxu0 0.0
        %5431 = vmatprep.subr.mxu0 0.0
        %5432 = vmatpush1.msra.mxu0 0.0
        %5433 = vmatprep.subr.mxu0 0.0
        %5434 = vmatpush1.msra.mxu0 0.0
        %5435 = vmatprep.subr.mxu0 0.0
        %5436 = vmatpush1.msra.mxu0 0.0
        %5437 = vmatprep.subr.mxu0 0.0
        %5438 = vmatpush1.msra.mxu0 0.0
        %5439 = vmatprep.subr.mxu0 0.0
        %5440 = vmatpush1.msra.mxu0 0.0
        %5441 = vmatprep.subr.mxu0 0.0
        %5442 = vmatpush1.msra.mxu0 0.0
        %5443 = vmatprep.mubr.f32.mxu0 0.0
        %5444 = vmatmul.mubr.f32.gmra.mrb[0].mxu0 %v5377
        %v5445 = vpop.f32.mrb[0].mxu0
        %v5446 = vadd.f32 0.0, %v5445
        %v5447 = vpop.f32.mrb[0].mxu0
        %5448 = vdwg.mxu0
        %5449 = vrot.lane.b32.xlu0 %v5008, 88
        %v5450 = vpop.permute.xlu0 %5449
        %v5453 = vsel %vm1230, %v5370, 0
        %5455 = vmatprep.subr.mxu0 0.0
        %5456 = vmatpush1.msra.mxu0 %v5450
        %5457 = vmatprep.subr.mxu0 0.0
        %5458 = vmatpush1.msra.mxu0 0.0
        %5459 = vmatprep.subr.mxu0 0.0
        %5460 = vmatpush1.msra.mxu0 0.0
        %5461 = vmatprep.subr.mxu0 0.0
        %5462 = vmatpush1.msra.mxu0 0.0
        %5463 = vmatprep.subr.mxu0 0.0
        %5464 = vmatpush1.msra.mxu0 0.0
        %5465 = vmatprep.subr.mxu0 0.0
        %5466 = vmatpush1.msra.mxu0 0.0
        %5467 = vmatprep.subr.mxu0 0.0
        %5468 = vmatpush1.msra.mxu0 0.0
        %5469 = vmatprep.subr.mxu0 0.0
        %5470 = vmatpush1.msra.mxu0 0.0
        %5471 = vmatprep.subr.mxu0 0.0
        %5472 = vmatpush1.msra.mxu0 0.0
        %5473 = vmatprep.subr.mxu0 0.0
        %5474 = vmatpush1.msra.mxu0 0.0
        %5475 = vmatprep.subr.mxu0 0.0
        %5476 = vmatpush1.msra.mxu0 0.0
        %5477 = vmatprep.subr.mxu0 0.0
        %5478 = vmatpush1.msra.mxu0 0.0
        %5479 = vmatprep.subr.mxu0 0.0
        %5480 = vmatpush1.msra.mxu0 0.0
        %5481 = vmatprep.subr.mxu0 0.0
        %5482 = vmatpush1.msra.mxu0 0.0
        %5483 = vmatprep.subr.mxu0 0.0
        %5484 = vmatpush1.msra.mxu0 0.0
        %5485 = vmatprep.subr.mxu0 0.0
        %5486 = vmatpush1.msra.mxu0 0.0
        %5487 = vmatprep.subr.mxu0 0.0
        %5488 = vmatpush1.msra.mxu0 0.0
        %5489 = vmatprep.subr.mxu0 0.0
        %5490 = vmatpush1.msra.mxu0 0.0
        %5491 = vmatprep.subr.mxu0 0.0
        %5492 = vmatpush1.msra.mxu0 0.0
        %5493 = vmatprep.subr.mxu0 0.0
        %5494 = vmatpush1.msra.mxu0 0.0
        %5495 = vmatprep.subr.mxu0 0.0
        %5496 = vmatpush1.msra.mxu0 0.0
        %5497 = vmatprep.subr.mxu0 0.0
        %5498 = vmatpush1.msra.mxu0 0.0
        %5499 = vmatprep.subr.mxu0 0.0
        %5500 = vmatpush1.msra.mxu0 0.0
        %5501 = vmatprep.subr.mxu0 0.0
        %5502 = vmatpush1.msra.mxu0 0.0
        %5503 = vmatprep.subr.mxu0 0.0
        %5504 = vmatpush1.msra.mxu0 0.0
        %5505 = vmatprep.subr.mxu0 0.0
        %5506 = vmatpush1.msra.mxu0 0.0
        %5507 = vmatprep.subr.mxu0 0.0
        %5508 = vmatpush1.msra.mxu0 0.0
        %5509 = vmatprep.subr.mxu0 0.0
        %5510 = vmatpush1.msra.mxu0 0.0
        %5511 = vmatprep.subr.mxu0 0.0
        %5512 = vmatpush1.msra.mxu0 0.0
        %5513 = vmatprep.subr.mxu0 0.0
        %5514 = vmatpush1.msra.mxu0 0.0
        %5515 = vmatprep.subr.mxu0 0.0
        %5516 = vmatpush1.msra.mxu0 0.0
        %5517 = vmatprep.subr.mxu0 0.0
        %5518 = vmatpush1.msra.mxu0 0.0
        %5519 = vmatprep.mubr.f32.mxu0 0.0
        %5520 = vmatmul.mubr.f32.gmra.mrb[0].mxu0 %v5453
        %v5521 = vpop.f32.mrb[0].mxu0
        %v5522 = vadd.f32 0.0, %v5521
        %v5523 = vpop.f32.mrb[0].mxu0
        %5524 = vdwg.mxu0
        %v5526 = vsel %vm1230, %v5522, 0
        %5528 = vmatprep.subr.mxu0 0.0
        %5529 = vmatpush1.msra.mxu0 %v4810
        %5530 = vmatprep.subr.mxu0 0.0
        %5531 = vmatpush1.msra.mxu0 0.0
        %5532 = vmatprep.subr.mxu0 0.0
        %5533 = vmatpush1.msra.mxu0 0.0
        %5534 = vmatprep.subr.mxu0 0.0
        %5535 = vmatpush1.msra.mxu0 0.0
        %5536 = vmatprep.subr.mxu0 0.0
        %5537 = vmatpush1.msra.mxu0 0.0
        %5538 = vmatprep.subr.mxu0 0.0
        %5539 = vmatpush1.msra.mxu0 0.0
        %5540 = vmatprep.subr.mxu0 0.0
        %5541 = vmatpush1.msra.mxu0 0.0
        %5542 = vmatprep.subr.mxu0 0.0
        %5543 = vmatpush1.msra.mxu0 0.0
        %5544 = vmatprep.subr.mxu0 0.0
        %5545 = vmatpush1.msra.mxu0 0.0
        %5546 = vmatprep.subr.mxu0 0.0
        %5547 = vmatpush1.msra.mxu0 0.0
        %5548 = vmatprep.subr.mxu0 0.0
        %5549 = vmatpush1.msra.mxu0 0.0
        %5550 = vmatprep.subr.mxu0 0.0
        %5551 = vmatpush1.msra.mxu0 0.0
        %5552 = vmatprep.subr.mxu0 0.0
        %5553 = vmatpush1.msra.mxu0 0.0
        %5554 = vmatprep.subr.mxu0 0.0
        %5555 = vmatpush1.msra.mxu0 0.0
        %5556 = vmatprep.subr.mxu0 0.0
        %5557 = vmatpush1.msra.mxu0 0.0
        %5558 = vmatprep.subr.mxu0 0.0
        %5559 = vmatpush1.msra.mxu0 0.0
        %5560 = vmatprep.subr.mxu0 0.0
        %5561 = vmatpush1.msra.mxu0 0.0
        %5562 = vmatprep.subr.mxu0 0.0
        %5563 = vmatpush1.msra.mxu0 0.0
        %5564 = vmatprep.subr.mxu0 0.0
        %5565 = vmatpush1.msra.mxu0 0.0
        %5566 = vmatprep.subr.mxu0 0.0
        %5567 = vmatpush1.msra.mxu0 0.0
        %5568 = vmatprep.subr.mxu0 0.0
        %5569 = vmatpush1.msra.mxu0 0.0
        %5570 = vmatprep.subr.mxu0 0.0
        %5571 = vmatpush1.msra.mxu0 0.0
        %5572 = vmatprep.subr.mxu0 0.0
        %5573 = vmatpush1.msra.mxu0 0.0
        %5574 = vmatprep.subr.mxu0 0.0
        %5575 = vmatpush1.msra.mxu0 0.0
        %5576 = vmatprep.subr.mxu0 0.0
        %5577 = vmatpush1.msra.mxu0 0.0
        %5578 = vmatprep.subr.mxu0 0.0
        %5579 = vmatpush1.msra.mxu0 0.0
        %5580 = vmatprep.subr.mxu0 0.0
        %5581 = vmatpush1.msra.mxu0 0.0
        %5582 = vmatprep.subr.mxu0 0.0
        %5583 = vmatpush1.msra.mxu0 0.0
        %5584 = vmatprep.subr.mxu0 0.0
        %5585 = vmatpush1.msra.mxu0 0.0
        %5586 = vmatprep.subr.mxu0 0.0
        %5587 = vmatpush1.msra.mxu0 0.0
        %5588 = vmatprep.subr.mxu0 0.0
        %5589 = vmatpush1.msra.mxu0 0.0
        %5590 = vmatprep.subr.mxu0 0.0
        %5591 = vmatpush1.msra.mxu0 0.0
        %5592 = vmatprep.mubr.f32.mxu0 0.0
        %5593 = vmatmul.mubr.f32.gmra.mrb[0].mxu0 %v5526
        %v5594 = vpop.f32.mrb[0].mxu0
        %v5595 = vadd.f32 0.0, %v5594
        %v5596 = vpop.f32.mrb[0].mxu0
        %5597 = vdwg.mxu0
        %v5599 = vsel %vm1230, %v5446, 0
        %5601 = vmatprep.subr.mxu0 0.0
        %5602 = vmatpush1.msra.mxu0 %v4809
        %5603 = vmatprep.subr.mxu0 0.0
        %5604 = vmatpush1.msra.mxu0 0.0
        %5605 = vmatprep.subr.mxu0 0.0
        %5606 = vmatpush1.msra.mxu0 0.0
        %5607 = vmatprep.subr.mxu0 0.0
        %5608 = vmatpush1.msra.mxu0 0.0
        %5609 = vmatprep.subr.mxu0 0.0
        %5610 = vmatpush1.msra.mxu0 0.0
        %5611 = vmatprep.subr.mxu0 0.0
        %5612 = vmatpush1.msra.mxu0 0.0
        %5613 = vmatprep.subr.mxu0 0.0
        %5614 = vmatpush1.msra.mxu0 0.0
        %5615 = vmatprep.subr.mxu0 0.0
        %5616 = vmatpush1.msra.mxu0 0.0
        %5617 = vmatprep.subr.mxu0 0.0
        %5618 = vmatpush1.msra.mxu0 0.0
        %5619 = vmatprep.subr.mxu0 0.0
        %5620 = vmatpush1.msra.mxu0 0.0
        %5621 = vmatprep.subr.mxu0 0.0
        %5622 = vmatpush1.msra.mxu0 0.0
        %5623 = vmatprep.subr.mxu0 0.0
        %5624 = vmatpush1.msra.mxu0 0.0
        %5625 = vmatprep.subr.mxu0 0.0
        %5626 = vmatpush1.msra.mxu0 0.0
        %5627 = vmatprep.subr.mxu0 0.0
        %5628 = vmatpush1.msra.mxu0 0.0
        %5629 = vmatprep.subr.mxu0 0.0
        %5630 = vmatpush1.msra.mxu0 0.0
        %5631 = vmatprep.subr.mxu0 0.0
        %5632 = vmatpush1.msra.mxu0 0.0
        %5633 = vmatprep.subr.mxu0 0.0
        %5634 = vmatpush1.msra.mxu0 0.0
        %5635 = vmatprep.subr.mxu0 0.0
        %5636 = vmatpush1.msra.mxu0 0.0
        %5637 = vmatprep.subr.mxu0 0.0
        %5638 = vmatpush1.msra.mxu0 0.0
        %5639 = vmatprep.subr.mxu0 0.0
        %5640 = vmatpush1.msra.mxu0 0.0
        %5641 = vmatprep.subr.mxu0 0.0
        %5642 = vmatpush1.msra.mxu0 0.0
        %5643 = vmatprep.subr.mxu0 0.0
        %5644 = vmatpush1.msra.mxu0 0.0
        %5645 = vmatprep.subr.mxu0 0.0
        %5646 = vmatpush1.msra.mxu0 0.0
        %5647 = vmatprep.subr.mxu0 0.0
        %5648 = vmatpush1.msra.mxu0 0.0
        %5649 = vmatprep.subr.mxu0 0.0
        %5650 = vmatpush1.msra.mxu0 0.0
        %5651 = vmatprep.subr.mxu0 0.0
        %5652 = vmatpush1.msra.mxu0 0.0
        %5653 = vmatprep.subr.mxu0 0.0
        %5654 = vmatpush1.msra.mxu0 0.0
        %5655 = vmatprep.subr.mxu0 0.0
        %5656 = vmatpush1.msra.mxu0 0.0
        %5657 = vmatprep.subr.mxu0 0.0
        %5658 = vmatpush1.msra.mxu0 0.0
        %5659 = vmatprep.subr.mxu0 0.0
        %5660 = vmatpush1.msra.mxu0 0.0
        %5661 = vmatprep.subr.mxu0 0.0
        %5662 = vmatpush1.msra.mxu0 0.0
        %5663 = vmatprep.subr.mxu0 0.0
        %5664 = vmatpush1.msra.mxu0 0.0
        %5665 = vmatprep.mubr.f32.mxu0 0.0
        %5666 = vmatmul.mubr.f32.gmra.mrb[0].mxu0 %v5599
        %v5667 = vpop.f32.mrb[0].mxu0
        %v5668 = vadd.f32 %v5595, %v5667
        %v5669 = vpop.f32.mrb[0].mxu0
        %5670 = vdwg.mxu0
        %5671 = vrot.lane.b32.xlu0 %v5008, 80
        %v5672 = vpop.permute.xlu0 %5671
        %v5675 = vsel %vm1230, %v5371, 0
        %5677 = vmatprep.subr.mxu0 0.0
        %5678 = vmatpush1.msra.mxu0 %v5672
        %5679 = vmatprep.subr.mxu0 0.0
        %5680 = vmatpush1.msra.mxu0 0.0
        %5681 = vmatprep.subr.mxu0 0.0
        %5682 = vmatpush1.msra.mxu0 0.0
        %5683 = vmatprep.subr.mxu0 0.0
        %5684 = vmatpush1.msra.mxu0 0.0
        %5685 = vmatprep.subr.mxu0 0.0
        %5686 = vmatpush1.msra.mxu0 0.0
        %5687 = vmatprep.subr.mxu0 0.0
        %5688 = vmatpush1.msra.mxu0 0.0
        %5689 = vmatprep.subr.mxu0 0.0
        %5690 = vmatpush1.msra.mxu0 0.0
        %5691 = vmatprep.subr.mxu0 0.0
        %5692 = vmatpush1.msra.mxu0 0.0
        %5693 = vmatprep.subr.mxu0 0.0
        %5694 = vmatpush1.msra.mxu0 0.0
        %5695 = vmatprep.subr.mxu0 0.0
        %5696 = vmatpush1.msra.mxu0 0.0
        %5697 = vmatprep.subr.mxu0 0.0
        %5698 = vmatpush1.msra.mxu0 0.0
        %5699 = vmatprep.subr.mxu0 0.0
        %5700 = vmatpush1.msra.mxu0 0.0
        %5701 = vmatprep.subr.mxu0 0.0
        %5702 = vmatpush1.msra.mxu0 0.0
        %5703 = vmatprep.subr.mxu0 0.0
        %5704 = vmatpush1.msra.mxu0 0.0
        %5705 = vmatprep.subr.mxu0 0.0
        %5706 = vmatpush1.msra.mxu0 0.0
        %5707 = vmatprep.subr.mxu0 0.0
        %5708 = vmatpush1.msra.mxu0 0.0
        %5709 = vmatprep.subr.mxu0 0.0
        %5710 = vmatpush1.msra.mxu0 0.0
        %5711 = vmatprep.subr.mxu0 0.0
        %5712 = vmatpush1.msra.mxu0 0.0
        %5713 = vmatprep.subr.mxu0 0.0
        %5714 = vmatpush1.msra.mxu0 0.0
        %5715 = vmatprep.subr.mxu0 0.0
        %5716 = vmatpush1.msra.mxu0 0.0
        %5717 = vmatprep.subr.mxu0 0.0
        %5718 = vmatpush1.msra.mxu0 0.0
        %5719 = vmatprep.subr.mxu0 0.0
        %5720 = vmatpush1.msra.mxu0 0.0
        %5721 = vmatprep.subr.mxu0 0.0
        %5722 = vmatpush1.msra.mxu0 0.0
        %5723 = vmatprep.subr.mxu0 0.0
        %5724 = vmatpush1.msra.mxu0 0.0
        %5725 = vmatprep.subr.mxu0 0.0
        %5726 = vmatpush1.msra.mxu0 0.0
        %5727 = vmatprep.subr.mxu0 0.0
        %5728 = vmatpush1.msra.mxu0 0.0
        %5729 = vmatprep.subr.mxu0 0.0
        %5730 = vmatpush1.msra.mxu0 0.0
        %5731 = vmatprep.subr.mxu0 0.0
        %5732 = vmatpush1.msra.mxu0 0.0
        %5733 = vmatprep.subr.mxu0 0.0
        %5734 = vmatpush1.msra.mxu0 0.0
        %5735 = vmatprep.subr.mxu0 0.0
        %5736 = vmatpush1.msra.mxu0 0.0
        %5737 = vmatprep.subr.mxu0 0.0
        %5738 = vmatpush1.msra.mxu0 0.0
        %5739 = vmatprep.subr.mxu0 0.0
        %5740 = vmatpush1.msra.mxu0 0.0
        %5741 = vmatprep.mubr.f32.mxu0 0.0
        %5742 = vmatmul.mubr.f32.gmra.mrb[0].mxu0 %v5675
        %v5743 = vpop.f32.mrb[0].mxu0
        %v5744 = vadd.f32 0.0, %v5743
        %v5745 = vpop.f32.mrb[0].mxu0
        %5746 = vdwg.mxu0
        %v5748 = vsel %vm1230, %v5744, 0
        %5750 = vmatprep.subr.mxu0 0.0
        %5751 = vmatpush1.msra.mxu0 %v4811
        %5752 = vmatprep.subr.mxu0 0.0
        %5753 = vmatpush1.msra.mxu0 0.0
        %5754 = vmatprep.subr.mxu0 0.0
        %5755 = vmatpush1.msra.mxu0 0.0
        %5756 = vmatprep.subr.mxu0 0.0
        %5757 = vmatpush1.msra.mxu0 0.0
        %5758 = vmatprep.subr.mxu0 0.0
        %5759 = vmatpush1.msra.mxu0 0.0
        %5760 = vmatprep.subr.mxu0 0.0
        %5761 = vmatpush1.msra.mxu0 0.0
        %5762 = vmatprep.subr.mxu0 0.0
        %5763 = vmatpush1.msra.mxu0 0.0
        %5764 = vmatprep.subr.mxu0 0.0
        %5765 = vmatpush1.msra.mxu0 0.0
        %5766 = vmatprep.subr.mxu0 0.0
        %5767 = vmatpush1.msra.mxu0 0.0
        %5768 = vmatprep.subr.mxu0 0.0
        %5769 = vmatpush1.msra.mxu0 0.0
        %5770 = vmatprep.subr.mxu0 0.0
        %5771 = vmatpush1.msra.mxu0 0.0
        %5772 = vmatprep.subr.mxu0 0.0
        %5773 = vmatpush1.msra.mxu0 0.0
        %5774 = vmatprep.subr.mxu0 0.0
        %5775 = vmatpush1.msra.mxu0 0.0
        %5776 = vmatprep.subr.mxu0 0.0
        %5777 = vmatpush1.msra.mxu0 0.0
        %5778 = vmatprep.subr.mxu0 0.0
        %5779 = vmatpush1.msra.mxu0 0.0
        %5780 = vmatprep.subr.mxu0 0.0
        %5781 = vmatpush1.msra.mxu0 0.0
        %5782 = vmatprep.subr.mxu0 0.0
        %5783 = vmatpush1.msra.mxu0 0.0
        %5784 = vmatprep.subr.mxu0 0.0
        %5785 = vmatpush1.msra.mxu0 0.0
        %5786 = vmatprep.subr.mxu0 0.0
        %5787 = vmatpush1.msra.mxu0 0.0
        %5788 = vmatprep.subr.mxu0 0.0
        %5789 = vmatpush1.msra.mxu0 0.0
        %5790 = vmatprep.subr.mxu0 0.0
        %5791 = vmatpush1.msra.mxu0 0.0
        %5792 = vmatprep.subr.mxu0 0.0
        %5793 = vmatpush1.msra.mxu0 0.0
        %5794 = vmatprep.subr.mxu0 0.0
        %5795 = vmatpush1.msra.mxu0 0.0
        %5796 = vmatprep.subr.mxu0 0.0
        %5797 = vmatpush1.msra.mxu0 0.0
        %5798 = vmatprep.subr.mxu0 0.0
        %5799 = vmatpush1.msra.mxu0 0.0
        %5800 = vmatprep.subr.mxu0 0.0
        %5801 = vmatpush1.msra.mxu0 0.0
        %5802 = vmatprep.subr.mxu0 0.0
        %5803 = vmatpush1.msra.mxu0 0.0
        %5804 = vmatprep.subr.mxu0 0.0
        %5805 = vmatpush1.msra.mxu0 0.0
        %5806 = vmatprep.subr.mxu0 0.0
        %5807 = vmatpush1.msra.mxu0 0.0
        %5808 = vmatprep.subr.mxu0 0.0
        %5809 = vmatpush1.msra.mxu0 0.0
        %5810 = vmatprep.subr.mxu0 0.0
        %5811 = vmatpush1.msra.mxu0 0.0
        %5812 = vmatprep.subr.mxu0 0.0
        %5813 = vmatpush1.msra.mxu0 0.0
        %5814 = vmatprep.mubr.f32.mxu0 0.0
        %5815 = vmatmul.mubr.f32.gmra.mrb[0].mxu0 %v5748
        %v5816 = vpop.f32.mrb[0].mxu0
        %v5817 = vadd.f32 0.0, %v5816
        %v5818 = vpop.f32.mrb[0].mxu0
        %5819 = vdwg.mxu0
        %v5820 = vadd.f32 %v5668, %v5817
        %5821 = vrot.lane.b32.xlu0 %v5008, 72
        %v5822 = vpop.permute.xlu0 %5821
        %v5825 = vsel %vm1230, %v5372, 0
        %5827 = vmatprep.subr.mxu0 0.0
        %5828 = vmatpush1.msra.mxu0 %v5822
        %5829 = vmatprep.subr.mxu0 0.0
        %5830 = vmatpush1.msra.mxu0 0.0
        %5831 = vmatprep.subr.mxu0 0.0
        %5832 = vmatpush1.msra.mxu0 0.0
        %5833 = vmatprep.subr.mxu0 0.0
        %5834 = vmatpush1.msra.mxu0 0.0
        %5835 = vmatprep.subr.mxu0 0.0
        %5836 = vmatpush1.msra.mxu0 0.0
        %5837 = vmatprep.subr.mxu0 0.0
        %5838 = vmatpush1.msra.mxu0 0.0
        %5839 = vmatprep.subr.mxu0 0.0
        %5840 = vmatpush1.msra.mxu0 0.0
        %5841 = vmatprep.subr.mxu0 0.0
        %5842 = vmatpush1.msra.mxu0 0.0
        %5843 = vmatprep.subr.mxu0 0.0
        %5844 = vmatpush1.msra.mxu0 0.0
        %5845 = vmatprep.subr.mxu0 0.0
        %5846 = vmatpush1.msra.mxu0 0.0
        %5847 = vmatprep.subr.mxu0 0.0
        %5848 = vmatpush1.msra.mxu0 0.0
        %5849 = vmatprep.subr.mxu0 0.0
        %5850 = vmatpush1.msra.mxu0 0.0
        %5851 = vmatprep.subr.mxu0 0.0
        %5852 = vmatpush1.msra.mxu0 0.0
        %5853 = vmatprep.subr.mxu0 0.0
        %5854 = vmatpush1.msra.mxu0 0.0
        %5855 = vmatprep.subr.mxu0 0.0
        %5856 = vmatpush1.msra.mxu0 0.0
        %5857 = vmatprep.subr.mxu0 0.0
        %5858 = vmatpush1.msra.mxu0 0.0
        %5859 = vmatprep.subr.mxu0 0.0
        %5860 = vmatpush1.msra.mxu0 0.0
        %5861 = vmatprep.subr.mxu0 0.0
        %5862 = vmatpush1.msra.mxu0 0.0
        %5863 = vmatprep.subr.mxu0 0.0
        %5864 = vmatpush1.msra.mxu0 0.0
        %5865 = vmatprep.subr.mxu0 0.0
        %5866 = vmatpush1.msra.mxu0 0.0
        %5867 = vmatprep.subr.mxu0 0.0
        %5868 = vmatpush1.msra.mxu0 0.0
        %5869 = vmatprep.subr.mxu0 0.0
        %5870 = vmatpush1.msra.mxu0 0.0
        %5871 = vmatprep.subr.mxu0 0.0
        %5872 = vmatpush1.msra.mxu0 0.0
        %5873 = vmatprep.subr.mxu0 0.0
        %5874 = vmatpush1.msra.mxu0 0.0
        %5875 = vmatprep.subr.mxu0 0.0
        %5876 = vmatpush1.msra.mxu0 0.0
        %5877 = vmatprep.subr.mxu0 0.0
        %5878 = vmatpush1.msra.mxu0 0.0
        %5879 = vmatprep.subr.mxu0 0.0
        %5880 = vmatpush1.msra.mxu0 0.0
        %5881 = vmatprep.subr.mxu0 0.0
        %5882 = vmatpush1.msra.mxu0 0.0
        %5883 = vmatprep.subr.mxu0 0.0
        %5884 = vmatpush1.msra.mxu0 0.0
        %5885 = vmatprep.subr.mxu0 0.0
        %5886 = vmatpush1.msra.mxu0 0.0
        %5887 = vmatprep.subr.mxu0 0.0
        %5888 = vmatpush1.msra.mxu0 0.0
        %5889 = vmatprep.subr.mxu0 0.0
        %5890 = vmatpush1.msra.mxu0 0.0
        %5891 = vmatprep.mubr.f32.mxu0 0.0
        %5892 = vmatmul.mubr.f32.gmra.mrb[0].mxu0 %v5825
        %v5893 = vpop.f32.mrb[0].mxu0
        %v5894 = vadd.f32 0.0, %v5893
        %v5895 = vpop.f32.mrb[0].mxu0
        %5896 = vdwg.mxu0
        %v5898 = vsel %vm1230, %v5894, 0
        %5900 = vmatprep.subr.mxu0 0.0
        %5901 = vmatpush1.msra.mxu0 %v4812
        %5902 = vmatprep.subr.mxu0 0.0
        %5903 = vmatpush1.msra.mxu0 0.0
        %5904 = vmatprep.subr.mxu0 0.0
        %5905 = vmatpush1.msra.mxu0 0.0
        %5906 = vmatprep.subr.mxu0 0.0
        %5907 = vmatpush1.msra.mxu0 0.0
        %5908 = vmatprep.subr.mxu0 0.0
        %5909 = vmatpush1.msra.mxu0 0.0
        %5910 = vmatprep.subr.mxu0 0.0
        %5911 = vmatpush1.msra.mxu0 0.0
        %5912 = vmatprep.subr.mxu0 0.0
        %5913 = vmatpush1.msra.mxu0 0.0
        %5914 = vmatprep.subr.mxu0 0.0
        %5915 = vmatpush1.msra.mxu0 0.0
        %5916 = vmatprep.subr.mxu0 0.0
        %5917 = vmatpush1.msra.mxu0 0.0
        %5918 = vmatprep.subr.mxu0 0.0
        %5919 = vmatpush1.msra.mxu0 0.0
        %5920 = vmatprep.subr.mxu0 0.0
        %5921 = vmatpush1.msra.mxu0 0.0
        %5922 = vmatprep.subr.mxu0 0.0
        %5923 = vmatpush1.msra.mxu0 0.0
        %5924 = vmatprep.subr.mxu0 0.0
        %5925 = vmatpush1.msra.mxu0 0.0
        %5926 = vmatprep.subr.mxu0 0.0
        %5927 = vmatpush1.msra.mxu0 0.0
        %5928 = vmatprep.subr.mxu0 0.0
        %5929 = vmatpush1.msra.mxu0 0.0
        %5930 = vmatprep.subr.mxu0 0.0
        %5931 = vmatpush1.msra.mxu0 0.0
        %5932 = vmatprep.subr.mxu0 0.0
        %5933 = vmatpush1.msra.mxu0 0.0
        %5934 = vmatprep.subr.mxu0 0.0
        %5935 = vmatpush1.msra.mxu0 0.0
        %5936 = vmatprep.subr.mxu0 0.0
        %5937 = vmatpush1.msra.mxu0 0.0
        %5938 = vmatprep.subr.mxu0 0.0
        %5939 = vmatpush1.msra.mxu0 0.0
        %5940 = vmatprep.subr.mxu0 0.0
        %5941 = vmatpush1.msra.mxu0 0.0
        %5942 = vmatprep.subr.mxu0 0.0
        %5943 = vmatpush1.msra.mxu0 0.0
        %5944 = vmatprep.subr.mxu0 0.0
        %5945 = vmatpush1.msra.mxu0 0.0
        %5946 = vmatprep.subr.mxu0 0.0
        %5947 = vmatpush1.msra.mxu0 0.0
        %5948 = vmatprep.subr.mxu0 0.0
        %5949 = vmatpush1.msra.mxu0 0.0
        %5950 = vmatprep.subr.mxu0 0.0
        %5951 = vmatpush1.msra.mxu0 0.0
        %5952 = vmatprep.subr.mxu0 0.0
        %5953 = vmatpush1.msra.mxu0 0.0
        %5954 = vmatprep.subr.mxu0 0.0
        %5955 = vmatpush1.msra.mxu0 0.0
        %5956 = vmatprep.subr.mxu0 0.0
        %5957 = vmatpush1.msra.mxu0 0.0
        %5958 = vmatprep.subr.mxu0 0.0
        %5959 = vmatpush1.msra.mxu0 0.0
        %5960 = vmatprep.subr.mxu0 0.0
        %5961 = vmatpush1.msra.mxu0 0.0
        %5962 = vmatprep.subr.mxu0 0.0
        %5963 = vmatpush1.msra.mxu0 0.0
        %5964 = vmatprep.mubr.f32.mxu0 0.0
        %5965 = vmatmul.mubr.f32.gmra.mrb[0].mxu0 %v5898
        %v5966 = vpop.f32.mrb[0].mxu0
        %v5967 = vadd.f32 0.0, %v5966
        %v5968 = vpop.f32.mrb[0].mxu0
        %5969 = vdwg.mxu0
        %v5970 = vadd.f32 %v5820, %v5967
        %v5972 = vlaneseq
        %v5973 = vshrl.u32 %v5972, 7
        %v5974 = vsub.s32 0, %v5973
        %v5975 = vrot.slane %v4813, %v5974
        %v5977 = vadd.f32 %v5970, %v5975
        %v5978 = vadd.f32 %v5977, %v4803
        %v5979 = vsel %vm1153, %v5978, 0.0
        %5980 = vadd.xlane.f32.xlu0 %v5979
        %v5981 = vpop.xlane.xlu0 %5980
        %v5982 = vmul.f32 %v5981, %v2200
        %v5983 = vsub.f32 %v5978, %v5982
        %v5984 = vmul.f32 %v5983, %v5983
        %v5985 = vsel %vm1153, %v5984, 0.0
        %5986 = vadd.xlane.f32.xlu0 %v5985
        %v5987 = vpop.xlane.xlu0 %5986
        %v5988 = vmul.f32 %v5987, %v2200
        %v5989 = vadd.f32 %v5988, 1e-05
        %v5990 = vrsqrt.pop %v5989
        %v5991 = vmul.f32 %v5983, %v5990
        %v5993 = vlaneseq
        %v5994 = vshrl.u32 %v5993, 7
        %v5995 = vsub.s32 0, %v5994
        %v5996 = vrot.slane %v4814, %v5995
        %v5998 = vmul.f32 %v5991, %v5996
        %v6000 = vlaneseq
        %v6001 = vshrl.u32 %v6000, 7
        %v6002 = vsub.s32 0, %v6001
        %v6003 = vrot.slane %v4815, %v6002
        %v6005 = vadd.f32 %v5998, %v6003
        %v6007 = vlaneseq
        %v6008 = vshrl.u32 %v6007, 7
        %v6009 = vsub.s32 0, %v6008
        %v6010 = vrot.slane %v4822, %v6009
        %v6013 = vsel %vm1153, %v6005, 0
        %6015 = vmatprep.subr.mxu0 0.0
        %6016 = vmatpush1.msra.mxu0 %v4818
        %6017 = vmatprep.subr.mxu0 0.0
        %6018 = vmatpush1.msra.mxu0 %v4819
        %6019 = vmatprep.subr.mxu0 0.0
        %6020 = vmatpush1.msra.mxu0 %v4820
        %6021 = vmatprep.subr.mxu0 0.0
        %6022 = vmatpush1.msra.mxu0 %v4821
        %6023 = vmatprep.subr.mxu0 0.0
        %6024 = vmatpush1.msra.mxu0 0.0
        %6025 = vmatprep.subr.mxu0 0.0
        %6026 = vmatpush1.msra.mxu0 0.0
        %6027 = vmatprep.subr.mxu0 0.0
        %6028 = vmatpush1.msra.mxu0 0.0
        %6029 = vmatprep.subr.mxu0 0.0
        %6030 = vmatpush1.msra.mxu0 0.0
        %6031 = vmatprep.subr.mxu0 0.0
        %6032 = vmatpush1.msra.mxu0 0.0
        %6033 = vmatprep.subr.mxu0 0.0
        %6034 = vmatpush1.msra.mxu0 0.0
        %6035 = vmatprep.subr.mxu0 0.0
        %6036 = vmatpush1.msra.mxu0 0.0
        %6037 = vmatprep.subr.mxu0 0.0
        %6038 = vmatpush1.msra.mxu0 0.0
        %6039 = vmatprep.subr.mxu0 0.0
        %6040 = vmatpush1.msra.mxu0 0.0
        %6041 = vmatprep.subr.mxu0 0.0
        %6042 = vmatpush1.msra.mxu0 0.0
        %6043 = vmatprep.subr.mxu0 0.0
        %6044 = vmatpush1.msra.mxu0 0.0
        %6045 = vmatprep.subr.mxu0 0.0
        %6046 = vmatpush1.msra.mxu0 0.0
        %6047 = vmatprep.subr.mxu0 0.0
        %6048 = vmatpush1.msra.mxu0 0.0
        %6049 = vmatprep.subr.mxu0 0.0
        %6050 = vmatpush1.msra.mxu0 0.0
        %6051 = vmatprep.subr.mxu0 0.0
        %6052 = vmatpush1.msra.mxu0 0.0
        %6053 = vmatprep.subr.mxu0 0.0
        %6054 = vmatpush1.msra.mxu0 0.0
        %6055 = vmatprep.subr.mxu0 0.0
        %6056 = vmatpush1.msra.mxu0 0.0
        %6057 = vmatprep.subr.mxu0 0.0
        %6058 = vmatpush1.msra.mxu0 0.0
        %6059 = vmatprep.subr.mxu0 0.0
        %6060 = vmatpush1.msra.mxu0 0.0
        %6061 = vmatprep.subr.mxu0 0.0
        %6062 = vmatpush1.msra.mxu0 0.0
        %6063 = vmatprep.subr.mxu0 0.0
        %6064 = vmatpush1.msra.mxu0 0.0
        %6065 = vmatprep.subr.mxu0 0.0
        %6066 = vmatpush1.msra.mxu0 0.0
        %6067 = vmatprep.subr.mxu0 0.0
        %6068 = vmatpush1.msra.mxu0 0.0
        %6069 = vmatprep.subr.mxu0 0.0
        %6070 = vmatpush1.msra.mxu0 0.0
        %6071 = vmatprep.subr.mxu0 0.0
        %6072 = vmatpush1.msra.mxu0 0.0
        %6073 = vmatprep.subr.mxu0 0.0
        %6074 = vmatpush1.msra.mxu0 0.0
        %6075 = vmatprep.subr.mxu0 0.0
        %6076 = vmatpush1.msra.mxu0 0.0
        %6077 = vmatprep.subr.mxu0 0.0
        %6078 = vmatpush1.msra.mxu0 0.0
        %6079 = vmatprep.mubr.f32.mxu0 0.0
        %6080 = vmatmul.mubr.f32.gmra.mrb[0].mxu0 %v6013
        %v6081 = vpop.f32.mrb[0].mxu0
        %v6082 = vadd.f32 %v6010, %v6081
        %v6083 = vpop.f32.mrb[0].mxu0
        %6084 = vdwg.mxu0
        %v6085 = vmax.f32 %v6082, 0.0
        %v6087 = vlaneseq
        %v6088 = vshrl.u32 %v6087, 7
        %v6089 = vsub.s32 0, %v6088
        %v6090 = vrot.slane %v4839, %v6089
        %6092 = vmatprep.subr.mxu0 0.0
        %6093 = vmatpush1.msra.mxu0 %v4823
        %6094 = vmatprep.subr.mxu0 0.0
        %6095 = vmatpush1.msra.mxu0 %v4824
        %6096 = vmatprep.subr.mxu0 0.0
        %6097 = vmatpush1.msra.mxu0 %v4825
        %6098 = vmatprep.subr.mxu0 0.0
        %6099 = vmatpush1.msra.mxu0 %v4826
        %6100 = vmatprep.subr.mxu0 0.0
        %6101 = vmatpush1.msra.mxu0 %v4827
        %6102 = vmatprep.subr.mxu0 0.0
        %6103 = vmatpush1.msra.mxu0 %v4828
        %6104 = vmatprep.subr.mxu0 0.0
        %6105 = vmatpush1.msra.mxu0 %v4829
        %6106 = vmatprep.subr.mxu0 0.0
        %6107 = vmatpush1.msra.mxu0 %v4830
        %6108 = vmatprep.subr.mxu0 0.0
        %6109 = vmatpush1.msra.mxu0 %v4831
        %6110 = vmatprep.subr.mxu0 0.0
        %6111 = vmatpush1.msra.mxu0 %v4832
        %6112 = vmatprep.subr.mxu0 0.0
        %6113 = vmatpush1.msra.mxu0 %v4833
        %6114 = vmatprep.subr.mxu0 0.0
        %6115 = vmatpush1.msra.mxu0 %v4834
        %6116 = vmatprep.subr.mxu0 0.0
        %6117 = vmatpush1.msra.mxu0 %v4835
        %6118 = vmatprep.subr.mxu0 0.0
        %6119 = vmatpush1.msra.mxu0 %v4836
        %6120 = vmatprep.subr.mxu0 0.0
        %6121 = vmatpush1.msra.mxu0 %v4837
        %6122 = vmatprep.subr.mxu0 0.0
        %6123 = vmatpush1.msra.mxu0 %v4838
        %6124 = vmatprep.subr.mxu0 0.0
        %6125 = vmatpush1.msra.mxu0 0.0
        %6126 = vmatprep.subr.mxu0 0.0
        %6127 = vmatpush1.msra.mxu0 0.0
        %6128 = vmatprep.subr.mxu0 0.0
        %6129 = vmatpush1.msra.mxu0 0.0
        %6130 = vmatprep.subr.mxu0 0.0
        %6131 = vmatpush1.msra.mxu0 0.0
        %6132 = vmatprep.subr.mxu0 0.0
        %6133 = vmatpush1.msra.mxu0 0.0
        %6134 = vmatprep.subr.mxu0 0.0
        %6135 = vmatpush1.msra.mxu0 0.0
        %6136 = vmatprep.subr.mxu0 0.0
        %6137 = vmatpush1.msra.mxu0 0.0
        %6138 = vmatprep.subr.mxu0 0.0
        %6139 = vmatpush1.msra.mxu0 0.0
        %6140 = vmatprep.subr.mxu0 0.0
        %6141 = vmatpush1.msra.mxu0 0.0
        %6142 = vmatprep.subr.mxu0 0.0
        %6143 = vmatpush1.msra.mxu0 0.0
        %6144 = vmatprep.subr.mxu0 0.0
        %6145 = vmatpush1.msra.mxu0 0.0
        %6146 = vmatprep.subr.mxu0 0.0
        %6147 = vmatpush1.msra.mxu0 0.0
        %6148 = vmatprep.subr.mxu0 0.0
        %6149 = vmatpush1.msra.mxu0 0.0
        %6150 = vmatprep.subr.mxu0 0.0
        %6151 = vmatpush1.msra.mxu0 0.0
        %6152 = vmatprep.subr.mxu0 0.0
        %6153 = vmatpush1.msra.mxu0 0.0
        %6154 = vmatprep.subr.mxu0 0.0
        %6155 = vmatpush1.msra.mxu0 0.0
        %6156 = vmatprep.mubr.f32.mxu0 0.0
        %6157 = vmatmul.mubr.f32.gmra.mrb[0].mxu0 %v6085
        %v6158 = vpop.f32.mrb[0].mxu0
        %v6159 = vadd.f32 %v6090, %v6158
        %v6160 = vpop.f32.mrb[0].mxu0
        %6161 = vdwg.mxu0
        %v6162 = vadd.f32 %v6159, %v6005
        %v6163 = vsel %vm1153, %v6162, 0.0
        %6164 = vadd.xlane.f32.xlu0 %v6163
        %v6165 = vpop.xlane.xlu0 %6164
        %v6166 = vmul.f32 %v6165, %v2200
        %v6167 = vsub.f32 %v6162, %v6166
        %v6168 = vmul.f32 %v6167, %v6167
        %v6169 = vsel %vm1153, %v6168, 0.0
        %6170 = vadd.xlane.f32.xlu0 %v6169
        %v6171 = vpop.xlane.xlu0 %6170
        %v6172 = vmul.f32 %v6171, %v2200
        %v6173 = vadd.f32 %v6172, 1e-05
        %v6174 = vrsqrt.pop %v6173
        %v6175 = vmul.f32 %v6167, %v6174
        %v6177 = vlaneseq
        %v6178 = vshrl.u32 %v6177, 7
        %v6179 = vsub.s32 0, %v6178
        %v6180 = vrot.slane %v4816, %v6179
        %v6182 = vmul.f32 %v6175, %v6180
        %v6184 = vlaneseq
        %v6185 = vshrl.u32 %v6184, 7
        %v6186 = vsub.s32 0, %v6185
        %v6187 = vrot.slane %v4817, %v6186
        %v6189 = vadd.f32 %v6182, %v6187
        %s6190 = scalar_lea.vmem %s31, 32
        %v6191 = vld [vmem:[%s6190] sm:$0xff]
        %v6192 = vld [vmem:[%s6190 + $0x8] sm:$0xff]
        %v6193 = vld [vmem:[%s6190 + $0x10] sm:$0xff]
        %v6194 = vld [vmem:[%s6190 + $0x18] sm:$0xff]
        %s6195 = scalar_lea.vmem %s33, 1
        %v6196 = vld [vmem:[%s6195] sm:$0x1]
        %s6197 = scalar_lea.vmem %s35, 32
        %v6198 = vld [vmem:[%s6197] sm:$0xff]
        %v6199 = vld [vmem:[%s6197 + $0x8] sm:$0xff]
        %v6200 = vld [vmem:[%s6197 + $0x10] sm:$0xff]
        %v6201 = vld [vmem:[%s6197 + $0x18] sm:$0xff]
        %s6202 = scalar_lea.vmem %s37, 1
        %v6203 = vld [vmem:[%s6202] sm:$0x1]
        %v6205 = vlaneseq
        %v6206 = vshrl.u32 %v6205, 7
        %v6207 = vsub.s32 0, %v6206
        %v6208 = vrot.slane %v6196, %v6207
        %v6211 = vsel %vm1153, %v6189, 0
        %6213 = vmatprep.subr.mxu0 0.0
        %6214 = vmatpush1.msra.mxu0 %v6191
        %6215 = vmatprep.subr.mxu0 0.0
        %6216 = vmatpush1.msra.mxu0 %v6192
        %6217 = vmatprep.subr.mxu0 0.0
        %6218 = vmatpush1.msra.mxu0 %v6193
        %6219 = vmatprep.subr.mxu0 0.0
        %6220 = vmatpush1.msra.mxu0 %v6194
        %6221 = vmatprep.subr.mxu0 0.0
        %6222 = vmatpush1.msra.mxu0 0.0
        %6223 = vmatprep.subr.mxu0 0.0
        %6224 = vmatpush1.msra.mxu0 0.0
        %6225 = vmatprep.subr.mxu0 0.0
        %6226 = vmatpush1.msra.mxu0 0.0
        %6227 = vmatprep.subr.mxu0 0.0
        %6228 = vmatpush1.msra.mxu0 0.0
        %6229 = vmatprep.subr.mxu0 0.0
        %6230 = vmatpush1.msra.mxu0 0.0
        %6231 = vmatprep.subr.mxu0 0.0
        %6232 = vmatpush1.msra.mxu0 0.0
        %6233 = vmatprep.subr.mxu0 0.0
        %6234 = vmatpush1.msra.mxu0 0.0
        %6235 = vmatprep.subr.mxu0 0.0
        %6236 = vmatpush1.msra.mxu0 0.0
        %6237 = vmatprep.subr.mxu0 0.0
        %6238 = vmatpush1.msra.mxu0 0.0
        %6239 = vmatprep.subr.mxu0 0.0
        %6240 = vmatpush1.msra.mxu0 0.0
        %6241 = vmatprep.subr.mxu0 0.0
        %6242 = vmatpush1.msra.mxu0 0.0
        %6243 = vmatprep.subr.mxu0 0.0
        %6244 = vmatpush1.msra.mxu0 0.0
        %6245 = vmatprep.subr.mxu0 0.0
        %6246 = vmatpush1.msra.mxu0 0.0
        %6247 = vmatprep.subr.mxu0 0.0
        %6248 = vmatpush1.msra.mxu0 0.0
        %6249 = vmatprep.subr.mxu0 0.0
        %6250 = vmatpush1.msra.mxu0 0.0
        %6251 = vmatprep.subr.mxu0 0.0
        %6252 = vmatpush1.msra.mxu0 0.0
        %6253 = vmatprep.subr.mxu0 0.0
        %6254 = vmatpush1.msra.mxu0 0.0
        %6255 = vmatprep.subr.mxu0 0.0
        %6256 = vmatpush1.msra.mxu0 0.0
        %6257 = vmatprep.subr.mxu0 0.0
        %6258 = vmatpush1.msra.mxu0 0.0
        %6259 = vmatprep.subr.mxu0 0.0
        %6260 = vmatpush1.msra.mxu0 0.0
        %6261 = vmatprep.subr.mxu0 0.0
        %6262 = vmatpush1.msra.mxu0 0.0
        %6263 = vmatprep.subr.mxu0 0.0
        %6264 = vmatpush1.msra.mxu0 0.0
        %6265 = vmatprep.subr.mxu0 0.0
        %6266 = vmatpush1.msra.mxu0 0.0
        %6267 = vmatprep.subr.mxu0 0.0
        %6268 = vmatpush1.msra.mxu0 0.0
        %6269 = vmatprep.subr.mxu0 0.0
        %6270 = vmatpush1.msra.mxu0 0.0
        %6271 = vmatprep.subr.mxu0 0.0
        %6272 = vmatpush1.msra.mxu0 0.0
        %6273 = vmatprep.subr.mxu0 0.0
        %6274 = vmatpush1.msra.mxu0 0.0
        %6275 = vmatprep.subr.mxu0 0.0
        %6276 = vmatpush1.msra.mxu0 0.0
        %6277 = vmatprep.mubr.f32.mxu0 0.0
        %6278 = vmatmul.mubr.f32.gmra.mrb[0].mxu0 %v6211
        %v6279 = vpop.f32.mrb[0].mxu0
        %v6280 = vadd.f32 %v6208, %v6279
        %v6281 = vpop.f32.mrb[0].mxu0
        %6282 = vdwg.mxu0
        %6284 = vrot.lane.b32.xlu0 %v6280, 96
        %v6285 = vpop.permute.xlu0 %6284
        %v6286 = vsel %vm1230, %v6280, 0
        %v6288 = vsel %vm1230, %v6285, 0
        %6290 = vmatprep.subr.mxu0 0.0
        %6291 = vmatpush1.xpose.msra.mxu0 %v6288
        %6292 = vmatprep.subr.mxu0 0.0
        %6293 = vmatpush1.xpose.msra.mxu0 0.0
        %6294 = vmatprep.subr.mxu0 0.0
        %6295 = vmatpush1.xpose.msra.mxu0 0.0
        %6296 = vmatprep.subr.mxu0 0.0
        %6297 = vmatpush1.xpose.msra.mxu0 0.0
        %6298 = vmatprep.subr.mxu0 0.0
        %6299 = vmatpush1.xpose.msra.mxu0 0.0
        %6300 = vmatprep.subr.mxu0 0.0
        %6301 = vmatpush1.xpose.msra.mxu0 0.0
        %6302 = vmatprep.subr.mxu0 0.0
        %6303 = vmatpush1.xpose.msra.mxu0 0.0
        %6304 = vmatprep.subr.mxu0 0.0
        %6305 = vmatpush1.xpose.msra.mxu0 0.0
        %6306 = vmatprep.subr.mxu0 0.0
        %6307 = vmatpush1.xpose.msra.mxu0 0.0
        %6308 = vmatprep.subr.mxu0 0.0
        %6309 = vmatpush1.xpose.msra.mxu0 0.0
        %6310 = vmatprep.subr.mxu0 0.0
        %6311 = vmatpush1.xpose.msra.mxu0 0.0
        %6312 = vmatprep.subr.mxu0 0.0
        %6313 = vmatpush1.xpose.msra.mxu0 0.0
        %6314 = vmatprep.subr.mxu0 0.0
        %6315 = vmatpush1.xpose.msra.mxu0 0.0
        %6316 = vmatprep.subr.mxu0 0.0
        %6317 = vmatpush1.xpose.msra.mxu0 0.0
        %6318 = vmatprep.subr.mxu0 0.0
        %6319 = vmatpush1.xpose.msra.mxu0 0.0
        %6320 = vmatprep.subr.mxu0 0.0
        %6321 = vmatpush1.xpose.msra.mxu0 0.0
        %6322 = vmatprep.subr.mxu0 0.0
        %6323 = vmatpush1.xpose.msra.mxu0 0.0
        %6324 = vmatprep.subr.mxu0 0.0
        %6325 = vmatpush1.xpose.msra.mxu0 0.0
        %6326 = vmatprep.subr.mxu0 0.0
        %6327 = vmatpush1.xpose.msra.mxu0 0.0
        %6328 = vmatprep.subr.mxu0 0.0
        %6329 = vmatpush1.xpose.msra.mxu0 0.0
        %6330 = vmatprep.subr.mxu0 0.0
        %6331 = vmatpush1.xpose.msra.mxu0 0.0
        %6332 = vmatprep.subr.mxu0 0.0
        %6333 = vmatpush1.xpose.msra.mxu0 0.0
        %6334 = vmatprep.subr.mxu0 0.0
        %6335 = vmatpush1.xpose.msra.mxu0 0.0
        %6336 = vmatprep.subr.mxu0 0.0
        %6337 = vmatpush1.xpose.msra.mxu0 0.0
        %6338 = vmatprep.subr.mxu0 0.0
        %6339 = vmatpush1.xpose.msra.mxu0 0.0
        %6340 = vmatprep.subr.mxu0 0.0
        %6341 = vmatpush1.xpose.msra.mxu0 0.0
        %6342 = vmatprep.subr.mxu0 0.0
        %6343 = vmatpush1.xpose.msra.mxu0 0.0
        %6344 = vmatprep.subr.mxu0 0.0
        %6345 = vmatpush1.xpose.msra.mxu0 0.0
        %6346 = vmatprep.subr.mxu0 0.0
        %6347 = vmatpush1.xpose.msra.mxu0 0.0
        %6348 = vmatprep.subr.mxu0 0.0
        %6349 = vmatpush1.xpose.msra.mxu0 0.0
        %6350 = vmatprep.subr.mxu0 0.0
        %6351 = vmatpush1.xpose.msra.mxu0 0.0
        %6352 = vmatprep.subr.mxu0 0.0
        %6353 = vmatpush1.xpose.msra.mxu0 0.0
        %6354 = vmatprep.mubr.f32.mxu0 0.0
        %6355 = vmatmul.mubr.f32.gmra.mrb[0].mxu0 %v6286
        %v6356 = vpop.f32.mrb[0].mxu0
        %v6357 = vadd.f32 0.0, %v6356
        %v6358 = vpop.f32.mrb[0].mxu0
        %6359 = vdwg.mxu0
        %6360 = vrot.lane.b32.xlu0 %v6280, 120
        %v6361 = vpop.permute.xlu0 %6360
        %6362 = vrot.lane.b32.xlu0 %v6280, 88
        %v6363 = vpop.permute.xlu0 %6362
        %v6364 = vsel %vm1230, %v6361, 0
        %v6366 = vsel %vm1230, %v6363, 0
        %6368 = vmatprep.subr.mxu0 0.0
        %6369 = vmatpush1.xpose.msra.mxu0 %v6366
        %6370 = vmatprep.subr.mxu0 0.0
        %6371 = vmatpush1.xpose.msra.mxu0 0.0
        %6372 = vmatprep.subr.mxu0 0.0
        %6373 = vmatpush1.xpose.msra.mxu0 0.0
        %6374 = vmatprep.subr.mxu0 0.0
        %6375 = vmatpush1.xpose.msra.mxu0 0.0
        %6376 = vmatprep.subr.mxu0 0.0
        %6377 = vmatpush1.xpose.msra.mxu0 0.0
        %6378 = vmatprep.subr.mxu0 0.0
        %6379 = vmatpush1.xpose.msra.mxu0 0.0
        %6380 = vmatprep.subr.mxu0 0.0
        %6381 = vmatpush1.xpose.msra.mxu0 0.0
        %6382 = vmatprep.subr.mxu0 0.0
        %6383 = vmatpush1.xpose.msra.mxu0 0.0
        %6384 = vmatprep.subr.mxu0 0.0
        %6385 = vmatpush1.xpose.msra.mxu0 0.0
        %6386 = vmatprep.subr.mxu0 0.0
        %6387 = vmatpush1.xpose.msra.mxu0 0.0
        %6388 = vmatprep.subr.mxu0 0.0
        %6389 = vmatpush1.xpose.msra.mxu0 0.0
        %6390 = vmatprep.subr.mxu0 0.0
        %6391 = vmatpush1.xpose.msra.mxu0 0.0
        %6392 = vmatprep.subr.mxu0 0.0
        %6393 = vmatpush1.xpose.msra.mxu0 0.0
        %6394 = vmatprep.subr.mxu0 0.0
        %6395 = vmatpush1.xpose.msra.mxu0 0.0
        %6396 = vmatprep.subr.mxu0 0.0
        %6397 = vmatpush1.xpose.msra.mxu0 0.0
        %6398 = vmatprep.subr.mxu0 0.0
        %6399 = vmatpush1.xpose.msra.mxu0 0.0
        %6400 = vmatprep.subr.mxu0 0.0
        %6401 = vmatpush1.xpose.msra.mxu0 0.0
        %6402 = vmatprep.subr.mxu0 0.0
        %6403 = vmatpush1.xpose.msra.mxu0 0.0
        %6404 = vmatprep.subr.mxu0 0.0
        %6405 = vmatpush1.xpose.msra.mxu0 0.0
        %6406 = vmatprep.subr.mxu0 0.0
        %6407 = vmatpush1.xpose.msra.mxu0 0.0
        %6408 = vmatprep.subr.mxu0 0.0
        %6409 = vmatpush1.xpose.msra.mxu0 0.0
        %6410 = vmatprep.subr.mxu0 0.0
        %6411 = vmatpush1.xpose.msra.mxu0 0.0
        %6412 = vmatprep.subr.mxu0 0.0
        %6413 = vmatpush1.xpose.msra.mxu0 0.0
        %6414 = vmatprep.subr.mxu0 0.0
        %6415 = vmatpush1.xpose.msra.mxu0 0.0
        %6416 = vmatprep.subr.mxu0 0.0
        %6417 = vmatpush1.xpose.msra.mxu0 0.0
        %6418 = vmatprep.subr.mxu0 0.0
        %6419 = vmatpush1.xpose.msra.mxu0 0.0
        %6420 = vmatprep.subr.mxu0 0.0
        %6421 = vmatpush1.xpose.msra.mxu0 0.0
        %6422 = vmatprep.subr.mxu0 0.0
        %6423 = vmatpush1.xpose.msra.mxu0 0.0
        %6424 = vmatprep.subr.mxu0 0.0
        %6425 = vmatpush1.xpose.msra.mxu0 0.0
        %6426 = vmatprep.subr.mxu0 0.0
        %6427 = vmatpush1.xpose.msra.mxu0 0.0
        %6428 = vmatprep.subr.mxu0 0.0
        %6429 = vmatpush1.xpose.msra.mxu0 0.0
        %6430 = vmatprep.subr.mxu0 0.0
        %6431 = vmatpush1.xpose.msra.mxu0 0.0
        %6432 = vmatprep.mubr.f32.mxu0 0.0
        %6433 = vmatmul.mubr.f32.gmra.mrb[0].mxu0 %v6364
        %v6434 = vpop.f32.mrb[0].mxu0
        %v6435 = vadd.f32 0.0, %v6434
        %v6436 = vpop.f32.mrb[0].mxu0
        %6437 = vdwg.mxu0
        %6438 = vrot.lane.b32.xlu0 %v6280, 112
        %v6439 = vpop.permute.xlu0 %6438
        %6440 = vrot.lane.b32.xlu0 %v6280, 80
        %v6441 = vpop.permute.xlu0 %6440
        %v6442 = vsel %vm1230, %v6439, 0
        %v6444 = vsel %vm1230, %v6441, 0
        %6446 = vmatprep.subr.mxu0 0.0
        %6447 = vmatpush1.xpose.msra.mxu0 %v6444
        %6448 = vmatprep.subr.mxu0 0.0
        %6449 = vmatpush1.xpose.msra.mxu0 0.0
        %6450 = vmatprep.subr.mxu0 0.0
        %6451 = vmatpush1.xpose.msra.mxu0 0.0
        %6452 = vmatprep.subr.mxu0 0.0
        %6453 = vmatpush1.xpose.msra.mxu0 0.0
        %6454 = vmatprep.subr.mxu0 0.0
        %6455 = vmatpush1.xpose.msra.mxu0 0.0
        %6456 = vmatprep.subr.mxu0 0.0
        %6457 = vmatpush1.xpose.msra.mxu0 0.0
        %6458 = vmatprep.subr.mxu0 0.0
        %6459 = vmatpush1.xpose.msra.mxu0 0.0
        %6460 = vmatprep.subr.mxu0 0.0
        %6461 = vmatpush1.xpose.msra.mxu0 0.0
        %6462 = vmatprep.subr.mxu0 0.0
        %6463 = vmatpush1.xpose.msra.mxu0 0.0
        %6464 = vmatprep.subr.mxu0 0.0
        %6465 = vmatpush1.xpose.msra.mxu0 0.0
        %6466 = vmatprep.subr.mxu0 0.0
        %6467 = vmatpush1.xpose.msra.mxu0 0.0
        %6468 = vmatprep.subr.mxu0 0.0
        %6469 = vmatpush1.xpose.msra.mxu0 0.0
        %6470 = vmatprep.subr.mxu0 0.0
        %6471 = vmatpush1.xpose.msra.mxu0 0.0
        %6472 = vmatprep.subr.mxu0 0.0
        %6473 = vmatpush1.xpose.msra.mxu0 0.0
        %6474 = vmatprep.subr.mxu0 0.0
        %6475 = vmatpush1.xpose.msra.mxu0 0.0
        %6476 = vmatprep.subr.mxu0 0.0
        %6477 = vmatpush1.xpose.msra.mxu0 0.0
        %6478 = vmatprep.subr.mxu0 0.0
        %6479 = vmatpush1.xpose.msra.mxu0 0.0
        %6480 = vmatprep.subr.mxu0 0.0
        %6481 = vmatpush1.xpose.msra.mxu0 0.0
        %6482 = vmatprep.subr.mxu0 0.0
        %6483 = vmatpush1.xpose.msra.mxu0 0.0
        %6484 = vmatprep.subr.mxu0 0.0
        %6485 = vmatpush1.xpose.msra.mxu0 0.0
        %6486 = vmatprep.subr.mxu0 0.0
        %6487 = vmatpush1.xpose.msra.mxu0 0.0
        %6488 = vmatprep.subr.mxu0 0.0
        %6489 = vmatpush1.xpose.msra.mxu0 0.0
        %6490 = vmatprep.subr.mxu0 0.0
        %6491 = vmatpush1.xpose.msra.mxu0 0.0
        %6492 = vmatprep.subr.mxu0 0.0
        %6493 = vmatpush1.xpose.msra.mxu0 0.0
        %6494 = vmatprep.subr.mxu0 0.0
        %6495 = vmatpush1.xpose.msra.mxu0 0.0
        %6496 = vmatprep.subr.mxu0 0.0
        %6497 = vmatpush1.xpose.msra.mxu0 0.0
        %6498 = vmatprep.subr.mxu0 0.0
        %6499 = vmatpush1.xpose.msra.mxu0 0.0
        %6500 = vmatprep.subr.mxu0 0.0
        %6501 = vmatpush1.xpose.msra.mxu0 0.0
        %6502 = vmatprep.subr.mxu0 0.0
        %6503 = vmatpush1.xpose.msra.mxu0 0.0
        %6504 = vmatprep.subr.mxu0 0.0
        %6505 = vmatpush1.xpose.msra.mxu0 0.0
        %6506 = vmatprep.subr.mxu0 0.0
        %6507 = vmatpush1.xpose.msra.mxu0 0.0
        %6508 = vmatprep.subr.mxu0 0.0
        %6509 = vmatpush1.xpose.msra.mxu0 0.0
        %6510 = vmatprep.mubr.f32.mxu0 0.0
        %6511 = vmatmul.mubr.f32.gmra.mrb[0].mxu0 %v6442
        %v6512 = vpop.f32.mrb[0].mxu0
        %v6513 = vadd.f32 0.0, %v6512
        %v6514 = vpop.f32.mrb[0].mxu0
        %6515 = vdwg.mxu0
        %6516 = vrot.lane.b32.xlu0 %v6280, 104
        %v6517 = vpop.permute.xlu0 %6516
        %6518 = vrot.lane.b32.xlu0 %v6280, 72
        %v6519 = vpop.permute.xlu0 %6518
        %v6520 = vsel %vm1230, %v6517, 0
        %v6522 = vsel %vm1230, %v6519, 0
        %6524 = vmatprep.subr.mxu0 0.0
        %6525 = vmatpush1.xpose.msra.mxu0 %v6522
        %6526 = vmatprep.subr.mxu0 0.0
        %6527 = vmatpush1.xpose.msra.mxu0 0.0
        %6528 = vmatprep.subr.mxu0 0.0
        %6529 = vmatpush1.xpose.msra.mxu0 0.0
        %6530 = vmatprep.subr.mxu0 0.0
        %6531 = vmatpush1.xpose.msra.mxu0 0.0
        %6532 = vmatprep.subr.mxu0 0.0
        %6533 = vmatpush1.xpose.msra.mxu0 0.0
        %6534 = vmatprep.subr.mxu0 0.0
        %6535 = vmatpush1.xpose.msra.mxu0 0.0
        %6536 = vmatprep.subr.mxu0 0.0
        %6537 = vmatpush1.xpose.msra.mxu0 0.0
        %6538 = vmatprep.subr.mxu0 0.0
        %6539 = vmatpush1.xpose.msra.mxu0 0.0
        %6540 = vmatprep.subr.mxu0 0.0
        %6541 = vmatpush1.xpose.msra.mxu0 0.0
        %6542 = vmatprep.subr.mxu0 0.0
        %6543 = vmatpush1.xpose.msra.mxu0 0.0
        %6544 = vmatprep.subr.mxu0 0.0
        %6545 = vmatpush1.xpose.msra.mxu0 0.0
        %6546 = vmatprep.subr.mxu0 0.0
        %6547 = vmatpush1.xpose.msra.mxu0 0.0
        %6548 = vmatprep.subr.mxu0 0.0
        %6549 = vmatpush1.xpose.msra.mxu0 0.0
        %6550 = vmatprep.subr.mxu0 0.0
        %6551 = vmatpush1.xpose.msra.mxu0 0.0
        %6552 = vmatprep.subr.mxu0 0.0
        %6553 = vmatpush1.xpose.msra.mxu0 0.0
        %6554 = vmatprep.subr.mxu0 0.0
        %6555 = vmatpush1.xpose.msra.mxu0 0.0
        %6556 = vmatprep.subr.mxu0 0.0
        %6557 = vmatpush1.xpose.msra.mxu0 0.0
        %6558 = vmatprep.subr.mxu0 0.0
        %6559 = vmatpush1.xpose.msra.mxu0 0.0
        %6560 = vmatprep.subr.mxu0 0.0
        %6561 = vmatpush1.xpose.msra.mxu0 0.0
        %6562 = vmatprep.subr.mxu0 0.0
        %6563 = vmatpush1.xpose.msra.mxu0 0.0
        %6564 = vmatprep.subr.mxu0 0.0
        %6565 = vmatpush1.xpose.msra.mxu0 0.0
        %6566 = vmatprep.subr.mxu0 0.0
        %6567 = vmatpush1.xpose.msra.mxu0 0.0
        %6568 = vmatprep.subr.mxu0 0.0
        %6569 = vmatpush1.xpose.msra.mxu0 0.0
        %6570 = vmatprep.subr.mxu0 0.0
        %6571 = vmatpush1.xpose.msra.mxu0 0.0
        %6572 = vmatprep.subr.mxu0 0.0
        %6573 = vmatpush1.xpose.msra.mxu0 0.0
        %6574 = vmatprep.subr.mxu0 0.0
        %6575 = vmatpush1.xpose.msra.mxu0 0.0
        %6576 = vmatprep.subr.mxu0 0.0
        %6577 = vmatpush1.xpose.msra.mxu0 0.0
        %6578 = vmatprep.subr.mxu0 0.0
        %6579 = vmatpush1.xpose.msra.mxu0 0.0
        %6580 = vmatprep.subr.mxu0 0.0
        %6581 = vmatpush1.xpose.msra.mxu0 0.0
        %6582 = vmatprep.subr.mxu0 0.0
        %6583 = vmatpush1.xpose.msra.mxu0 0.0
        %6584 = vmatprep.subr.mxu0 0.0
        %6585 = vmatpush1.xpose.msra.mxu0 0.0
        %6586 = vmatprep.subr.mxu0 0.0
        %6587 = vmatpush1.xpose.msra.mxu0 0.0
        %6588 = vmatprep.mubr.f32.mxu0 0.0
        %6589 = vmatmul.mubr.f32.gmra.mrb[0].mxu0 %v6520
        %v6590 = vpop.f32.mrb[0].mxu0
        %v6591 = vadd.f32 0.0, %v6590
        %v6592 = vpop.f32.mrb[0].mxu0
        %6593 = vdwg.mxu0
        %v6594 = vmul.f32 %v6357, 0.35355338
        %v6595 = vmul.f32 %v6435, 0.35355338
        %v6596 = vmul.f32 %v6513, 0.35355338
        %v6597 = vmul.f32 %v6591, 0.35355338
        %v6598 = vsel %vm1109, %v6594, -1e+09
        %v6599 = vsel %vm1109, %v6595, -1e+09
        %v6600 = vsel %vm1109, %v6596, -1e+09
        %v6601 = vsel %vm1109, %v6597, -1e+09
        %v6602 = vsel %vm1230, %v6598, -inf
        %6603 = vmax.xlane.f32.xlu0 %v6602
        %v6604 = vpop.xlane.xlu0 %6603
        %v6605 = vsel %vm1230, %v6599, -inf
        %6606 = vmax.xlane.f32.xlu0 %v6605
        %v6607 = vpop.xlane.xlu0 %6606
        %v6608 = vsel %vm1230, %v6600, -inf
        %6609 = vmax.xlane.f32.xlu0 %v6608
        %v6610 = vpop.xlane.xlu0 %6609
        %v6611 = vsel %vm1230, %v6601, -inf
        %6612 = vmax.xlane.f32.xlu0 %v6611
        %v6613 = vpop.xlane.xlu0 %6612
        %v6614 = vsub.f32 %v6598, %v6604
        %v6615 = vsub.f32 %v6599, %v6607
        %v6616 = vsub.f32 %v6600, %v6610
        %v6617 = vsub.f32 %v6601, %v6613
        %v6618 = vmul.f32 %v6614, 1.442695
        %v6619 = vpow.pop %v6618
        %v6620 = vmul.f32 %v6615, 1.442695
        %v6621 = vpow.pop %v6620
        %v6622 = vmul.f32 %v6616, 1.442695
        %v6623 = vpow.pop %v6622
        %v6624 = vmul.f32 %v6617, 1.442695
        %v6625 = vpow.pop %v6624
        %v6626 = vsel %vm1230, %v6619, 0.0
        %6627 = vadd.xlane.f32.xlu0 %v6626
        %v6628 = vpop.xlane.xlu0 %6627
        %v6629 = vsel %vm1230, %v6621, 0.0
        %6630 = vadd.xlane.f32.xlu0 %v6629
        %v6631 = vpop.xlane.xlu0 %6630
        %v6632 = vsel %vm1230, %v6623, 0.0
        %6633 = vadd.xlane.f32.xlu0 %v6632
        %v6634 = vpop.xlane.xlu0 %6633
        %v6635 = vsel %vm1230, %v6625, 0.0
        %6636 = vadd.xlane.f32.xlu0 %v6635
        %v6637 = vpop.xlane.xlu0 %6636
        %v6638 = vrcp.pop %v6628
        %v6639 = vrcp.pop %v6631
        %v6640 = vrcp.pop %v6634
        %v6641 = vrcp.pop %v6637
        %v6642 = vmul.f32 %v6619, %v6638
        %v6643 = vmul.f32 %v6621, %v6639
        %v6644 = vmul.f32 %v6623, %v6640
        %v6645 = vmul.f32 %v6625, %v6641
        %6646 = vrot.lane.b32.xlu0 %v6280, 64
        %v6647 = vpop.permute.xlu0 %6646
        %v6650 = vsel %vm1230, %v6642, 0
        %6652 = vmatprep.subr.mxu0 0.0
        %6653 = vmatpush1.msra.mxu0 %v6647
        %6654 = vmatprep.subr.mxu0 0.0
        %6655 = vmatpush1.msra.mxu0 0.0
        %6656 = vmatprep.subr.mxu0 0.0
        %6657 = vmatpush1.msra.mxu0 0.0
        %6658 = vmatprep.subr.mxu0 0.0
        %6659 = vmatpush1.msra.mxu0 0.0
        %6660 = vmatprep.subr.mxu0 0.0
        %6661 = vmatpush1.msra.mxu0 0.0
        %6662 = vmatprep.subr.mxu0 0.0
        %6663 = vmatpush1.msra.mxu0 0.0
        %6664 = vmatprep.subr.mxu0 0.0
        %6665 = vmatpush1.msra.mxu0 0.0
        %6666 = vmatprep.subr.mxu0 0.0
        %6667 = vmatpush1.msra.mxu0 0.0
        %6668 = vmatprep.subr.mxu0 0.0
        %6669 = vmatpush1.msra.mxu0 0.0
        %6670 = vmatprep.subr.mxu0 0.0
        %6671 = vmatpush1.msra.mxu0 0.0
        %6672 = vmatprep.subr.mxu0 0.0
        %6673 = vmatpush1.msra.mxu0 0.0
        %6674 = vmatprep.subr.mxu0 0.0
        %6675 = vmatpush1.msra.mxu0 0.0
        %6676 = vmatprep.subr.mxu0 0.0
        %6677 = vmatpush1.msra.mxu0 0.0
        %6678 = vmatprep.subr.mxu0 0.0
        %6679 = vmatpush1.msra.mxu0 0.0
        %6680 = vmatprep.subr.mxu0 0.0
        %6681 = vmatpush1.msra.mxu0 0.0
        %6682 = vmatprep.subr.mxu0 0.0
        %6683 = vmatpush1.msra.mxu0 0.0
        %6684 = vmatprep.subr.mxu0 0.0
        %6685 = vmatpush1.msra.mxu0 0.0
        %6686 = vmatprep.subr.mxu0 0.0
        %6687 = vmatpush1.msra.mxu0 0.0
        %6688 = vmatprep.subr.mxu0 0.0
        %6689 = vmatpush1.msra.mxu0 0.0
        %6690 = vmatprep.subr.mxu0 0.0
        %6691 = vmatpush1.msra.mxu0 0.0
        %6692 = vmatprep.subr.mxu0 0.0
        %6693 = vmatpush1.msra.mxu0 0.0
        %6694 = vmatprep.subr.mxu0 0.0
        %6695 = vmatpush1.msra.mxu0 0.0
        %6696 = vmatprep.subr.mxu0 0.0
        %6697 = vmatpush1.msra.mxu0 0.0
        %6698 = vmatprep.subr.mxu0 0.0
        %6699 = vmatpush1.msra.mxu0 0.0
        %6700 = vmatprep.subr.mxu0 0.0
        %6701 = vmatpush1.msra.mxu0 0.0
        %6702 = vmatprep.subr.mxu0 0.0
        %6703 = vmatpush1.msra.mxu0 0.0
        %6704 = vmatprep.subr.mxu0 0.0
        %6705 = vmatpush1.msra.mxu0 0.0
        %6706 = vmatprep.subr.mxu0 0.0
        %6707 = vmatpush1.msra.mxu0 0.0
        %6708 = vmatprep.subr.mxu0 0.0
        %6709 = vmatpush1.msra.mxu0 0.0
        %6710 = vmatprep.subr.mxu0 0.0
        %6711 = vmatpush1.msra.mxu0 0.0
        %6712 = vmatprep.subr.mxu0 0.0
        %6713 = vmatpush1.msra.mxu0 0.0
        %6714 = vmatprep.subr.mxu0 0.0
        %6715 = vmatpush1.msra.mxu0 0.0
        %6716 = vmatprep.mubr.f32.mxu0 0.0
        %6717 = vmatmul.mubr.f32.gmra.mrb[0].mxu0 %v6650
        %v6718 = vpop.f32.mrb[0].mxu0
        %v6719 = vadd.f32 0.0, %v6718
        %v6720 = vpop.f32.mrb[0].mxu0
        %6721 = vdwg.mxu0
        %6722 = vrot.lane.b32.xlu0 %v6280, 56
        %v6723 = vpop.permute.xlu0 %6722
        %v6726 = vsel %vm1230, %v6643, 0
        %6728 = vmatprep.subr.mxu0 0.0
        %6729 = vmatpush1.msra.mxu0 %v6723
        %6730 = vmatprep.subr.mxu0 0.0
        %6731 = vmatpush1.msra.mxu0 0.0
        %6732 = vmatprep.subr.mxu0 0.0
        %6733 = vmatpush1.msra.mxu0 0.0
        %6734 = vmatprep.subr.mxu0 0.0
        %6735 = vmatpush1.msra.mxu0 0.0
        %6736 = vmatprep.subr.mxu0 0.0
        %6737 = vmatpush1.msra.mxu0 0.0
        %6738 = vmatprep.subr.mxu0 0.0
        %6739 = vmatpush1.msra.mxu0 0.0
        %6740 = vmatprep.subr.mxu0 0.0
        %6741 = vmatpush1.msra.mxu0 0.0
        %6742 = vmatprep.subr.mxu0 0.0
        %6743 = vmatpush1.msra.mxu0 0.0
        %6744 = vmatprep.subr.mxu0 0.0
        %6745 = vmatpush1.msra.mxu0 0.0
        %6746 = vmatprep.subr.mxu0 0.0
        %6747 = vmatpush1.msra.mxu0 0.0
        %6748 = vmatprep.subr.mxu0 0.0
        %6749 = vmatpush1.msra.mxu0 0.0
        %6750 = vmatprep.subr.mxu0 0.0
        %6751 = vmatpush1.msra.mxu0 0.0
        %6752 = vmatprep.subr.mxu0 0.0
        %6753 = vmatpush1.msra.mxu0 0.0
        %6754 = vmatprep.subr.mxu0 0.0
        %6755 = vmatpush1.msra.mxu0 0.0
        %6756 = vmatprep.subr.mxu0 0.0
        %6757 = vmatpush1.msra.mxu0 0.0
        %6758 = vmatprep.subr.mxu0 0.0
        %6759 = vmatpush1.msra.mxu0 0.0
        %6760 = vmatprep.subr.mxu0 0.0
        %6761 = vmatpush1.msra.mxu0 0.0
        %6762 = vmatprep.subr.mxu0 0.0
        %6763 = vmatpush1.msra.mxu0 0.0
        %6764 = vmatprep.subr.mxu0 0.0
        %6765 = vmatpush1.msra.mxu0 0.0
        %6766 = vmatprep.subr.mxu0 0.0
        %6767 = vmatpush1.msra.mxu0 0.0
        %6768 = vmatprep.subr.mxu0 0.0
        %6769 = vmatpush1.msra.mxu0 0.0
        %6770 = vmatprep.subr.mxu0 0.0
        %6771 = vmatpush1.msra.mxu0 0.0
        %6772 = vmatprep.subr.mxu0 0.0
        %6773 = vmatpush1.msra.mxu0 0.0
        %6774 = vmatprep.subr.mxu0 0.0
        %6775 = vmatpush1.msra.mxu0 0.0
        %6776 = vmatprep.subr.mxu0 0.0
        %6777 = vmatpush1.msra.mxu0 0.0
        %6778 = vmatprep.subr.mxu0 0.0
        %6779 = vmatpush1.msra.mxu0 0.0
        %6780 = vmatprep.subr.mxu0 0.0
        %6781 = vmatpush1.msra.mxu0 0.0
        %6782 = vmatprep.subr.mxu0 0.0
        %6783 = vmatpush1.msra.mxu0 0.0
        %6784 = vmatprep.subr.mxu0 0.0
        %6785 = vmatpush1.msra.mxu0 0.0
        %6786 = vmatprep.subr.mxu0 0.0
        %6787 = vmatpush1.msra.mxu0 0.0
        %6788 = vmatprep.subr.mxu0 0.0
        %6789 = vmatpush1.msra.mxu0 0.0
        %6790 = vmatprep.subr.mxu0 0.0
        %6791 = vmatpush1.msra.mxu0 0.0
        %6792 = vmatprep.mubr.f32.mxu0 0.0
        %6793 = vmatmul.mubr.f32.gmra.mrb[0].mxu0 %v6726
        %v6794 = vpop.f32.mrb[0].mxu0
        %v6795 = vadd.f32 0.0, %v6794
        %v6796 = vpop.f32.mrb[0].mxu0
        %6797 = vdwg.mxu0
        %v6799 = vsel %vm1230, %v6795, 0
        %6801 = vmatprep.subr.mxu0 0.0
        %6802 = vmatpush1.msra.mxu0 %v6199
        %6803 = vmatprep.subr.mxu0 0.0
        %6804 = vmatpush1.msra.mxu0 0.0
        %6805 = vmatprep.subr.mxu0 0.0
        %6806 = vmatpush1.msra.mxu0 0.0
        %6807 = vmatprep.subr.mxu0 0.0
        %6808 = vmatpush1.msra.mxu0 0.0
        %6809 = vmatprep.subr.mxu0 0.0
        %6810 = vmatpush1.msra.mxu0 0.0
        %6811 = vmatprep.subr.mxu0 0.0
        %6812 = vmatpush1.msra.mxu0 0.0
        %6813 = vmatprep.subr.mxu0 0.0
        %6814 = vmatpush1.msra.mxu0 0.0
        %6815 = vmatprep.subr.mxu0 0.0
        %6816 = vmatpush1.msra.mxu0 0.0
        %6817 = vmatprep.subr.mxu0 0.0
        %6818 = vmatpush1.msra.mxu0 0.0
        %6819 = vmatprep.subr.mxu0 0.0
        %6820 = vmatpush1.msra.mxu0 0.0
        %6821 = vmatprep.subr.mxu0 0.0
        %6822 = vmatpush1.msra.mxu0 0.0
        %6823 = vmatprep.subr.mxu0 0.0
        %6824 = vmatpush1.msra.mxu0 0.0
        %6825 = vmatprep.subr.mxu0 0.0
        %6826 = vmatpush1.msra.mxu0 0.0
        %6827 = vmatprep.subr.mxu0 0.0
        %6828 = vmatpush1.msra.mxu0 0.0
        %6829 = vmatprep.subr.mxu0 0.0
        %6830 = vmatpush1.msra.mxu0 0.0
        %6831 = vmatprep.subr.mxu0 0.0
        %6832 = vmatpush1.msra.mxu0 0.0
        %6833 = vmatprep.subr.mxu0 0.0
        %6834 = vmatpush1.msra.mxu0 0.0
        %6835 = vmatprep.subr.mxu0 0.0
        %6836 = vmatpush1.msra.mxu0 0.0
        %6837 = vmatprep.subr.mxu0 0.0
        %6838 = vmatpush1.msra.mxu0 0.0
        %6839 = vmatprep.subr.mxu0 0.0
        %6840 = vmatpush1.msra.mxu0 0.0
        %6841 = vmatprep.subr.mxu0 0.0
        %6842 = vmatpush1.msra.mxu0 0.0
        %6843 = vmatprep.subr.mxu0 0.0
        %6844 = vmatpush1.msra.mxu0 0.0
        %6845 = vmatprep.subr.mxu0 0.0
        %6846 = vmatpush1.msra.mxu0 0.0
        %6847 = vmatprep.subr.mxu0 0.0
        %6848 = vmatpush1.msra.mxu0 0.0
        %6849 = vmatprep.subr.mxu0 0.0
        %6850 = vmatpush1.msra.mxu0 0.0
        %6851 = vmatprep.subr.mxu0 0.0
        %6852 = vmatpush1.msra.mxu0 0.0
        %6853 = vmatprep.subr.mxu0 0.0
        %6854 = vmatpush1.msra.mxu0 0.0
        %6855 = vmatprep.subr.mxu0 0.0
        %6856 = vmatpush1.msra.mxu0 0.0
        %6857 = vmatprep.subr.mxu0 0.0
        %6858 = vmatpush1.msra.mxu0 0.0
        %6859 = vmatprep.subr.mxu0 0.0
        %6860 = vmatpush1.msra.mxu0 0.0
        %6861 = vmatprep.subr.mxu0 0.0
        %6862 = vmatpush1.msra.mxu0 0.0
        %6863 = vmatprep.subr.mxu0 0.0
        %6864 = vmatpush1.msra.mxu0 0.0
        %6865 = vmatprep.mubr.f32.mxu0 0.0
        %6866 = vmatmul.mubr.f32.gmra.mrb[0].mxu0 %v6799
        %v6867 = vpop.f32.mrb[0].mxu0
        %v6868 = vadd.f32 0.0, %v6867
        %v6869 = vpop.f32.mrb[0].mxu0
        %6870 = vdwg.mxu0
        %v6872 = vsel %vm1230, %v6719, 0
        %6874 = vmatprep.subr.mxu0 0.0
        %6875 = vmatpush1.msra.mxu0 %v6198
        %6876 = vmatprep.subr.mxu0 0.0
        %6877 = vmatpush1.msra.mxu0 0.0
        %6878 = vmatprep.subr.mxu0 0.0
        %6879 = vmatpush1.msra.mxu0 0.0
        %6880 = vmatprep.subr.mxu0 0.0
        %6881 = vmatpush1.msra.mxu0 0.0
        %6882 = vmatprep.subr.mxu0 0.0
        %6883 = vmatpush1.msra.mxu0 0.0
        %6884 = vmatprep.subr.mxu0 0.0
        %6885 = vmatpush1.msra.mxu0 0.0
        %6886 = vmatprep.subr.mxu0 0.0
        %6887 = vmatpush1.msra.mxu0 0.0
        %6888 = vmatprep.subr.mxu0 0.0
        %6889 = vmatpush1.msra.mxu0 0.0
        %6890 = vmatprep.subr.mxu0 0.0
        %6891 = vmatpush1.msra.mxu0 0.0
        %6892 = vmatprep.subr.mxu0 0.0
        %6893 = vmatpush1.msra.mxu0 0.0
        %6894 = vmatprep.subr.mxu0 0.0
        %6895 = vmatpush1.msra.mxu0 0.0
        %6896 = vmatprep.subr.mxu0 0.0
        %6897 = vmatpush1.msra.mxu0 0.0
        %6898 = vmatprep.subr.mxu0 0.0
        %6899 = vmatpush1.msra.mxu0 0.0
        %6900 = vmatprep.subr.mxu0 0.0
        %6901 = vmatpush1.msra.mxu0 0.0
        %6902 = vmatprep.subr.mxu0 0.0
        %6903 = vmatpush1.msra.mxu0 0.0
        %6904 = vmatprep.subr.mxu0 0.0
        %6905 = vmatpush1.msra.mxu0 0.0
        %6906 = vmatprep.subr.mxu0 0.0
        %6907 = vmatpush1.msra.mxu0 0.0
        %6908 = vmatprep.subr.mxu0 0.0
        %6909 = vmatpush1.msra.mxu0 0.0
        %6910 = vmatprep.subr.mxu0 0.0
        %6911 = vmatpush1.msra.mxu0 0.0
        %6912 = vmatprep.subr.mxu0 0.0
        %6913 = vmatpush1.msra.mxu0 0.0
        %6914 = vmatprep.subr.mxu0 0.0
        %6915 = vmatpush1.msra.mxu0 0.0
        %6916 = vmatprep.subr.mxu0 0.0
        %6917 = vmatpush1.msra.mxu0 0.0
        %6918 = vmatprep.subr.mxu0 0.0
        %6919 = vmatpush1.msra.mxu0 0.0
        %6920 = vmatprep.subr.mxu0 0.0
        %6921 = vmatpush1.msra.mxu0 0.0
        %6922 = vmatprep.subr.mxu0 0.0
        %6923 = vmatpush1.msra.mxu0 0.0
        %6924 = vmatprep.subr.mxu0 0.0
        %6925 = vmatpush1.msra.mxu0 0.0
        %6926 = vmatprep.subr.mxu0 0.0
        %6927 = vmatpush1.msra.mxu0 0.0
        %6928 = vmatprep.subr.mxu0 0.0
        %6929 = vmatpush1.msra.mxu0 0.0
        %6930 = vmatprep.subr.mxu0 0.0
        %6931 = vmatpush1.msra.mxu0 0.0
        %6932 = vmatprep.subr.mxu0 0.0
        %6933 = vmatpush1.msra.mxu0 0.0
        %6934 = vmatprep.subr.mxu0 0.0
        %6935 = vmatpush1.msra.mxu0 0.0
        %6936 = vmatprep.subr.mxu0 0.0
        %6937 = vmatpush1.msra.mxu0 0.0
        %6938 = vmatprep.mubr.f32.mxu0 0.0
        %6939 = vmatmul.mubr.f32.gmra.mrb[0].mxu0 %v6872
        %v6940 = vpop.f32.mrb[0].mxu0
        %v6941 = vadd.f32 %v6868, %v6940
        %v6942 = vpop.f32.mrb[0].mxu0
        %6943 = vdwg.mxu0
        %6944 = vrot.lane.b32.xlu0 %v6280, 48
        %v6945 = vpop.permute.xlu0 %6944
        %v6948 = vsel %vm1230, %v6644, 0
        %6950 = vmatprep.subr.mxu0 0.0
        %6951 = vmatpush1.msra.mxu0 %v6945
        %6952 = vmatprep.subr.mxu0 0.0
        %6953 = vmatpush1.msra.mxu0 0.0
        %6954 = vmatprep.subr.mxu0 0.0
        %6955 = vmatpush1.msra.mxu0 0.0
        %6956 = vmatprep.subr.mxu0 0.0
        %6957 = vmatpush1.msra.mxu0 0.0
        %6958 = vmatprep.subr.mxu0 0.0
        %6959 = vmatpush1.msra.mxu0 0.0
        %6960 = vmatprep.subr.mxu0 0.0
        %6961 = vmatpush1.msra.mxu0 0.0
        %6962 = vmatprep.subr.mxu0 0.0
        %6963 = vmatpush1.msra.mxu0 0.0
        %6964 = vmatprep.subr.mxu0 0.0
        %6965 = vmatpush1.msra.mxu0 0.0
        %6966 = vmatprep.subr.mxu0 0.0
        %6967 = vmatpush1.msra.mxu0 0.0
        %6968 = vmatprep.subr.mxu0 0.0
        %6969 = vmatpush1.msra.mxu0 0.0
        %6970 = vmatprep.subr.mxu0 0.0
        %6971 = vmatpush1.msra.mxu0 0.0
        %6972 = vmatprep.subr.mxu0 0.0
        %6973 = vmatpush1.msra.mxu0 0.0
        %6974 = vmatprep.subr.mxu0 0.0
        %6975 = vmatpush1.msra.mxu0 0.0
        %6976 = vmatprep.subr.mxu0 0.0
        %6977 = vmatpush1.msra.mxu0 0.0
        %6978 = vmatprep.subr.mxu0 0.0
        %6979 = vmatpush1.msra.mxu0 0.0
        %6980 = vmatprep.subr.mxu0 0.0
        %6981 = vmatpush1.msra.mxu0 0.0
        %6982 = vmatprep.subr.mxu0 0.0
        %6983 = vmatpush1.msra.mxu0 0.0
        %6984 = vmatprep.subr.mxu0 0.0
        %6985 = vmatpush1.msra.mxu0 0.0
        %6986 = vmatprep.subr.mxu0 0.0
        %6987 = vmatpush1.msra.mxu0 0.0
        %6988 = vmatprep.subr.mxu0 0.0
        %6989 = vmatpush1.msra.mxu0 0.0
        %6990 = vmatprep.subr.mxu0 0.0
        %6991 = vmatpush1.msra.mxu0 0.0
        %6992 = vmatprep.subr.mxu0 0.0
        %6993 = vmatpush1.msra.mxu0 0.0
        %6994 = vmatprep.subr.mxu0 0.0
        %6995 = vmatpush1.msra.mxu0 0.0
        %6996 = vmatprep.subr.mxu0 0.0
        %6997 = vmatpush1.msra.mxu0 0.0
        %6998 = vmatprep.subr.mxu0 0.0
        %6999 = vmatpush1.msra.mxu0 0.0
        %7000 = vmatprep.subr.mxu0 0.0
        %7001 = vmatpush1.msra.mxu0 0.0
        %7002 = vmatprep.subr.mxu0 0.0
        %7003 = vmatpush1.msra.mxu0 0.0
        %7004 = vmatprep.subr.mxu0 0.0
        %7005 = vmatpush1.msra.mxu0 0.0
        %7006 = vmatprep.subr.mxu0 0.0
        %7007 = vmatpush1.msra.mxu0 0.0
        %7008 = vmatprep.subr.mxu0 0.0
        %7009 = vmatpush1.msra.mxu0 0.0
        %7010 = vmatprep.subr.mxu0 0.0
        %7011 = vmatpush1.msra.mxu0 0.0
        %7012 = vmatprep.subr.mxu0 0.0
        %7013 = vmatpush1.msra.mxu0 0.0
        %7014 = vmatprep.mubr.f32.mxu0 0.0
        %7015 = vmatmul.mubr.f32.gmra.mrb[0].mxu0 %v6948
        %v7016 = vpop.f32.mrb[0].mxu0
        %v7017 = vadd.f32 0.0, %v7016
        %v7018 = vpop.f32.mrb[0].mxu0
        %7019 = vdwg.mxu0
        %v7021 = vsel %vm1230, %v7017, 0
        %7023 = vmatprep.subr.mxu0 0.0
        %7024 = vmatpush1.msra.mxu0 %v6200
        %7025 = vmatprep.subr.mxu0 0.0
        %7026 = vmatpush1.msra.mxu0 0.0
        %7027 = vmatprep.subr.mxu0 0.0
        %7028 = vmatpush1.msra.mxu0 0.0
        %7029 = vmatprep.subr.mxu0 0.0
        %7030 = vmatpush1.msra.mxu0 0.0
        %7031 = vmatprep.subr.mxu0 0.0
        %7032 = vmatpush1.msra.mxu0 0.0
        %7033 = vmatprep.subr.mxu0 0.0
        %7034 = vmatpush1.msra.mxu0 0.0
        %7035 = vmatprep.subr.mxu0 0.0
        %7036 = vmatpush1.msra.mxu0 0.0
        %7037 = vmatprep.subr.mxu0 0.0
        %7038 = vmatpush1.msra.mxu0 0.0
        %7039 = vmatprep.subr.mxu0 0.0
        %7040 = vmatpush1.msra.mxu0 0.0
        %7041 = vmatprep.subr.mxu0 0.0
        %7042 = vmatpush1.msra.mxu0 0.0
        %7043 = vmatprep.subr.mxu0 0.0
        %7044 = vmatpush1.msra.mxu0 0.0
        %7045 = vmatprep.subr.mxu0 0.0
        %7046 = vmatpush1.msra.mxu0 0.0
        %7047 = vmatprep.subr.mxu0 0.0
        %7048 = vmatpush1.msra.mxu0 0.0
        %7049 = vmatprep.subr.mxu0 0.0
        %7050 = vmatpush1.msra.mxu0 0.0
        %7051 = vmatprep.subr.mxu0 0.0
        %7052 = vmatpush1.msra.mxu0 0.0
        %7053 = vmatprep.subr.mxu0 0.0
        %7054 = vmatpush1.msra.mxu0 0.0
        %7055 = vmatprep.subr.mxu0 0.0
        %7056 = vmatpush1.msra.mxu0 0.0
        %7057 = vmatprep.subr.mxu0 0.0
        %7058 = vmatpush1.msra.mxu0 0.0
        %7059 = vmatprep.subr.mxu0 0.0
        %7060 = vmatpush1.msra.mxu0 0.0
        %7061 = vmatprep.subr.mxu0 0.0
        %7062 = vmatpush1.msra.mxu0 0.0
        %7063 = vmatprep.subr.mxu0 0.0
        %7064 = vmatpush1.msra.mxu0 0.0
        %7065 = vmatprep.subr.mxu0 0.0
        %7066 = vmatpush1.msra.mxu0 0.0
        %7067 = vmatprep.subr.mxu0 0.0
        %7068 = vmatpush1.msra.mxu0 0.0
        %7069 = vmatprep.subr.mxu0 0.0
        %7070 = vmatpush1.msra.mxu0 0.0
        %7071 = vmatprep.subr.mxu0 0.0
        %7072 = vmatpush1.msra.mxu0 0.0
        %7073 = vmatprep.subr.mxu0 0.0
        %7074 = vmatpush1.msra.mxu0 0.0
        %7075 = vmatprep.subr.mxu0 0.0
        %7076 = vmatpush1.msra.mxu0 0.0
        %7077 = vmatprep.subr.mxu0 0.0
        %7078 = vmatpush1.msra.mxu0 0.0
        %7079 = vmatprep.subr.mxu0 0.0
        %7080 = vmatpush1.msra.mxu0 0.0
        %7081 = vmatprep.subr.mxu0 0.0
        %7082 = vmatpush1.msra.mxu0 0.0
        %7083 = vmatprep.subr.mxu0 0.0
        %7084 = vmatpush1.msra.mxu0 0.0
        %7085 = vmatprep.subr.mxu0 0.0
        %7086 = vmatpush1.msra.mxu0 0.0
        %7087 = vmatprep.mubr.f32.mxu0 0.0
        %7088 = vmatmul.mubr.f32.gmra.mrb[0].mxu0 %v7021
        %v7089 = vpop.f32.mrb[0].mxu0
        %v7090 = vadd.f32 0.0, %v7089
        %v7091 = vpop.f32.mrb[0].mxu0
        %7092 = vdwg.mxu0
        %v7093 = vadd.f32 %v6941, %v7090
        %7094 = vrot.lane.b32.xlu0 %v6280, 40
        %v7095 = vpop.permute.xlu0 %7094
        %v7098 = vsel %vm1230, %v6645, 0
        %7100 = vmatprep.subr.mxu0 0.0
        %7101 = vmatpush1.msra.mxu0 %v7095
        %7102 = vmatprep.subr.mxu0 0.0
        %7103 = vmatpush1.msra.mxu0 0.0
        %7104 = vmatprep.subr.mxu0 0.0
        %7105 = vmatpush1.msra.mxu0 0.0
        %7106 = vmatprep.subr.mxu0 0.0
        %7107 = vmatpush1.msra.mxu0 0.0
        %7108 = vmatprep.subr.mxu0 0.0
        %7109 = vmatpush1.msra.mxu0 0.0
        %7110 = vmatprep.subr.mxu0 0.0
        %7111 = vmatpush1.msra.mxu0 0.0
        %7112 = vmatprep.subr.mxu0 0.0
        %7113 = vmatpush1.msra.mxu0 0.0
        %7114 = vmatprep.subr.mxu0 0.0
        %7115 = vmatpush1.msra.mxu0 0.0
        %7116 = vmatprep.subr.mxu0 0.0
        %7117 = vmatpush1.msra.mxu0 0.0
        %7118 = vmatprep.subr.mxu0 0.0
        %7119 = vmatpush1.msra.mxu0 0.0
        %7120 = vmatprep.subr.mxu0 0.0
        %7121 = vmatpush1.msra.mxu0 0.0
        %7122 = vmatprep.subr.mxu0 0.0
        %7123 = vmatpush1.msra.mxu0 0.0
        %7124 = vmatprep.subr.mxu0 0.0
        %7125 = vmatpush1.msra.mxu0 0.0
        %7126 = vmatprep.subr.mxu0 0.0
        %7127 = vmatpush1.msra.mxu0 0.0
        %7128 = vmatprep.subr.mxu0 0.0
        %7129 = vmatpush1.msra.mxu0 0.0
        %7130 = vmatprep.subr.mxu0 0.0
        %7131 = vmatpush1.msra.mxu0 0.0
        %7132 = vmatprep.subr.mxu0 0.0
        %7133 = vmatpush1.msra.mxu0 0.0
        %7134 = vmatprep.subr.mxu0 0.0
        %7135 = vmatpush1.msra.mxu0 0.0
        %7136 = vmatprep.subr.mxu0 0.0
        %7137 = vmatpush1.msra.mxu0 0.0
        %7138 = vmatprep.subr.mxu0 0.0
        %7139 = vmatpush1.msra.mxu0 0.0
        %7140 = vmatprep.subr.mxu0 0.0
        %7141 = vmatpush1.msra.mxu0 0.0
        %7142 = vmatprep.subr.mxu0 0.0
        %7143 = vmatpush1.msra.mxu0 0.0
        %7144 = vmatprep.subr.mxu0 0.0
        %7145 = vmatpush1.msra.mxu0 0.0
        %7146 = vmatprep.subr.mxu0 0.0
        %7147 = vmatpush1.msra.mxu0 0.0
        %7148 = vmatprep.subr.mxu0 0.0
        %7149 = vmatpush1.msra.mxu0 0.0
        %7150 = vmatprep.subr.mxu0 0.0
        %7151 = vmatpush1.msra.mxu0 0.0
        %7152 = vmatprep.subr.mxu0 0.0
        %7153 = vmatpush1.msra.mxu0 0.0
        %7154 = vmatprep.subr.mxu0 0.0
        %7155 = vmatpush1.msra.mxu0 0.0
        %7156 = vmatprep.subr.mxu0 0.0
        %7157 = vmatpush1.msra.mxu0 0.0
        %7158 = vmatprep.subr.mxu0 0.0
        %7159 = vmatpush1.msra.mxu0 0.0
        %7160 = vmatprep.subr.mxu0 0.0
        %7161 = vmatpush1.msra.mxu0 0.0
        %7162 = vmatprep.subr.mxu0 0.0
        %7163 = vmatpush1.msra.mxu0 0.0
        %7164 = vmatprep.mubr.f32.mxu0 0.0
        %7165 = vmatmul.mubr.f32.gmra.mrb[0].mxu0 %v7098
        %v7166 = vpop.f32.mrb[0].mxu0
        %v7167 = vadd.f32 0.0, %v7166
        %v7168 = vpop.f32.mrb[0].mxu0
        %7169 = vdwg.mxu0
        %v7171 = vsel %vm1230, %v7167, 0
        %7173 = vmatprep.subr.mxu0 0.0
        %7174 = vmatpush1.msra.mxu0 %v6201
        %7175 = vmatprep.subr.mxu0 0.0
        %7176 = vmatpush1.msra.mxu0 0.0
        %7177 = vmatprep.subr.mxu0 0.0
        %7178 = vmatpush1.msra.mxu0 0.0
        %7179 = vmatprep.subr.mxu0 0.0
        %7180 = vmatpush1.msra.mxu0 0.0
        %7181 = vmatprep.subr.mxu0 0.0
        %7182 = vmatpush1.msra.mxu0 0.0
        %7183 = vmatprep.subr.mxu0 0.0
        %7184 = vmatpush1.msra.mxu0 0.0
        %7185 = vmatprep.subr.mxu0 0.0
        %7186 = vmatpush1.msra.mxu0 0.0
        %7187 = vmatprep.subr.mxu0 0.0
        %7188 = vmatpush1.msra.mxu0 0.0
        %7189 = vmatprep.subr.mxu0 0.0
        %7190 = vmatpush1.msra.mxu0 0.0
        %7191 = vmatprep.subr.mxu0 0.0
        %7192 = vmatpush1.msra.mxu0 0.0
        %7193 = vmatprep.subr.mxu0 0.0
        %7194 = vmatpush1.msra.mxu0 0.0
        %7195 = vmatprep.subr.mxu0 0.0
        %7196 = vmatpush1.msra.mxu0 0.0
        %7197 = vmatprep.subr.mxu0 0.0
        %7198 = vmatpush1.msra.mxu0 0.0
        %7199 = vmatprep.subr.mxu0 0.0
        %7200 = vmatpush1.msra.mxu0 0.0
        %7201 = vmatprep.subr.mxu0 0.0
        %7202 = vmatpush1.msra.mxu0 0.0
        %7203 = vmatprep.subr.mxu0 0.0
        %7204 = vmatpush1.msra.mxu0 0.0
        %7205 = vmatprep.subr.mxu0 0.0
        %7206 = vmatpush1.msra.mxu0 0.0
        %7207 = vmatprep.subr.mxu0 0.0
        %7208 = vmatpush1.msra.mxu0 0.0
        %7209 = vmatprep.subr.mxu0 0.0
        %7210 = vmatpush1.msra.mxu0 0.0
        %7211 = vmatprep.subr.mxu0 0.0
        %7212 = vmatpush1.msra.mxu0 0.0
        %7213 = vmatprep.subr.mxu0 0.0
        %7214 = vmatpush1.msra.mxu0 0.0
        %7215 = vmatprep.subr.mxu0 0.0
        %7216 = vmatpush1.msra.mxu0 0.0
        %7217 = vmatprep.subr.mxu0 0.0
        %7218 = vmatpush1.msra.mxu0 0.0
        %7219 = vmatprep.subr.mxu0 0.0
        %7220 = vmatpush1.msra.mxu0 0.0
        %7221 = vmatprep.subr.mxu0 0.0
        %7222 = vmatpush1.msra.mxu0 0.0
        %7223 = vmatprep.subr.mxu0 0.0
        %7224 = vmatpush1.msra.mxu0 0.0
        %7225 = vmatprep.subr.mxu0 0.0
        %7226 = vmatpush1.msra.mxu0 0.0
        %7227 = vmatprep.subr.mxu0 0.0
        %7228 = vmatpush1.msra.mxu0 0.0
        %7229 = vmatprep.subr.mxu0 0.0
        %7230 = vmatpush1.msra.mxu0 0.0
        %7231 = vmatprep.subr.mxu0 0.0
        %7232 = vmatpush1.msra.mxu0 0.0
        %7233 = vmatprep.subr.mxu0 0.0
        %7234 = vmatpush1.msra.mxu0 0.0
        %7235 = vmatprep.subr.mxu0 0.0
        %7236 = vmatpush1.msra.mxu0 0.0
        %7237 = vmatprep.mubr.f32.mxu0 0.0
        %7238 = vmatmul.mubr.f32.gmra.mrb[0].mxu0 %v7171
        %v7239 = vpop.f32.mrb[0].mxu0
        %v7240 = vadd.f32 0.0, %v7239
        %v7241 = vpop.f32.mrb[0].mxu0
        %7242 = vdwg.mxu0
        %v7243 = vadd.f32 %v7093, %v7240
        %v7245 = vlaneseq
        %v7246 = vshrl.u32 %v7245, 7
        %v7247 = vsub.s32 0, %v7246
        %v7248 = vrot.slane %v6203, %v7247
        %v7250 = vadd.f32 %v7243, %v7248
        %v7251 = vadd.f32 %v7250, %v6189
        %s7252 = scalar_lea.vmem %s39, 1
        %v7253 = vld [vmem:[%s7252] sm:$0x1]
        %s7254 = scalar_lea.vmem %s41, 1
        %v7255 = vld [vmem:[%s7254] sm:$0x1]
        %v7256 = vsel %vm1153, %v7251, 0.0
        %7257 = vadd.xlane.f32.xlu0 %v7256
        %v7258 = vpop.xlane.xlu0 %7257
        %v7259 = vmul.f32 %v7258, %v2200
        %v7260 = vsub.f32 %v7251, %v7259
        %v7261 = vmul.f32 %v7260, %v7260
        %v7262 = vsel %vm1153, %v7261, 0.0
        %7263 = vadd.xlane.f32.xlu0 %v7262
        %v7264 = vpop.xlane.xlu0 %7263
        %v7265 = vmul.f32 %v7264, %v2200
        %v7266 = vadd.f32 %v7265, 1e-05
        %v7267 = vrsqrt.pop %v7266
        %v7268 = vmul.f32 %v7260, %v7267
        %v7270 = vlaneseq
        %v7271 = vshrl.u32 %v7270, 7
        %v7272 = vsub.s32 0, %v7271
        %v7273 = vrot.slane %v7253, %v7272
        %v7275 = vmul.f32 %v7268, %v7273
        %v7277 = vlaneseq
        %v7278 = vshrl.u32 %v7277, 7
        %v7279 = vsub.s32 0, %v7278
        %v7280 = vrot.slane %v7255, %v7279
        %v7282 = vadd.f32 %v7275, %v7280
        %s7283 = scalar_lea.vmem %s43, 32
        %v7284 = vld [vmem:[%s7283] sm:$0xff]
        %v7285 = vld [vmem:[%s7283 + $0x8] sm:$0xff]
        %v7286 = vld [vmem:[%s7283 + $0x10] sm:$0xff]
        %v7287 = vld [vmem:[%s7283 + $0x18] sm:$0xff]
        %s7288 = scalar_lea.vmem %s45, 1
        %v7289 = vld [vmem:[%s7288] sm:$0x1]
        %s7290 = scalar_lea.vmem %s47, 32
        %v7291 = vld [vmem:[%s7290] sm:$0xff]
        %v7292 = vld [vmem:[%s7290 + $0x8] sm:$0xff]
        %v7293 = vld [vmem:[%s7290 + $0x10] sm:$0xff]
        %v7294 = vld [vmem:[%s7290 + $0x18] sm:$0xff]
        %s7295 = scalar_lea.vmem %s49, 1
        %v7296 = vld [vmem:[%s7295] sm:$0x1]
        %s7297 = scalar_lea.vmem %s51, 1
        %v7298 = vld [vmem:[%s7297] sm:$0x1]
        %s7299 = scalar_lea.vmem %s53, 1
        %v7300 = vld [vmem:[%s7299] sm:$0x1]
        %s7301 = scalar_lea.vmem %s55, 1
        %v7302 = vld [vmem:[%s7301] sm:$0x1]
        %s7303 = scalar_lea.vmem %s57, 1
        %v7304 = vld [vmem:[%s7303] sm:$0x1]
        %s7305 = scalar_lea.vmem %s59, 32
        %v7306 = vld [vmem:[%s7305] sm:$0xff]
        %v7307 = vld [vmem:[%s7305 + $0x8] sm:$0xff]
        %v7308 = vld [vmem:[%s7305 + $0x10] sm:$0xff]
        %v7309 = vld [vmem:[%s7305 + $0x18] sm:$0xff]
        %s7310 = scalar_lea.vmem %s61, 1
        %v7311 = vld [vmem:[%s7310] sm:$0x1]
        %s7312 = scalar_lea.vmem %s63, 128
        %v7313 = vld [vmem:[%s7312] sm:$0xff]
        %v7314 = vld [vmem:[%s7312 + $0x8] sm:$0xff]
        %v7315 = vld [vmem:[%s7312 + $0x10] sm:$0xff]
        %v7316 = vld [vmem:[%s7312 + $0x18] sm:$0xff]
        %v7317 = vld [vmem:[%s7312 + $0x20] sm:$0xff]
        %v7318 = vld [vmem:[%s7312 + $0x28] sm:$0xff]
        %v7319 = vld [vmem:[%s7312 + $0x30] sm:$0xff]
        %v7320 = vld [vmem:[%s7312 + $0x38] sm:$0xff]
        %v7321 = vld [vmem:[%s7312 + $0x40] sm:$0xff]
        %v7322 = vld [vmem:[%s7312 + $0x48] sm:$0xff]
        %v7323 = vld [vmem:[%s7312 + $0x50] sm:$0xff]
        %v7324 = vld [vmem:[%s7312 + $0x58] sm:$0xff]
        %v7325 = vld [vmem:[%s7312 + $0x60] sm:$0xff]
        %v7326 = vld [vmem:[%s7312 + $0x68] sm:$0xff]
        %v7327 = vld [vmem:[%s7312 + $0x70] sm:$0xff]
        %v7328 = vld [vmem:[%s7312 + $0x78] sm:$0xff]
        %s7329 = scalar_lea.vmem %s65, 1
        %v7330 = vld [vmem:[%s7329] sm:$0x1]
        %v7332 = vlaneseq
        %v7333 = vshrl.u32 %v7332, 7
        %v7334 = vsub.s32 0, %v7333
        %v7335 = vrot.slane %v7289, %v7334
        %v7338 = vsel %vm1153, %v7282, 0
        %7340 = vmatprep.subr.mxu0 0.0
        %7341 = vmatpush1.msra.mxu0 %v7284
        %7342 = vmatprep.subr.mxu0 0.0
        %7343 = vmatpush1.msra.mxu0 %v7285
        %7344 = vmatprep.subr.mxu0 0.0
        %7345 = vmatpush1.msra.mxu0 %v7286
        %7346 = vmatprep.subr.mxu0 0.0
        %7347 = vmatpush1.msra.mxu0 %v7287
        %7348 = vmatprep.subr.mxu0 0.0
        %7349 = vmatpush1.msra.mxu0 0.0
        %7350 = vmatprep.subr.mxu0 0.0
        %7351 = vmatpush1.msra.mxu0 0.0
        %7352 = vmatprep.subr.mxu0 0.0
        %7353 = vmatpush1.msra.mxu0 0.0
        %7354 = vmatprep.subr.mxu0 0.0
        %7355 = vmatpush1.msra.mxu0 0.0
        %7356 = vmatprep.subr.mxu0 0.0
        %7357 = vmatpush1.msra.mxu0 0.0
        %7358 = vmatprep.subr.mxu0 0.0
        %7359 = vmatpush1.msra.mxu0 0.0
        %7360 = vmatprep.subr.mxu0 0.0
        %7361 = vmatpush1.msra.mxu0 0.0
        %7362 = vmatprep.subr.mxu0 0.0
        %7363 = vmatpush1.msra.mxu0 0.0
        %7364 = vmatprep.subr.mxu0 0.0
        %7365 = vmatpush1.msra.mxu0 0.0
        %7366 = vmatprep.subr.mxu0 0.0
        %7367 = vmatpush1.msra.mxu0 0.0
        %7368 = vmatprep.subr.mxu0 0.0
        %7369 = vmatpush1.msra.mxu0 0.0
        %7370 = vmatprep.subr.mxu0 0.0
        %7371 = vmatpush1.msra.mxu0 0.0
        %7372 = vmatprep.subr.mxu0 0.0
        %7373 = vmatpush1.msra.mxu0 0.0
        %7374 = vmatprep.subr.mxu0 0.0
        %7375 = vmatpush1.msra.mxu0 0.0
        %7376 = vmatprep.subr.mxu0 0.0
        %7377 = vmatpush1.msra.mxu0 0.0
        %7378 = vmatprep.subr.mxu0 0.0
        %7379 = vmatpush1.msra.mxu0 0.0
        %7380 = vmatprep.subr.mxu0 0.0
        %7381 = vmatpush1.msra.mxu0 0.0
        %7382 = vmatprep.subr.mxu0 0.0
        %7383 = vmatpush1.msra.mxu0 0.0
        %7384 = vmatprep.subr.mxu0 0.0
        %7385 = vmatpush1.msra.mxu0 0.0
        %7386 = vmatprep.subr.mxu0 0.0
        %7387 = vmatpush1.msra.mxu0 0.0
        %7388 = vmatprep.subr.mxu0 0.0
        %7389 = vmatpush1.msra.mxu0 0.0
        %7390 = vmatprep.subr.mxu0 0.0
        %7391 = vmatpush1.msra.mxu0 0.0
        %7392 = vmatprep.subr.mxu0 0.0
        %7393 = vmatpush1.msra.mxu0 0.0
        %7394 = vmatprep.subr.mxu0 0.0
        %7395 = vmatpush1.msra.mxu0 0.0
        %7396 = vmatprep.subr.mxu0 0.0
        %7397 = vmatpush1.msra.mxu0 0.0
        %7398 = vmatprep.subr.mxu0 0.0
        %7399 = vmatpush1.msra.mxu0 0.0
        %7400 = vmatprep.subr.mxu0 0.0
        %7401 = vmatpush1.msra.mxu0 0.0
        %7402 = vmatprep.subr.mxu0 0.0
        %7403 = vmatpush1.msra.mxu0 0.0
        %7404 = vmatprep.mubr.f32.mxu0 0.0
        %7405 = vmatmul.mubr.f32.gmra.mrb[0].mxu0 %v7338
        %v7406 = vpop.f32.mrb[0].mxu0
        %v7407 = vadd.f32 %v7335, %v7406
        %v7408 = vpop.f32.mrb[0].mxu0
        %7409 = vdwg.mxu0
        %7414 = vrot.lane.b32.xlu0 %v7284, 96
        %v7415 = vpop.permute.xlu0 %7414
        %7416 = vrot.lane.b32.xlu0 %v7285, 96
        %v7417 = vpop.permute.xlu0 %7416
        %7418 = vrot.lane.b32.xlu0 %v7286, 96
        %v7419 = vpop.permute.xlu0 %7418
        %7420 = vrot.lane.b32.xlu0 %v7287, 96
        %v7421 = vpop.permute.xlu0 %7420
        %7426 = vrot.lane.b32.xlu0 %v7335, 96
        %v7427 = vpop.permute.xlu0 %7426
        %7429 = vmatprep.subr.mxu0 0.0
        %7430 = vmatpush1.msra.mxu0 %v7415
        %7431 = vmatprep.subr.mxu0 0.0
        %7432 = vmatpush1.msra.mxu0 %v7417
        %7433 = vmatprep.subr.mxu0 0.0
        %7434 = vmatpush1.msra.mxu0 %v7419
        %7435 = vmatprep.subr.mxu0 0.0
        %7436 = vmatpush1.msra.mxu0 %v7421
        %7437 = vmatprep.subr.mxu0 0.0
        %7438 = vmatpush1.msra.mxu0 0.0
        %7439 = vmatprep.subr.mxu0 0.0
        %7440 = vmatpush1.msra.mxu0 0.0
        %7441 = vmatprep.subr.mxu0 0.0
        %7442 = vmatpush1.msra.mxu0 0.0
        %7443 = vmatprep.subr.mxu0 0.0
        %7444 = vmatpush1.msra.mxu0 0.0
        %7445 = vmatprep.subr.mxu0 0.0
        %7446 = vmatpush1.msra.mxu0 0.0
        %7447 = vmatprep.subr.mxu0 0.0
        %7448 = vmatpush1.msra.mxu0 0.0
        %7449 = vmatprep.subr.mxu0 0.0
        %7450 = vmatpush1.msra.mxu0 0.0
        %7451 = vmatprep.subr.mxu0 0.0
        %7452 = vmatpush1.msra.mxu0 0.0
        %7453 = vmatprep.subr.mxu0 0.0
        %7454 = vmatpush1.msra.mxu0 0.0
        %7455 = vmatprep.subr.mxu0 0.0
        %7456 = vmatpush1.msra.mxu0 0.0
        %7457 = vmatprep.subr.mxu0 0.0
        %7458 = vmatpush1.msra.mxu0 0.0
        %7459 = vmatprep.subr.mxu0 0.0
        %7460 = vmatpush1.msra.mxu0 0.0
        %7461 = vmatprep.subr.mxu0 0.0
        %7462 = vmatpush1.msra.mxu0 0.0
        %7463 = vmatprep.subr.mxu0 0.0
        %7464 = vmatpush1.msra.mxu0 0.0
        %7465 = vmatprep.subr.mxu0 0.0
        %7466 = vmatpush1.msra.mxu0 0.0
        %7467 = vmatprep.subr.mxu0 0.0
        %7468 = vmatpush1.msra.mxu0 0.0
        %7469 = vmatprep.subr.mxu0 0.0
        %7470 = vmatpush1.msra.mxu0 0.0
        %7471 = vmatprep.subr.mxu0 0.0
        %7472 = vmatpush1.msra.mxu0 0.0
        %7473 = vmatprep.subr.mxu0 0.0
        %7474 = vmatpush1.msra.mxu0 0.0
        %7475 = vmatprep.subr.mxu0 0.0
        %7476 = vmatpush1.msra.mxu0 0.0
        %7477 = vmatprep.subr.mxu0 0.0
        %7478 = vmatpush1.msra.mxu0 0.0
        %7479 = vmatprep.subr.mxu0 0.0
        %7480 = vmatpush1.msra.mxu0 0.0
        %7481 = vmatprep.subr.mxu0 0.0
        %7482 = vmatpush1.msra.mxu0 0.0
        %7483 = vmatprep.subr.mxu0 0.0
        %7484 = vmatpush1.msra.mxu0 0.0
        %7485 = vmatprep.subr.mxu0 0.0
        %7486 = vmatpush1.msra.mxu0 0.0
        %7487 = vmatprep.subr.mxu0 0.0
        %7488 = vmatpush1.msra.mxu0 0.0
        %7489 = vmatprep.subr.mxu0 0.0
        %7490 = vmatpush1.msra.mxu0 0.0
        %7491 = vmatprep.subr.mxu0 0.0
        %7492 = vmatpush1.msra.mxu0 0.0
        %7493 = vmatprep.mubr.f32.mxu0 0.0
        %7494 = vmatmul.mubr.f32.gmra.mrb[0].mxu0 %v4939
        %v7495 = vpop.f32.mrb[0].mxu0
        %v7496 = vadd.f32 %v7427, %v7495
        %v7497 = vpop.f32.mrb[0].mxu0
        %7498 = vdwg.mxu0
        %v7500 = vsel %vm1230, %v7407, 0
        %v7503 = vsel %vm1230, %v7496, 0
        %7505 = vmatprep.subr.mxu0 0.0
        %7506 = vmatpush1.xpose.msra.mxu0 %v7503
        %7507 = vmatprep.subr.mxu0 0.0
        %7508 = vmatpush1.xpose.msra.mxu0 0.0
        %7509 = vmatprep.subr.mxu0 0.0
        %7510 = vmatpush1.xpose.msra.mxu0 0.0
        %7511 = vmatprep.subr.mxu0 0.0
        %7512 = vmatpush1.xpose.msra.mxu0 0.0
        %7513 = vmatprep.subr.mxu0 0.0
        %7514 = vmatpush1.xpose.msra.mxu0 0.0
        %7515 = vmatprep.subr.mxu0 0.0
        %7516 = vmatpush1.xpose.msra.mxu0 0.0
        %7517 = vmatprep.subr.mxu0 0.0
        %7518 = vmatpush1.xpose.msra.mxu0 0.0
        %7519 = vmatprep.subr.mxu0 0.0
        %7520 = vmatpush1.xpose.msra.mxu0 0.0
        %7521 = vmatprep.subr.mxu0 0.0
        %7522 = vmatpush1.xpose.msra.mxu0 0.0
        %7523 = vmatprep.subr.mxu0 0.0
        %7524 = vmatpush1.xpose.msra.mxu0 0.0
        %7525 = vmatprep.subr.mxu0 0.0
        %7526 = vmatpush1.xpose.msra.mxu0 0.0
        %7527 = vmatprep.subr.mxu0 0.0
        %7528 = vmatpush1.xpose.msra.mxu0 0.0
        %7529 = vmatprep.subr.mxu0 0.0
        %7530 = vmatpush1.xpose.msra.mxu0 0.0
        %7531 = vmatprep.subr.mxu0 0.0
        %7532 = vmatpush1.xpose.msra.mxu0 0.0
        %7533 = vmatprep.subr.mxu0 0.0
        %7534 = vmatpush1.xpose.msra.mxu0 0.0
        %7535 = vmatprep.subr.mxu0 0.0
        %7536 = vmatpush1.xpose.msra.mxu0 0.0
        %7537 = vmatprep.subr.mxu0 0.0
        %7538 = vmatpush1.xpose.msra.mxu0 0.0
        %7539 = vmatprep.subr.mxu0 0.0
        %7540 = vmatpush1.xpose.msra.mxu0 0.0
        %7541 = vmatprep.subr.mxu0 0.0
        %7542 = vmatpush1.xpose.msra.mxu0 0.0
        %7543 = vmatprep.subr.mxu0 0.0
        %7544 = vmatpush1.xpose.msra.mxu0 0.0
        %7545 = vmatprep.subr.mxu0 0.0
        %7546 = vmatpush1.xpose.msra.mxu0 0.0
        %7547 = vmatprep.subr.mxu0 0.0
        %7548 = vmatpush1.xpose.msra.mxu0 0.0
        %7549 = vmatprep.subr.mxu0 0.0
        %7550 = vmatpush1.xpose.msra.mxu0 0.0
        %7551 = vmatprep.subr.mxu0 0.0
        %7552 = vmatpush1.xpose.msra.mxu0 0.0
        %7553 = vmatprep.subr.mxu0 0.0
        %7554 = vmatpush1.xpose.msra.mxu0 0.0
        %7555 = vmatprep.subr.mxu0 0.0
        %7556 = vmatpush1.xpose.msra.mxu0 0.0
        %7557 = vmatprep.subr.mxu0 0.0
        %7558 = vmatpush1.xpose.msra.mxu0 0.0
        %7559 = vmatprep.subr.mxu0 0.0
        %7560 = vmatpush1.xpose.msra.mxu0 0.0
        %7561 = vmatprep.subr.mxu0 0.0
        %7562 = vmatpush1.xpose.msra.mxu0 0.0
        %7563 = vmatprep.subr.mxu0 0.0
        %7564 = vmatpush1.xpose.msra.mxu0 0.0
        %7565 = vmatprep.subr.mxu0 0.0
        %7566 = vmatpush1.xpose.msra.mxu0 0.0
        %7567 = vmatprep.subr.mxu0 0.0
        %7568 = vmatpush1.xpose.msra.mxu0 0.0
        %7569 = vmatprep.mubr.f32.mxu0 0.0
        %7570 = vmatmul.mubr.f32.gmra.mrb[0].mxu0 %v7500
        %v7571 = vpop.f32.mrb[0].mxu0
        %v7572 = vadd.f32 0.0, %v7571
        %v7573 = vpop.f32.mrb[0].mxu0
        %7574 = vdwg.mxu0
        %7575 = vrot.lane.b32.xlu0 %v7407, 120
        %v7576 = vpop.permute.xlu0 %7575
        %7577 = vrot.lane.b32.xlu0 %v7496, 120
        %v7578 = vpop.permute.xlu0 %7577
        %v7579 = vsel %vm1230, %v7576, 0
        %v7581 = vsel %vm1230, %v7578, 0
        %7583 = vmatprep.subr.mxu0 0.0
        %7584 = vmatpush1.xpose.msra.mxu0 %v7581
        %7585 = vmatprep.subr.mxu0 0.0
        %7586 = vmatpush1.xpose.msra.mxu0 0.0
        %7587 = vmatprep.subr.mxu0 0.0
        %7588 = vmatpush1.xpose.msra.mxu0 0.0
        %7589 = vmatprep.subr.mxu0 0.0
        %7590 = vmatpush1.xpose.msra.mxu0 0.0
        %7591 = vmatprep.subr.mxu0 0.0
        %7592 = vmatpush1.xpose.msra.mxu0 0.0
        %7593 = vmatprep.subr.mxu0 0.0
        %7594 = vmatpush1.xpose.msra.mxu0 0.0
        %7595 = vmatprep.subr.mxu0 0.0
        %7596 = vmatpush1.xpose.msra.mxu0 0.0
        %7597 = vmatprep.subr.mxu0 0.0
        %7598 = vmatpush1.xpose.msra.mxu0 0.0
        %7599 = vmatprep.subr.mxu0 0.0
        %7600 = vmatpush1.xpose.msra.mxu0 0.0
        %7601 = vmatprep.subr.mxu0 0.0
        %7602 = vmatpush1.xpose.msra.mxu0 0.0
        %7603 = vmatprep.subr.mxu0 0.0
        %7604 = vmatpush1.xpose.msra.mxu0 0.0
        %7605 = vmatprep.subr.mxu0 0.0
        %7606 = vmatpush1.xpose.msra.mxu0 0.0
        %7607 = vmatprep.subr.mxu0 0.0
        %7608 = vmatpush1.xpose.msra.mxu0 0.0
        %7609 = vmatprep.subr.mxu0 0.0
        %7610 = vmatpush1.xpose.msra.mxu0 0.0
        %7611 = vmatprep.subr.mxu0 0.0
        %7612 = vmatpush1.xpose.msra.mxu0 0.0
        %7613 = vmatprep.subr.mxu0 0.0
        %7614 = vmatpush1.xpose.msra.mxu0 0.0
        %7615 = vmatprep.subr.mxu0 0.0
        %7616 = vmatpush1.xpose.msra.mxu0 0.0
        %7617 = vmatprep.subr.mxu0 0.0
        %7618 = vmatpush1.xpose.msra.mxu0 0.0
        %7619 = vmatprep.subr.mxu0 0.0
        %7620 = vmatpush1.xpose.msra.mxu0 0.0
        %7621 = vmatprep.subr.mxu0 0.0
        %7622 = vmatpush1.xpose.msra.mxu0 0.0
        %7623 = vmatprep.subr.mxu0 0.0
        %7624 = vmatpush1.xpose.msra.mxu0 0.0
        %7625 = vmatprep.subr.mxu0 0.0
        %7626 = vmatpush1.xpose.msra.mxu0 0.0
        %7627 = vmatprep.subr.mxu0 0.0
        %7628 = vmatpush1.xpose.msra.mxu0 0.0
        %7629 = vmatprep.subr.mxu0 0.0
        %7630 = vmatpush1.xpose.msra.mxu0 0.0
        %7631 = vmatprep.subr.mxu0 0.0
        %7632 = vmatpush1.xpose.msra.mxu0 0.0
        %7633 = vmatprep.subr.mxu0 0.0
        %7634 = vmatpush1.xpose.msra.mxu0 0.0
        %7635 = vmatprep.subr.mxu0 0.0
        %7636 = vmatpush1.xpose.msra.mxu0 0.0
        %7637 = vmatprep.subr.mxu0 0.0
        %7638 = vmatpush1.xpose.msra.mxu0 0.0
        %7639 = vmatprep.subr.mxu0 0.0
        %7640 = vmatpush1.xpose.msra.mxu0 0.0
        %7641 = vmatprep.subr.mxu0 0.0
        %7642 = vmatpush1.xpose.msra.mxu0 0.0
        %7643 = vmatprep.subr.mxu0 0.0
        %7644 = vmatpush1.xpose.msra.mxu0 0.0
        %7645 = vmatprep.subr.mxu0 0.0
        %7646 = vmatpush1.xpose.msra.mxu0 0.0
        %7647 = vmatprep.mubr.f32.mxu0 0.0
        %7648 = vmatmul.mubr.f32.gmra.mrb[0].mxu0 %v7579
        %v7649 = vpop.f32.mrb[0].mxu0
        %v7650 = vadd.f32 0.0, %v7649
        %v7651 = vpop.f32.mrb[0].mxu0
        %7652 = vdwg.mxu0
        %7653 = vrot.lane.b32.xlu0 %v7407, 112
        %v7654 = vpop.permute.xlu0 %7653
        %7655 = vrot.lane.b32.xlu0 %v7496, 112
        %v7656 = vpop.permute.xlu0 %7655
        %v7657 = vsel %vm1230, %v7654, 0
        %v7659 = vsel %vm1230, %v7656, 0
        %7661 = vmatprep.subr.mxu0 0.0
        %7662 = vmatpush1.xpose.msra.mxu0 %v7659
        %7663 = vmatprep.subr.mxu0 0.0
        %7664 = vmatpush1.xpose.msra.mxu0 0.0
        %7665 = vmatprep.subr.mxu0 0.0
        %7666 = vmatpush1.xpose.msra.mxu0 0.0
        %7667 = vmatprep.subr.mxu0 0.0
        %7668 = vmatpush1.xpose.msra.mxu0 0.0
        %7669 = vmatprep.subr.mxu0 0.0
        %7670 = vmatpush1.xpose.msra.mxu0 0.0
        %7671 = vmatprep.subr.mxu0 0.0
        %7672 = vmatpush1.xpose.msra.mxu0 0.0
        %7673 = vmatprep.subr.mxu0 0.0
        %7674 = vmatpush1.xpose.msra.mxu0 0.0
        %7675 = vmatprep.subr.mxu0 0.0
        %7676 = vmatpush1.xpose.msra.mxu0 0.0
        %7677 = vmatprep.subr.mxu0 0.0
        %7678 = vmatpush1.xpose.msra.mxu0 0.0
        %7679 = vmatprep.subr.mxu0 0.0
        %7680 = vmatpush1.xpose.msra.mxu0 0.0
        %7681 = vmatprep.subr.mxu0 0.0
        %7682 = vmatpush1.xpose.msra.mxu0 0.0
        %7683 = vmatprep.subr.mxu0 0.0
        %7684 = vmatpush1.xpose.msra.mxu0 0.0
        %7685 = vmatprep.subr.mxu0 0.0
        %7686 = vmatpush1.xpose.msra.mxu0 0.0
        %7687 = vmatprep.subr.mxu0 0.0
        %7688 = vmatpush1.xpose.msra.mxu0 0.0
        %7689 = vmatprep.subr.mxu0 0.0
        %7690 = vmatpush1.xpose.msra.mxu0 0.0
        %7691 = vmatprep.subr.mxu0 0.0
        %7692 = vmatpush1.xpose.msra.mxu0 0.0
        %7693 = vmatprep.subr.mxu0 0.0
        %7694 = vmatpush1.xpose.msra.mxu0 0.0
        %7695 = vmatprep.subr.mxu0 0.0
        %7696 = vmatpush1.xpose.msra.mxu0 0.0
        %7697 = vmatprep.subr.mxu0 0.0
        %7698 = vmatpush1.xpose.msra.mxu0 0.0
        %7699 = vmatprep.subr.mxu0 0.0
        %7700 = vmatpush1.xpose.msra.mxu0 0.0
        %7701 = vmatprep.subr.mxu0 0.0
        %7702 = vmatpush1.xpose.msra.mxu0 0.0
        %7703 = vmatprep.subr.mxu0 0.0
        %7704 = vmatpush1.xpose.msra.mxu0 0.0
        %7705 = vmatprep.subr.mxu0 0.0
        %7706 = vmatpush1.xpose.msra.mxu0 0.0
        %7707 = vmatprep.subr.mxu0 0.0
        %7708 = vmatpush1.xpose.msra.mxu0 0.0
        %7709 = vmatprep.subr.mxu0 0.0
        %7710 = vmatpush1.xpose.msra.mxu0 0.0
        %7711 = vmatprep.subr.mxu0 0.0
        %7712 = vmatpush1.xpose.msra.mxu0 0.0
        %7713 = vmatprep.subr.mxu0 0.0
        %7714 = vmatpush1.xpose.msra.mxu0 0.0
        %7715 = vmatprep.subr.mxu0 0.0
        %7716 = vmatpush1.xpose.msra.mxu0 0.0
        %7717 = vmatprep.subr.mxu0 0.0
        %7718 = vmatpush1.xpose.msra.mxu0 0.0
        %7719 = vmatprep.subr.mxu0 0.0
        %7720 = vmatpush1.xpose.msra.mxu0 0.0
        %7721 = vmatprep.subr.mxu0 0.0
        %7722 = vmatpush1.xpose.msra.mxu0 0.0
        %7723 = vmatprep.subr.mxu0 0.0
        %7724 = vmatpush1.xpose.msra.mxu0 0.0
        %7725 = vmatprep.mubr.f32.mxu0 0.0
        %7726 = vmatmul.mubr.f32.gmra.mrb[0].mxu0 %v7657
        %v7727 = vpop.f32.mrb[0].mxu0
        %v7728 = vadd.f32 0.0, %v7727
        %v7729 = vpop.f32.mrb[0].mxu0
        %7730 = vdwg.mxu0
        %7731 = vrot.lane.b32.xlu0 %v7407, 104
        %v7732 = vpop.permute.xlu0 %7731
        %7733 = vrot.lane.b32.xlu0 %v7496, 104
        %v7734 = vpop.permute.xlu0 %7733
        %v7735 = vsel %vm1230, %v7732, 0
        %v7737 = vsel %vm1230, %v7734, 0
        %7739 = vmatprep.subr.mxu0 0.0
        %7740 = vmatpush1.xpose.msra.mxu0 %v7737
        %7741 = vmatprep.subr.mxu0 0.0
        %7742 = vmatpush1.xpose.msra.mxu0 0.0
        %7743 = vmatprep.subr.mxu0 0.0
        %7744 = vmatpush1.xpose.msra.mxu0 0.0
        %7745 = vmatprep.subr.mxu0 0.0
        %7746 = vmatpush1.xpose.msra.mxu0 0.0
        %7747 = vmatprep.subr.mxu0 0.0
        %7748 = vmatpush1.xpose.msra.mxu0 0.0
        %7749 = vmatprep.subr.mxu0 0.0
        %7750 = vmatpush1.xpose.msra.mxu0 0.0
        %7751 = vmatprep.subr.mxu0 0.0
        %7752 = vmatpush1.xpose.msra.mxu0 0.0
        %7753 = vmatprep.subr.mxu0 0.0
        %7754 = vmatpush1.xpose.msra.mxu0 0.0
        %7755 = vmatprep.subr.mxu0 0.0
        %7756 = vmatpush1.xpose.msra.mxu0 0.0
        %7757 = vmatprep.subr.mxu0 0.0
        %7758 = vmatpush1.xpose.msra.mxu0 0.0
        %7759 = vmatprep.subr.mxu0 0.0
        %7760 = vmatpush1.xpose.msra.mxu0 0.0
        %7761 = vmatprep.subr.mxu0 0.0
        %7762 = vmatpush1.xpose.msra.mxu0 0.0
        %7763 = vmatprep.subr.mxu0 0.0
        %7764 = vmatpush1.xpose.msra.mxu0 0.0
        %7765 = vmatprep.subr.mxu0 0.0
        %7766 = vmatpush1.xpose.msra.mxu0 0.0
        %7767 = vmatprep.subr.mxu0 0.0
        %7768 = vmatpush1.xpose.msra.mxu0 0.0
        %7769 = vmatprep.subr.mxu0 0.0
        %7770 = vmatpush1.xpose.msra.mxu0 0.0
        %7771 = vmatprep.subr.mxu0 0.0
        %7772 = vmatpush1.xpose.msra.mxu0 0.0
        %7773 = vmatprep.subr.mxu0 0.0
        %7774 = vmatpush1.xpose.msra.mxu0 0.0
        %7775 = vmatprep.subr.mxu0 0.0
        %7776 = vmatpush1.xpose.msra.mxu0 0.0
        %7777 = vmatprep.subr.mxu0 0.0
        %7778 = vmatpush1.xpose.msra.mxu0 0.0
        %7779 = vmatprep.subr.mxu0 0.0
        %7780 = vmatpush1.xpose.msra.mxu0 0.0
        %7781 = vmatprep.subr.mxu0 0.0
        %7782 = vmatpush1.xpose.msra.mxu0 0.0
        %7783 = vmatprep.subr.mxu0 0.0
        %7784 = vmatpush1.xpose.msra.mxu0 0.0
        %7785 = vmatprep.subr.mxu0 0.0
        %7786 = vmatpush1.xpose.msra.mxu0 0.0
        %7787 = vmatprep.subr.mxu0 0.0
        %7788 = vmatpush1.xpose.msra.mxu0 0.0
        %7789 = vmatprep.subr.mxu0 0.0
        %7790 = vmatpush1.xpose.msra.mxu0 0.0
        %7791 = vmatprep.subr.mxu0 0.0
        %7792 = vmatpush1.xpose.msra.mxu0 0.0
        %7793 = vmatprep.subr.mxu0 0.0
        %7794 = vmatpush1.xpose.msra.mxu0 0.0
        %7795 = vmatprep.subr.mxu0 0.0
        %7796 = vmatpush1.xpose.msra.mxu0 0.0
        %7797 = vmatprep.subr.mxu0 0.0
        %7798 = vmatpush1.xpose.msra.mxu0 0.0
        %7799 = vmatprep.subr.mxu0 0.0
        %7800 = vmatpush1.xpose.msra.mxu0 0.0
        %7801 = vmatprep.subr.mxu0 0.0
        %7802 = vmatpush1.xpose.msra.mxu0 0.0
        %7803 = vmatprep.mubr.f32.mxu0 0.0
        %7804 = vmatmul.mubr.f32.gmra.mrb[0].mxu0 %v7735
        %v7805 = vpop.f32.mrb[0].mxu0
        %v7806 = vadd.f32 0.0, %v7805
        %v7807 = vpop.f32.mrb[0].mxu0
        %7808 = vdwg.mxu0
        %v7809 = vmul.f32 %v7572, 0.35355338
        %v7810 = vmul.f32 %v7650, 0.35355338
        %v7811 = vmul.f32 %v7728, 0.35355338
        %v7812 = vmul.f32 %v7806, 0.35355338
        %v7813 = vsel %vm1104, %v7809, -1e+09
        %v7814 = vsel %vm1104, %v7810, -1e+09
        %v7815 = vsel %vm1104, %v7811, -1e+09
        %v7816 = vsel %vm1104, %v7812, -1e+09
        %v7817 = vsel %vm1230, %v7813, -inf
        %7818 = vmax.xlane.f32.xlu0 %v7817
        %v7819 = vpop.xlane.xlu0 %7818
        %v7820 = vsel %vm1230, %v7814, -inf
        %7821 = vmax.xlane.f32.xlu0 %v7820
        %v7822 = vpop.xlane.xlu0 %7821
        %v7823 = vsel %vm1230, %v7815, -inf
        %7824 = vmax.xlane.f32.xlu0 %v7823
        %v7825 = vpop.xlane.xlu0 %7824
        %v7826 = vsel %vm1230, %v7816, -inf
        %7827 = vmax.xlane.f32.xlu0 %v7826
        %v7828 = vpop.xlane.xlu0 %7827
        %v7829 = vsub.f32 %v7813, %v7819
        %v7830 = vsub.f32 %v7814, %v7822
        %v7831 = vsub.f32 %v7815, %v7825
        %v7832 = vsub.f32 %v7816, %v7828
        %v7833 = vmul.f32 %v7829, 1.442695
        %v7834 = vpow.pop %v7833
        %v7835 = vmul.f32 %v7830, 1.442695
        %v7836 = vpow.pop %v7835
        %v7837 = vmul.f32 %v7831, 1.442695
        %v7838 = vpow.pop %v7837
        %v7839 = vmul.f32 %v7832, 1.442695
        %v7840 = vpow.pop %v7839
        %v7841 = vsel %vm1230, %v7834, 0.0
        %7842 = vadd.xlane.f32.xlu0 %v7841
        %v7843 = vpop.xlane.xlu0 %7842
        %v7844 = vsel %vm1230, %v7836, 0.0
        %7845 = vadd.xlane.f32.xlu0 %v7844
        %v7846 = vpop.xlane.xlu0 %7845
        %v7847 = vsel %vm1230, %v7838, 0.0
        %7848 = vadd.xlane.f32.xlu0 %v7847
        %v7849 = vpop.xlane.xlu0 %7848
        %v7850 = vsel %vm1230, %v7840, 0.0
        %7851 = vadd.xlane.f32.xlu0 %v7850
        %v7852 = vpop.xlane.xlu0 %7851
        %v7853 = vrcp.pop %v7843
        %v7854 = vrcp.pop %v7846
        %v7855 = vrcp.pop %v7849
        %v7856 = vrcp.pop %v7852
        %v7857 = vmul.f32 %v7834, %v7853
        %v7858 = vmul.f32 %v7836, %v7854
        %v7859 = vmul.f32 %v7838, %v7855
        %v7860 = vmul.f32 %v7840, %v7856
        %7861 = vrot.lane.b32.xlu0 %v7496, 96
        %v7862 = vpop.permute.xlu0 %7861
        %v7865 = vsel %vm1230, %v7857, 0
        %7867 = vmatprep.subr.mxu0 0.0
        %7868 = vmatpush1.msra.mxu0 %v7862
        %7869 = vmatprep.subr.mxu0 0.0
        %7870 = vmatpush1.msra.mxu0 0.0
        %7871 = vmatprep.subr.mxu0 0.0
        %7872 = vmatpush1.msra.mxu0 0.0
        %7873 = vmatprep.subr.mxu0 0.0
        %7874 = vmatpush1.msra.mxu0 0.0
        %7875 = vmatprep.subr.mxu0 0.0
        %7876 = vmatpush1.msra.mxu0 0.0
        %7877 = vmatprep.subr.mxu0 0.0
        %7878 = vmatpush1.msra.mxu0 0.0
        %7879 = vmatprep.subr.mxu0 0.0
        %7880 = vmatpush1.msra.mxu0 0.0
        %7881 = vmatprep.subr.mxu0 0.0
        %7882 = vmatpush1.msra.mxu0 0.0
        %7883 = vmatprep.subr.mxu0 0.0
        %7884 = vmatpush1.msra.mxu0 0.0
        %7885 = vmatprep.subr.mxu0 0.0
        %7886 = vmatpush1.msra.mxu0 0.0
        %7887 = vmatprep.subr.mxu0 0.0
        %7888 = vmatpush1.msra.mxu0 0.0
        %7889 = vmatprep.subr.mxu0 0.0
        %7890 = vmatpush1.msra.mxu0 0.0
        %7891 = vmatprep.subr.mxu0 0.0
        %7892 = vmatpush1.msra.mxu0 0.0
        %7893 = vmatprep.subr.mxu0 0.0
        %7894 = vmatpush1.msra.mxu0 0.0
        %7895 = vmatprep.subr.mxu0 0.0
        %7896 = vmatpush1.msra.mxu0 0.0
        %7897 = vmatprep.subr.mxu0 0.0
        %7898 = vmatpush1.msra.mxu0 0.0
        %7899 = vmatprep.subr.mxu0 0.0
        %7900 = vmatpush1.msra.mxu0 0.0
        %7901 = vmatprep.subr.mxu0 0.0
        %7902 = vmatpush1.msra.mxu0 0.0
        %7903 = vmatprep.subr.mxu0 0.0
        %7904 = vmatpush1.msra.mxu0 0.0
        %7905 = vmatprep.subr.mxu0 0.0
        %7906 = vmatpush1.msra.mxu0 0.0
        %7907 = vmatprep.subr.mxu0 0.0
        %7908 = vmatpush1.msra.mxu0 0.0
        %7909 = vmatprep.subr.mxu0 0.0
        %7910 = vmatpush1.msra.mxu0 0.0
        %7911 = vmatprep.subr.mxu0 0.0
        %7912 = vmatpush1.msra.mxu0 0.0
        %7913 = vmatprep.subr.mxu0 0.0
        %7914 = vmatpush1.msra.mxu0 0.0
        %7915 = vmatprep.subr.mxu0 0.0
        %7916 = vmatpush1.msra.mxu0 0.0
        %7917 = vmatprep.subr.mxu0 0.0
        %7918 = vmatpush1.msra.mxu0 0.0
        %7919 = vmatprep.subr.mxu0 0.0
        %7920 = vmatpush1.msra.mxu0 0.0
        %7921 = vmatprep.subr.mxu0 0.0
        %7922 = vmatpush1.msra.mxu0 0.0
        %7923 = vmatprep.subr.mxu0 0.0
        %7924 = vmatpush1.msra.mxu0 0.0
        %7925 = vmatprep.subr.mxu0 0.0
        %7926 = vmatpush1.msra.mxu0 0.0
        %7927 = vmatprep.subr.mxu0 0.0
        %7928 = vmatpush1.msra.mxu0 0.0
        %7929 = vmatprep.subr.mxu0 0.0
        %7930 = vmatpush1.msra.mxu0 0.0
        %7931 = vmatprep.mubr.f32.mxu0 0.0
        %7932 = vmatmul.mubr.f32.gmra.mrb[0].mxu0 %v7865
        %v7933 = vpop.f32.mrb[0].mxu0
        %v7934 = vadd.f32 0.0, %v7933
        %v7935 = vpop.f32.mrb[0].mxu0
        %7936 = vdwg.mxu0
        %7937 = vrot.lane.b32.xlu0 %v7496, 88
        %v7938 = vpop.permute.xlu0 %7937
        %v7941 = vsel %vm1230, %v7858, 0
        %7943 = vmatprep.subr.mxu0 0.0
        %7944 = vmatpush1.msra.mxu0 %v7938
        %7945 = vmatprep.subr.mxu0 0.0
        %7946 = vmatpush1.msra.mxu0 0.0
        %7947 = vmatprep.subr.mxu0 0.0
        %7948 = vmatpush1.msra.mxu0 0.0
        %7949 = vmatprep.subr.mxu0 0.0
        %7950 = vmatpush1.msra.mxu0 0.0
        %7951 = vmatprep.subr.mxu0 0.0
        %7952 = vmatpush1.msra.mxu0 0.0
        %7953 = vmatprep.subr.mxu0 0.0
        %7954 = vmatpush1.msra.mxu0 0.0
        %7955 = vmatprep.subr.mxu0 0.0
        %7956 = vmatpush1.msra.mxu0 0.0
        %7957 = vmatprep.subr.mxu0 0.0
        %7958 = vmatpush1.msra.mxu0 0.0
        %7959 = vmatprep.subr.mxu0 0.0
        %7960 = vmatpush1.msra.mxu0 0.0
        %7961 = vmatprep.subr.mxu0 0.0
        %7962 = vmatpush1.msra.mxu0 0.0
        %7963 = vmatprep.subr.mxu0 0.0
        %7964 = vmatpush1.msra.mxu0 0.0
        %7965 = vmatprep.subr.mxu0 0.0
        %7966 = vmatpush1.msra.mxu0 0.0
        %7967 = vmatprep.subr.mxu0 0.0
        %7968 = vmatpush1.msra.mxu0 0.0
        %7969 = vmatprep.subr.mxu0 0.0
        %7970 = vmatpush1.msra.mxu0 0.0
        %7971 = vmatprep.subr.mxu0 0.0
        %7972 = vmatpush1.msra.mxu0 0.0
        %7973 = vmatprep.subr.mxu0 0.0
        %7974 = vmatpush1.msra.mxu0 0.0
        %7975 = vmatprep.subr.mxu0 0.0
        %7976 = vmatpush1.msra.mxu0 0.0
        %7977 = vmatprep.subr.mxu0 0.0
        %7978 = vmatpush1.msra.mxu0 0.0
        %7979 = vmatprep.subr.mxu0 0.0
        %7980 = vmatpush1.msra.mxu0 0.0
        %7981 = vmatprep.subr.mxu0 0.0
        %7982 = vmatpush1.msra.mxu0 0.0
        %7983 = vmatprep.subr.mxu0 0.0
        %7984 = vmatpush1.msra.mxu0 0.0
        %7985 = vmatprep.subr.mxu0 0.0
        %7986 = vmatpush1.msra.mxu0 0.0
        %7987 = vmatprep.subr.mxu0 0.0
        %7988 = vmatpush1.msra.mxu0 0.0
        %7989 = vmatprep.subr.mxu0 0.0
        %7990 = vmatpush1.msra.mxu0 0.0
        %7991 = vmatprep.subr.mxu0 0.0
        %7992 = vmatpush1.msra.mxu0 0.0
        %7993 = vmatprep.subr.mxu0 0.0
        %7994 = vmatpush1.msra.mxu0 0.0
        %7995 = vmatprep.subr.mxu0 0.0
        %7996 = vmatpush1.msra.mxu0 0.0
        %7997 = vmatprep.subr.mxu0 0.0
        %7998 = vmatpush1.msra.mxu0 0.0
        %7999 = vmatprep.subr.mxu0 0.0
        %8000 = vmatpush1.msra.mxu0 0.0
        %8001 = vmatprep.subr.mxu0 0.0
        %8002 = vmatpush1.msra.mxu0 0.0
        %8003 = vmatprep.subr.mxu0 0.0
        %8004 = vmatpush1.msra.mxu0 0.0
        %8005 = vmatprep.subr.mxu0 0.0
        %8006 = vmatpush1.msra.mxu0 0.0
        %8007 = vmatprep.mubr.f32.mxu0 0.0
        %8008 = vmatmul.mubr.f32.gmra.mrb[0].mxu0 %v7941
        %v8009 = vpop.f32.mrb[0].mxu0
        %v8010 = vadd.f32 0.0, %v8009
        %v8011 = vpop.f32.mrb[0].mxu0
        %8012 = vdwg.mxu0
        %v8014 = vsel %vm1230, %v8010, 0
        %8016 = vmatprep.subr.mxu0 0.0
        %8017 = vmatpush1.msra.mxu0 %v7292
        %8018 = vmatprep.subr.mxu0 0.0
        %8019 = vmatpush1.msra.mxu0 0.0
        %8020 = vmatprep.subr.mxu0 0.0
        %8021 = vmatpush1.msra.mxu0 0.0
        %8022 = vmatprep.subr.mxu0 0.0
        %8023 = vmatpush1.msra.mxu0 0.0
        %8024 = vmatprep.subr.mxu0 0.0
        %8025 = vmatpush1.msra.mxu0 0.0
        %8026 = vmatprep.subr.mxu0 0.0
        %8027 = vmatpush1.msra.mxu0 0.0
        %8028 = vmatprep.subr.mxu0 0.0
        %8029 = vmatpush1.msra.mxu0 0.0
        %8030 = vmatprep.subr.mxu0 0.0
        %8031 = vmatpush1.msra.mxu0 0.0
        %8032 = vmatprep.subr.mxu0 0.0
        %8033 = vmatpush1.msra.mxu0 0.0
        %8034 = vmatprep.subr.mxu0 0.0
        %8035 = vmatpush1.msra.mxu0 0.0
        %8036 = vmatprep.subr.mxu0 0.0
        %8037 = vmatpush1.msra.mxu0 0.0
        %8038 = vmatprep.subr.mxu0 0.0
        %8039 = vmatpush1.msra.mxu0 0.0
        %8040 = vmatprep.subr.mxu0 0.0
        %8041 = vmatpush1.msra.mxu0 0.0
        %8042 = vmatprep.subr.mxu0 0.0
        %8043 = vmatpush1.msra.mxu0 0.0
        %8044 = vmatprep.subr.mxu0 0.0
        %8045 = vmatpush1.msra.mxu0 0.0
        %8046 = vmatprep.subr.mxu0 0.0
        %8047 = vmatpush1.msra.mxu0 0.0
        %8048 = vmatprep.subr.mxu0 0.0
        %8049 = vmatpush1.msra.mxu0 0.0
        %8050 = vmatprep.subr.mxu0 0.0
        %8051 = vmatpush1.msra.mxu0 0.0
        %8052 = vmatprep.subr.mxu0 0.0
        %8053 = vmatpush1.msra.mxu0 0.0
        %8054 = vmatprep.subr.mxu0 0.0
        %8055 = vmatpush1.msra.mxu0 0.0
        %8056 = vmatprep.subr.mxu0 0.0
        %8057 = vmatpush1.msra.mxu0 0.0
        %8058 = vmatprep.subr.mxu0 0.0
        %8059 = vmatpush1.msra.mxu0 0.0
        %8060 = vmatprep.subr.mxu0 0.0
        %8061 = vmatpush1.msra.mxu0 0.0
        %8062 = vmatprep.subr.mxu0 0.0
        %8063 = vmatpush1.msra.mxu0 0.0
        %8064 = vmatprep.subr.mxu0 0.0
        %8065 = vmatpush1.msra.mxu0 0.0
        %8066 = vmatprep.subr.mxu0 0.0
        %8067 = vmatpush1.msra.mxu0 0.0
        %8068 = vmatprep.subr.mxu0 0.0
        %8069 = vmatpush1.msra.mxu0 0.0
        %8070 = vmatprep.subr.mxu0 0.0
        %8071 = vmatpush1.msra.mxu0 0.0
        %8072 = vmatprep.subr.mxu0 0.0
        %8073 = vmatpush1.msra.mxu0 0.0
        %8074 = vmatprep.subr.mxu0 0.0
        %8075 = vmatpush1.msra.mxu0 0.0
        %8076 = vmatprep.subr.mxu0 0.0
        %8077 = vmatpush1.msra.mxu0 0.0
        %8078 = vmatprep.subr.mxu0 0.0
        %8079 = vmatpush1.msra.mxu0 0.0
        %8080 = vmatprep.mubr.f32.mxu0 0.0
        %8081 = vmatmul.mubr.f32.gmra.mrb[0].mxu0 %v8014
        %v8082 = vpop.f32.mrb[0].mxu0
        %v8083 = vadd.f32 0.0, %v8082
        %v8084 = vpop.f32.mrb[0].mxu0
        %8085 = vdwg.mxu0
        %v8087 = vsel %vm1230, %v7934, 0
        %8089 = vmatprep.subr.mxu0 0.0
        %8090 = vmatpush1.msra.mxu0 %v7291
        %8091 = vmatprep.subr.mxu0 0.0
        %8092 = vmatpush1.msra.mxu0 0.0
        %8093 = vmatprep.subr.mxu0 0.0
        %8094 = vmatpush1.msra.mxu0 0.0
        %8095 = vmatprep.subr.mxu0 0.0
        %8096 = vmatpush1.msra.mxu0 0.0
        %8097 = vmatprep.subr.mxu0 0.0
        %8098 = vmatpush1.msra.mxu0 0.0
        %8099 = vmatprep.subr.mxu0 0.0
        %8100 = vmatpush1.msra.mxu0 0.0
        %8101 = vmatprep.subr.mxu0 0.0
        %8102 = vmatpush1.msra.mxu0 0.0
        %8103 = vmatprep.subr.mxu0 0.0
        %8104 = vmatpush1.msra.mxu0 0.0
        %8105 = vmatprep.subr.mxu0 0.0
        %8106 = vmatpush1.msra.mxu0 0.0
        %8107 = vmatprep.subr.mxu0 0.0
        %8108 = vmatpush1.msra.mxu0 0.0
        %8109 = vmatprep.subr.mxu0 0.0
        %8110 = vmatpush1.msra.mxu0 0.0
        %8111 = vmatprep.subr.mxu0 0.0
        %8112 = vmatpush1.msra.mxu0 0.0
        %8113 = vmatprep.subr.mxu0 0.0
        %8114 = vmatpush1.msra.mxu0 0.0
        %8115 = vmatprep.subr.mxu0 0.0
        %8116 = vmatpush1.msra.mxu0 0.0
        %8117 = vmatprep.subr.mxu0 0.0
        %8118 = vmatpush1.msra.mxu0 0.0
        %8119 = vmatprep.subr.mxu0 0.0
        %8120 = vmatpush1.msra.mxu0 0.0
        %8121 = vmatprep.subr.mxu0 0.0
        %8122 = vmatpush1.msra.mxu0 0.0
        %8123 = vmatprep.subr.mxu0 0.0
        %8124 = vmatpush1.msra.mxu0 0.0
        %8125 = vmatprep.subr.mxu0 0.0
        %8126 = vmatpush1.msra.mxu0 0.0
        %8127 = vmatprep.subr.mxu0 0.0
        %8128 = vmatpush1.msra.mxu0 0.0
        %8129 = vmatprep.subr.mxu0 0.0
        %8130 = vmatpush1.msra.mxu0 0.0
        %8131 = vmatprep.subr.mxu0 0.0
        %8132 = vmatpush1.msra.mxu0 0.0
        %8133 = vmatprep.subr.mxu0 0.0
        %8134 = vmatpush1.msra.mxu0 0.0
        %8135 = vmatprep.subr.mxu0 0.0
        %8136 = vmatpush1.msra.mxu0 0.0
        %8137 = vmatprep.subr.mxu0 0.0
        %8138 = vmatpush1.msra.mxu0 0.0
        %8139 = vmatprep.subr.mxu0 0.0
        %8140 = vmatpush1.msra.mxu0 0.0
        %8141 = vmatprep.subr.mxu0 0.0
        %8142 = vmatpush1.msra.mxu0 0.0
        %8143 = vmatprep.subr.mxu0 0.0
        %8144 = vmatpush1.msra.mxu0 0.0
        %8145 = vmatprep.subr.mxu0 0.0
        %8146 = vmatpush1.msra.mxu0 0.0
        %8147 = vmatprep.subr.mxu0 0.0
        %8148 = vmatpush1.msra.mxu0 0.0
        %8149 = vmatprep.subr.mxu0 0.0
        %8150 = vmatpush1.msra.mxu0 0.0
        %8151 = vmatprep.subr.mxu0 0.0
        %8152 = vmatpush1.msra.mxu0 0.0
        %8153 = vmatprep.mubr.f32.mxu0 0.0
        %8154 = vmatmul.mubr.f32.gmra.mrb[0].mxu0 %v8087
        %v8155 = vpop.f32.mrb[0].mxu0
        %v8156 = vadd.f32 %v8083, %v8155
        %v8157 = vpop.f32.mrb[0].mxu0
        %8158 = vdwg.mxu0
        %8159 = vrot.lane.b32.xlu0 %v7496, 80
        %v8160 = vpop.permute.xlu0 %8159
        %v8163 = vsel %vm1230, %v7859, 0
        %8165 = vmatprep.subr.mxu0 0.0
        %8166 = vmatpush1.msra.mxu0 %v8160
        %8167 = vmatprep.subr.mxu0 0.0
        %8168 = vmatpush1.msra.mxu0 0.0
        %8169 = vmatprep.subr.mxu0 0.0
        %8170 = vmatpush1.msra.mxu0 0.0
        %8171 = vmatprep.subr.mxu0 0.0
        %8172 = vmatpush1.msra.mxu0 0.0
        %8173 = vmatprep.subr.mxu0 0.0
        %8174 = vmatpush1.msra.mxu0 0.0
        %8175 = vmatprep.subr.mxu0 0.0
        %8176 = vmatpush1.msra.mxu0 0.0
        %8177 = vmatprep.subr.mxu0 0.0
        %8178 = vmatpush1.msra.mxu0 0.0
        %8179 = vmatprep.subr.mxu0 0.0
        %8180 = vmatpush1.msra.mxu0 0.0
        %8181 = vmatprep.subr.mxu0 0.0
        %8182 = vmatpush1.msra.mxu0 0.0
        %8183 = vmatprep.subr.mxu0 0.0
        %8184 = vmatpush1.msra.mxu0 0.0
        %8185 = vmatprep.subr.mxu0 0.0
        %8186 = vmatpush1.msra.mxu0 0.0
        %8187 = vmatprep.subr.mxu0 0.0
        %8188 = vmatpush1.msra.mxu0 0.0
        %8189 = vmatprep.subr.mxu0 0.0
        %8190 = vmatpush1.msra.mxu0 0.0
        %8191 = vmatprep.subr.mxu0 0.0
        %8192 = vmatpush1.msra.mxu0 0.0
        %8193 = vmatprep.subr.mxu0 0.0
        %8194 = vmatpush1.msra.mxu0 0.0
        %8195 = vmatprep.subr.mxu0 0.0
        %8196 = vmatpush1.msra.mxu0 0.0
        %8197 = vmatprep.subr.mxu0 0.0
        %8198 = vmatpush1.msra.mxu0 0.0
        %8199 = vmatprep.subr.mxu0 0.0
        %8200 = vmatpush1.msra.mxu0 0.0
        %8201 = vmatprep.subr.mxu0 0.0
        %8202 = vmatpush1.msra.mxu0 0.0
        %8203 = vmatprep.subr.mxu0 0.0
        %8204 = vmatpush1.msra.mxu0 0.0
        %8205 = vmatprep.subr.mxu0 0.0
        %8206 = vmatpush1.msra.mxu0 0.0
        %8207 = vmatprep.subr.mxu0 0.0
        %8208 = vmatpush1.msra.mxu0 0.0
        %8209 = vmatprep.subr.mxu0 0.0
        %8210 = vmatpush1.msra.mxu0 0.0
        %8211 = vmatprep.subr.mxu0 0.0
        %8212 = vmatpush1.msra.mxu0 0.0
        %8213 = vmatprep.subr.mxu0 0.0
        %8214 = vmatpush1.msra.mxu0 0.0
        %8215 = vmatprep.subr.mxu0 0.0
        %8216 = vmatpush1.msra.mxu0 0.0
        %8217 = vmatprep.subr.mxu0 0.0
        %8218 = vmatpush1.msra.mxu0 0.0
        %8219 = vmatprep.subr.mxu0 0.0
        %8220 = vmatpush1.msra.mxu0 0.0
        %8221 = vmatprep.subr.mxu0 0.0
        %8222 = vmatpush1.msra.mxu0 0.0
        %8223 = vmatprep.subr.mxu0 0.0
        %8224 = vmatpush1.msra.mxu0 0.0
        %8225 = vmatprep.subr.mxu0 0.0
        %8226 = vmatpush1.msra.mxu0 0.0
        %8227 = vmatprep.subr.mxu0 0.0
        %8228 = vmatpush1.msra.mxu0 0.0
        %8229 = vmatprep.mubr.f32.mxu0 0.0
        %8230 = vmatmul.mubr.f32.gmra.mrb[0].mxu0 %v8163
        %v8231 = vpop.f32.mrb[0].mxu0
        %v8232 = vadd.f32 0.0, %v8231
        %v8233 = vpop.f32.mrb[0].mxu0
        %8234 = vdwg.mxu0
        %v8236 = vsel %vm1230, %v8232, 0
        %8238 = vmatprep.subr.mxu0 0.0
        %8239 = vmatpush1.msra.mxu0 %v7293
        %8240 = vmatprep.subr.mxu0 0.0
        %8241 = vmatpush1.msra.mxu0 0.0
        %8242 = vmatprep.subr.mxu0 0.0
        %8243 = vmatpush1.msra.mxu0 0.0
        %8244 = vmatprep.subr.mxu0 0.0
        %8245 = vmatpush1.msra.mxu0 0.0
        %8246 = vmatprep.subr.mxu0 0.0
        %8247 = vmatpush1.msra.mxu0 0.0
        %8248 = vmatprep.subr.mxu0 0.0
        %8249 = vmatpush1.msra.mxu0 0.0
        %8250 = vmatprep.subr.mxu0 0.0
        %8251 = vmatpush1.msra.mxu0 0.0
        %8252 = vmatprep.subr.mxu0 0.0
        %8253 = vmatpush1.msra.mxu0 0.0
        %8254 = vmatprep.subr.mxu0 0.0
        %8255 = vmatpush1.msra.mxu0 0.0
        %8256 = vmatprep.subr.mxu0 0.0
        %8257 = vmatpush1.msra.mxu0 0.0
        %8258 = vmatprep.subr.mxu0 0.0
        %8259 = vmatpush1.msra.mxu0 0.0
        %8260 = vmatprep.subr.mxu0 0.0
        %8261 = vmatpush1.msra.mxu0 0.0
        %8262 = vmatprep.subr.mxu0 0.0
        %8263 = vmatpush1.msra.mxu0 0.0
        %8264 = vmatprep.subr.mxu0 0.0
        %8265 = vmatpush1.msra.mxu0 0.0
        %8266 = vmatprep.subr.mxu0 0.0
        %8267 = vmatpush1.msra.mxu0 0.0
        %8268 = vmatprep.subr.mxu0 0.0
        %8269 = vmatpush1.msra.mxu0 0.0
        %8270 = vmatprep.subr.mxu0 0.0
        %8271 = vmatpush1.msra.mxu0 0.0
        %8272 = vmatprep.subr.mxu0 0.0
        %8273 = vmatpush1.msra.mxu0 0.0
        %8274 = vmatprep.subr.mxu0 0.0
        %8275 = vmatpush1.msra.mxu0 0.0
        %8276 = vmatprep.subr.mxu0 0.0
        %8277 = vmatpush1.msra.mxu0 0.0
        %8278 = vmatprep.subr.mxu0 0.0
        %8279 = vmatpush1.msra.mxu0 0.0
        %8280 = vmatprep.subr.mxu0 0.0
        %8281 = vmatpush1.msra.mxu0 0.0
        %8282 = vmatprep.subr.mxu0 0.0
        %8283 = vmatpush1.msra.mxu0 0.0
        %8284 = vmatprep.subr.mxu0 0.0
        %8285 = vmatpush1.msra.mxu0 0.0
        %8286 = vmatprep.subr.mxu0 0.0
        %8287 = vmatpush1.msra.mxu0 0.0
        %8288 = vmatprep.subr.mxu0 0.0
        %8289 = vmatpush1.msra.mxu0 0.0
        %8290 = vmatprep.subr.mxu0 0.0
        %8291 = vmatpush1.msra.mxu0 0.0
        %8292 = vmatprep.subr.mxu0 0.0
        %8293 = vmatpush1.msra.mxu0 0.0
        %8294 = vmatprep.subr.mxu0 0.0
        %8295 = vmatpush1.msra.mxu0 0.0
        %8296 = vmatprep.subr.mxu0 0.0
        %8297 = vmatpush1.msra.mxu0 0.0
        %8298 = vmatprep.subr.mxu0 0.0
        %8299 = vmatpush1.msra.mxu0 0.0
        %8300 = vmatprep.subr.mxu0 0.0
        %8301 = vmatpush1.msra.mxu0 0.0
        %8302 = vmatprep.mubr.f32.mxu0 0.0
        %8303 = vmatmul.mubr.f32.gmra.mrb[0].mxu0 %v8236
        %v8304 = vpop.f32.mrb[0].mxu0
        %v8305 = vadd.f32 0.0, %v8304
        %v8306 = vpop.f32.mrb[0].mxu0
        %8307 = vdwg.mxu0
        %v8308 = vadd.f32 %v8156, %v8305
        %8309 = vrot.lane.b32.xlu0 %v7496, 72
        %v8310 = vpop.permute.xlu0 %8309
        %v8313 = vsel %vm1230, %v7860, 0
        %8315 = vmatprep.subr.mxu0 0.0
        %8316 = vmatpush1.msra.mxu0 %v8310
        %8317 = vmatprep.subr.mxu0 0.0
        %8318 = vmatpush1.msra.mxu0 0.0
        %8319 = vmatprep.subr.mxu0 0.0
        %8320 = vmatpush1.msra.mxu0 0.0
        %8321 = vmatprep.subr.mxu0 0.0
        %8322 = vmatpush1.msra.mxu0 0.0
        %8323 = vmatprep.subr.mxu0 0.0
        %8324 = vmatpush1.msra.mxu0 0.0
        %8325 = vmatprep.subr.mxu0 0.0
        %8326 = vmatpush1.msra.mxu0 0.0
        %8327 = vmatprep.subr.mxu0 0.0
        %8328 = vmatpush1.msra.mxu0 0.0
        %8329 = vmatprep.subr.mxu0 0.0
        %8330 = vmatpush1.msra.mxu0 0.0
        %8331 = vmatprep.subr.mxu0 0.0
        %8332 = vmatpush1.msra.mxu0 0.0
        %8333 = vmatprep.subr.mxu0 0.0
        %8334 = vmatpush1.msra.mxu0 0.0
        %8335 = vmatprep.subr.mxu0 0.0
        %8336 = vmatpush1.msra.mxu0 0.0
        %8337 = vmatprep.subr.mxu0 0.0
        %8338 = vmatpush1.msra.mxu0 0.0
        %8339 = vmatprep.subr.mxu0 0.0
        %8340 = vmatpush1.msra.mxu0 0.0
        %8341 = vmatprep.subr.mxu0 0.0
        %8342 = vmatpush1.msra.mxu0 0.0
        %8343 = vmatprep.subr.mxu0 0.0
        %8344 = vmatpush1.msra.mxu0 0.0
        %8345 = vmatprep.subr.mxu0 0.0
        %8346 = vmatpush1.msra.mxu0 0.0
        %8347 = vmatprep.subr.mxu0 0.0
        %8348 = vmatpush1.msra.mxu0 0.0
        %8349 = vmatprep.subr.mxu0 0.0
        %8350 = vmatpush1.msra.mxu0 0.0
        %8351 = vmatprep.subr.mxu0 0.0
        %8352 = vmatpush1.msra.mxu0 0.0
        %8353 = vmatprep.subr.mxu0 0.0
        %8354 = vmatpush1.msra.mxu0 0.0
        %8355 = vmatprep.subr.mxu0 0.0
        %8356 = vmatpush1.msra.mxu0 0.0
        %8357 = vmatprep.subr.mxu0 0.0
        %8358 = vmatpush1.msra.mxu0 0.0
        %8359 = vmatprep.subr.mxu0 0.0
        %8360 = vmatpush1.msra.mxu0 0.0
        %8361 = vmatprep.subr.mxu0 0.0
        %8362 = vmatpush1.msra.mxu0 0.0
        %8363 = vmatprep.subr.mxu0 0.0
        %8364 = vmatpush1.msra.mxu0 0.0
        %8365 = vmatprep.subr.mxu0 0.0
        %8366 = vmatpush1.msra.mxu0 0.0
        %8367 = vmatprep.subr.mxu0 0.0
        %8368 = vmatpush1.msra.mxu0 0.0
        %8369 = vmatprep.subr.mxu0 0.0
        %8370 = vmatpush1.msra.mxu0 0.0
        %8371 = vmatprep.subr.mxu0 0.0
        %8372 = vmatpush1.msra.mxu0 0.0
        %8373 = vmatprep.subr.mxu0 0.0
        %8374 = vmatpush1.msra.mxu0 0.0
        %8375 = vmatprep.subr.mxu0 0.0
        %8376 = vmatpush1.msra.mxu0 0.0
        %8377 = vmatprep.subr.mxu0 0.0
        %8378 = vmatpush1.msra.mxu0 0.0
        %8379 = vmatprep.mubr.f32.mxu0 0.0
        %8380 = vmatmul.mubr.f32.gmra.mrb[0].mxu0 %v8313
        %v8381 = vpop.f32.mrb[0].mxu0
        %v8382 = vadd.f32 0.0, %v8381
        %v8383 = vpop.f32.mrb[0].mxu0
        %8384 = vdwg.mxu0
        %v8386 = vsel %vm1230, %v8382, 0
        %8388 = vmatprep.subr.mxu0 0.0
        %8389 = vmatpush1.msra.mxu0 %v7294
        %8390 = vmatprep.subr.mxu0 0.0
        %8391 = vmatpush1.msra.mxu0 0.0
        %8392 = vmatprep.subr.mxu0 0.0
        %8393 = vmatpush1.msra.mxu0 0.0
        %8394 = vmatprep.subr.mxu0 0.0
        %8395 = vmatpush1.msra.mxu0 0.0
        %8396 = vmatprep.subr.mxu0 0.0
        %8397 = vmatpush1.msra.mxu0 0.0
        %8398 = vmatprep.subr.mxu0 0.0
        %8399 = vmatpush1.msra.mxu0 0.0
        %8400 = vmatprep.subr.mxu0 0.0
        %8401 = vmatpush1.msra.mxu0 0.0
        %8402 = vmatprep.subr.mxu0 0.0
        %8403 = vmatpush1.msra.mxu0 0.0
        %8404 = vmatprep.subr.mxu0 0.0
        %8405 = vmatpush1.msra.mxu0 0.0
        %8406 = vmatprep.subr.mxu0 0.0
        %8407 = vmatpush1.msra.mxu0 0.0
        %8408 = vmatprep.subr.mxu0 0.0
        %8409 = vmatpush1.msra.mxu0 0.0
        %8410 = vmatprep.subr.mxu0 0.0
        %8411 = vmatpush1.msra.mxu0 0.0
        %8412 = vmatprep.subr.mxu0 0.0
        %8413 = vmatpush1.msra.mxu0 0.0
        %8414 = vmatprep.subr.mxu0 0.0
        %8415 = vmatpush1.msra.mxu0 0.0
        %8416 = vmatprep.subr.mxu0 0.0
        %8417 = vmatpush1.msra.mxu0 0.0
        %8418 = vmatprep.subr.mxu0 0.0
        %8419 = vmatpush1.msra.mxu0 0.0
        %8420 = vmatprep.subr.mxu0 0.0
        %8421 = vmatpush1.msra.mxu0 0.0
        %8422 = vmatprep.subr.mxu0 0.0
        %8423 = vmatpush1.msra.mxu0 0.0
        %8424 = vmatprep.subr.mxu0 0.0
        %8425 = vmatpush1.msra.mxu0 0.0
        %8426 = vmatprep.subr.mxu0 0.0
        %8427 = vmatpush1.msra.mxu0 0.0
        %8428 = vmatprep.subr.mxu0 0.0
        %8429 = vmatpush1.msra.mxu0 0.0
        %8430 = vmatprep.subr.mxu0 0.0
        %8431 = vmatpush1.msra.mxu0 0.0
        %8432 = vmatprep.subr.mxu0 0.0
        %8433 = vmatpush1.msra.mxu0 0.0
        %8434 = vmatprep.subr.mxu0 0.0
        %8435 = vmatpush1.msra.mxu0 0.0
        %8436 = vmatprep.subr.mxu0 0.0
        %8437 = vmatpush1.msra.mxu0 0.0
        %8438 = vmatprep.subr.mxu0 0.0
        %8439 = vmatpush1.msra.mxu0 0.0
        %8440 = vmatprep.subr.mxu0 0.0
        %8441 = vmatpush1.msra.mxu0 0.0
        %8442 = vmatprep.subr.mxu0 0.0
        %8443 = vmatpush1.msra.mxu0 0.0
        %8444 = vmatprep.subr.mxu0 0.0
        %8445 = vmatpush1.msra.mxu0 0.0
        %8446 = vmatprep.subr.mxu0 0.0
        %8447 = vmatpush1.msra.mxu0 0.0
        %8448 = vmatprep.subr.mxu0 0.0
        %8449 = vmatpush1.msra.mxu0 0.0
        %8450 = vmatprep.subr.mxu0 0.0
        %8451 = vmatpush1.msra.mxu0 0.0
        %8452 = vmatprep.mubr.f32.mxu0 0.0
        %8453 = vmatmul.mubr.f32.gmra.mrb[0].mxu0 %v8386
        %v8454 = vpop.f32.mrb[0].mxu0
        %v8455 = vadd.f32 0.0, %v8454
        %v8456 = vpop.f32.mrb[0].mxu0
        %8457 = vdwg.mxu0
        %v8458 = vadd.f32 %v8308, %v8455
        %v8460 = vlaneseq
        %v8461 = vshrl.u32 %v8460, 7
        %v8462 = vsub.s32 0, %v8461
        %v8463 = vrot.slane %v7296, %v8462
        %v8465 = vadd.f32 %v8458, %v8463
        %v8466 = vadd.f32 %v8465, %v7282
        %v8467 = vsel %vm1153, %v8466, 0.0
        %8468 = vadd.xlane.f32.xlu0 %v8467
        %v8469 = vpop.xlane.xlu0 %8468
        %v8470 = vmul.f32 %v8469, %v2200
        %v8471 = vsub.f32 %v8466, %v8470
        %v8472 = vmul.f32 %v8471, %v8471
        %v8473 = vsel %vm1153, %v8472, 0.0
        %8474 = vadd.xlane.f32.xlu0 %v8473
        %v8475 = vpop.xlane.xlu0 %8474
        %v8476 = vmul.f32 %v8475, %v2200
        %v8477 = vadd.f32 %v8476, 1e-05
        %v8478 = vrsqrt.pop %v8477
        %v8479 = vmul.f32 %v8471, %v8478
        %v8481 = vlaneseq
        %v8482 = vshrl.u32 %v8481, 7
        %v8483 = vsub.s32 0, %v8482
        %v8484 = vrot.slane %v7298, %v8483
        %v8486 = vmul.f32 %v8479, %v8484
        %v8488 = vlaneseq
        %v8489 = vshrl.u32 %v8488, 7
        %v8490 = vsub.s32 0, %v8489
        %v8491 = vrot.slane %v7300, %v8490
        %v8493 = vadd.f32 %v8486, %v8491
        %v8495 = vlaneseq
        %v8496 = vshrl.u32 %v8495, 7
        %v8497 = vsub.s32 0, %v8496
        %v8498 = vrot.slane %v7311, %v8497
        %v8501 = vsel %vm1153, %v8493, 0
        %8503 = vmatprep.subr.mxu0 0.0
        %8504 = vmatpush1.msra.mxu0 %v7306
        %8505 = vmatprep.subr.mxu0 0.0
        %8506 = vmatpush1.msra.mxu0 %v7307
        %8507 = vmatprep.subr.mxu0 0.0
        %8508 = vmatpush1.msra.mxu0 %v7308
        %8509 = vmatprep.subr.mxu0 0.0
        %8510 = vmatpush1.msra.mxu0 %v7309
        %8511 = vmatprep.subr.mxu0 0.0
        %8512 = vmatpush1.msra.mxu0 0.0
        %8513 = vmatprep.subr.mxu0 0.0
        %8514 = vmatpush1.msra.mxu0 0.0
        %8515 = vmatprep.subr.mxu0 0.0
        %8516 = vmatpush1.msra.mxu0 0.0
        %8517 = vmatprep.subr.mxu0 0.0
        %8518 = vmatpush1.msra.mxu0 0.0
        %8519 = vmatprep.subr.mxu0 0.0
        %8520 = vmatpush1.msra.mxu0 0.0
        %8521 = vmatprep.subr.mxu0 0.0
        %8522 = vmatpush1.msra.mxu0 0.0
        %8523 = vmatprep.subr.mxu0 0.0
        %8524 = vmatpush1.msra.mxu0 0.0
        %8525 = vmatprep.subr.mxu0 0.0
        %8526 = vmatpush1.msra.mxu0 0.0
        %8527 = vmatprep.subr.mxu0 0.0
        %8528 = vmatpush1.msra.mxu0 0.0
        %8529 = vmatprep.subr.mxu0 0.0
        %8530 = vmatpush1.msra.mxu0 0.0
        %8531 = vmatprep.subr.mxu0 0.0
        %8532 = vmatpush1.msra.mxu0 0.0
        %8533 = vmatprep.subr.mxu0 0.0
        %8534 = vmatpush1.msra.mxu0 0.0
        %8535 = vmatprep.subr.mxu0 0.0
        %8536 = vmatpush1.msra.mxu0 0.0
        %8537 = vmatprep.subr.mxu0 0.0
        %8538 = vmatpush1.msra.mxu0 0.0
        %8539 = vmatprep.subr.mxu0 0.0
        %8540 = vmatpush1.msra.mxu0 0.0
        %8541 = vmatprep.subr.mxu0 0.0
        %8542 = vmatpush1.msra.mxu0 0.0
        %8543 = vmatprep.subr.mxu0 0.0
        %8544 = vmatpush1.msra.mxu0 0.0
        %8545 = vmatprep.subr.mxu0 0.0
        %8546 = vmatpush1.msra.mxu0 0.0
        %8547 = vmatprep.subr.mxu0 0.0
        %8548 = vmatpush1.msra.mxu0 0.0
        %8549 = vmatprep.subr.mxu0 0.0
        %8550 = vmatpush1.msra.mxu0 0.0
        %8551 = vmatprep.subr.mxu0 0.0
        %8552 = vmatpush1.msra.mxu0 0.0
        %8553 = vmatprep.subr.mxu0 0.0
        %8554 = vmatpush1.msra.mxu0 0.0
        %8555 = vmatprep.subr.mxu0 0.0
        %8556 = vmatpush1.msra.mxu0 0.0
        %8557 = vmatprep.subr.mxu0 0.0
        %8558 = vmatpush1.msra.mxu0 0.0
        %8559 = vmatprep.subr.mxu0 0.0
        %8560 = vmatpush1.msra.mxu0 0.0
        %8561 = vmatprep.subr.mxu0 0.0
        %8562 = vmatpush1.msra.mxu0 0.0
        %8563 = vmatprep.subr.mxu0 0.0
        %8564 = vmatpush1.msra.mxu0 0.0
        %8565 = vmatprep.subr.mxu0 0.0
        %8566 = vmatpush1.msra.mxu0 0.0
        %8567 = vmatprep.mubr.f32.mxu0 0.0
        %8568 = vmatmul.mubr.f32.gmra.mrb[0].mxu0 %v8501
        %v8569 = vpop.f32.mrb[0].mxu0
        %v8570 = vadd.f32 %v8498, %v8569
        %v8571 = vpop.f32.mrb[0].mxu0
        %8572 = vdwg.mxu0
        %v8573 = vmax.f32 %v8570, 0.0
        %v8575 = vlaneseq
        %v8576 = vshrl.u32 %v8575, 7
        %v8577 = vsub.s32 0, %v8576
        %v8578 = vrot.slane %v7330, %v8577
        %8580 = vmatprep.subr.mxu0 0.0
        %8581 = vmatpush1.msra.mxu0 %v7313
        %8582 = vmatprep.subr.mxu0 0.0
        %8583 = vmatpush1.msra.mxu0 %v7314
        %8584 = vmatprep.subr.mxu0 0.0
        %8585 = vmatpush1.msra.mxu0 %v7315
        %8586 = vmatprep.subr.mxu0 0.0
        %8587 = vmatpush1.msra.mxu0 %v7316
        %8588 = vmatprep.subr.mxu0 0.0
        %8589 = vmatpush1.msra.mxu0 %v7317
        %8590 = vmatprep.subr.mxu0 0.0
        %8591 = vmatpush1.msra.mxu0 %v7318
        %8592 = vmatprep.subr.mxu0 0.0
        %8593 = vmatpush1.msra.mxu0 %v7319
        %8594 = vmatprep.subr.mxu0 0.0
        %8595 = vmatpush1.msra.mxu0 %v7320
        %8596 = vmatprep.subr.mxu0 0.0
        %8597 = vmatpush1.msra.mxu0 %v7321
        %8598 = vmatprep.subr.mxu0 0.0
        %8599 = vmatpush1.msra.mxu0 %v7322
        %8600 = vmatprep.subr.mxu0 0.0
        %8601 = vmatpush1.msra.mxu0 %v7323
        %8602 = vmatprep.subr.mxu0 0.0
        %8603 = vmatpush1.msra.mxu0 %v7324
        %8604 = vmatprep.subr.mxu0 0.0
        %8605 = vmatpush1.msra.mxu0 %v7325
        %8606 = vmatprep.subr.mxu0 0.0
        %8607 = vmatpush1.msra.mxu0 %v7326
        %8608 = vmatprep.subr.mxu0 0.0
        %8609 = vmatpush1.msra.mxu0 %v7327
        %8610 = vmatprep.subr.mxu0 0.0
        %8611 = vmatpush1.msra.mxu0 %v7328
        %8612 = vmatprep.subr.mxu0 0.0
        %8613 = vmatpush1.msra.mxu0 0.0
        %8614 = vmatprep.subr.mxu0 0.0
        %8615 = vmatpush1.msra.mxu0 0.0
        %8616 = vmatprep.subr.mxu0 0.0
        %8617 = vmatpush1.msra.mxu0 0.0
        %8618 = vmatprep.subr.mxu0 0.0
        %8619 = vmatpush1.msra.mxu0 0.0
        %8620 = vmatprep.subr.mxu0 0.0
        %8621 = vmatpush1.msra.mxu0 0.0
        %8622 = vmatprep.subr.mxu0 0.0
        %8623 = vmatpush1.msra.mxu0 0.0
        %8624 = vmatprep.subr.mxu0 0.0
        %8625 = vmatpush1.msra.mxu0 0.0
        %8626 = vmatprep.subr.mxu0 0.0
        %8627 = vmatpush1.msra.mxu0 0.0
        %8628 = vmatprep.subr.mxu0 0.0
        %8629 = vmatpush1.msra.mxu0 0.0
        %8630 = vmatprep.subr.mxu0 0.0
        %8631 = vmatpush1.msra.mxu0 0.0
        %8632 = vmatprep.subr.mxu0 0.0
        %8633 = vmatpush1.msra.mxu0 0.0
        %8634 = vmatprep.subr.mxu0 0.0
        %8635 = vmatpush1.msra.mxu0 0.0
        %8636 = vmatprep.subr.mxu0 0.0
        %8637 = vmatpush1.msra.mxu0 0.0
        %8638 = vmatprep.subr.mxu0 0.0
        %8639 = vmatpush1.msra.mxu0 0.0
        %8640 = vmatprep.subr.mxu0 0.0
        %8641 = vmatpush1.msra.mxu0 0.0
        %8642 = vmatprep.subr.mxu0 0.0
        %8643 = vmatpush1.msra.mxu0 0.0
        %8644 = vmatprep.mubr.f32.mxu0 0.0
        %8645 = vmatmul.mubr.f32.gmra.mrb[0].mxu0 %v8573
        %v8646 = vpop.f32.mrb[0].mxu0
        %v8647 = vadd.f32 %v8578, %v8646
        %v8648 = vpop.f32.mrb[0].mxu0
        %8649 = vdwg.mxu0
        %v8650 = vadd.f32 %v8647, %v8493
        %v8651 = vsel %vm1153, %v8650, 0.0
        %8652 = vadd.xlane.f32.xlu0 %v8651
        %v8653 = vpop.xlane.xlu0 %8652
        %v8654 = vmul.f32 %v8653, %v2200
        %v8655 = vsub.f32 %v8650, %v8654
        %v8656 = vmul.f32 %v8655, %v8655
        %v8657 = vsel %vm1153, %v8656, 0.0
        %8658 = vadd.xlane.f32.xlu0 %v8657
        %v8659 = vpop.xlane.xlu0 %8658
        %v8660 = vmul.f32 %v8659, %v2200
        %v8661 = vadd.f32 %v8660, 1e-05
        %v8662 = vrsqrt.pop %v8661
        %v8663 = vmul.f32 %v8655, %v8662
        %v8665 = vlaneseq
        %v8666 = vshrl.u32 %v8665, 7
        %v8667 = vsub.s32 0, %v8666
        %v8668 = vrot.slane %v7302, %v8667
        %v8670 = vmul.f32 %v8663, %v8668
        %v8672 = vlaneseq
        %v8673 = vshrl.u32 %v8672, 7
        %v8674 = vsub.s32 0, %v8673
        %v8675 = vrot.slane %v7304, %v8674
        %v8677 = vadd.f32 %v8670, %v8675
        %v8678 = vld [vmem:[%s67] sm:$0xff]
        %v8679 = vld [vmem:[%s67 + $0x8] sm:$0xff]
        %v8680 = vld [vmem:[%s67 + $0x10] sm:$0xff]
        %v8681 = vld [vmem:[%s67 + $0x18] sm:$0xff]
        %v8682 = vld [vmem:[%s69] sm:$0x1]
        %v8684 = vlaneseq
        %v8685 = vshrl.u32 %v8684, 7
        %v8686 = vsub.s32 0, %v8685
        %v8687 = vrot.slane %v8682, %v8686
        %v8690 = vsel %vm1153, %v8677, 0
        %8692 = vmatprep.subr.mxu0 0.0
        %8693 = vmatpush1.msra.mxu0 %v8678
        %8694 = vmatprep.subr.mxu0 0.0
        %8695 = vmatpush1.msra.mxu0 %v8679
        %8696 = vmatprep.subr.mxu0 0.0
        %8697 = vmatpush1.msra.mxu0 %v8680
        %8698 = vmatprep.subr.mxu0 0.0
        %8699 = vmatpush1.msra.mxu0 %v8681
        %8700 = vmatprep.subr.mxu0 0.0
        %8701 = vmatpush1.msra.mxu0 0.0
        %8702 = vmatprep.subr.mxu0 0.0
        %8703 = vmatpush1.msra.mxu0 0.0
        %8704 = vmatprep.subr.mxu0 0.0
        %8705 = vmatpush1.msra.mxu0 0.0
        %8706 = vmatprep.subr.mxu0 0.0
        %8707 = vmatpush1.msra.mxu0 0.0
        %8708 = vmatprep.subr.mxu0 0.0
        %8709 = vmatpush1.msra.mxu0 0.0
        %8710 = vmatprep.subr.mxu0 0.0
        %8711 = vmatpush1.msra.mxu0 0.0
        %8712 = vmatprep.subr.mxu0 0.0
        %8713 = vmatpush1.msra.mxu0 0.0
        %8714 = vmatprep.subr.mxu0 0.0
        %8715 = vmatpush1.msra.mxu0 0.0
        %8716 = vmatprep.subr.mxu0 0.0
        %8717 = vmatpush1.msra.mxu0 0.0
        %8718 = vmatprep.subr.mxu0 0.0
        %8719 = vmatpush1.msra.mxu0 0.0
        %8720 = vmatprep.subr.mxu0 0.0
        %8721 = vmatpush1.msra.mxu0 0.0
        %8722 = vmatprep.subr.mxu0 0.0
        %8723 = vmatpush1.msra.mxu0 0.0
        %8724 = vmatprep.subr.mxu0 0.0
        %8725 = vmatpush1.msra.mxu0 0.0
        %8726 = vmatprep.subr.mxu0 0.0
        %8727 = vmatpush1.msra.mxu0 0.0
        %8728 = vmatprep.subr.mxu0 0.0
        %8729 = vmatpush1.msra.mxu0 0.0
        %8730 = vmatprep.subr.mxu0 0.0
        %8731 = vmatpush1.msra.mxu0 0.0
        %8732 = vmatprep.subr.mxu0 0.0
        %8733 = vmatpush1.msra.mxu0 0.0
        %8734 = vmatprep.subr.mxu0 0.0
        %8735 = vmatpush1.msra.mxu0 0.0
        %8736 = vmatprep.subr.mxu0 0.0
        %8737 = vmatpush1.msra.mxu0 0.0
        %8738 = vmatprep.subr.mxu0 0.0
        %8739 = vmatpush1.msra.mxu0 0.0
        %8740 = vmatprep.subr.mxu0 0.0
        %8741 = vmatpush1.msra.mxu0 0.0
        %8742 = vmatprep.subr.mxu0 0.0
        %8743 = vmatpush1.msra.mxu0 0.0
        %8744 = vmatprep.subr.mxu0 0.0
        %8745 = vmatpush1.msra.mxu0 0.0
        %8746 = vmatprep.subr.mxu0 0.0
        %8747 = vmatpush1.msra.mxu0 0.0
        %8748 = vmatprep.subr.mxu0 0.0
        %8749 = vmatpush1.msra.mxu0 0.0
        %8750 = vmatprep.subr.mxu0 0.0
        %8751 = vmatpush1.msra.mxu0 0.0
        %8752 = vmatprep.subr.mxu0 0.0
        %8753 = vmatpush1.msra.mxu0 0.0
        %8754 = vmatprep.subr.mxu0 0.0
        %8755 = vmatpush1.msra.mxu0 0.0
        %8756 = vmatprep.mubr.f32.mxu0 0.0
        %8757 = vmatmul.mubr.f32.gmra.mrb[0].mxu0 %v8690
        %v8758 = vpop.f32.mrb[0].mxu0
        %v8759 = vadd.f32 %v8687, %v8758
        %v8760 = vpop.f32.mrb[0].mxu0
        %8761 = vdwg.mxu0
        %8762 = vst [vmem:[%s1085] sm:$0xff] %v8759
        %s8763 = sand.u32 %s843, 1
        %s8764 = scalar_lea.sflag [#allocation3], %s8763
        %s8765 = sand.u32 %s843, 1
        %s8766 = smul.addr %s8765, 8
        %s8767 = scalar_lea.vmem [#allocation2], %s8766
        // Predicated region
        $region161: #{transformer_forward.1} parent=159 // pred_check
          %p8768 = pneg %p853
        $region162: #{transformer_forward.1} parent=159 // pred_check_branch
          %8770 = sbr.rel (%p8768) target = $region164
        $region163: #{transformer_forward.1} parent=159 // pred_region
          %s8772 = ssub.s32 128, 128
          %8773 = vsyncadd %s8764, %s8772
          %s8774 = smul.addr %s85, 128
          %s8775 = scalar_lea.hbm %s71, %s8774
          %s8777 = sshll.u32 %s8767, 4
          %s8778 = int_to_ptr.vmem [resolvable:$true] %s8777
          %8780 = dma.vmem_to_hbm [thread:$0]  %s8778, 128, %s8775, %s8764
        $region164: #{transformer_forward.1} parent=159 // pred_fallthru
          _
      $region160: #{transformer_forward.1} parent=5 // pred_fallthru
        _
      %p8781 = scmp.le.s32.totalorder 2, %s80
      // Predicated region
      $region165: #{transformer_forward.1} parent=5 // pred_check
        %p8782 = pneg %p8781
      $region166: #{transformer_forward.1} parent=5 // pred_check_branch
        %8784 = sbr.rel (%p8782) target = $region168
      $region167: #{transformer_forward.1} parent=5 // pred_region
        %s8785 = ssub.s32 %s80, 2
        // Predicated region
        $region169: #{transformer_forward.1} parent=167 // pred_check
          %p8786 = pneg %p859
        $region170: #{transformer_forward.1} parent=167 // pred_check_branch
          %8788 = sbr.rel (%p8786) target = $region172
        $region171: #{transformer_forward.1} parent=167 // pred_region
          %s8789 = sand.u32 %s844, 1
          %s8790 = scalar_lea.sflag [#allocation3], %s8789
          %s8791 = sand.u32 %s844, 1
          %s8792 = smul.addr %s8791, 8
          %s8793 = scalar_lea.vmem [#allocation2], %s8792
          %8794 = dma.done %s8790, 128
        $region172: #{transformer_forward.1} parent=167 // pred_fallthru
          _
      $region168: #{transformer_forward.1} parent=5 // pred_fallthru
        _
    $region6: #{transformer_forward.1} parent=1 // loop_footer
      %s84 = sadd.s32 1, %s80
    $region7: #{transformer_forward.1} parent=1 // loop_footer_branch
      %79 = sbr.rel target = $region3
    $region8: #{transformer_forward.1} parent=1 // loop_exit
      _
    %8795 = vsyncpa [#allocation3], 1
    %s8796 = scalar_lea.sflag [#allocation3], 1
    %8797 = vsyncpa %s8796, 1

</llo_original>
